<compile_context>
chip_gen: v5e
topology: v5e:2x2
jax: 0.10.0
libtpu: 0.0.40
codegen_flags: <defaults>
</compile_context>

<pallas_src>
import jax
import jax.numpy as jnp
from jax.experimental import pallas as pl
from jax.experimental.pallas import tpu as pltpu

# Small synthetic config consistent with the module (img_shape = (C, S, S)).
CHANNELS = 4
IMG_SIZE = 16
IN_FEATURES = CHANNELS * IMG_SIZE * IMG_SIZE  # 1024
LAYER_DIMS = [IN_FEATURES, 1024, 512, 256, 128, 1]
NEG_SLOPE = 0.2

MAX_TILE_B = 512  # cap: keeps double-buffered activations + weights well inside
                  # v7x's 64 MiB VMEM; also plenty to amortize per-step overhead.

# NT matmul dimension numbers: contract last dim of lhs with last dim of rhs
# (same form the reference flash-attention kernel uses for q @ k^T).
_NT_DIMS = (((1,), (1,)), ((), ()))


def discriminator_kernel(x_ref,
                         w1_ref, b1_ref,
                         w2_ref, b2_ref,
                         w3_ref, b3_ref,
                         w4_ref, b4_ref,
                         w5_ref, b5_ref,
                         out_ref):
    # x_ref: (TILE_B, 1024) f32.  In-kernel cast to bf16 (cheap VPU op hidden
    # under the MXU) instead of a separate wrapper-side XLA cast pass.
    h = x_ref[...].astype(jnp.bfloat16)

    # Hidden layers: bf16 MXU matmuls with f32 accumulation.  LeakyReLU as
    # max(a, 0.2*a) on the f32 accumulator (valid since 0 < slope < 1).
    for w_ref, b_ref in ((w1_ref, b1_ref), (w2_ref, b2_ref),
                         (w3_ref, b3_ref), (w4_ref, b4_ref)):
        a = jnp.dot(h, w_ref[...], preferred_element_type=jnp.float32) + b_ref[...]
        h = jnp.maximum(a, NEG_SLOPE * a).astype(jnp.bfloat16)

    # Head Linear(128 -> 1): NT matmul so the per-row scores land lane-dense.
    # w5_ref is the weight row zero-padded to 8 sublanes: (8, 128) bf16.
    # s = w5 @ h^T -> (8, TILE_B) f32; row 0 carries the real scores.
    s = jax.lax.dot_general(w5_ref[...], h, _NT_DIMS,
                            preferred_element_type=jnp.float32)
    out_ref[...] = s[0:1, :] + b5_ref[...]   # (1, TILE_B), unmasked 128-lane stores


def init_params(key):
    """Deterministic init mimicking PyTorch nn.Linear default U[-1/sqrt(fan_in), +].

    Layers 1-4 store W transposed as (in, out) bf16 for the x @ W hot path.
    The final layer stores its single weight row zero-padded to (8, 128) bf16
    so the head can run as an 8-row NT MXU pass.  Biases stay f32.
    """
    params = []
    n = len(LAYER_DIMS) - 1
    for i in range(n):
        fan_in, fan_out = LAYER_DIMS[i], LAYER_DIMS[i + 1]
        key, kw, kb = jax.random.split(key, 3)
        bound = 1.0 / (fan_in ** 0.5)
        if i < n - 1:
            w = jax.random.uniform(kw, (fan_in, fan_out), jnp.float32, -bound, bound)
        else:
            w_row = jax.random.uniform(kw, (1, fan_in), jnp.float32, -bound, bound)
            w = jnp.zeros((8, fan_in), jnp.float32).at[0:1].set(w_row)
        b = jax.random.uniform(kb, (1, fan_out), jnp.float32, -bound, bound)
        params.append((w.astype(jnp.bfloat16), b))
    return params


def _round_up(x, m):
    return ((x + m - 1) // m) * m


def _pick_tile_b(batch):
    """Batch-adaptive tile: >=128 lanes of scores per output row, <=512 rows,
    and (when batch allows) at least 2 grid steps so v7x's 2 TCs both work."""
    b128 = _round_up(batch, 128)
    if b128 <= 128:
        return 128
    return max(128, min(MAX_TILE_B, _round_up(b128 // 2, 128)))


def discriminator_forward(img, params):
    """img: (B, C, H, W) float32 -> validity (B, 1) float32."""
    B = img.shape[0]
    x = img.reshape(B, -1)                      # free view; raw f32 into the kernel

    tile_b = _pick_tile_b(B)
    B_pad = _round_up(B, tile_b)
    if B_pad != B:
        x = jnp.pad(x, ((0, B_pad - B), (0, 0)))
    num_tiles = B_pad // tile_b

    flat_args = [x]
    in_specs = [pl.BlockSpec((tile_b, IN_FEATURES), lambda i: (i, 0))]
    for w, b in params:
        flat_args.extend([w, b])
        # Constant index_map -> weights/biases stay resident in VMEM across steps.
        in_specs.append(pl.BlockSpec(w.shape, lambda i: (0, 0)))
        in_specs.append(pl.BlockSpec(b.shape, lambda i: (0, 0)))

    out = pl.pallas_call(
        discriminator_kernel,
        # Packed scores: out[t, 0, j] = score of batch row t*tile_b + j.
        out_shape=jax.ShapeDtypeStruct((num_tiles, 1, tile_b), jnp.float32),
        grid=(num_tiles,),
        in_specs=in_specs,
        out_specs=pl.BlockSpec((None, 1, tile_b), lambda i: (i, 0, 0)),
        compiler_params=pltpu.CompilerParams(
            dimension_semantics=("parallel",),        # 2-TC split on v7x
            vmem_limit_bytes=48 * 1024 * 1024,        # ~16-20 MiB working set + headroom
        ),
    )(*flat_args)

    return out.reshape(-1)[:B].reshape(B, 1)


def discriminator_ref(img, params):
    """Pure-JAX reference with the same bf16/f32 numerics as the kernel."""
    x = img.reshape(img.shape[0], -1).astype(jnp.bfloat16)
    for w, b in params[:-1]:
        a = jnp.dot(x, w, preferred_element_type=jnp.float32) + b
        x = jnp.maximum(a, NEG_SLOPE * a).astype(jnp.bfloat16)
    w5, b5 = params[-1]
    return jnp.dot(x, w5[0:1, :].T, preferred_element_type=jnp.float32) + b5


if __name__ == "__main__":
    key = jax.random.PRNGKey(0)
    key, k_img = jax.random.split(key)

    batch = 2
    img = jax.random.normal(k_img, (batch, CHANNELS, IMG_SIZE, IMG_SIZE), jnp.float32)
    params = init_params(key)

    out = jax.block_until_ready(discriminator_forward(img, params))
    ref = jax.block_until_ready(discriminator_ref(img, params))

    assert out.shape == (batch, 1), out.shape
    assert jnp.allclose(out, ref, atol=1e-2, rtol=1e-2), (out, ref)

    print("KERNEL_OK")
</pallas_src>

<mosaic_0001>
module attributes {stable_mosaic.version = 11 : i64} {
  func.func @discriminator_kernel(%arg0: i32, %arg1: memref<128x1024xf32, #tpu.memory_space<vmem>>, %arg2: memref<1024x1024xbf16, #tpu.memory_space<vmem>>, %arg3: memref<1x1024xf32, #tpu.memory_space<vmem>>, %arg4: memref<1024x512xbf16, #tpu.memory_space<vmem>>, %arg5: memref<1x512xf32, #tpu.memory_space<vmem>>, %arg6: memref<512x256xbf16, #tpu.memory_space<vmem>>, %arg7: memref<1x256xf32, #tpu.memory_space<vmem>>, %arg8: memref<256x128xbf16, #tpu.memory_space<vmem>>, %arg9: memref<1x128xf32, #tpu.memory_space<vmem>>, %arg10: memref<8x128xbf16, #tpu.memory_space<vmem>>, %arg11: memref<1x1xf32, #tpu.memory_space<vmem>>, %arg12: memref<1x1x128xf32, #tpu.memory_space<vmem>>) attributes {dimension_semantics = [#tpu.dimension_semantics<parallel>], iteration_bounds = array<i64: 1>, scalar_prefetch = 0 : i64, scratch_operands = 0 : i64, tpu.core_type = #tpu.core_type<tc>, window_params = [{transform_indices = @transform_0, window_bounds = array<i64: 128, 1024>}, {pipeline_mode = #tpu.pipeline_mode<synchronous>, transform_indices = @transform_1, window_bounds = array<i64: 1024, 1024>}, {pipeline_mode = #tpu.pipeline_mode<synchronous>, transform_indices = @transform_2, window_bounds = array<i64: 1, 1024>}, {pipeline_mode = #tpu.pipeline_mode<synchronous>, transform_indices = @transform_3, window_bounds = array<i64: 1024, 512>}, {pipeline_mode = #tpu.pipeline_mode<synchronous>, transform_indices = @transform_4, window_bounds = array<i64: 1, 512>}, {pipeline_mode = #tpu.pipeline_mode<synchronous>, transform_indices = @transform_5, window_bounds = array<i64: 512, 256>}, {pipeline_mode = #tpu.pipeline_mode<synchronous>, transform_indices = @transform_6, window_bounds = array<i64: 1, 256>}, {pipeline_mode = #tpu.pipeline_mode<synchronous>, transform_indices = @transform_7, window_bounds = array<i64: 256, 128>}, {pipeline_mode = #tpu.pipeline_mode<synchronous>, transform_indices = @transform_8, window_bounds = array<i64: 1, 128>}, {pipeline_mode = #tpu.pipeline_mode<synchronous>, transform_indices = @transform_9, window_bounds = array<i64: 8, 128>}, {pipeline_mode = #tpu.pipeline_mode<synchronous>, transform_indices = @transform_10, window_bounds = array<i64: 1, 1>}, {transform_indices = @transform_11, window_bounds = array<i64: 1, 1, 128>}]} {
    %c0 = arith.constant 0 : index
    %c0_0 = arith.constant 0 : index
    %0 = vector.load %arg1[%c0, %c0_0] : memref<128x1024xf32, #tpu.memory_space<vmem>>, vector<128x1024xf32>
    %1 = arith.truncf %0 : vector<128x1024xf32> to vector<128x1024xbf16>
    %c0_1 = arith.constant 0 : index
    %c0_2 = arith.constant 0 : index
    %2 = vector.load %arg2[%c0_1, %c0_2] : memref<1024x1024xbf16, #tpu.memory_space<vmem>>, vector<1024x1024xbf16>
    %cst = arith.constant dense<0.000000e+00> : vector<128x1024xf32>
    %3 = tpu.matmul %1, %2, %cst {dimension_numbers = #tpu.dot_dimension_numbers<[1], [0], [0], [1], [0, 0, 1, 1], [], []>} : vector<128x1024xbf16>, vector<1024x1024xbf16>, vector<128x1024xf32> -> vector<128x1024xf32>
    %c0_3 = arith.constant 0 : index
    %c0_4 = arith.constant 0 : index
    %4 = vector.load %arg3[%c0_3, %c0_4] : memref<1x1024xf32, #tpu.memory_space<vmem>>, vector<1x1024xf32>
    %5 = vector.broadcast %4 : vector<1x1024xf32> to vector<128x1024xf32>
    %6 = arith.addf %3, %5 : vector<128x1024xf32>
    %cst_5 = arith.constant 2.000000e-01 : f32
    %7 = vector.broadcast %cst_5 : f32 to vector<128x1024xf32>
    %8 = arith.mulf %7, %6 : vector<128x1024xf32>
    %9 = arith.maximumf %6, %8 : vector<128x1024xf32>
    %10 = arith.truncf %9 : vector<128x1024xf32> to vector<128x1024xbf16>
    %c0_6 = arith.constant 0 : index
    %c0_7 = arith.constant 0 : index
    %11 = vector.load %arg4[%c0_6, %c0_7] : memref<1024x512xbf16, #tpu.memory_space<vmem>>, vector<1024x512xbf16>
    %cst_8 = arith.constant dense<0.000000e+00> : vector<128x512xf32>
    %12 = tpu.matmul %10, %11, %cst_8 {dimension_numbers = #tpu.dot_dimension_numbers<[1], [0], [0], [1], [0, 0, 1, 1], [], []>} : vector<128x1024xbf16>, vector<1024x512xbf16>, vector<128x512xf32> -> vector<128x512xf32>
    %c0_9 = arith.constant 0 : index
    %c0_10 = arith.constant 0 : index
    %13 = vector.load %arg5[%c0_9, %c0_10] : memref<1x512xf32, #tpu.memory_space<vmem>>, vector<1x512xf32>
    %14 = vector.broadcast %13 : vector<1x512xf32> to vector<128x512xf32>
    %15 = arith.addf %12, %14 : vector<128x512xf32>
    %cst_11 = arith.constant 2.000000e-01 : f32
    %16 = vector.broadcast %cst_11 : f32 to vector<128x512xf32>
    %17 = arith.mulf %16, %15 : vector<128x512xf32>
    %18 = arith.maximumf %15, %17 : vector<128x512xf32>
    %19 = arith.truncf %18 : vector<128x512xf32> to vector<128x512xbf16>
    %c0_12 = arith.constant 0 : index
    %c0_13 = arith.constant 0 : index
    %20 = vector.load %arg6[%c0_12, %c0_13] : memref<512x256xbf16, #tpu.memory_space<vmem>>, vector<512x256xbf16>
    %cst_14 = arith.constant dense<0.000000e+00> : vector<128x256xf32>
    %21 = tpu.matmul %19, %20, %cst_14 {dimension_numbers = #tpu.dot_dimension_numbers<[1], [0], [0], [1], [0, 0, 1, 1], [], []>} : vector<128x512xbf16>, vector<512x256xbf16>, vector<128x256xf32> -> vector<128x256xf32>
    %c0_15 = arith.constant 0 : index
    %c0_16 = arith.constant 0 : index
    %22 = vector.load %arg7[%c0_15, %c0_16] : memref<1x256xf32, #tpu.memory_space<vmem>>, vector<1x256xf32>
    %23 = vector.broadcast %22 : vector<1x256xf32> to vector<128x256xf32>
    %24 = arith.addf %21, %23 : vector<128x256xf32>
    %cst_17 = arith.constant 2.000000e-01 : f32
    %25 = vector.broadcast %cst_17 : f32 to vector<128x256xf32>
    %26 = arith.mulf %25, %24 : vector<128x256xf32>
    %27 = arith.maximumf %24, %26 : vector<128x256xf32>
    %28 = arith.truncf %27 : vector<128x256xf32> to vector<128x256xbf16>
    %c0_18 = arith.constant 0 : index
    %c0_19 = arith.constant 0 : index
    %29 = vector.load %arg8[%c0_18, %c0_19] : memref<256x128xbf16, #tpu.memory_space<vmem>>, vector<256x128xbf16>
    %cst_20 = arith.constant dense<0.000000e+00> : vector<128x128xf32>
    %30 = tpu.matmul %28, %29, %cst_20 {dimension_numbers = #tpu.dot_dimension_numbers<[1], [0], [0], [1], [0, 0, 1, 1], [], []>} : vector<128x256xbf16>, vector<256x128xbf16>, vector<128x128xf32> -> vector<128x128xf32>
    %c0_21 = arith.constant 0 : index
    %c0_22 = arith.constant 0 : index
    %31 = vector.load %arg9[%c0_21, %c0_22] : memref<1x128xf32, #tpu.memory_space<vmem>>, vector<1x128xf32>
    %32 = vector.broadcast %31 : vector<1x128xf32> to vector<128x128xf32>
    %33 = arith.addf %30, %32 : vector<128x128xf32>
    %cst_23 = arith.constant 2.000000e-01 : f32
    %34 = vector.broadcast %cst_23 : f32 to vector<128x128xf32>
    %35 = arith.mulf %34, %33 : vector<128x128xf32>
    %36 = arith.maximumf %33, %35 : vector<128x128xf32>
    %37 = arith.truncf %36 : vector<128x128xf32> to vector<128x128xbf16>
    %c0_24 = arith.constant 0 : index
    %c0_25 = arith.constant 0 : index
    %38 = vector.load %arg10[%c0_24, %c0_25] : memref<8x128xbf16, #tpu.memory_space<vmem>>, vector<8x128xbf16>
    %cst_26 = arith.constant dense<0.000000e+00> : vector<8x128xf32>
    %39 = tpu.matmul %38, %37, %cst_26 {dimension_numbers = #tpu.dot_dimension_numbers<[1], [1], [0], [0], [0, 0, 1, 0], [], []>} : vector<8x128xbf16>, vector<128x128xbf16>, vector<8x128xf32> -> vector<8x128xf32>
    %40 = vector.extract_strided_slice %39 {offsets = [0, 0], sizes = [1, 128], strides = [1, 1]} : vector<8x128xf32> to vector<1x128xf32>
    %c0_27 = arith.constant 0 : index
    %c0_28 = arith.constant 0 : index
    %41 = vector.load %arg11[%c0_27, %c0_28] : memref<1x1xf32, #tpu.memory_space<vmem>>, vector<1x1xf32>
    %42 = vector.broadcast %41 : vector<1x1xf32> to vector<1x128xf32>
    %43 = arith.addf %40, %42 : vector<1x128xf32>
    %c0_29 = arith.constant 0 : index
    %c0_30 = arith.constant 0 : index
    %c0_31 = arith.constant 0 : index
    %44 = vector.load %arg12[%c0_29, %c0_30, %c0_31] : memref<1x1x128xf32, #tpu.memory_space<vmem>>, vector<1x1x128xf32>
    %45 = vector.shape_cast %44 : vector<1x1x128xf32> to vector<1x128xf32>
    %46 = vector.shape_cast %43 : vector<1x128xf32> to vector<1x1x128xf32>
    tpu.vector_store %arg12[%c0_29, %c0_30, %c0_31], %46 {strides = array<i32>} : memref<1x1x128xf32, #tpu.memory_space<vmem>>, vector<1x1x128xf32>,
    return
  }
  func.func @transform_0(%arg0: i32) -> (i32, i32) {
    %c0_i32 = arith.constant 0 : i32
    %c0_i32_0 = arith.constant 0 : i32
    return %arg0, %c0_i32 : i32, i32
  }
  func.func @transform_1(%arg0: i32) -> (i32, i32) {
    %c0_i32 = arith.constant 0 : i32
    %c0_i32_0 = arith.constant 0 : i32
    %c0_i32_1 = arith.constant 0 : i32
    return %c0_i32, %c0_i32_0 : i32, i32
  }
  func.func @transform_2(%arg0: i32) -> (i32, i32) {
    %c0_i32 = arith.constant 0 : i32
    %c0_i32_0 = arith.constant 0 : i32
    %c0_i32_1 = arith.constant 0 : i32
    return %c0_i32, %c0_i32_0 : i32, i32
  }
  func.func @transform_3(%arg0: i32) -> (i32, i32) {
    %c0_i32 = arith.constant 0 : i32
    %c0_i32_0 = arith.constant 0 : i32
    %c0_i32_1 = arith.constant 0 : i32
    return %c0_i32, %c0_i32_0 : i32, i32
  }
  func.func @transform_4(%arg0: i32) -> (i32, i32) {
    %c0_i32 = arith.constant 0 : i32
    %c0_i32_0 = arith.constant 0 : i32
    %c0_i32_1 = arith.constant 0 : i32
    return %c0_i32, %c0_i32_0 : i32, i32
  }
  func.func @transform_5(%arg0: i32) -> (i32, i32) {
    %c0_i32 = arith.constant 0 : i32
    %c0_i32_0 = arith.constant 0 : i32
    %c0_i32_1 = arith.constant 0 : i32
    return %c0_i32, %c0_i32_0 : i32, i32
  }
  func.func @transform_6(%arg0: i32) -> (i32, i32) {
    %c0_i32 = arith.constant 0 : i32
    %c0_i32_0 = arith.constant 0 : i32
    %c0_i32_1 = arith.constant 0 : i32
    return %c0_i32, %c0_i32_0 : i32, i32
  }
  func.func @transform_7(%arg0: i32) -> (i32, i32) {
    %c0_i32 = arith.constant 0 : i32
    %c0_i32_0 = arith.constant 0 : i32
    %c0_i32_1 = arith.constant 0 : i32
    return %c0_i32, %c0_i32_0 : i32, i32
  }
  func.func @transform_8(%arg0: i32) -> (i32, i32) {
    %c0_i32 = arith.constant 0 : i32
    %c0_i32_0 = arith.constant 0 : i32
    %c0_i32_1 = arith.constant 0 : i32
    return %c0_i32, %c0_i32_0 : i32, i32
  }
  func.func @transform_9(%arg0: i32) -> (i32, i32) {
    %c0_i32 = arith.constant 0 : i32
    %c0_i32_0 = arith.constant 0 : i32
    %c0_i32_1 = arith.constant 0 : i32
    return %c0_i32, %c0_i32_0 : i32, i32
  }
  func.func @transform_10(%arg0: i32) -> (i32, i32) {
    %c0_i32 = arith.constant 0 : i32
    %c0_i32_0 = arith.constant 0 : i32
    %c0_i32_1 = arith.constant 0 : i32
    return %c0_i32, %c0_i32_0 : i32, i32
  }
  func.func @transform_11(%arg0: i32) -> (i32, i32, i32) {
    %c0_i32 = arith.constant 0 : i32
    %c0_i32_0 = arith.constant 0 : i32
    %c0_i32_1 = arith.constant 0 : i32
    return %arg0, %c0_i32, %c0_i32_0 : i32, i32, i32
  }
}

</mosaic_0001>

<llo_original>
// kernel: tpu_custom_call.1
$region0: #{tpu_custom_call.1}
  #allocation0 [shape = 'u32[]', space=smem, size = 0x4, offset = 0x4, fixed_abs, tag = 'smem constant byte address 0x4 - core index']
  #allocation1 [shape = 'u32[72,128]{1,0:T(1,128)}', space=vmem, size = 0x9000, scoped, tag = 'internal scratch']
  #allocation2 [shape = 'f32[1,1]{1,0:T(1,128)S(1)}', space=vmem, size = 0x200, scoped, tag = 'scoped memory for tpu_custom_call.1']
  %s0 = inlined_call_operand.hbm [shape: f32[128,1024], index: 0, kind: input, shape index: {}]
  %s1 = inlined_call_operand.hbm [shape: bf16[1024,1024], index: 1, kind: input, shape index: {}]
  %s2 = inlined_call_operand.hbm [shape: f32[1,1024], index: 2, kind: input, shape index: {}]
  %s3 = inlined_call_operand.hbm [shape: bf16[1024,512], index: 3, kind: input, shape index: {}]
  %s4 = inlined_call_operand.hbm [shape: f32[1,512], index: 4, kind: input, shape index: {}]
  %s5 = inlined_call_operand.hbm [shape: bf16[512,256], index: 5, kind: input, shape index: {}]
  %s6 = inlined_call_operand.hbm [shape: f32[1,256], index: 6, kind: input, shape index: {}]
  %s7 = inlined_call_operand.hbm [shape: bf16[256,128], index: 7, kind: input, shape index: {}]
  %s8 = inlined_call_operand.hbm [shape: f32[1,128], index: 8, kind: input, shape index: {}]
  %s9 = inlined_call_operand.hbm [shape: bf16[8,128], index: 9, kind: input, shape index: {}]
  %s10 = inlined_call_operand.<no memory space> [shape: f32[1,1], index: 10, kind: input, shape index: {}]
  %s11 = inlined_call_operand.hbm [shape: f32[1,1,128], index: 11, kind: output, shape index: {}]
  %s12 = sld [smem:[#allocation0]]
  $region94: #{tpu_custom_call.1} parent=0
    _
  %s14 = ssub.s32 1, %s12
  %s15 = scalar_select 0, %s14, %s12
  %v16 = vstv %s10
  %17 = vst [vmem:[#allocation2] sm:$0x1] %v16
  $region1: #{tpu_custom_call.1} parent=0
    #allocation3 [shape = 'u8[524288]{0}', space=vmem, size = 0x80000, scoped, tag = 'input window, operand 0, single buffered']
    #allocation4 [shape = 's32[1]{0}', space=sflag, size = 0x4, scoped, tag = 'scoped memory for tpu_custom_call.1']
    #allocation5 [shape = 's32[1]{0}', space=sflag, size = 0x4, scoped, tag = 'scoped memory for tpu_custom_call.1']
    #allocation6 [shape = 'u8[2097152]{0}', space=vmem, size = 0x200000, scoped, tag = 'input window, operand 1, single buffered']
    #allocation7 [shape = 's32[1]{0}', space=sflag, size = 0x4, scoped, tag = 'scoped memory for tpu_custom_call.1']
    #allocation8 [shape = 'u8[4096]{0}', space=vmem, size = 0x1000, scoped, tag = 'input window, operand 2, single buffered']
    #allocation9 [shape = 'u8[1048576]{0}', space=vmem, size = 0x100000, scoped, tag = 'input window, operand 3, single buffered']
    #allocation10 [shape = 's32[1]{0}', space=sflag, size = 0x4, scoped, tag = 'scoped memory for tpu_custom_call.1']
    #allocation11 [shape = 'u8[2048]{0}', space=vmem, size = 0x800, scoped, tag = 'input window, operand 4, single buffered']
    #allocation12 [shape = 'u8[262144]{0}', space=vmem, size = 0x40000, scoped, tag = 'input window, operand 5, single buffered']
    #allocation13 [shape = 's32[1]{0}', space=sflag, size = 0x4, scoped, tag = 'scoped memory for tpu_custom_call.1']
    #allocation14 [shape = 'u8[1024]{0}', space=vmem, size = 0x400, scoped, tag = 'input window, operand 6, single buffered']
    #allocation15 [shape = 'u8[65536]{0}', space=vmem, size = 0x10000, scoped, tag = 'input window, operand 7, single buffered']
    #allocation16 [shape = 's32[1]{0}', space=sflag, size = 0x4, scoped, tag = 'scoped memory for tpu_custom_call.1']
    #allocation17 [shape = 'u8[512]{0}', space=vmem, size = 0x400, scoped, tag = 'input window, operand 8, single buffered']
    #allocation18 [shape = 'u8[2048]{0}', space=vmem, size = 0x800, scoped, tag = 'input window, operand 9, single buffered']
    #allocation19 [shape = 's32[1]{0}', space=sflag, size = 0x4, scoped, tag = 'scoped memory for tpu_custom_call.1']
    #allocation20 [shape = 'u8[512]{0}', space=vmem, size = 0x400, scoped, tag = 'output window, operand 0, single buffered']
    %18 = vsyncpa [#allocation4], 0
    %19 = vsyncpa [#allocation7], 0
    %20 = vsyncpa [#allocation10], 0
    %21 = vsyncpa [#allocation13], 0
    %22 = vsyncpa [#allocation16], 0
    %23 = vsyncpa [#allocation19], 0
    %24 = vsyncpa [#allocation5], 0
    // Predicated region
    $region2: #{tpu_custom_call.1} parent=1 // pred_check
      _
    $region3: #{tpu_custom_call.1} parent=1 // pred_check_branch
      %26 = sbr.rel (0) target = $region5
    $region4: #{tpu_custom_call.1} parent=1 // pred_region
      %28 = vsyncadd [#allocation4], 0
      %s29 = sshll.u32 %s0, 4
      %s30 = int_to_ptr.hbm [resolvable:$true] %s29
      %s31 = sshll.u32 [#allocation3], 4
      %s32 = int_to_ptr.vmem [resolvable:$true] %s31
      %37 = dma.hbm_to_vmem [thread:$0]  %s30, 16384, %s32, [#allocation4], 1024, 1024, 64
    $region5: #{tpu_custom_call.1} parent=1 // pred_fallthru
      _
    // Predicated region
    $region6: #{tpu_custom_call.1} parent=1 // pred_check
      _
    $region7: #{tpu_custom_call.1} parent=1 // pred_check_branch
      %39 = sbr.rel (0) target = $region9
    $region8: #{tpu_custom_call.1} parent=1 // pred_region
      %41 = vsyncadd [#allocation7], 0
      %s42 = sshll.u32 %s1, 4
      %s43 = int_to_ptr.hbm [resolvable:$true] %s42
      %s44 = sshll.u32 [#allocation6], 4
      %s45 = int_to_ptr.vmem [resolvable:$true] %s44
      %50 = dma.hbm_to_vmem [thread:$0]  %s43, 65536, %s45, [#allocation7], 512, 512, 32
    $region9: #{tpu_custom_call.1} parent=1 // pred_fallthru
      _
    // Predicated region
    $region10: #{tpu_custom_call.1} parent=1 // pred_check
      _
    $region11: #{tpu_custom_call.1} parent=1 // pred_check_branch
      %52 = sbr.rel (0) target = $region13
    $region12: #{tpu_custom_call.1} parent=1 // pred_region
      %54 = vsyncadd [#allocation7], 0
      %s56 = sshll.u32 %s2, 4
      %s57 = int_to_ptr.hbm [resolvable:$true] %s56
      %s58 = sshll.u32 [#allocation8], 4
      %s59 = int_to_ptr.vmem [resolvable:$true] %s58
      %61 = dma.hbm_to_vmem [thread:$0]  %s57, 128, %s59, [#allocation7]
    $region13: #{tpu_custom_call.1} parent=1 // pred_fallthru
      _
    // Predicated region
    $region14: #{tpu_custom_call.1} parent=1 // pred_check
      _
    $region15: #{tpu_custom_call.1} parent=1 // pred_check_branch
      %63 = sbr.rel (0) target = $region17
    $region16: #{tpu_custom_call.1} parent=1 // pred_region
      %65 = vsyncadd [#allocation10], 0
      %s66 = sshll.u32 %s3, 4
      %s67 = int_to_ptr.hbm [resolvable:$true] %s66
      %s68 = sshll.u32 [#allocation9], 4
      %s69 = int_to_ptr.vmem [resolvable:$true] %s68
      %74 = dma.hbm_to_vmem [thread:$0]  %s67, 32768, %s69, [#allocation10], 256, 256, 16
    $region17: #{tpu_custom_call.1} parent=1 // pred_fallthru
      _
    // Predicated region
    $region18: #{tpu_custom_call.1} parent=1 // pred_check
      _
    $region19: #{tpu_custom_call.1} parent=1 // pred_check_branch
      %76 = sbr.rel (0) target = $region21
    $region20: #{tpu_custom_call.1} parent=1 // pred_region
      %78 = vsyncadd [#allocation10], 0
      %s80 = sshll.u32 %s4, 4
      %s81 = int_to_ptr.hbm [resolvable:$true] %s80
      %s82 = sshll.u32 [#allocation11], 4
      %s83 = int_to_ptr.vmem [resolvable:$true] %s82
      %85 = dma.hbm_to_vmem [thread:$0]  %s81, 64, %s83, [#allocation10]
    $region21: #{tpu_custom_call.1} parent=1 // pred_fallthru
      _
    // Predicated region
    $region22: #{tpu_custom_call.1} parent=1 // pred_check
      _
    $region23: #{tpu_custom_call.1} parent=1 // pred_check_branch
      %87 = sbr.rel (0) target = $region25
    $region24: #{tpu_custom_call.1} parent=1 // pred_region
      %89 = vsyncadd [#allocation13], 0
      %s90 = sshll.u32 %s5, 4
      %s91 = int_to_ptr.hbm [resolvable:$true] %s90
      %s92 = sshll.u32 [#allocation12], 4
      %s93 = int_to_ptr.vmem [resolvable:$true] %s92
      %98 = dma.hbm_to_vmem [thread:$0]  %s91, 8192, %s93, [#allocation13], 128, 128, 8
    $region25: #{tpu_custom_call.1} parent=1 // pred_fallthru
      _
    // Predicated region
    $region26: #{tpu_custom_call.1} parent=1 // pred_check
      _
    $region27: #{tpu_custom_call.1} parent=1 // pred_check_branch
      %100 = sbr.rel (0) target = $region29
    $region28: #{tpu_custom_call.1} parent=1 // pred_region
      %102 = vsyncadd [#allocation13], 0
      %s104 = sshll.u32 %s6, 4
      %s105 = int_to_ptr.hbm [resolvable:$true] %s104
      %s106 = sshll.u32 [#allocation14], 4
      %s107 = int_to_ptr.vmem [resolvable:$true] %s106
      %109 = dma.hbm_to_vmem [thread:$0]  %s105, 32, %s107, [#allocation13]
    $region29: #{tpu_custom_call.1} parent=1 // pred_fallthru
      _
    // Predicated region
    $region30: #{tpu_custom_call.1} parent=1 // pred_check
      _
    $region31: #{tpu_custom_call.1} parent=1 // pred_check_branch
      %111 = sbr.rel (0) target = $region33
    $region32: #{tpu_custom_call.1} parent=1 // pred_region
      %113 = vsyncadd [#allocation16], 0
      %s114 = sshll.u32 %s7, 4
      %s115 = int_to_ptr.hbm [resolvable:$true] %s114
      %s116 = sshll.u32 [#allocation15], 4
      %s117 = int_to_ptr.vmem [resolvable:$true] %s116
      %122 = dma.hbm_to_vmem [thread:$0]  %s115, 2048, %s117, [#allocation16], 64, 64, 4
    $region33: #{tpu_custom_call.1} parent=1 // pred_fallthru
      _
    // Predicated region
    $region34: #{tpu_custom_call.1} parent=1 // pred_check
      _
    $region35: #{tpu_custom_call.1} parent=1 // pred_check_branch
      %124 = sbr.rel (0) target = $region37
    $region36: #{tpu_custom_call.1} parent=1 // pred_region
      %126 = vsyncadd [#allocation16], 0
      %s128 = sshll.u32 %s8, 4
      %s129 = int_to_ptr.hbm [resolvable:$true] %s128
      %s130 = sshll.u32 [#allocation17], 4
      %s131 = int_to_ptr.vmem [resolvable:$true] %s130
      %133 = dma.hbm_to_vmem [thread:$0]  %s129, 16, %s131, [#allocation16]
    $region37: #{tpu_custom_call.1} parent=1 // pred_fallthru
      _
    // Predicated region
    $region38: #{tpu_custom_call.1} parent=1 // pred_check
      _
    $region39: #{tpu_custom_call.1} parent=1 // pred_check_branch
      %135 = sbr.rel (0) target = $region41
    $region40: #{tpu_custom_call.1} parent=1 // pred_region
      %137 = vsyncadd [#allocation19], 0
      %s139 = sshll.u32 %s9, 4
      %s140 = int_to_ptr.hbm [resolvable:$true] %s139
      %s141 = sshll.u32 [#allocation18], 4
      %s142 = int_to_ptr.vmem [resolvable:$true] %s141
      %144 = dma.hbm_to_vmem [thread:$0]  %s140, 64, %s142, [#allocation19]
    $region41: #{tpu_custom_call.1} parent=1 // pred_fallthru
      _
    // Predicated region
    $region42: #{tpu_custom_call.1} parent=1 // pred_check
      _
    $region43: #{tpu_custom_call.1} parent=1 // pred_check_branch
      %146 = sbr.rel (0) target = $region45
    $region44: #{tpu_custom_call.1} parent=1 // pred_region
      _
    $region45: #{tpu_custom_call.1} parent=1 // pred_fallthru
      _
    // Predicated region
    $region46: #{tpu_custom_call.1} parent=1 // pred_check
      _
    $region47: #{tpu_custom_call.1} parent=1 // pred_check_branch
      %148 = sbr.rel (0) target = $region49
    $region48: #{tpu_custom_call.1} parent=1 // pred_region
      %150 = dma.done [#allocation4], 16384
    $region49: #{tpu_custom_call.1} parent=1 // pred_fallthru
      _
    // Predicated region
    $region50: #{tpu_custom_call.1} parent=1 // pred_check
      _
    $region51: #{tpu_custom_call.1} parent=1 // pred_check_branch
      %152 = sbr.rel (0) target = $region53
    $region52: #{tpu_custom_call.1} parent=1 // pred_region
      %154 = dma.done [#allocation7], 65536
    $region53: #{tpu_custom_call.1} parent=1 // pred_fallthru
      _
    // Predicated region
    $region54: #{tpu_custom_call.1} parent=1 // pred_check
      _
    $region55: #{tpu_custom_call.1} parent=1 // pred_check_branch
      %156 = sbr.rel (0) target = $region57
    $region56: #{tpu_custom_call.1} parent=1 // pred_region
      %158 = dma.done [#allocation7], 128
    $region57: #{tpu_custom_call.1} parent=1 // pred_fallthru
      _
    // Predicated region
    $region58: #{tpu_custom_call.1} parent=1 // pred_check
      _
    $region59: #{tpu_custom_call.1} parent=1 // pred_check_branch
      %160 = sbr.rel (0) target = $region61
    $region60: #{tpu_custom_call.1} parent=1 // pred_region
      %162 = dma.done [#allocation10], 32768
    $region61: #{tpu_custom_call.1} parent=1 // pred_fallthru
      _
    // Predicated region
    $region62: #{tpu_custom_call.1} parent=1 // pred_check
      _
    $region63: #{tpu_custom_call.1} parent=1 // pred_check_branch
      %164 = sbr.rel (0) target = $region65
    $region64: #{tpu_custom_call.1} parent=1 // pred_region
      %166 = dma.done [#allocation10], 64
    $region65: #{tpu_custom_call.1} parent=1 // pred_fallthru
      _
    // Predicated region
    $region66: #{tpu_custom_call.1} parent=1 // pred_check
      _
    $region67: #{tpu_custom_call.1} parent=1 // pred_check_branch
      %168 = sbr.rel (0) target = $region69
    $region68: #{tpu_custom_call.1} parent=1 // pred_region
      %170 = dma.done [#allocation13], 8192
    $region69: #{tpu_custom_call.1} parent=1 // pred_fallthru
      _
    // Predicated region
    $region70: #{tpu_custom_call.1} parent=1 // pred_check
      _
    $region71: #{tpu_custom_call.1} parent=1 // pred_check_branch
      %172 = sbr.rel (0) target = $region73
    $region72: #{tpu_custom_call.1} parent=1 // pred_region
      %174 = dma.done [#allocation13], 32
    $region73: #{tpu_custom_call.1} parent=1 // pred_fallthru
      _
    // Predicated region
    $region74: #{tpu_custom_call.1} parent=1 // pred_check
      _
    $region75: #{tpu_custom_call.1} parent=1 // pred_check_branch
      %176 = sbr.rel (0) target = $region77
    $region76: #{tpu_custom_call.1} parent=1 // pred_region
      %178 = dma.done [#allocation16], 2048
    $region77: #{tpu_custom_call.1} parent=1 // pred_fallthru
      _
    // Predicated region
    $region78: #{tpu_custom_call.1} parent=1 // pred_check
      _
    $region79: #{tpu_custom_call.1} parent=1 // pred_check_branch
      %180 = sbr.rel (0) target = $region81
    $region80: #{tpu_custom_call.1} parent=1 // pred_region
      %182 = dma.done [#allocation16], 16
    $region81: #{tpu_custom_call.1} parent=1 // pred_fallthru
      _
    // Predicated region
    $region82: #{tpu_custom_call.1} parent=1 // pred_check
      _
    $region83: #{tpu_custom_call.1} parent=1 // pred_check_branch
      %184 = sbr.rel (0) target = $region85
    $region84: #{tpu_custom_call.1} parent=1 // pred_region
      %186 = dma.done [#allocation19], 64
    $region85: #{tpu_custom_call.1} parent=1 // pred_fallthru
      _
    %v187 = vld [vmem:[#allocation3] sm:$0xff]
    %v188 = vld [vmem:[#allocation3 + $0x8] sm:$0xff]
    %v189 = vld [vmem:[#allocation3 + $0x10] sm:$0xff]
    %v190 = vld [vmem:[#allocation3 + $0x18] sm:$0xff]
    %v191 = vld [vmem:[#allocation3 + $0x20] sm:$0xff]
    %v192 = vld [vmem:[#allocation3 + $0x28] sm:$0xff]
    %v193 = vld [vmem:[#allocation3 + $0x30] sm:$0xff]
    %v194 = vld [vmem:[#allocation3 + $0x38] sm:$0xff]
    %v195 = vld [vmem:[#allocation3 + $0x40] sm:$0xff]
    %v196 = vld [vmem:[#allocation3 + $0x48] sm:$0xff]
    %v197 = vld [vmem:[#allocation3 + $0x50] sm:$0xff]
    %v198 = vld [vmem:[#allocation3 + $0x58] sm:$0xff]
    %v199 = vld [vmem:[#allocation3 + $0x60] sm:$0xff]
    %v200 = vld [vmem:[#allocation3 + $0x68] sm:$0xff]
    %v201 = vld [vmem:[#allocation3 + $0x70] sm:$0xff]
    %v202 = vld [vmem:[#allocation3 + $0x78] sm:$0xff]
    %v203 = vld [vmem:[#allocation3 + $0x80] sm:$0xff]
    %v204 = vld [vmem:[#allocation3 + $0x88] sm:$0xff]
    %v205 = vld [vmem:[#allocation3 + $0x90] sm:$0xff]
    %v206 = vld [vmem:[#allocation3 + $0x98] sm:$0xff]
    %v207 = vld [vmem:[#allocation3 + $0xa0] sm:$0xff]
    %v208 = vld [vmem:[#allocation3 + $0xa8] sm:$0xff]
    %v209 = vld [vmem:[#allocation3 + $0xb0] sm:$0xff]
    %v210 = vld [vmem:[#allocation3 + $0xb8] sm:$0xff]
    %v211 = vld [vmem:[#allocation3 + $0xc0] sm:$0xff]
    %v212 = vld [vmem:[#allocation3 + $0xc8] sm:$0xff]
    %v213 = vld [vmem:[#allocation3 + $0xd0] sm:$0xff]
    %v214 = vld [vmem:[#allocation3 + $0xd8] sm:$0xff]
    %v215 = vld [vmem:[#allocation3 + $0xe0] sm:$0xff]
    %v216 = vld [vmem:[#allocation3 + $0xe8] sm:$0xff]
    %v217 = vld [vmem:[#allocation3 + $0xf0] sm:$0xff]
    %v218 = vld [vmem:[#allocation3 + $0xf8] sm:$0xff]
    %v219 = vld [vmem:[#allocation3 + $0x100] sm:$0xff]
    %v220 = vld [vmem:[#allocation3 + $0x108] sm:$0xff]
    %v221 = vld [vmem:[#allocation3 + $0x110] sm:$0xff]
    %v222 = vld [vmem:[#allocation3 + $0x118] sm:$0xff]
    %v223 = vld [vmem:[#allocation3 + $0x120] sm:$0xff]
    %v224 = vld [vmem:[#allocation3 + $0x128] sm:$0xff]
    %v225 = vld [vmem:[#allocation3 + $0x130] sm:$0xff]
    %v226 = vld [vmem:[#allocation3 + $0x138] sm:$0xff]
    %v227 = vld [vmem:[#allocation3 + $0x140] sm:$0xff]
    %v228 = vld [vmem:[#allocation3 + $0x148] sm:$0xff]
    %v229 = vld [vmem:[#allocation3 + $0x150] sm:$0xff]
    %v230 = vld [vmem:[#allocation3 + $0x158] sm:$0xff]
    %v231 = vld [vmem:[#allocation3 + $0x160] sm:$0xff]
    %v232 = vld [vmem:[#allocation3 + $0x168] sm:$0xff]
    %v233 = vld [vmem:[#allocation3 + $0x170] sm:$0xff]
    %v234 = vld [vmem:[#allocation3 + $0x178] sm:$0xff]
    %v235 = vld [vmem:[#allocation3 + $0x180] sm:$0xff]
    %v236 = vld [vmem:[#allocation3 + $0x188] sm:$0xff]
    %v237 = vld [vmem:[#allocation3 + $0x190] sm:$0xff]
    %v238 = vld [vmem:[#allocation3 + $0x198] sm:$0xff]
    %v239 = vld [vmem:[#allocation3 + $0x1a0] sm:$0xff]
    %v240 = vld [vmem:[#allocation3 + $0x1a8] sm:$0xff]
    %v241 = vld [vmem:[#allocation3 + $0x1b0] sm:$0xff]
    %v242 = vld [vmem:[#allocation3 + $0x1b8] sm:$0xff]
    %v243 = vld [vmem:[#allocation3 + $0x1c0] sm:$0xff]
    %v244 = vld [vmem:[#allocation3 + $0x1c8] sm:$0xff]
    %v245 = vld [vmem:[#allocation3 + $0x1d0] sm:$0xff]
    %v246 = vld [vmem:[#allocation3 + $0x1d8] sm:$0xff]
    %v247 = vld [vmem:[#allocation3 + $0x1e0] sm:$0xff]
    %v248 = vld [vmem:[#allocation3 + $0x1e8] sm:$0xff]
    %v249 = vld [vmem:[#allocation3 + $0x1f0] sm:$0xff]
    %v250 = vld [vmem:[#allocation3 + $0x1f8] sm:$0xff]
    %v251 = vld [vmem:[#allocation3 + $0x200] sm:$0xff]
    %v252 = vld [vmem:[#allocation3 + $0x208] sm:$0xff]
    %v253 = vld [vmem:[#allocation3 + $0x210] sm:$0xff]
    %v254 = vld [vmem:[#allocation3 + $0x218] sm:$0xff]
    %v255 = vld [vmem:[#allocation3 + $0x220] sm:$0xff]
    %v256 = vld [vmem:[#allocation3 + $0x228] sm:$0xff]
    %v257 = vld [vmem:[#allocation3 + $0x230] sm:$0xff]
    %v258 = vld [vmem:[#allocation3 + $0x238] sm:$0xff]
    %v259 = vld [vmem:[#allocation3 + $0x240] sm:$0xff]
    %v260 = vld [vmem:[#allocation3 + $0x248] sm:$0xff]
    %v261 = vld [vmem:[#allocation3 + $0x250] sm:$0xff]
    %v262 = vld [vmem:[#allocation3 + $0x258] sm:$0xff]
    %v263 = vld [vmem:[#allocation3 + $0x260] sm:$0xff]
    %v264 = vld [vmem:[#allocation3 + $0x268] sm:$0xff]
    %v265 = vld [vmem:[#allocation3 + $0x270] sm:$0xff]
    %v266 = vld [vmem:[#allocation3 + $0x278] sm:$0xff]
    %v267 = vld [vmem:[#allocation3 + $0x280] sm:$0xff]
    %v268 = vld [vmem:[#allocation3 + $0x288] sm:$0xff]
    %v269 = vld [vmem:[#allocation3 + $0x290] sm:$0xff]
    %v270 = vld [vmem:[#allocation3 + $0x298] sm:$0xff]
    %v271 = vld [vmem:[#allocation3 + $0x2a0] sm:$0xff]
    %v272 = vld [vmem:[#allocation3 + $0x2a8] sm:$0xff]
    %v273 = vld [vmem:[#allocation3 + $0x2b0] sm:$0xff]
    %v274 = vld [vmem:[#allocation3 + $0x2b8] sm:$0xff]
    %v275 = vld [vmem:[#allocation3 + $0x2c0] sm:$0xff]
    %v276 = vld [vmem:[#allocation3 + $0x2c8] sm:$0xff]
    %v277 = vld [vmem:[#allocation3 + $0x2d0] sm:$0xff]
    %v278 = vld [vmem:[#allocation3 + $0x2d8] sm:$0xff]
    %v279 = vld [vmem:[#allocation3 + $0x2e0] sm:$0xff]
    %v280 = vld [vmem:[#allocation3 + $0x2e8] sm:$0xff]
    %v281 = vld [vmem:[#allocation3 + $0x2f0] sm:$0xff]
    %v282 = vld [vmem:[#allocation3 + $0x2f8] sm:$0xff]
    %v283 = vld [vmem:[#allocation3 + $0x300] sm:$0xff]
    %v284 = vld [vmem:[#allocation3 + $0x308] sm:$0xff]
    %v285 = vld [vmem:[#allocation3 + $0x310] sm:$0xff]
    %v286 = vld [vmem:[#allocation3 + $0x318] sm:$0xff]
    %v287 = vld [vmem:[#allocation3 + $0x320] sm:$0xff]
    %v288 = vld [vmem:[#allocation3 + $0x328] sm:$0xff]
    %v289 = vld [vmem:[#allocation3 + $0x330] sm:$0xff]
    %v290 = vld [vmem:[#allocation3 + $0x338] sm:$0xff]
    %v291 = vld [vmem:[#allocation3 + $0x340] sm:$0xff]
    %v292 = vld [vmem:[#allocation3 + $0x348] sm:$0xff]
    %v293 = vld [vmem:[#allocation3 + $0x350] sm:$0xff]
    %v294 = vld [vmem:[#allocation3 + $0x358] sm:$0xff]
    %v295 = vld [vmem:[#allocation3 + $0x360] sm:$0xff]
    %v296 = vld [vmem:[#allocation3 + $0x368] sm:$0xff]
    %v297 = vld [vmem:[#allocation3 + $0x370] sm:$0xff]
    %v298 = vld [vmem:[#allocation3 + $0x378] sm:$0xff]
    %v299 = vld [vmem:[#allocation3 + $0x380] sm:$0xff]
    %v300 = vld [vmem:[#allocation3 + $0x388] sm:$0xff]
    %v301 = vld [vmem:[#allocation3 + $0x390] sm:$0xff]
    %v302 = vld [vmem:[#allocation3 + $0x398] sm:$0xff]
    %v303 = vld [vmem:[#allocation3 + $0x3a0] sm:$0xff]
    %v304 = vld [vmem:[#allocation3 + $0x3a8] sm:$0xff]
    %v305 = vld [vmem:[#allocation3 + $0x3b0] sm:$0xff]
    %v306 = vld [vmem:[#allocation3 + $0x3b8] sm:$0xff]
    %v307 = vld [vmem:[#allocation3 + $0x3c0] sm:$0xff]
    %v308 = vld [vmem:[#allocation3 + $0x3c8] sm:$0xff]
    %v309 = vld [vmem:[#allocation3 + $0x3d0] sm:$0xff]
    %v310 = vld [vmem:[#allocation3 + $0x3d8] sm:$0xff]
    %v311 = vld [vmem:[#allocation3 + $0x3e0] sm:$0xff]
    %v312 = vld [vmem:[#allocation3 + $0x3e8] sm:$0xff]
    %v313 = vld [vmem:[#allocation3 + $0x3f0] sm:$0xff]
    %v314 = vld [vmem:[#allocation3 + $0x3f8] sm:$0xff]
    %v315 = vpack.c.bf16 %v195, %v187
    %v316 = vpack.c.bf16 %v196, %v188
    %v317 = vpack.c.bf16 %v197, %v189
    %v318 = vpack.c.bf16 %v198, %v190
    %v319 = vpack.c.bf16 %v199, %v191
    %v320 = vpack.c.bf16 %v200, %v192
    %v321 = vpack.c.bf16 %v201, %v193
    %v322 = vpack.c.bf16 %v202, %v194
    %v323 = vpack.c.bf16 %v211, %v203
    %v324 = vpack.c.bf16 %v212, %v204
    %v325 = vpack.c.bf16 %v213, %v205
    %v326 = vpack.c.bf16 %v214, %v206
    %v327 = vpack.c.bf16 %v215, %v207
    %v328 = vpack.c.bf16 %v216, %v208
    %v329 = vpack.c.bf16 %v217, %v209
    %v330 = vpack.c.bf16 %v218, %v210
    %v331 = vpack.c.bf16 %v227, %v219
    %v332 = vpack.c.bf16 %v228, %v220
    %v333 = vpack.c.bf16 %v229, %v221
    %v334 = vpack.c.bf16 %v230, %v222
    %v335 = vpack.c.bf16 %v231, %v223
    %v336 = vpack.c.bf16 %v232, %v224
    %v337 = vpack.c.bf16 %v233, %v225
    %v338 = vpack.c.bf16 %v234, %v226
    %v339 = vpack.c.bf16 %v243, %v235
    %v340 = vpack.c.bf16 %v244, %v236
    %v341 = vpack.c.bf16 %v245, %v237
    %v342 = vpack.c.bf16 %v246, %v238
    %v343 = vpack.c.bf16 %v247, %v239
    %v344 = vpack.c.bf16 %v248, %v240
    %v345 = vpack.c.bf16 %v249, %v241
    %v346 = vpack.c.bf16 %v250, %v242
    %v347 = vpack.c.bf16 %v259, %v251
    %v348 = vpack.c.bf16 %v260, %v252
    %v349 = vpack.c.bf16 %v261, %v253
    %v350 = vpack.c.bf16 %v262, %v254
    %v351 = vpack.c.bf16 %v263, %v255
    %v352 = vpack.c.bf16 %v264, %v256
    %v353 = vpack.c.bf16 %v265, %v257
    %v354 = vpack.c.bf16 %v266, %v258
    %v355 = vpack.c.bf16 %v275, %v267
    %v356 = vpack.c.bf16 %v276, %v268
    %v357 = vpack.c.bf16 %v277, %v269
    %v358 = vpack.c.bf16 %v278, %v270
    %v359 = vpack.c.bf16 %v279, %v271
    %v360 = vpack.c.bf16 %v280, %v272
    %v361 = vpack.c.bf16 %v281, %v273
    %v362 = vpack.c.bf16 %v282, %v274
    %v363 = vpack.c.bf16 %v291, %v283
    %v364 = vpack.c.bf16 %v292, %v284
    %v365 = vpack.c.bf16 %v293, %v285
    %v366 = vpack.c.bf16 %v294, %v286
    %v367 = vpack.c.bf16 %v295, %v287
    %v368 = vpack.c.bf16 %v296, %v288
    %v369 = vpack.c.bf16 %v297, %v289
    %v370 = vpack.c.bf16 %v298, %v290
    %v371 = vpack.c.bf16 %v307, %v299
    %v372 = vpack.c.bf16 %v308, %v300
    %v373 = vpack.c.bf16 %v309, %v301
    %v374 = vpack.c.bf16 %v310, %v302
    %v375 = vpack.c.bf16 %v311, %v303
    %v376 = vpack.c.bf16 %v312, %v304
    %v377 = vpack.c.bf16 %v313, %v305
    %v378 = vpack.c.bf16 %v314, %v306
    %v379 = vld [vmem:[#allocation6] sm:$0xff]
    %v380 = vld [vmem:[#allocation6 + $0x8] sm:$0xff]
    %v381 = vld [vmem:[#allocation6 + $0x10] sm:$0xff]
    %v382 = vld [vmem:[#allocation6 + $0x18] sm:$0xff]
    %v383 = vld [vmem:[#allocation6 + $0x20] sm:$0xff]
    %v384 = vld [vmem:[#allocation6 + $0x28] sm:$0xff]
    %v385 = vld [vmem:[#allocation6 + $0x30] sm:$0xff]
    %v386 = vld [vmem:[#allocation6 + $0x38] sm:$0xff]
    %v387 = vld [vmem:[#allocation6 + $0x40] sm:$0xff]
    %v388 = vld [vmem:[#allocation6 + $0x48] sm:$0xff]
    %v389 = vld [vmem:[#allocation6 + $0x50] sm:$0xff]
    %v390 = vld [vmem:[#allocation6 + $0x58] sm:$0xff]
    %v391 = vld [vmem:[#allocation6 + $0x60] sm:$0xff]
    %v392 = vld [vmem:[#allocation6 + $0x68] sm:$0xff]
    %v393 = vld [vmem:[#allocation6 + $0x70] sm:$0xff]
    %v394 = vld [vmem:[#allocation6 + $0x78] sm:$0xff]
    %v395 = vld [vmem:[#allocation6 + $0x80] sm:$0xff]
    %v396 = vld [vmem:[#allocation6 + $0x88] sm:$0xff]
    %v397 = vld [vmem:[#allocation6 + $0x90] sm:$0xff]
    %v398 = vld [vmem:[#allocation6 + $0x98] sm:$0xff]
    %v399 = vld [vmem:[#allocation6 + $0xa0] sm:$0xff]
    %v400 = vld [vmem:[#allocation6 + $0xa8] sm:$0xff]
    %v401 = vld [vmem:[#allocation6 + $0xb0] sm:$0xff]
    %v402 = vld [vmem:[#allocation6 + $0xb8] sm:$0xff]
    %v403 = vld [vmem:[#allocation6 + $0xc0] sm:$0xff]
    %v404 = vld [vmem:[#allocation6 + $0xc8] sm:$0xff]
    %v405 = vld [vmem:[#allocation6 + $0xd0] sm:$0xff]
    %v406 = vld [vmem:[#allocation6 + $0xd8] sm:$0xff]
    %v407 = vld [vmem:[#allocation6 + $0xe0] sm:$0xff]
    %v408 = vld [vmem:[#allocation6 + $0xe8] sm:$0xff]
    %v409 = vld [vmem:[#allocation6 + $0xf0] sm:$0xff]
    %v410 = vld [vmem:[#allocation6 + $0xf8] sm:$0xff]
    %v411 = vld [vmem:[#allocation6 + $0x100] sm:$0xff]
    %v412 = vld [vmem:[#allocation6 + $0x108] sm:$0xff]
    %v413 = vld [vmem:[#allocation6 + $0x110] sm:$0xff]
    %v414 = vld [vmem:[#allocation6 + $0x118] sm:$0xff]
    %v415 = vld [vmem:[#allocation6 + $0x120] sm:$0xff]
    %v416 = vld [vmem:[#allocation6 + $0x128] sm:$0xff]
    %v417 = vld [vmem:[#allocation6 + $0x130] sm:$0xff]
    %v418 = vld [vmem:[#allocation6 + $0x138] sm:$0xff]
    %v419 = vld [vmem:[#allocation6 + $0x140] sm:$0xff]
    %v420 = vld [vmem:[#allocation6 + $0x148] sm:$0xff]
    %v421 = vld [vmem:[#allocation6 + $0x150] sm:$0xff]
    %v422 = vld [vmem:[#allocation6 + $0x158] sm:$0xff]
    %v423 = vld [vmem:[#allocation6 + $0x160] sm:$0xff]
    %v424 = vld [vmem:[#allocation6 + $0x168] sm:$0xff]
    %v425 = vld [vmem:[#allocation6 + $0x170] sm:$0xff]
    %v426 = vld [vmem:[#allocation6 + $0x178] sm:$0xff]
    %v427 = vld [vmem:[#allocation6 + $0x180] sm:$0xff]
    %v428 = vld [vmem:[#allocation6 + $0x188] sm:$0xff]
    %v429 = vld [vmem:[#allocation6 + $0x190] sm:$0xff]
    %v430 = vld [vmem:[#allocation6 + $0x198] sm:$0xff]
    %v431 = vld [vmem:[#allocation6 + $0x1a0] sm:$0xff]
    %v432 = vld [vmem:[#allocation6 + $0x1a8] sm:$0xff]
    %v433 = vld [vmem:[#allocation6 + $0x1b0] sm:$0xff]
    %v434 = vld [vmem:[#allocation6 + $0x1b8] sm:$0xff]
    %v435 = vld [vmem:[#allocation6 + $0x1c0] sm:$0xff]
    %v436 = vld [vmem:[#allocation6 + $0x1c8] sm:$0xff]
    %v437 = vld [vmem:[#allocation6 + $0x1d0] sm:$0xff]
    %v438 = vld [vmem:[#allocation6 + $0x1d8] sm:$0xff]
    %v439 = vld [vmem:[#allocation6 + $0x1e0] sm:$0xff]
    %v440 = vld [vmem:[#allocation6 + $0x1e8] sm:$0xff]
    %v441 = vld [vmem:[#allocation6 + $0x1f0] sm:$0xff]
    %v442 = vld [vmem:[#allocation6 + $0x1f8] sm:$0xff]
    %v443 = vld [vmem:[#allocation6 + $0x200] sm:$0xff]
    %v444 = vld [vmem:[#allocation6 + $0x208] sm:$0xff]
    %v445 = vld [vmem:[#allocation6 + $0x210] sm:$0xff]
    %v446 = vld [vmem:[#allocation6 + $0x218] sm:$0xff]
    %v447 = vld [vmem:[#allocation6 + $0x220] sm:$0xff]
    %v448 = vld [vmem:[#allocation6 + $0x228] sm:$0xff]
    %v449 = vld [vmem:[#allocation6 + $0x230] sm:$0xff]
    %v450 = vld [vmem:[#allocation6 + $0x238] sm:$0xff]
    %v451 = vld [vmem:[#allocation6 + $0x240] sm:$0xff]
    %v452 = vld [vmem:[#allocation6 + $0x248] sm:$0xff]
    %v453 = vld [vmem:[#allocation6 + $0x250] sm:$0xff]
    %v454 = vld [vmem:[#allocation6 + $0x258] sm:$0xff]
    %v455 = vld [vmem:[#allocation6 + $0x260] sm:$0xff]
    %v456 = vld [vmem:[#allocation6 + $0x268] sm:$0xff]
    %v457 = vld [vmem:[#allocation6 + $0x270] sm:$0xff]
    %v458 = vld [vmem:[#allocation6 + $0x278] sm:$0xff]
    %v459 = vld [vmem:[#allocation6 + $0x280] sm:$0xff]
    %v460 = vld [vmem:[#allocation6 + $0x288] sm:$0xff]
    %v461 = vld [vmem:[#allocation6 + $0x290] sm:$0xff]
    %v462 = vld [vmem:[#allocation6 + $0x298] sm:$0xff]
    %v463 = vld [vmem:[#allocation6 + $0x2a0] sm:$0xff]
    %v464 = vld [vmem:[#allocation6 + $0x2a8] sm:$0xff]
    %v465 = vld [vmem:[#allocation6 + $0x2b0] sm:$0xff]
    %v466 = vld [vmem:[#allocation6 + $0x2b8] sm:$0xff]
    %v467 = vld [vmem:[#allocation6 + $0x2c0] sm:$0xff]
    %v468 = vld [vmem:[#allocation6 + $0x2c8] sm:$0xff]
    %v469 = vld [vmem:[#allocation6 + $0x2d0] sm:$0xff]
    %v470 = vld [vmem:[#allocation6 + $0x2d8] sm:$0xff]
    %v471 = vld [vmem:[#allocation6 + $0x2e0] sm:$0xff]
    %v472 = vld [vmem:[#allocation6 + $0x2e8] sm:$0xff]
    %v473 = vld [vmem:[#allocation6 + $0x2f0] sm:$0xff]
    %v474 = vld [vmem:[#allocation6 + $0x2f8] sm:$0xff]
    %v475 = vld [vmem:[#allocation6 + $0x300] sm:$0xff]
    %v476 = vld [vmem:[#allocation6 + $0x308] sm:$0xff]
    %v477 = vld [vmem:[#allocation6 + $0x310] sm:$0xff]
    %v478 = vld [vmem:[#allocation6 + $0x318] sm:$0xff]
    %v479 = vld [vmem:[#allocation6 + $0x320] sm:$0xff]
    %v480 = vld [vmem:[#allocation6 + $0x328] sm:$0xff]
    %v481 = vld [vmem:[#allocation6 + $0x330] sm:$0xff]
    %v482 = vld [vmem:[#allocation6 + $0x338] sm:$0xff]
    %v483 = vld [vmem:[#allocation6 + $0x340] sm:$0xff]
    %v484 = vld [vmem:[#allocation6 + $0x348] sm:$0xff]
    %v485 = vld [vmem:[#allocation6 + $0x350] sm:$0xff]
    %v486 = vld [vmem:[#allocation6 + $0x358] sm:$0xff]
    %v487 = vld [vmem:[#allocation6 + $0x360] sm:$0xff]
    %v488 = vld [vmem:[#allocation6 + $0x368] sm:$0xff]
    %v489 = vld [vmem:[#allocation6 + $0x370] sm:$0xff]
    %v490 = vld [vmem:[#allocation6 + $0x378] sm:$0xff]
    %v491 = vld [vmem:[#allocation6 + $0x380] sm:$0xff]
    %v492 = vld [vmem:[#allocation6 + $0x388] sm:$0xff]
    %v493 = vld [vmem:[#allocation6 + $0x390] sm:$0xff]
    %v494 = vld [vmem:[#allocation6 + $0x398] sm:$0xff]
    %v495 = vld [vmem:[#allocation6 + $0x3a0] sm:$0xff]
    %v496 = vld [vmem:[#allocation6 + $0x3a8] sm:$0xff]
    %v497 = vld [vmem:[#allocation6 + $0x3b0] sm:$0xff]
    %v498 = vld [vmem:[#allocation6 + $0x3b8] sm:$0xff]
    %v499 = vld [vmem:[#allocation6 + $0x3c0] sm:$0xff]
    %v500 = vld [vmem:[#allocation6 + $0x3c8] sm:$0xff]
    %v501 = vld [vmem:[#allocation6 + $0x3d0] sm:$0xff]
    %v502 = vld [vmem:[#allocation6 + $0x3d8] sm:$0xff]
    %v503 = vld [vmem:[#allocation6 + $0x3e0] sm:$0xff]
    %v504 = vld [vmem:[#allocation6 + $0x3e8] sm:$0xff]
    %v505 = vld [vmem:[#allocation6 + $0x3f0] sm:$0xff]
    %v506 = vld [vmem:[#allocation6 + $0x3f8] sm:$0xff]
    %v507 = vld [vmem:[#allocation6 + $0x400] sm:$0xff]
    %v508 = vld [vmem:[#allocation6 + $0x408] sm:$0xff]
    %v509 = vld [vmem:[#allocation6 + $0x410] sm:$0xff]
    %v510 = vld [vmem:[#allocation6 + $0x418] sm:$0xff]
    %v511 = vld [vmem:[#allocation6 + $0x420] sm:$0xff]
    %v512 = vld [vmem:[#allocation6 + $0x428] sm:$0xff]
    %v513 = vld [vmem:[#allocation6 + $0x430] sm:$0xff]
    %v514 = vld [vmem:[#allocation6 + $0x438] sm:$0xff]
    %v515 = vld [vmem:[#allocation6 + $0x440] sm:$0xff]
    %v516 = vld [vmem:[#allocation6 + $0x448] sm:$0xff]
    %v517 = vld [vmem:[#allocation6 + $0x450] sm:$0xff]
    %v518 = vld [vmem:[#allocation6 + $0x458] sm:$0xff]
    %v519 = vld [vmem:[#allocation6 + $0x460] sm:$0xff]
    %v520 = vld [vmem:[#allocation6 + $0x468] sm:$0xff]
    %v521 = vld [vmem:[#allocation6 + $0x470] sm:$0xff]
    %v522 = vld [vmem:[#allocation6 + $0x478] sm:$0xff]
    %v523 = vld [vmem:[#allocation6 + $0x480] sm:$0xff]
    %v524 = vld [vmem:[#allocation6 + $0x488] sm:$0xff]
    %v525 = vld [vmem:[#allocation6 + $0x490] sm:$0xff]
    %v526 = vld [vmem:[#allocation6 + $0x498] sm:$0xff]
    %v527 = vld [vmem:[#allocation6 + $0x4a0] sm:$0xff]
    %v528 = vld [vmem:[#allocation6 + $0x4a8] sm:$0xff]
    %v529 = vld [vmem:[#allocation6 + $0x4b0] sm:$0xff]
    %v530 = vld [vmem:[#allocation6 + $0x4b8] sm:$0xff]
    %v531 = vld [vmem:[#allocation6 + $0x4c0] sm:$0xff]
    %v532 = vld [vmem:[#allocation6 + $0x4c8] sm:$0xff]
    %v533 = vld [vmem:[#allocation6 + $0x4d0] sm:$0xff]
    %v534 = vld [vmem:[#allocation6 + $0x4d8] sm:$0xff]
    %v535 = vld [vmem:[#allocation6 + $0x4e0] sm:$0xff]
    %v536 = vld [vmem:[#allocation6 + $0x4e8] sm:$0xff]
    %v537 = vld [vmem:[#allocation6 + $0x4f0] sm:$0xff]
    %v538 = vld [vmem:[#allocation6 + $0x4f8] sm:$0xff]
    %v539 = vld [vmem:[#allocation6 + $0x500] sm:$0xff]
    %v540 = vld [vmem:[#allocation6 + $0x508] sm:$0xff]
    %v541 = vld [vmem:[#allocation6 + $0x510] sm:$0xff]
    %v542 = vld [vmem:[#allocation6 + $0x518] sm:$0xff]
    %v543 = vld [vmem:[#allocation6 + $0x520] sm:$0xff]
    %v544 = vld [vmem:[#allocation6 + $0x528] sm:$0xff]
    %v545 = vld [vmem:[#allocation6 + $0x530] sm:$0xff]
    %v546 = vld [vmem:[#allocation6 + $0x538] sm:$0xff]
    %v547 = vld [vmem:[#allocation6 + $0x540] sm:$0xff]
    %v548 = vld [vmem:[#allocation6 + $0x548] sm:$0xff]
    %v549 = vld [vmem:[#allocation6 + $0x550] sm:$0xff]
    %v550 = vld [vmem:[#allocation6 + $0x558] sm:$0xff]
    %v551 = vld [vmem:[#allocation6 + $0x560] sm:$0xff]
    %v552 = vld [vmem:[#allocation6 + $0x568] sm:$0xff]
    %v553 = vld [vmem:[#allocation6 + $0x570] sm:$0xff]
    %v554 = vld [vmem:[#allocation6 + $0x578] sm:$0xff]
    %v555 = vld [vmem:[#allocation6 + $0x580] sm:$0xff]
    %v556 = vld [vmem:[#allocation6 + $0x588] sm:$0xff]
    %v557 = vld [vmem:[#allocation6 + $0x590] sm:$0xff]
    %v558 = vld [vmem:[#allocation6 + $0x598] sm:$0xff]
    %v559 = vld [vmem:[#allocation6 + $0x5a0] sm:$0xff]
    %v560 = vld [vmem:[#allocation6 + $0x5a8] sm:$0xff]
    %v561 = vld [vmem:[#allocation6 + $0x5b0] sm:$0xff]
    %v562 = vld [vmem:[#allocation6 + $0x5b8] sm:$0xff]
    %v563 = vld [vmem:[#allocation6 + $0x5c0] sm:$0xff]
    %v564 = vld [vmem:[#allocation6 + $0x5c8] sm:$0xff]
    %v565 = vld [vmem:[#allocation6 + $0x5d0] sm:$0xff]
    %v566 = vld [vmem:[#allocation6 + $0x5d8] sm:$0xff]
    %v567 = vld [vmem:[#allocation6 + $0x5e0] sm:$0xff]
    %v568 = vld [vmem:[#allocation6 + $0x5e8] sm:$0xff]
    %v569 = vld [vmem:[#allocation6 + $0x5f0] sm:$0xff]
    %v570 = vld [vmem:[#allocation6 + $0x5f8] sm:$0xff]
    %v571 = vld [vmem:[#allocation6 + $0x600] sm:$0xff]
    %v572 = vld [vmem:[#allocation6 + $0x608] sm:$0xff]
    %v573 = vld [vmem:[#allocation6 + $0x610] sm:$0xff]
    %v574 = vld [vmem:[#allocation6 + $0x618] sm:$0xff]
    %v575 = vld [vmem:[#allocation6 + $0x620] sm:$0xff]
    %v576 = vld [vmem:[#allocation6 + $0x628] sm:$0xff]
    %v577 = vld [vmem:[#allocation6 + $0x630] sm:$0xff]
    %v578 = vld [vmem:[#allocation6 + $0x638] sm:$0xff]
    %v579 = vld [vmem:[#allocation6 + $0x640] sm:$0xff]
    %v580 = vld [vmem:[#allocation6 + $0x648] sm:$0xff]
    %v581 = vld [vmem:[#allocation6 + $0x650] sm:$0xff]
    %v582 = vld [vmem:[#allocation6 + $0x658] sm:$0xff]
    %v583 = vld [vmem:[#allocation6 + $0x660] sm:$0xff]
    %v584 = vld [vmem:[#allocation6 + $0x668] sm:$0xff]
    %v585 = vld [vmem:[#allocation6 + $0x670] sm:$0xff]
    %v586 = vld [vmem:[#allocation6 + $0x678] sm:$0xff]
    %v587 = vld [vmem:[#allocation6 + $0x680] sm:$0xff]
    %v588 = vld [vmem:[#allocation6 + $0x688] sm:$0xff]
    %v589 = vld [vmem:[#allocation6 + $0x690] sm:$0xff]
    %v590 = vld [vmem:[#allocation6 + $0x698] sm:$0xff]
    %v591 = vld [vmem:[#allocation6 + $0x6a0] sm:$0xff]
    %v592 = vld [vmem:[#allocation6 + $0x6a8] sm:$0xff]
    %v593 = vld [vmem:[#allocation6 + $0x6b0] sm:$0xff]
    %v594 = vld [vmem:[#allocation6 + $0x6b8] sm:$0xff]
    %v595 = vld [vmem:[#allocation6 + $0x6c0] sm:$0xff]
    %v596 = vld [vmem:[#allocation6 + $0x6c8] sm:$0xff]
    %v597 = vld [vmem:[#allocation6 + $0x6d0] sm:$0xff]
    %v598 = vld [vmem:[#allocation6 + $0x6d8] sm:$0xff]
    %v599 = vld [vmem:[#allocation6 + $0x6e0] sm:$0xff]
    %v600 = vld [vmem:[#allocation6 + $0x6e8] sm:$0xff]
    %v601 = vld [vmem:[#allocation6 + $0x6f0] sm:$0xff]
    %v602 = vld [vmem:[#allocation6 + $0x6f8] sm:$0xff]
    %v603 = vld [vmem:[#allocation6 + $0x700] sm:$0xff]
    %v604 = vld [vmem:[#allocation6 + $0x708] sm:$0xff]
    %v605 = vld [vmem:[#allocation6 + $0x710] sm:$0xff]
    %v606 = vld [vmem:[#allocation6 + $0x718] sm:$0xff]
    %v607 = vld [vmem:[#allocation6 + $0x720] sm:$0xff]
    %v608 = vld [vmem:[#allocation6 + $0x728] sm:$0xff]
    %v609 = vld [vmem:[#allocation6 + $0x730] sm:$0xff]
    %v610 = vld [vmem:[#allocation6 + $0x738] sm:$0xff]
    %v611 = vld [vmem:[#allocation6 + $0x740] sm:$0xff]
    %v612 = vld [vmem:[#allocation6 + $0x748] sm:$0xff]
    %v613 = vld [vmem:[#allocation6 + $0x750] sm:$0xff]
    %v614 = vld [vmem:[#allocation6 + $0x758] sm:$0xff]
    %v615 = vld [vmem:[#allocation6 + $0x760] sm:$0xff]
    %v616 = vld [vmem:[#allocation6 + $0x768] sm:$0xff]
    %v617 = vld [vmem:[#allocation6 + $0x770] sm:$0xff]
    %v618 = vld [vmem:[#allocation6 + $0x778] sm:$0xff]
    %v619 = vld [vmem:[#allocation6 + $0x780] sm:$0xff]
    %v620 = vld [vmem:[#allocation6 + $0x788] sm:$0xff]
    %v621 = vld [vmem:[#allocation6 + $0x790] sm:$0xff]
    %v622 = vld [vmem:[#allocation6 + $0x798] sm:$0xff]
    %v623 = vld [vmem:[#allocation6 + $0x7a0] sm:$0xff]
    %v624 = vld [vmem:[#allocation6 + $0x7a8] sm:$0xff]
    %v625 = vld [vmem:[#allocation6 + $0x7b0] sm:$0xff]
    %v626 = vld [vmem:[#allocation6 + $0x7b8] sm:$0xff]
    %v627 = vld [vmem:[#allocation6 + $0x7c0] sm:$0xff]
    %v628 = vld [vmem:[#allocation6 + $0x7c8] sm:$0xff]
    %v629 = vld [vmem:[#allocation6 + $0x7d0] sm:$0xff]
    %v630 = vld [vmem:[#allocation6 + $0x7d8] sm:$0xff]
    %v631 = vld [vmem:[#allocation6 + $0x7e0] sm:$0xff]
    %v632 = vld [vmem:[#allocation6 + $0x7e8] sm:$0xff]
    %v633 = vld [vmem:[#allocation6 + $0x7f0] sm:$0xff]
    %v634 = vld [vmem:[#allocation6 + $0x7f8] sm:$0xff]
    %v635 = vld [vmem:[#allocation6 + $0x800] sm:$0xff]
    %v636 = vld [vmem:[#allocation6 + $0x808] sm:$0xff]
    %v637 = vld [vmem:[#allocation6 + $0x810] sm:$0xff]
    %v638 = vld [vmem:[#allocation6 + $0x818] sm:$0xff]
    %v639 = vld [vmem:[#allocation6 + $0x820] sm:$0xff]
    %v640 = vld [vmem:[#allocation6 + $0x828] sm:$0xff]
    %v641 = vld [vmem:[#allocation6 + $0x830] sm:$0xff]
    %v642 = vld [vmem:[#allocation6 + $0x838] sm:$0xff]
    %v643 = vld [vmem:[#allocation6 + $0x840] sm:$0xff]
    %v644 = vld [vmem:[#allocation6 + $0x848] sm:$0xff]
    %v645 = vld [vmem:[#allocation6 + $0x850] sm:$0xff]
    %v646 = vld [vmem:[#allocation6 + $0x858] sm:$0xff]
    %v647 = vld [vmem:[#allocation6 + $0x860] sm:$0xff]
    %v648 = vld [vmem:[#allocation6 + $0x868] sm:$0xff]
    %v649 = vld [vmem:[#allocation6 + $0x870] sm:$0xff]
    %v650 = vld [vmem:[#allocation6 + $0x878] sm:$0xff]
    %v651 = vld [vmem:[#allocation6 + $0x880] sm:$0xff]
    %v652 = vld [vmem:[#allocation6 + $0x888] sm:$0xff]
    %v653 = vld [vmem:[#allocation6 + $0x890] sm:$0xff]
    %v654 = vld [vmem:[#allocation6 + $0x898] sm:$0xff]
    %v655 = vld [vmem:[#allocation6 + $0x8a0] sm:$0xff]
    %v656 = vld [vmem:[#allocation6 + $0x8a8] sm:$0xff]
    %v657 = vld [vmem:[#allocation6 + $0x8b0] sm:$0xff]
    %v658 = vld [vmem:[#allocation6 + $0x8b8] sm:$0xff]
    %v659 = vld [vmem:[#allocation6 + $0x8c0] sm:$0xff]
    %v660 = vld [vmem:[#allocation6 + $0x8c8] sm:$0xff]
    %v661 = vld [vmem:[#allocation6 + $0x8d0] sm:$0xff]
    %v662 = vld [vmem:[#allocation6 + $0x8d8] sm:$0xff]
    %v663 = vld [vmem:[#allocation6 + $0x8e0] sm:$0xff]
    %v664 = vld [vmem:[#allocation6 + $0x8e8] sm:$0xff]
    %v665 = vld [vmem:[#allocation6 + $0x8f0] sm:$0xff]
    %v666 = vld [vmem:[#allocation6 + $0x8f8] sm:$0xff]
    %v667 = vld [vmem:[#allocation6 + $0x900] sm:$0xff]
    %v668 = vld [vmem:[#allocation6 + $0x908] sm:$0xff]
    %v669 = vld [vmem:[#allocation6 + $0x910] sm:$0xff]
    %v670 = vld [vmem:[#allocation6 + $0x918] sm:$0xff]
    %v671 = vld [vmem:[#allocation6 + $0x920] sm:$0xff]
    %v672 = vld [vmem:[#allocation6 + $0x928] sm:$0xff]
    %v673 = vld [vmem:[#allocation6 + $0x930] sm:$0xff]
    %v674 = vld [vmem:[#allocation6 + $0x938] sm:$0xff]
    %v675 = vld [vmem:[#allocation6 + $0x940] sm:$0xff]
    %v676 = vld [vmem:[#allocation6 + $0x948] sm:$0xff]
    %v677 = vld [vmem:[#allocation6 + $0x950] sm:$0xff]
    %v678 = vld [vmem:[#allocation6 + $0x958] sm:$0xff]
    %v679 = vld [vmem:[#allocation6 + $0x960] sm:$0xff]
    %v680 = vld [vmem:[#allocation6 + $0x968] sm:$0xff]
    %v681 = vld [vmem:[#allocation6 + $0x970] sm:$0xff]
    %v682 = vld [vmem:[#allocation6 + $0x978] sm:$0xff]
    %v683 = vld [vmem:[#allocation6 + $0x980] sm:$0xff]
    %v684 = vld [vmem:[#allocation6 + $0x988] sm:$0xff]
    %v685 = vld [vmem:[#allocation6 + $0x990] sm:$0xff]
    %v686 = vld [vmem:[#allocation6 + $0x998] sm:$0xff]
    %v687 = vld [vmem:[#allocation6 + $0x9a0] sm:$0xff]
    %v688 = vld [vmem:[#allocation6 + $0x9a8] sm:$0xff]
    %v689 = vld [vmem:[#allocation6 + $0x9b0] sm:$0xff]
    %v690 = vld [vmem:[#allocation6 + $0x9b8] sm:$0xff]
    %v691 = vld [vmem:[#allocation6 + $0x9c0] sm:$0xff]
    %v692 = vld [vmem:[#allocation6 + $0x9c8] sm:$0xff]
    %v693 = vld [vmem:[#allocation6 + $0x9d0] sm:$0xff]
    %v694 = vld [vmem:[#allocation6 + $0x9d8] sm:$0xff]
    %v695 = vld [vmem:[#allocation6 + $0x9e0] sm:$0xff]
    %v696 = vld [vmem:[#allocation6 + $0x9e8] sm:$0xff]
    %v697 = vld [vmem:[#allocation6 + $0x9f0] sm:$0xff]
    %v698 = vld [vmem:[#allocation6 + $0x9f8] sm:$0xff]
    %v699 = vld [vmem:[#allocation6 + $0xa00] sm:$0xff]
    %v700 = vld [vmem:[#allocation6 + $0xa08] sm:$0xff]
    %v701 = vld [vmem:[#allocation6 + $0xa10] sm:$0xff]
    %v702 = vld [vmem:[#allocation6 + $0xa18] sm:$0xff]
    %v703 = vld [vmem:[#allocation6 + $0xa20] sm:$0xff]
    %v704 = vld [vmem:[#allocation6 + $0xa28] sm:$0xff]
    %v705 = vld [vmem:[#allocation6 + $0xa30] sm:$0xff]
    %v706 = vld [vmem:[#allocation6 + $0xa38] sm:$0xff]
    %v707 = vld [vmem:[#allocation6 + $0xa40] sm:$0xff]
    %v708 = vld [vmem:[#allocation6 + $0xa48] sm:$0xff]
    %v709 = vld [vmem:[#allocation6 + $0xa50] sm:$0xff]
    %v710 = vld [vmem:[#allocation6 + $0xa58] sm:$0xff]
    %v711 = vld [vmem:[#allocation6 + $0xa60] sm:$0xff]
    %v712 = vld [vmem:[#allocation6 + $0xa68] sm:$0xff]
    %v713 = vld [vmem:[#allocation6 + $0xa70] sm:$0xff]
    %v714 = vld [vmem:[#allocation6 + $0xa78] sm:$0xff]
    %v715 = vld [vmem:[#allocation6 + $0xa80] sm:$0xff]
    %v716 = vld [vmem:[#allocation6 + $0xa88] sm:$0xff]
    %v717 = vld [vmem:[#allocation6 + $0xa90] sm:$0xff]
    %v718 = vld [vmem:[#allocation6 + $0xa98] sm:$0xff]
    %v719 = vld [vmem:[#allocation6 + $0xaa0] sm:$0xff]
    %v720 = vld [vmem:[#allocation6 + $0xaa8] sm:$0xff]
    %v721 = vld [vmem:[#allocation6 + $0xab0] sm:$0xff]
    %v722 = vld [vmem:[#allocation6 + $0xab8] sm:$0xff]
    %v723 = vld [vmem:[#allocation6 + $0xac0] sm:$0xff]
    %v724 = vld [vmem:[#allocation6 + $0xac8] sm:$0xff]
    %v725 = vld [vmem:[#allocation6 + $0xad0] sm:$0xff]
    %v726 = vld [vmem:[#allocation6 + $0xad8] sm:$0xff]
    %v727 = vld [vmem:[#allocation6 + $0xae0] sm:$0xff]
    %v728 = vld [vmem:[#allocation6 + $0xae8] sm:$0xff]
    %v729 = vld [vmem:[#allocation6 + $0xaf0] sm:$0xff]
    %v730 = vld [vmem:[#allocation6 + $0xaf8] sm:$0xff]
    %v731 = vld [vmem:[#allocation6 + $0xb00] sm:$0xff]
    %v732 = vld [vmem:[#allocation6 + $0xb08] sm:$0xff]
    %v733 = vld [vmem:[#allocation6 + $0xb10] sm:$0xff]
    %v734 = vld [vmem:[#allocation6 + $0xb18] sm:$0xff]
    %v735 = vld [vmem:[#allocation6 + $0xb20] sm:$0xff]
    %v736 = vld [vmem:[#allocation6 + $0xb28] sm:$0xff]
    %v737 = vld [vmem:[#allocation6 + $0xb30] sm:$0xff]
    %v738 = vld [vmem:[#allocation6 + $0xb38] sm:$0xff]
    %v739 = vld [vmem:[#allocation6 + $0xb40] sm:$0xff]
    %v740 = vld [vmem:[#allocation6 + $0xb48] sm:$0xff]
    %v741 = vld [vmem:[#allocation6 + $0xb50] sm:$0xff]
    %v742 = vld [vmem:[#allocation6 + $0xb58] sm:$0xff]
    %v743 = vld [vmem:[#allocation6 + $0xb60] sm:$0xff]
    %v744 = vld [vmem:[#allocation6 + $0xb68] sm:$0xff]
    %v745 = vld [vmem:[#allocation6 + $0xb70] sm:$0xff]
    %v746 = vld [vmem:[#allocation6 + $0xb78] sm:$0xff]
    %v747 = vld [vmem:[#allocation6 + $0xb80] sm:$0xff]
    %v748 = vld [vmem:[#allocation6 + $0xb88] sm:$0xff]
    %v749 = vld [vmem:[#allocation6 + $0xb90] sm:$0xff]
    %v750 = vld [vmem:[#allocation6 + $0xb98] sm:$0xff]
    %v751 = vld [vmem:[#allocation6 + $0xba0] sm:$0xff]
    %v752 = vld [vmem:[#allocation6 + $0xba8] sm:$0xff]
    %v753 = vld [vmem:[#allocation6 + $0xbb0] sm:$0xff]
    %v754 = vld [vmem:[#allocation6 + $0xbb8] sm:$0xff]
    %v755 = vld [vmem:[#allocation6 + $0xbc0] sm:$0xff]
    %v756 = vld [vmem:[#allocation6 + $0xbc8] sm:$0xff]
    %v757 = vld [vmem:[#allocation6 + $0xbd0] sm:$0xff]
    %v758 = vld [vmem:[#allocation6 + $0xbd8] sm:$0xff]
    %v759 = vld [vmem:[#allocation6 + $0xbe0] sm:$0xff]
    %v760 = vld [vmem:[#allocation6 + $0xbe8] sm:$0xff]
    %v761 = vld [vmem:[#allocation6 + $0xbf0] sm:$0xff]
    %v762 = vld [vmem:[#allocation6 + $0xbf8] sm:$0xff]
    %v763 = vld [vmem:[#allocation6 + $0xc00] sm:$0xff]
    %v764 = vld [vmem:[#allocation6 + $0xc08] sm:$0xff]
    %v765 = vld [vmem:[#allocation6 + $0xc10] sm:$0xff]
    %v766 = vld [vmem:[#allocation6 + $0xc18] sm:$0xff]
    %v767 = vld [vmem:[#allocation6 + $0xc20] sm:$0xff]
    %v768 = vld [vmem:[#allocation6 + $0xc28] sm:$0xff]
    %v769 = vld [vmem:[#allocation6 + $0xc30] sm:$0xff]
    %v770 = vld [vmem:[#allocation6 + $0xc38] sm:$0xff]
    %v771 = vld [vmem:[#allocation6 + $0xc40] sm:$0xff]
    %v772 = vld [vmem:[#allocation6 + $0xc48] sm:$0xff]
    %v773 = vld [vmem:[#allocation6 + $0xc50] sm:$0xff]
    %v774 = vld [vmem:[#allocation6 + $0xc58] sm:$0xff]
    %v775 = vld [vmem:[#allocation6 + $0xc60] sm:$0xff]
    %v776 = vld [vmem:[#allocation6 + $0xc68] sm:$0xff]
    %v777 = vld [vmem:[#allocation6 + $0xc70] sm:$0xff]
    %v778 = vld [vmem:[#allocation6 + $0xc78] sm:$0xff]
    %v779 = vld [vmem:[#allocation6 + $0xc80] sm:$0xff]
    %v780 = vld [vmem:[#allocation6 + $0xc88] sm:$0xff]
    %v781 = vld [vmem:[#allocation6 + $0xc90] sm:$0xff]
    %v782 = vld [vmem:[#allocation6 + $0xc98] sm:$0xff]
    %v783 = vld [vmem:[#allocation6 + $0xca0] sm:$0xff]
    %v784 = vld [vmem:[#allocation6 + $0xca8] sm:$0xff]
    %v785 = vld [vmem:[#allocation6 + $0xcb0] sm:$0xff]
    %v786 = vld [vmem:[#allocation6 + $0xcb8] sm:$0xff]
    %v787 = vld [vmem:[#allocation6 + $0xcc0] sm:$0xff]
    %v788 = vld [vmem:[#allocation6 + $0xcc8] sm:$0xff]
    %v789 = vld [vmem:[#allocation6 + $0xcd0] sm:$0xff]
    %v790 = vld [vmem:[#allocation6 + $0xcd8] sm:$0xff]
    %v791 = vld [vmem:[#allocation6 + $0xce0] sm:$0xff]
    %v792 = vld [vmem:[#allocation6 + $0xce8] sm:$0xff]
    %v793 = vld [vmem:[#allocation6 + $0xcf0] sm:$0xff]
    %v794 = vld [vmem:[#allocation6 + $0xcf8] sm:$0xff]
    %v795 = vld [vmem:[#allocation6 + $0xd00] sm:$0xff]
    %v796 = vld [vmem:[#allocation6 + $0xd08] sm:$0xff]
    %v797 = vld [vmem:[#allocation6 + $0xd10] sm:$0xff]
    %v798 = vld [vmem:[#allocation6 + $0xd18] sm:$0xff]
    %v799 = vld [vmem:[#allocation6 + $0xd20] sm:$0xff]
    %v800 = vld [vmem:[#allocation6 + $0xd28] sm:$0xff]
    %v801 = vld [vmem:[#allocation6 + $0xd30] sm:$0xff]
    %v802 = vld [vmem:[#allocation6 + $0xd38] sm:$0xff]
    %v803 = vld [vmem:[#allocation6 + $0xd40] sm:$0xff]
    %v804 = vld [vmem:[#allocation6 + $0xd48] sm:$0xff]
    %v805 = vld [vmem:[#allocation6 + $0xd50] sm:$0xff]
    %v806 = vld [vmem:[#allocation6 + $0xd58] sm:$0xff]
    %v807 = vld [vmem:[#allocation6 + $0xd60] sm:$0xff]
    %v808 = vld [vmem:[#allocation6 + $0xd68] sm:$0xff]
    %v809 = vld [vmem:[#allocation6 + $0xd70] sm:$0xff]
    %v810 = vld [vmem:[#allocation6 + $0xd78] sm:$0xff]
    %v811 = vld [vmem:[#allocation6 + $0xd80] sm:$0xff]
    %v812 = vld [vmem:[#allocation6 + $0xd88] sm:$0xff]
    %v813 = vld [vmem:[#allocation6 + $0xd90] sm:$0xff]
    %v814 = vld [vmem:[#allocation6 + $0xd98] sm:$0xff]
    %v815 = vld [vmem:[#allocation6 + $0xda0] sm:$0xff]
    %v816 = vld [vmem:[#allocation6 + $0xda8] sm:$0xff]
    %v817 = vld [vmem:[#allocation6 + $0xdb0] sm:$0xff]
    %v818 = vld [vmem:[#allocation6 + $0xdb8] sm:$0xff]
    %v819 = vld [vmem:[#allocation6 + $0xdc0] sm:$0xff]
    %v820 = vld [vmem:[#allocation6 + $0xdc8] sm:$0xff]
    %v821 = vld [vmem:[#allocation6 + $0xdd0] sm:$0xff]
    %v822 = vld [vmem:[#allocation6 + $0xdd8] sm:$0xff]
    %v823 = vld [vmem:[#allocation6 + $0xde0] sm:$0xff]
    %v824 = vld [vmem:[#allocation6 + $0xde8] sm:$0xff]
    %v825 = vld [vmem:[#allocation6 + $0xdf0] sm:$0xff]
    %v826 = vld [vmem:[#allocation6 + $0xdf8] sm:$0xff]
    %v827 = vld [vmem:[#allocation6 + $0xe00] sm:$0xff]
    %v828 = vld [vmem:[#allocation6 + $0xe08] sm:$0xff]
    %v829 = vld [vmem:[#allocation6 + $0xe10] sm:$0xff]
    %v830 = vld [vmem:[#allocation6 + $0xe18] sm:$0xff]
    %v831 = vld [vmem:[#allocation6 + $0xe20] sm:$0xff]
    %v832 = vld [vmem:[#allocation6 + $0xe28] sm:$0xff]
    %v833 = vld [vmem:[#allocation6 + $0xe30] sm:$0xff]
    %v834 = vld [vmem:[#allocation6 + $0xe38] sm:$0xff]
    %v835 = vld [vmem:[#allocation6 + $0xe40] sm:$0xff]
    %v836 = vld [vmem:[#allocation6 + $0xe48] sm:$0xff]
    %v837 = vld [vmem:[#allocation6 + $0xe50] sm:$0xff]
    %v838 = vld [vmem:[#allocation6 + $0xe58] sm:$0xff]
    %v839 = vld [vmem:[#allocation6 + $0xe60] sm:$0xff]
    %v840 = vld [vmem:[#allocation6 + $0xe68] sm:$0xff]
    %v841 = vld [vmem:[#allocation6 + $0xe70] sm:$0xff]
    %v842 = vld [vmem:[#allocation6 + $0xe78] sm:$0xff]
    %v843 = vld [vmem:[#allocation6 + $0xe80] sm:$0xff]
    %v844 = vld [vmem:[#allocation6 + $0xe88] sm:$0xff]
    %v845 = vld [vmem:[#allocation6 + $0xe90] sm:$0xff]
    %v846 = vld [vmem:[#allocation6 + $0xe98] sm:$0xff]
    %v847 = vld [vmem:[#allocation6 + $0xea0] sm:$0xff]
    %v848 = vld [vmem:[#allocation6 + $0xea8] sm:$0xff]
    %v849 = vld [vmem:[#allocation6 + $0xeb0] sm:$0xff]
    %v850 = vld [vmem:[#allocation6 + $0xeb8] sm:$0xff]
    %v851 = vld [vmem:[#allocation6 + $0xec0] sm:$0xff]
    %v852 = vld [vmem:[#allocation6 + $0xec8] sm:$0xff]
    %v853 = vld [vmem:[#allocation6 + $0xed0] sm:$0xff]
    %v854 = vld [vmem:[#allocation6 + $0xed8] sm:$0xff]
    %v855 = vld [vmem:[#allocation6 + $0xee0] sm:$0xff]
    %v856 = vld [vmem:[#allocation6 + $0xee8] sm:$0xff]
    %v857 = vld [vmem:[#allocation6 + $0xef0] sm:$0xff]
    %v858 = vld [vmem:[#allocation6 + $0xef8] sm:$0xff]
    %v859 = vld [vmem:[#allocation6 + $0xf00] sm:$0xff]
    %v860 = vld [vmem:[#allocation6 + $0xf08] sm:$0xff]
    %v861 = vld [vmem:[#allocation6 + $0xf10] sm:$0xff]
    %v862 = vld [vmem:[#allocation6 + $0xf18] sm:$0xff]
    %v863 = vld [vmem:[#allocation6 + $0xf20] sm:$0xff]
    %v864 = vld [vmem:[#allocation6 + $0xf28] sm:$0xff]
    %v865 = vld [vmem:[#allocation6 + $0xf30] sm:$0xff]
    %v866 = vld [vmem:[#allocation6 + $0xf38] sm:$0xff]
    %v867 = vld [vmem:[#allocation6 + $0xf40] sm:$0xff]
    %v868 = vld [vmem:[#allocation6 + $0xf48] sm:$0xff]
    %v869 = vld [vmem:[#allocation6 + $0xf50] sm:$0xff]
    %v870 = vld [vmem:[#allocation6 + $0xf58] sm:$0xff]
    %v871 = vld [vmem:[#allocation6 + $0xf60] sm:$0xff]
    %v872 = vld [vmem:[#allocation6 + $0xf68] sm:$0xff]
    %v873 = vld [vmem:[#allocation6 + $0xf70] sm:$0xff]
    %v874 = vld [vmem:[#allocation6 + $0xf78] sm:$0xff]
    %v875 = vld [vmem:[#allocation6 + $0xf80] sm:$0xff]
    %v876 = vld [vmem:[#allocation6 + $0xf88] sm:$0xff]
    %v877 = vld [vmem:[#allocation6 + $0xf90] sm:$0xff]
    %v878 = vld [vmem:[#allocation6 + $0xf98] sm:$0xff]
    %v879 = vld [vmem:[#allocation6 + $0xfa0] sm:$0xff]
    %v880 = vld [vmem:[#allocation6 + $0xfa8] sm:$0xff]
    %v881 = vld [vmem:[#allocation6 + $0xfb0] sm:$0xff]
    %v882 = vld [vmem:[#allocation6 + $0xfb8] sm:$0xff]
    %v883 = vld [vmem:[#allocation6 + $0xfc0] sm:$0xff]
    %v884 = vld [vmem:[#allocation6 + $0xfc8] sm:$0xff]
    %v885 = vld [vmem:[#allocation6 + $0xfd0] sm:$0xff]
    %v886 = vld [vmem:[#allocation6 + $0xfd8] sm:$0xff]
    %v887 = vld [vmem:[#allocation6 + $0xfe0] sm:$0xff]
    %v888 = vld [vmem:[#allocation6 + $0xfe8] sm:$0xff]
    %v889 = vld [vmem:[#allocation6 + $0xff0] sm:$0xff]
    %v890 = vld [vmem:[#allocation6 + $0xff8] sm:$0xff]
    %v891 = vld [vmem:[#allocation8] sm:$0xff]
    %v893 = vperm.slane %v891, 0
    %v894 = vperm.slane %v891, 1
    %v895 = vperm.slane %v891, 2
    %v896 = vperm.slane %v891, 3
    %v897 = vperm.slane %v891, 4
    %v898 = vperm.slane %v891, 5
    %v899 = vperm.slane %v891, 6
    %v900 = vperm.slane %v891, 7
    %v1421 = vunpack.c.l.b16 %v379
    %v1422 = vunpack.c.h.b16 %v379
    %v1423 = vunpack.c.l.b16 %v380
    %v1424 = vunpack.c.h.b16 %v380
    %v1425 = vunpack.c.l.b16 %v381
    %v1426 = vunpack.c.h.b16 %v381
    %v1427 = vunpack.c.l.b16 %v382
    %v1428 = vunpack.c.h.b16 %v382
    %v1429 = vunpack.c.l.b16 %v383
    %v1430 = vunpack.c.h.b16 %v383
    %v1431 = vunpack.c.l.b16 %v384
    %v1432 = vunpack.c.h.b16 %v384
    %v1433 = vunpack.c.l.b16 %v385
    %v1434 = vunpack.c.h.b16 %v385
    %v1435 = vunpack.c.l.b16 %v386
    %v1436 = vunpack.c.h.b16 %v386
    %v1437 = vunpack.c.l.b16 %v387
    %v1438 = vunpack.c.h.b16 %v387
    %v1439 = vunpack.c.l.b16 %v388
    %v1440 = vunpack.c.h.b16 %v388
    %v1441 = vunpack.c.l.b16 %v389
    %v1442 = vunpack.c.h.b16 %v389
    %v1443 = vunpack.c.l.b16 %v390
    %v1444 = vunpack.c.h.b16 %v390
    %v1445 = vunpack.c.l.b16 %v391
    %v1446 = vunpack.c.h.b16 %v391
    %v1447 = vunpack.c.l.b16 %v392
    %v1448 = vunpack.c.h.b16 %v392
    %v1449 = vunpack.c.l.b16 %v393
    %v1450 = vunpack.c.h.b16 %v393
    %v1451 = vunpack.c.l.b16 %v394
    %v1452 = vunpack.c.h.b16 %v394
    %v1453 = vunpack.c.l.b16 %v395
    %v1454 = vunpack.c.h.b16 %v395
    %v1455 = vunpack.c.l.b16 %v396
    %v1456 = vunpack.c.h.b16 %v396
    %v1457 = vunpack.c.l.b16 %v397
    %v1458 = vunpack.c.h.b16 %v397
    %v1459 = vunpack.c.l.b16 %v398
    %v1460 = vunpack.c.h.b16 %v398
    %v1461 = vunpack.c.l.b16 %v399
    %v1462 = vunpack.c.h.b16 %v399
    %v1463 = vunpack.c.l.b16 %v400
    %v1464 = vunpack.c.h.b16 %v400
    %v1465 = vunpack.c.l.b16 %v401
    %v1466 = vunpack.c.h.b16 %v401
    %v1467 = vunpack.c.l.b16 %v402
    %v1468 = vunpack.c.h.b16 %v402
    %v1469 = vunpack.c.l.b16 %v403
    %v1470 = vunpack.c.h.b16 %v403
    %v1471 = vunpack.c.l.b16 %v404
    %v1472 = vunpack.c.h.b16 %v404
    %v1473 = vunpack.c.l.b16 %v405
    %v1474 = vunpack.c.h.b16 %v405
    %v1475 = vunpack.c.l.b16 %v406
    %v1476 = vunpack.c.h.b16 %v406
    %v1477 = vunpack.c.l.b16 %v407
    %v1478 = vunpack.c.h.b16 %v407
    %v1479 = vunpack.c.l.b16 %v408
    %v1480 = vunpack.c.h.b16 %v408
    %v1481 = vunpack.c.l.b16 %v409
    %v1482 = vunpack.c.h.b16 %v409
    %v1483 = vunpack.c.l.b16 %v410
    %v1484 = vunpack.c.h.b16 %v410
    %v1485 = vunpack.c.l.b16 %v411
    %v1486 = vunpack.c.h.b16 %v411
    %v1487 = vunpack.c.l.b16 %v412
    %v1488 = vunpack.c.h.b16 %v412
    %v1489 = vunpack.c.l.b16 %v413
    %v1490 = vunpack.c.h.b16 %v413
    %v1491 = vunpack.c.l.b16 %v414
    %v1492 = vunpack.c.h.b16 %v414
    %v1493 = vunpack.c.l.b16 %v415
    %v1494 = vunpack.c.h.b16 %v415
    %v1495 = vunpack.c.l.b16 %v416
    %v1496 = vunpack.c.h.b16 %v416
    %v1497 = vunpack.c.l.b16 %v417
    %v1498 = vunpack.c.h.b16 %v417
    %v1499 = vunpack.c.l.b16 %v418
    %v1500 = vunpack.c.h.b16 %v418
    %v1501 = vunpack.c.l.b16 %v419
    %v1502 = vunpack.c.h.b16 %v419
    %v1503 = vunpack.c.l.b16 %v420
    %v1504 = vunpack.c.h.b16 %v420
    %v1505 = vunpack.c.l.b16 %v421
    %v1506 = vunpack.c.h.b16 %v421
    %v1507 = vunpack.c.l.b16 %v422
    %v1508 = vunpack.c.h.b16 %v422
    %v1509 = vunpack.c.l.b16 %v423
    %v1510 = vunpack.c.h.b16 %v423
    %v1511 = vunpack.c.l.b16 %v424
    %v1512 = vunpack.c.h.b16 %v424
    %v1513 = vunpack.c.l.b16 %v425
    %v1514 = vunpack.c.h.b16 %v425
    %v1515 = vunpack.c.l.b16 %v426
    %v1516 = vunpack.c.h.b16 %v426
    %v1517 = vunpack.c.l.b16 %v427
    %v1518 = vunpack.c.h.b16 %v427
    %v1519 = vunpack.c.l.b16 %v428
    %v1520 = vunpack.c.h.b16 %v428
    %v1521 = vunpack.c.l.b16 %v429
    %v1522 = vunpack.c.h.b16 %v429
    %v1523 = vunpack.c.l.b16 %v430
    %v1524 = vunpack.c.h.b16 %v430
    %v1525 = vunpack.c.l.b16 %v431
    %v1526 = vunpack.c.h.b16 %v431
    %v1527 = vunpack.c.l.b16 %v432
    %v1528 = vunpack.c.h.b16 %v432
    %v1529 = vunpack.c.l.b16 %v433
    %v1530 = vunpack.c.h.b16 %v433
    %v1531 = vunpack.c.l.b16 %v434
    %v1532 = vunpack.c.h.b16 %v434
    %v1533 = vunpack.c.l.b16 %v435
    %v1534 = vunpack.c.h.b16 %v435
    %v1535 = vunpack.c.l.b16 %v436
    %v1536 = vunpack.c.h.b16 %v436
    %v1537 = vunpack.c.l.b16 %v437
    %v1538 = vunpack.c.h.b16 %v437
    %v1539 = vunpack.c.l.b16 %v438
    %v1540 = vunpack.c.h.b16 %v438
    %v1541 = vunpack.c.l.b16 %v439
    %v1542 = vunpack.c.h.b16 %v439
    %v1543 = vunpack.c.l.b16 %v440
    %v1544 = vunpack.c.h.b16 %v440
    %v1545 = vunpack.c.l.b16 %v441
    %v1546 = vunpack.c.h.b16 %v441
    %v1547 = vunpack.c.l.b16 %v442
    %v1548 = vunpack.c.h.b16 %v442
    %v1549 = vunpack.c.l.b16 %v443
    %v1550 = vunpack.c.h.b16 %v443
    %v1551 = vunpack.c.l.b16 %v444
    %v1552 = vunpack.c.h.b16 %v444
    %v1553 = vunpack.c.l.b16 %v445
    %v1554 = vunpack.c.h.b16 %v445
    %v1555 = vunpack.c.l.b16 %v446
    %v1556 = vunpack.c.h.b16 %v446
    %v1557 = vunpack.c.l.b16 %v447
    %v1558 = vunpack.c.h.b16 %v447
    %v1559 = vunpack.c.l.b16 %v448
    %v1560 = vunpack.c.h.b16 %v448
    %v1561 = vunpack.c.l.b16 %v449
    %v1562 = vunpack.c.h.b16 %v449
    %v1563 = vunpack.c.l.b16 %v450
    %v1564 = vunpack.c.h.b16 %v450
    %v1565 = vunpack.c.l.b16 %v451
    %v1566 = vunpack.c.h.b16 %v451
    %v1567 = vunpack.c.l.b16 %v452
    %v1568 = vunpack.c.h.b16 %v452
    %v1569 = vunpack.c.l.b16 %v453
    %v1570 = vunpack.c.h.b16 %v453
    %v1571 = vunpack.c.l.b16 %v454
    %v1572 = vunpack.c.h.b16 %v454
    %v1573 = vunpack.c.l.b16 %v455
    %v1574 = vunpack.c.h.b16 %v455
    %v1575 = vunpack.c.l.b16 %v456
    %v1576 = vunpack.c.h.b16 %v456
    %v1577 = vunpack.c.l.b16 %v457
    %v1578 = vunpack.c.h.b16 %v457
    %v1579 = vunpack.c.l.b16 %v458
    %v1580 = vunpack.c.h.b16 %v458
    %v1581 = vunpack.c.l.b16 %v459
    %v1582 = vunpack.c.h.b16 %v459
    %v1583 = vunpack.c.l.b16 %v460
    %v1584 = vunpack.c.h.b16 %v460
    %v1585 = vunpack.c.l.b16 %v461
    %v1586 = vunpack.c.h.b16 %v461
    %v1587 = vunpack.c.l.b16 %v462
    %v1588 = vunpack.c.h.b16 %v462
    %v1589 = vunpack.c.l.b16 %v463
    %v1590 = vunpack.c.h.b16 %v463
    %v1591 = vunpack.c.l.b16 %v464
    %v1592 = vunpack.c.h.b16 %v464
    %v1593 = vunpack.c.l.b16 %v465
    %v1594 = vunpack.c.h.b16 %v465
    %v1595 = vunpack.c.l.b16 %v466
    %v1596 = vunpack.c.h.b16 %v466
    %v1597 = vunpack.c.l.b16 %v467
    %v1598 = vunpack.c.h.b16 %v467
    %v1599 = vunpack.c.l.b16 %v468
    %v1600 = vunpack.c.h.b16 %v468
    %v1601 = vunpack.c.l.b16 %v469
    %v1602 = vunpack.c.h.b16 %v469
    %v1603 = vunpack.c.l.b16 %v470
    %v1604 = vunpack.c.h.b16 %v470
    %v1605 = vunpack.c.l.b16 %v471
    %v1606 = vunpack.c.h.b16 %v471
    %v1607 = vunpack.c.l.b16 %v472
    %v1608 = vunpack.c.h.b16 %v472
    %v1609 = vunpack.c.l.b16 %v473
    %v1610 = vunpack.c.h.b16 %v473
    %v1611 = vunpack.c.l.b16 %v474
    %v1612 = vunpack.c.h.b16 %v474
    %v1613 = vunpack.c.l.b16 %v475
    %v1614 = vunpack.c.h.b16 %v475
    %v1615 = vunpack.c.l.b16 %v476
    %v1616 = vunpack.c.h.b16 %v476
    %v1617 = vunpack.c.l.b16 %v477
    %v1618 = vunpack.c.h.b16 %v477
    %v1619 = vunpack.c.l.b16 %v478
    %v1620 = vunpack.c.h.b16 %v478
    %v1621 = vunpack.c.l.b16 %v479
    %v1622 = vunpack.c.h.b16 %v479
    %v1623 = vunpack.c.l.b16 %v480
    %v1624 = vunpack.c.h.b16 %v480
    %v1625 = vunpack.c.l.b16 %v481
    %v1626 = vunpack.c.h.b16 %v481
    %v1627 = vunpack.c.l.b16 %v482
    %v1628 = vunpack.c.h.b16 %v482
    %v1629 = vunpack.c.l.b16 %v483
    %v1630 = vunpack.c.h.b16 %v483
    %v1631 = vunpack.c.l.b16 %v484
    %v1632 = vunpack.c.h.b16 %v484
    %v1633 = vunpack.c.l.b16 %v485
    %v1634 = vunpack.c.h.b16 %v485
    %v1635 = vunpack.c.l.b16 %v486
    %v1636 = vunpack.c.h.b16 %v486
    %v1637 = vunpack.c.l.b16 %v487
    %v1638 = vunpack.c.h.b16 %v487
    %v1639 = vunpack.c.l.b16 %v488
    %v1640 = vunpack.c.h.b16 %v488
    %v1641 = vunpack.c.l.b16 %v489
    %v1642 = vunpack.c.h.b16 %v489
    %v1643 = vunpack.c.l.b16 %v490
    %v1644 = vunpack.c.h.b16 %v490
    %v1645 = vunpack.c.l.b16 %v491
    %v1646 = vunpack.c.h.b16 %v491
    %v1647 = vunpack.c.l.b16 %v492
    %v1648 = vunpack.c.h.b16 %v492
    %v1649 = vunpack.c.l.b16 %v493
    %v1650 = vunpack.c.h.b16 %v493
    %v1651 = vunpack.c.l.b16 %v494
    %v1652 = vunpack.c.h.b16 %v494
    %v1653 = vunpack.c.l.b16 %v495
    %v1654 = vunpack.c.h.b16 %v495
    %v1655 = vunpack.c.l.b16 %v496
    %v1656 = vunpack.c.h.b16 %v496
    %v1657 = vunpack.c.l.b16 %v497
    %v1658 = vunpack.c.h.b16 %v497
    %v1659 = vunpack.c.l.b16 %v498
    %v1660 = vunpack.c.h.b16 %v498
    %v1661 = vunpack.c.l.b16 %v499
    %v1662 = vunpack.c.h.b16 %v499
    %v1663 = vunpack.c.l.b16 %v500
    %v1664 = vunpack.c.h.b16 %v500
    %v1665 = vunpack.c.l.b16 %v501
    %v1666 = vunpack.c.h.b16 %v501
    %v1667 = vunpack.c.l.b16 %v502
    %v1668 = vunpack.c.h.b16 %v502
    %v1669 = vunpack.c.l.b16 %v503
    %v1670 = vunpack.c.h.b16 %v503
    %v1671 = vunpack.c.l.b16 %v504
    %v1672 = vunpack.c.h.b16 %v504
    %v1673 = vunpack.c.l.b16 %v505
    %v1674 = vunpack.c.h.b16 %v505
    %v1675 = vunpack.c.l.b16 %v506
    %v1676 = vunpack.c.h.b16 %v506
    %v1677 = vunpack.c.l.b16 %v507
    %v1678 = vunpack.c.h.b16 %v507
    %v1679 = vunpack.c.l.b16 %v508
    %v1680 = vunpack.c.h.b16 %v508
    %v1681 = vunpack.c.l.b16 %v509
    %v1682 = vunpack.c.h.b16 %v509
    %v1683 = vunpack.c.l.b16 %v510
    %v1684 = vunpack.c.h.b16 %v510
    %v1685 = vunpack.c.l.b16 %v511
    %v1686 = vunpack.c.h.b16 %v511
    %v1687 = vunpack.c.l.b16 %v512
    %v1688 = vunpack.c.h.b16 %v512
    %v1689 = vunpack.c.l.b16 %v513
    %v1690 = vunpack.c.h.b16 %v513
    %v1691 = vunpack.c.l.b16 %v514
    %v1692 = vunpack.c.h.b16 %v514
    %v1693 = vunpack.c.l.b16 %v515
    %v1694 = vunpack.c.h.b16 %v515
    %v1695 = vunpack.c.l.b16 %v516
    %v1696 = vunpack.c.h.b16 %v516
    %v1697 = vunpack.c.l.b16 %v517
    %v1698 = vunpack.c.h.b16 %v517
    %v1699 = vunpack.c.l.b16 %v518
    %v1700 = vunpack.c.h.b16 %v518
    %v1701 = vunpack.c.l.b16 %v519
    %v1702 = vunpack.c.h.b16 %v519
    %v1703 = vunpack.c.l.b16 %v520
    %v1704 = vunpack.c.h.b16 %v520
    %v1705 = vunpack.c.l.b16 %v521
    %v1706 = vunpack.c.h.b16 %v521
    %v1707 = vunpack.c.l.b16 %v522
    %v1708 = vunpack.c.h.b16 %v522
    %v1709 = vunpack.c.l.b16 %v523
    %v1710 = vunpack.c.h.b16 %v523
    %v1711 = vunpack.c.l.b16 %v524
    %v1712 = vunpack.c.h.b16 %v524
    %v1713 = vunpack.c.l.b16 %v525
    %v1714 = vunpack.c.h.b16 %v525
    %v1715 = vunpack.c.l.b16 %v526
    %v1716 = vunpack.c.h.b16 %v526
    %v1717 = vunpack.c.l.b16 %v527
    %v1718 = vunpack.c.h.b16 %v527
    %v1719 = vunpack.c.l.b16 %v528
    %v1720 = vunpack.c.h.b16 %v528
    %v1721 = vunpack.c.l.b16 %v529
    %v1722 = vunpack.c.h.b16 %v529
    %v1723 = vunpack.c.l.b16 %v530
    %v1724 = vunpack.c.h.b16 %v530
    %v1725 = vunpack.c.l.b16 %v531
    %v1726 = vunpack.c.h.b16 %v531
    %v1727 = vunpack.c.l.b16 %v532
    %v1728 = vunpack.c.h.b16 %v532
    %v1729 = vunpack.c.l.b16 %v533
    %v1730 = vunpack.c.h.b16 %v533
    %v1731 = vunpack.c.l.b16 %v534
    %v1732 = vunpack.c.h.b16 %v534
    %v1733 = vunpack.c.l.b16 %v535
    %v1734 = vunpack.c.h.b16 %v535
    %v1735 = vunpack.c.l.b16 %v536
    %v1736 = vunpack.c.h.b16 %v536
    %v1737 = vunpack.c.l.b16 %v537
    %v1738 = vunpack.c.h.b16 %v537
    %v1739 = vunpack.c.l.b16 %v538
    %v1740 = vunpack.c.h.b16 %v538
    %v1741 = vunpack.c.l.b16 %v539
    %v1742 = vunpack.c.h.b16 %v539
    %v1743 = vunpack.c.l.b16 %v540
    %v1744 = vunpack.c.h.b16 %v540
    %v1745 = vunpack.c.l.b16 %v541
    %v1746 = vunpack.c.h.b16 %v541
    %v1747 = vunpack.c.l.b16 %v542
    %v1748 = vunpack.c.h.b16 %v542
    %v1749 = vunpack.c.l.b16 %v543
    %v1750 = vunpack.c.h.b16 %v543
    %v1751 = vunpack.c.l.b16 %v544
    %v1752 = vunpack.c.h.b16 %v544
    %v1753 = vunpack.c.l.b16 %v545
    %v1754 = vunpack.c.h.b16 %v545
    %v1755 = vunpack.c.l.b16 %v546
    %v1756 = vunpack.c.h.b16 %v546
    %v1757 = vunpack.c.l.b16 %v547
    %v1758 = vunpack.c.h.b16 %v547
    %v1759 = vunpack.c.l.b16 %v548
    %v1760 = vunpack.c.h.b16 %v548
    %v1761 = vunpack.c.l.b16 %v549
    %v1762 = vunpack.c.h.b16 %v549
    %v1763 = vunpack.c.l.b16 %v550
    %v1764 = vunpack.c.h.b16 %v550
    %v1765 = vunpack.c.l.b16 %v551
    %v1766 = vunpack.c.h.b16 %v551
    %v1767 = vunpack.c.l.b16 %v552
    %v1768 = vunpack.c.h.b16 %v552
    %v1769 = vunpack.c.l.b16 %v553
    %v1770 = vunpack.c.h.b16 %v553
    %v1771 = vunpack.c.l.b16 %v554
    %v1772 = vunpack.c.h.b16 %v554
    %v1773 = vunpack.c.l.b16 %v555
    %v1774 = vunpack.c.h.b16 %v555
    %v1775 = vunpack.c.l.b16 %v556
    %v1776 = vunpack.c.h.b16 %v556
    %v1777 = vunpack.c.l.b16 %v557
    %v1778 = vunpack.c.h.b16 %v557
    %v1779 = vunpack.c.l.b16 %v558
    %v1780 = vunpack.c.h.b16 %v558
    %v1781 = vunpack.c.l.b16 %v559
    %v1782 = vunpack.c.h.b16 %v559
    %v1783 = vunpack.c.l.b16 %v560
    %v1784 = vunpack.c.h.b16 %v560
    %v1785 = vunpack.c.l.b16 %v561
    %v1786 = vunpack.c.h.b16 %v561
    %v1787 = vunpack.c.l.b16 %v562
    %v1788 = vunpack.c.h.b16 %v562
    %v1789 = vunpack.c.l.b16 %v563
    %v1790 = vunpack.c.h.b16 %v563
    %v1791 = vunpack.c.l.b16 %v564
    %v1792 = vunpack.c.h.b16 %v564
    %v1793 = vunpack.c.l.b16 %v565
    %v1794 = vunpack.c.h.b16 %v565
    %v1795 = vunpack.c.l.b16 %v566
    %v1796 = vunpack.c.h.b16 %v566
    %v1797 = vunpack.c.l.b16 %v567
    %v1798 = vunpack.c.h.b16 %v567
    %v1799 = vunpack.c.l.b16 %v568
    %v1800 = vunpack.c.h.b16 %v568
    %v1801 = vunpack.c.l.b16 %v569
    %v1802 = vunpack.c.h.b16 %v569
    %v1803 = vunpack.c.l.b16 %v570
    %v1804 = vunpack.c.h.b16 %v570
    %v1805 = vunpack.c.l.b16 %v571
    %v1806 = vunpack.c.h.b16 %v571
    %v1807 = vunpack.c.l.b16 %v572
    %v1808 = vunpack.c.h.b16 %v572
    %v1809 = vunpack.c.l.b16 %v573
    %v1810 = vunpack.c.h.b16 %v573
    %v1811 = vunpack.c.l.b16 %v574
    %v1812 = vunpack.c.h.b16 %v574
    %v1813 = vunpack.c.l.b16 %v575
    %v1814 = vunpack.c.h.b16 %v575
    %v1815 = vunpack.c.l.b16 %v576
    %v1816 = vunpack.c.h.b16 %v576
    %v1817 = vunpack.c.l.b16 %v577
    %v1818 = vunpack.c.h.b16 %v577
    %v1819 = vunpack.c.l.b16 %v578
    %v1820 = vunpack.c.h.b16 %v578
    %v1821 = vunpack.c.l.b16 %v579
    %v1822 = vunpack.c.h.b16 %v579
    %v1823 = vunpack.c.l.b16 %v580
    %v1824 = vunpack.c.h.b16 %v580
    %v1825 = vunpack.c.l.b16 %v581
    %v1826 = vunpack.c.h.b16 %v581
    %v1827 = vunpack.c.l.b16 %v582
    %v1828 = vunpack.c.h.b16 %v582
    %v1829 = vunpack.c.l.b16 %v583
    %v1830 = vunpack.c.h.b16 %v583
    %v1831 = vunpack.c.l.b16 %v584
    %v1832 = vunpack.c.h.b16 %v584
    %v1833 = vunpack.c.l.b16 %v585
    %v1834 = vunpack.c.h.b16 %v585
    %v1835 = vunpack.c.l.b16 %v586
    %v1836 = vunpack.c.h.b16 %v586
    %v1837 = vunpack.c.l.b16 %v587
    %v1838 = vunpack.c.h.b16 %v587
    %v1839 = vunpack.c.l.b16 %v588
    %v1840 = vunpack.c.h.b16 %v588
    %v1841 = vunpack.c.l.b16 %v589
    %v1842 = vunpack.c.h.b16 %v589
    %v1843 = vunpack.c.l.b16 %v590
    %v1844 = vunpack.c.h.b16 %v590
    %v1845 = vunpack.c.l.b16 %v591
    %v1846 = vunpack.c.h.b16 %v591
    %v1847 = vunpack.c.l.b16 %v592
    %v1848 = vunpack.c.h.b16 %v592
    %v1849 = vunpack.c.l.b16 %v593
    %v1850 = vunpack.c.h.b16 %v593
    %v1851 = vunpack.c.l.b16 %v594
    %v1852 = vunpack.c.h.b16 %v594
    %v1853 = vunpack.c.l.b16 %v595
    %v1854 = vunpack.c.h.b16 %v595
    %v1855 = vunpack.c.l.b16 %v596
    %v1856 = vunpack.c.h.b16 %v596
    %v1857 = vunpack.c.l.b16 %v597
    %v1858 = vunpack.c.h.b16 %v597
    %v1859 = vunpack.c.l.b16 %v598
    %v1860 = vunpack.c.h.b16 %v598
    %v1861 = vunpack.c.l.b16 %v599
    %v1862 = vunpack.c.h.b16 %v599
    %v1863 = vunpack.c.l.b16 %v600
    %v1864 = vunpack.c.h.b16 %v600
    %v1865 = vunpack.c.l.b16 %v601
    %v1866 = vunpack.c.h.b16 %v601
    %v1867 = vunpack.c.l.b16 %v602
    %v1868 = vunpack.c.h.b16 %v602
    %v1869 = vunpack.c.l.b16 %v603
    %v1870 = vunpack.c.h.b16 %v603
    %v1871 = vunpack.c.l.b16 %v604
    %v1872 = vunpack.c.h.b16 %v604
    %v1873 = vunpack.c.l.b16 %v605
    %v1874 = vunpack.c.h.b16 %v605
    %v1875 = vunpack.c.l.b16 %v606
    %v1876 = vunpack.c.h.b16 %v606
    %v1877 = vunpack.c.l.b16 %v607
    %v1878 = vunpack.c.h.b16 %v607
    %v1879 = vunpack.c.l.b16 %v608
    %v1880 = vunpack.c.h.b16 %v608
    %v1881 = vunpack.c.l.b16 %v609
    %v1882 = vunpack.c.h.b16 %v609
    %v1883 = vunpack.c.l.b16 %v610
    %v1884 = vunpack.c.h.b16 %v610
    %v1885 = vunpack.c.l.b16 %v611
    %v1886 = vunpack.c.h.b16 %v611
    %v1887 = vunpack.c.l.b16 %v612
    %v1888 = vunpack.c.h.b16 %v612
    %v1889 = vunpack.c.l.b16 %v613
    %v1890 = vunpack.c.h.b16 %v613
    %v1891 = vunpack.c.l.b16 %v614
    %v1892 = vunpack.c.h.b16 %v614
    %v1893 = vunpack.c.l.b16 %v615
    %v1894 = vunpack.c.h.b16 %v615
    %v1895 = vunpack.c.l.b16 %v616
    %v1896 = vunpack.c.h.b16 %v616
    %v1897 = vunpack.c.l.b16 %v617
    %v1898 = vunpack.c.h.b16 %v617
    %v1899 = vunpack.c.l.b16 %v618
    %v1900 = vunpack.c.h.b16 %v618
    %v1901 = vunpack.c.l.b16 %v619
    %v1902 = vunpack.c.h.b16 %v619
    %v1903 = vunpack.c.l.b16 %v620
    %v1904 = vunpack.c.h.b16 %v620
    %v1905 = vunpack.c.l.b16 %v621
    %v1906 = vunpack.c.h.b16 %v621
    %v1907 = vunpack.c.l.b16 %v622
    %v1908 = vunpack.c.h.b16 %v622
    %v1909 = vunpack.c.l.b16 %v623
    %v1910 = vunpack.c.h.b16 %v623
    %v1911 = vunpack.c.l.b16 %v624
    %v1912 = vunpack.c.h.b16 %v624
    %v1913 = vunpack.c.l.b16 %v625
    %v1914 = vunpack.c.h.b16 %v625
    %v1915 = vunpack.c.l.b16 %v626
    %v1916 = vunpack.c.h.b16 %v626
    %v1917 = vunpack.c.l.b16 %v627
    %v1918 = vunpack.c.h.b16 %v627
    %v1919 = vunpack.c.l.b16 %v628
    %v1920 = vunpack.c.h.b16 %v628
    %v1921 = vunpack.c.l.b16 %v629
    %v1922 = vunpack.c.h.b16 %v629
    %v1923 = vunpack.c.l.b16 %v630
    %v1924 = vunpack.c.h.b16 %v630
    %v1925 = vunpack.c.l.b16 %v631
    %v1926 = vunpack.c.h.b16 %v631
    %v1927 = vunpack.c.l.b16 %v632
    %v1928 = vunpack.c.h.b16 %v632
    %v1929 = vunpack.c.l.b16 %v633
    %v1930 = vunpack.c.h.b16 %v633
    %v1931 = vunpack.c.l.b16 %v634
    %v1932 = vunpack.c.h.b16 %v634
    %v1933 = vunpack.c.l.b16 %v635
    %v1934 = vunpack.c.h.b16 %v635
    %v1935 = vunpack.c.l.b16 %v636
    %v1936 = vunpack.c.h.b16 %v636
    %v1937 = vunpack.c.l.b16 %v637
    %v1938 = vunpack.c.h.b16 %v637
    %v1939 = vunpack.c.l.b16 %v638
    %v1940 = vunpack.c.h.b16 %v638
    %v1941 = vunpack.c.l.b16 %v639
    %v1942 = vunpack.c.h.b16 %v639
    %v1943 = vunpack.c.l.b16 %v640
    %v1944 = vunpack.c.h.b16 %v640
    %v1945 = vunpack.c.l.b16 %v641
    %v1946 = vunpack.c.h.b16 %v641
    %v1947 = vunpack.c.l.b16 %v642
    %v1948 = vunpack.c.h.b16 %v642
    %v1949 = vunpack.c.l.b16 %v643
    %v1950 = vunpack.c.h.b16 %v643
    %v1951 = vunpack.c.l.b16 %v644
    %v1952 = vunpack.c.h.b16 %v644
    %v1953 = vunpack.c.l.b16 %v645
    %v1954 = vunpack.c.h.b16 %v645
    %v1955 = vunpack.c.l.b16 %v646
    %v1956 = vunpack.c.h.b16 %v646
    %v1957 = vunpack.c.l.b16 %v647
    %v1958 = vunpack.c.h.b16 %v647
    %v1959 = vunpack.c.l.b16 %v648
    %v1960 = vunpack.c.h.b16 %v648
    %v1961 = vunpack.c.l.b16 %v649
    %v1962 = vunpack.c.h.b16 %v649
    %v1963 = vunpack.c.l.b16 %v650
    %v1964 = vunpack.c.h.b16 %v650
    %v1965 = vunpack.c.l.b16 %v651
    %v1966 = vunpack.c.h.b16 %v651
    %v1967 = vunpack.c.l.b16 %v652
    %v1968 = vunpack.c.h.b16 %v652
    %v1969 = vunpack.c.l.b16 %v653
    %v1970 = vunpack.c.h.b16 %v653
    %v1971 = vunpack.c.l.b16 %v654
    %v1972 = vunpack.c.h.b16 %v654
    %v1973 = vunpack.c.l.b16 %v655
    %v1974 = vunpack.c.h.b16 %v655
    %v1975 = vunpack.c.l.b16 %v656
    %v1976 = vunpack.c.h.b16 %v656
    %v1977 = vunpack.c.l.b16 %v657
    %v1978 = vunpack.c.h.b16 %v657
    %v1979 = vunpack.c.l.b16 %v658
    %v1980 = vunpack.c.h.b16 %v658
    %v1981 = vunpack.c.l.b16 %v659
    %v1982 = vunpack.c.h.b16 %v659
    %v1983 = vunpack.c.l.b16 %v660
    %v1984 = vunpack.c.h.b16 %v660
    %v1985 = vunpack.c.l.b16 %v661
    %v1986 = vunpack.c.h.b16 %v661
    %v1987 = vunpack.c.l.b16 %v662
    %v1988 = vunpack.c.h.b16 %v662
    %v1989 = vunpack.c.l.b16 %v663
    %v1990 = vunpack.c.h.b16 %v663
    %v1991 = vunpack.c.l.b16 %v664
    %v1992 = vunpack.c.h.b16 %v664
    %v1993 = vunpack.c.l.b16 %v665
    %v1994 = vunpack.c.h.b16 %v665
    %v1995 = vunpack.c.l.b16 %v666
    %v1996 = vunpack.c.h.b16 %v666
    %v1997 = vunpack.c.l.b16 %v667
    %v1998 = vunpack.c.h.b16 %v667
    %v1999 = vunpack.c.l.b16 %v668
    %v2000 = vunpack.c.h.b16 %v668
    %v2001 = vunpack.c.l.b16 %v669
    %v2002 = vunpack.c.h.b16 %v669
    %v2003 = vunpack.c.l.b16 %v670
    %v2004 = vunpack.c.h.b16 %v670
    %v2005 = vunpack.c.l.b16 %v671
    %v2006 = vunpack.c.h.b16 %v671
    %v2007 = vunpack.c.l.b16 %v672
    %v2008 = vunpack.c.h.b16 %v672
    %v2009 = vunpack.c.l.b16 %v673
    %v2010 = vunpack.c.h.b16 %v673
    %v2011 = vunpack.c.l.b16 %v674
    %v2012 = vunpack.c.h.b16 %v674
    %v2013 = vunpack.c.l.b16 %v675
    %v2014 = vunpack.c.h.b16 %v675
    %v2015 = vunpack.c.l.b16 %v676
    %v2016 = vunpack.c.h.b16 %v676
    %v2017 = vunpack.c.l.b16 %v677
    %v2018 = vunpack.c.h.b16 %v677
    %v2019 = vunpack.c.l.b16 %v678
    %v2020 = vunpack.c.h.b16 %v678
    %v2021 = vunpack.c.l.b16 %v679
    %v2022 = vunpack.c.h.b16 %v679
    %v2023 = vunpack.c.l.b16 %v680
    %v2024 = vunpack.c.h.b16 %v680
    %v2025 = vunpack.c.l.b16 %v681
    %v2026 = vunpack.c.h.b16 %v681
    %v2027 = vunpack.c.l.b16 %v682
    %v2028 = vunpack.c.h.b16 %v682
    %v2029 = vunpack.c.l.b16 %v683
    %v2030 = vunpack.c.h.b16 %v683
    %v2031 = vunpack.c.l.b16 %v684
    %v2032 = vunpack.c.h.b16 %v684
    %v2033 = vunpack.c.l.b16 %v685
    %v2034 = vunpack.c.h.b16 %v685
    %v2035 = vunpack.c.l.b16 %v686
    %v2036 = vunpack.c.h.b16 %v686
    %v2037 = vunpack.c.l.b16 %v687
    %v2038 = vunpack.c.h.b16 %v687
    %v2039 = vunpack.c.l.b16 %v688
    %v2040 = vunpack.c.h.b16 %v688
    %v2041 = vunpack.c.l.b16 %v689
    %v2042 = vunpack.c.h.b16 %v689
    %v2043 = vunpack.c.l.b16 %v690
    %v2044 = vunpack.c.h.b16 %v690
    %v2045 = vunpack.c.l.b16 %v691
    %v2046 = vunpack.c.h.b16 %v691
    %v2047 = vunpack.c.l.b16 %v692
    %v2048 = vunpack.c.h.b16 %v692
    %v2049 = vunpack.c.l.b16 %v693
    %v2050 = vunpack.c.h.b16 %v693
    %v2051 = vunpack.c.l.b16 %v694
    %v2052 = vunpack.c.h.b16 %v694
    %v2053 = vunpack.c.l.b16 %v695
    %v2054 = vunpack.c.h.b16 %v695
    %v2055 = vunpack.c.l.b16 %v696
    %v2056 = vunpack.c.h.b16 %v696
    %v2057 = vunpack.c.l.b16 %v697
    %v2058 = vunpack.c.h.b16 %v697
    %v2059 = vunpack.c.l.b16 %v698
    %v2060 = vunpack.c.h.b16 %v698
    %v2061 = vunpack.c.l.b16 %v699
    %v2062 = vunpack.c.h.b16 %v699
    %v2063 = vunpack.c.l.b16 %v700
    %v2064 = vunpack.c.h.b16 %v700
    %v2065 = vunpack.c.l.b16 %v701
    %v2066 = vunpack.c.h.b16 %v701
    %v2067 = vunpack.c.l.b16 %v702
    %v2068 = vunpack.c.h.b16 %v702
    %v2069 = vunpack.c.l.b16 %v703
    %v2070 = vunpack.c.h.b16 %v703
    %v2071 = vunpack.c.l.b16 %v704
    %v2072 = vunpack.c.h.b16 %v704
    %v2073 = vunpack.c.l.b16 %v705
    %v2074 = vunpack.c.h.b16 %v705
    %v2075 = vunpack.c.l.b16 %v706
    %v2076 = vunpack.c.h.b16 %v706
    %v2077 = vunpack.c.l.b16 %v707
    %v2078 = vunpack.c.h.b16 %v707
    %v2079 = vunpack.c.l.b16 %v708
    %v2080 = vunpack.c.h.b16 %v708
    %v2081 = vunpack.c.l.b16 %v709
    %v2082 = vunpack.c.h.b16 %v709
    %v2083 = vunpack.c.l.b16 %v710
    %v2084 = vunpack.c.h.b16 %v710
    %v2085 = vunpack.c.l.b16 %v711
    %v2086 = vunpack.c.h.b16 %v711
    %v2087 = vunpack.c.l.b16 %v712
    %v2088 = vunpack.c.h.b16 %v712
    %v2089 = vunpack.c.l.b16 %v713
    %v2090 = vunpack.c.h.b16 %v713
    %v2091 = vunpack.c.l.b16 %v714
    %v2092 = vunpack.c.h.b16 %v714
    %v2093 = vunpack.c.l.b16 %v715
    %v2094 = vunpack.c.h.b16 %v715
    %v2095 = vunpack.c.l.b16 %v716
    %v2096 = vunpack.c.h.b16 %v716
    %v2097 = vunpack.c.l.b16 %v717
    %v2098 = vunpack.c.h.b16 %v717
    %v2099 = vunpack.c.l.b16 %v718
    %v2100 = vunpack.c.h.b16 %v718
    %v2101 = vunpack.c.l.b16 %v719
    %v2102 = vunpack.c.h.b16 %v719
    %v2103 = vunpack.c.l.b16 %v720
    %v2104 = vunpack.c.h.b16 %v720
    %v2105 = vunpack.c.l.b16 %v721
    %v2106 = vunpack.c.h.b16 %v721
    %v2107 = vunpack.c.l.b16 %v722
    %v2108 = vunpack.c.h.b16 %v722
    %v2109 = vunpack.c.l.b16 %v723
    %v2110 = vunpack.c.h.b16 %v723
    %v2111 = vunpack.c.l.b16 %v724
    %v2112 = vunpack.c.h.b16 %v724
    %v2113 = vunpack.c.l.b16 %v725
    %v2114 = vunpack.c.h.b16 %v725
    %v2115 = vunpack.c.l.b16 %v726
    %v2116 = vunpack.c.h.b16 %v726
    %v2117 = vunpack.c.l.b16 %v727
    %v2118 = vunpack.c.h.b16 %v727
    %v2119 = vunpack.c.l.b16 %v728
    %v2120 = vunpack.c.h.b16 %v728
    %v2121 = vunpack.c.l.b16 %v729
    %v2122 = vunpack.c.h.b16 %v729
    %v2123 = vunpack.c.l.b16 %v730
    %v2124 = vunpack.c.h.b16 %v730
    %v2125 = vunpack.c.l.b16 %v731
    %v2126 = vunpack.c.h.b16 %v731
    %v2127 = vunpack.c.l.b16 %v732
    %v2128 = vunpack.c.h.b16 %v732
    %v2129 = vunpack.c.l.b16 %v733
    %v2130 = vunpack.c.h.b16 %v733
    %v2131 = vunpack.c.l.b16 %v734
    %v2132 = vunpack.c.h.b16 %v734
    %v2133 = vunpack.c.l.b16 %v735
    %v2134 = vunpack.c.h.b16 %v735
    %v2135 = vunpack.c.l.b16 %v736
    %v2136 = vunpack.c.h.b16 %v736
    %v2137 = vunpack.c.l.b16 %v737
    %v2138 = vunpack.c.h.b16 %v737
    %v2139 = vunpack.c.l.b16 %v738
    %v2140 = vunpack.c.h.b16 %v738
    %v2141 = vunpack.c.l.b16 %v739
    %v2142 = vunpack.c.h.b16 %v739
    %v2143 = vunpack.c.l.b16 %v740
    %v2144 = vunpack.c.h.b16 %v740
    %v2145 = vunpack.c.l.b16 %v741
    %v2146 = vunpack.c.h.b16 %v741
    %v2147 = vunpack.c.l.b16 %v742
    %v2148 = vunpack.c.h.b16 %v742
    %v2149 = vunpack.c.l.b16 %v743
    %v2150 = vunpack.c.h.b16 %v743
    %v2151 = vunpack.c.l.b16 %v744
    %v2152 = vunpack.c.h.b16 %v744
    %v2153 = vunpack.c.l.b16 %v745
    %v2154 = vunpack.c.h.b16 %v745
    %v2155 = vunpack.c.l.b16 %v746
    %v2156 = vunpack.c.h.b16 %v746
    %v2157 = vunpack.c.l.b16 %v747
    %v2158 = vunpack.c.h.b16 %v747
    %v2159 = vunpack.c.l.b16 %v748
    %v2160 = vunpack.c.h.b16 %v748
    %v2161 = vunpack.c.l.b16 %v749
    %v2162 = vunpack.c.h.b16 %v749
    %v2163 = vunpack.c.l.b16 %v750
    %v2164 = vunpack.c.h.b16 %v750
    %v2165 = vunpack.c.l.b16 %v751
    %v2166 = vunpack.c.h.b16 %v751
    %v2167 = vunpack.c.l.b16 %v752
    %v2168 = vunpack.c.h.b16 %v752
    %v2169 = vunpack.c.l.b16 %v753
    %v2170 = vunpack.c.h.b16 %v753
    %v2171 = vunpack.c.l.b16 %v754
    %v2172 = vunpack.c.h.b16 %v754
    %v2173 = vunpack.c.l.b16 %v755
    %v2174 = vunpack.c.h.b16 %v755
    %v2175 = vunpack.c.l.b16 %v756
    %v2176 = vunpack.c.h.b16 %v756
    %v2177 = vunpack.c.l.b16 %v757
    %v2178 = vunpack.c.h.b16 %v757
    %v2179 = vunpack.c.l.b16 %v758
    %v2180 = vunpack.c.h.b16 %v758
    %v2181 = vunpack.c.l.b16 %v759
    %v2182 = vunpack.c.h.b16 %v759
    %v2183 = vunpack.c.l.b16 %v760
    %v2184 = vunpack.c.h.b16 %v760
    %v2185 = vunpack.c.l.b16 %v761
    %v2186 = vunpack.c.h.b16 %v761
    %v2187 = vunpack.c.l.b16 %v762
    %v2188 = vunpack.c.h.b16 %v762
    %v2189 = vunpack.c.l.b16 %v763
    %v2190 = vunpack.c.h.b16 %v763
    %v2191 = vunpack.c.l.b16 %v764
    %v2192 = vunpack.c.h.b16 %v764
    %v2193 = vunpack.c.l.b16 %v765
    %v2194 = vunpack.c.h.b16 %v765
    %v2195 = vunpack.c.l.b16 %v766
    %v2196 = vunpack.c.h.b16 %v766
    %v2197 = vunpack.c.l.b16 %v767
    %v2198 = vunpack.c.h.b16 %v767
    %v2199 = vunpack.c.l.b16 %v768
    %v2200 = vunpack.c.h.b16 %v768
    %v2201 = vunpack.c.l.b16 %v769
    %v2202 = vunpack.c.h.b16 %v769
    %v2203 = vunpack.c.l.b16 %v770
    %v2204 = vunpack.c.h.b16 %v770
    %v2205 = vunpack.c.l.b16 %v771
    %v2206 = vunpack.c.h.b16 %v771
    %v2207 = vunpack.c.l.b16 %v772
    %v2208 = vunpack.c.h.b16 %v772
    %v2209 = vunpack.c.l.b16 %v773
    %v2210 = vunpack.c.h.b16 %v773
    %v2211 = vunpack.c.l.b16 %v774
    %v2212 = vunpack.c.h.b16 %v774
    %v2213 = vunpack.c.l.b16 %v775
    %v2214 = vunpack.c.h.b16 %v775
    %v2215 = vunpack.c.l.b16 %v776
    %v2216 = vunpack.c.h.b16 %v776
    %v2217 = vunpack.c.l.b16 %v777
    %v2218 = vunpack.c.h.b16 %v777
    %v2219 = vunpack.c.l.b16 %v778
    %v2220 = vunpack.c.h.b16 %v778
    %v2221 = vunpack.c.l.b16 %v779
    %v2222 = vunpack.c.h.b16 %v779
    %v2223 = vunpack.c.l.b16 %v780
    %v2224 = vunpack.c.h.b16 %v780
    %v2225 = vunpack.c.l.b16 %v781
    %v2226 = vunpack.c.h.b16 %v781
    %v2227 = vunpack.c.l.b16 %v782
    %v2228 = vunpack.c.h.b16 %v782
    %v2229 = vunpack.c.l.b16 %v783
    %v2230 = vunpack.c.h.b16 %v783
    %v2231 = vunpack.c.l.b16 %v784
    %v2232 = vunpack.c.h.b16 %v784
    %v2233 = vunpack.c.l.b16 %v785
    %v2234 = vunpack.c.h.b16 %v785
    %v2235 = vunpack.c.l.b16 %v786
    %v2236 = vunpack.c.h.b16 %v786
    %v2237 = vunpack.c.l.b16 %v787
    %v2238 = vunpack.c.h.b16 %v787
    %v2239 = vunpack.c.l.b16 %v788
    %v2240 = vunpack.c.h.b16 %v788
    %v2241 = vunpack.c.l.b16 %v789
    %v2242 = vunpack.c.h.b16 %v789
    %v2243 = vunpack.c.l.b16 %v790
    %v2244 = vunpack.c.h.b16 %v790
    %v2245 = vunpack.c.l.b16 %v791
    %v2246 = vunpack.c.h.b16 %v791
    %v2247 = vunpack.c.l.b16 %v792
    %v2248 = vunpack.c.h.b16 %v792
    %v2249 = vunpack.c.l.b16 %v793
    %v2250 = vunpack.c.h.b16 %v793
    %v2251 = vunpack.c.l.b16 %v794
    %v2252 = vunpack.c.h.b16 %v794
    %v2253 = vunpack.c.l.b16 %v795
    %v2254 = vunpack.c.h.b16 %v795
    %v2255 = vunpack.c.l.b16 %v796
    %v2256 = vunpack.c.h.b16 %v796
    %v2257 = vunpack.c.l.b16 %v797
    %v2258 = vunpack.c.h.b16 %v797
    %v2259 = vunpack.c.l.b16 %v798
    %v2260 = vunpack.c.h.b16 %v798
    %v2261 = vunpack.c.l.b16 %v799
    %v2262 = vunpack.c.h.b16 %v799
    %v2263 = vunpack.c.l.b16 %v800
    %v2264 = vunpack.c.h.b16 %v800
    %v2265 = vunpack.c.l.b16 %v801
    %v2266 = vunpack.c.h.b16 %v801
    %v2267 = vunpack.c.l.b16 %v802
    %v2268 = vunpack.c.h.b16 %v802
    %v2269 = vunpack.c.l.b16 %v803
    %v2270 = vunpack.c.h.b16 %v803
    %v2271 = vunpack.c.l.b16 %v804
    %v2272 = vunpack.c.h.b16 %v804
    %v2273 = vunpack.c.l.b16 %v805
    %v2274 = vunpack.c.h.b16 %v805
    %v2275 = vunpack.c.l.b16 %v806
    %v2276 = vunpack.c.h.b16 %v806
    %v2277 = vunpack.c.l.b16 %v807
    %v2278 = vunpack.c.h.b16 %v807
    %v2279 = vunpack.c.l.b16 %v808
    %v2280 = vunpack.c.h.b16 %v808
    %v2281 = vunpack.c.l.b16 %v809
    %v2282 = vunpack.c.h.b16 %v809
    %v2283 = vunpack.c.l.b16 %v810
    %v2284 = vunpack.c.h.b16 %v810
    %v2285 = vunpack.c.l.b16 %v811
    %v2286 = vunpack.c.h.b16 %v811
    %v2287 = vunpack.c.l.b16 %v812
    %v2288 = vunpack.c.h.b16 %v812
    %v2289 = vunpack.c.l.b16 %v813
    %v2290 = vunpack.c.h.b16 %v813
    %v2291 = vunpack.c.l.b16 %v814
    %v2292 = vunpack.c.h.b16 %v814
    %v2293 = vunpack.c.l.b16 %v815
    %v2294 = vunpack.c.h.b16 %v815
    %v2295 = vunpack.c.l.b16 %v816
    %v2296 = vunpack.c.h.b16 %v816
    %v2297 = vunpack.c.l.b16 %v817
    %v2298 = vunpack.c.h.b16 %v817
    %v2299 = vunpack.c.l.b16 %v818
    %v2300 = vunpack.c.h.b16 %v818
    %v2301 = vunpack.c.l.b16 %v819
    %v2302 = vunpack.c.h.b16 %v819
    %v2303 = vunpack.c.l.b16 %v820
    %v2304 = vunpack.c.h.b16 %v820
    %v2305 = vunpack.c.l.b16 %v821
    %v2306 = vunpack.c.h.b16 %v821
    %v2307 = vunpack.c.l.b16 %v822
    %v2308 = vunpack.c.h.b16 %v822
    %v2309 = vunpack.c.l.b16 %v823
    %v2310 = vunpack.c.h.b16 %v823
    %v2311 = vunpack.c.l.b16 %v824
    %v2312 = vunpack.c.h.b16 %v824
    %v2313 = vunpack.c.l.b16 %v825
    %v2314 = vunpack.c.h.b16 %v825
    %v2315 = vunpack.c.l.b16 %v826
    %v2316 = vunpack.c.h.b16 %v826
    %v2317 = vunpack.c.l.b16 %v827
    %v2318 = vunpack.c.h.b16 %v827
    %v2319 = vunpack.c.l.b16 %v828
    %v2320 = vunpack.c.h.b16 %v828
    %v2321 = vunpack.c.l.b16 %v829
    %v2322 = vunpack.c.h.b16 %v829
    %v2323 = vunpack.c.l.b16 %v830
    %v2324 = vunpack.c.h.b16 %v830
    %v2325 = vunpack.c.l.b16 %v831
    %v2326 = vunpack.c.h.b16 %v831
    %v2327 = vunpack.c.l.b16 %v832
    %v2328 = vunpack.c.h.b16 %v832
    %v2329 = vunpack.c.l.b16 %v833
    %v2330 = vunpack.c.h.b16 %v833
    %v2331 = vunpack.c.l.b16 %v834
    %v2332 = vunpack.c.h.b16 %v834
    %v2333 = vunpack.c.l.b16 %v835
    %v2334 = vunpack.c.h.b16 %v835
    %v2335 = vunpack.c.l.b16 %v836
    %v2336 = vunpack.c.h.b16 %v836
    %v2337 = vunpack.c.l.b16 %v837
    %v2338 = vunpack.c.h.b16 %v837
    %v2339 = vunpack.c.l.b16 %v838
    %v2340 = vunpack.c.h.b16 %v838
    %v2341 = vunpack.c.l.b16 %v839
    %v2342 = vunpack.c.h.b16 %v839
    %v2343 = vunpack.c.l.b16 %v840
    %v2344 = vunpack.c.h.b16 %v840
    %v2345 = vunpack.c.l.b16 %v841
    %v2346 = vunpack.c.h.b16 %v841
    %v2347 = vunpack.c.l.b16 %v842
    %v2348 = vunpack.c.h.b16 %v842
    %v2349 = vunpack.c.l.b16 %v843
    %v2350 = vunpack.c.h.b16 %v843
    %v2351 = vunpack.c.l.b16 %v844
    %v2352 = vunpack.c.h.b16 %v844
    %v2353 = vunpack.c.l.b16 %v845
    %v2354 = vunpack.c.h.b16 %v845
    %v2355 = vunpack.c.l.b16 %v846
    %v2356 = vunpack.c.h.b16 %v846
    %v2357 = vunpack.c.l.b16 %v847
    %v2358 = vunpack.c.h.b16 %v847
    %v2359 = vunpack.c.l.b16 %v848
    %v2360 = vunpack.c.h.b16 %v848
    %v2361 = vunpack.c.l.b16 %v849
    %v2362 = vunpack.c.h.b16 %v849
    %v2363 = vunpack.c.l.b16 %v850
    %v2364 = vunpack.c.h.b16 %v850
    %v2365 = vunpack.c.l.b16 %v851
    %v2366 = vunpack.c.h.b16 %v851
    %v2367 = vunpack.c.l.b16 %v852
    %v2368 = vunpack.c.h.b16 %v852
    %v2369 = vunpack.c.l.b16 %v853
    %v2370 = vunpack.c.h.b16 %v853
    %v2371 = vunpack.c.l.b16 %v854
    %v2372 = vunpack.c.h.b16 %v854
    %v2373 = vunpack.c.l.b16 %v855
    %v2374 = vunpack.c.h.b16 %v855
    %v2375 = vunpack.c.l.b16 %v856
    %v2376 = vunpack.c.h.b16 %v856
    %v2377 = vunpack.c.l.b16 %v857
    %v2378 = vunpack.c.h.b16 %v857
    %v2379 = vunpack.c.l.b16 %v858
    %v2380 = vunpack.c.h.b16 %v858
    %v2381 = vunpack.c.l.b16 %v859
    %v2382 = vunpack.c.h.b16 %v859
    %v2383 = vunpack.c.l.b16 %v860
    %v2384 = vunpack.c.h.b16 %v860
    %v2385 = vunpack.c.l.b16 %v861
    %v2386 = vunpack.c.h.b16 %v861
    %v2387 = vunpack.c.l.b16 %v862
    %v2388 = vunpack.c.h.b16 %v862
    %v2389 = vunpack.c.l.b16 %v863
    %v2390 = vunpack.c.h.b16 %v863
    %v2391 = vunpack.c.l.b16 %v864
    %v2392 = vunpack.c.h.b16 %v864
    %v2393 = vunpack.c.l.b16 %v865
    %v2394 = vunpack.c.h.b16 %v865
    %v2395 = vunpack.c.l.b16 %v866
    %v2396 = vunpack.c.h.b16 %v866
    %v2397 = vunpack.c.l.b16 %v867
    %v2398 = vunpack.c.h.b16 %v867
    %v2399 = vunpack.c.l.b16 %v868
    %v2400 = vunpack.c.h.b16 %v868
    %v2401 = vunpack.c.l.b16 %v869
    %v2402 = vunpack.c.h.b16 %v869
    %v2403 = vunpack.c.l.b16 %v870
    %v2404 = vunpack.c.h.b16 %v870
    %v2405 = vunpack.c.l.b16 %v871
    %v2406 = vunpack.c.h.b16 %v871
    %v2407 = vunpack.c.l.b16 %v872
    %v2408 = vunpack.c.h.b16 %v872
    %v2409 = vunpack.c.l.b16 %v873
    %v2410 = vunpack.c.h.b16 %v873
    %v2411 = vunpack.c.l.b16 %v874
    %v2412 = vunpack.c.h.b16 %v874
    %v2413 = vunpack.c.l.b16 %v875
    %v2414 = vunpack.c.h.b16 %v875
    %v2415 = vunpack.c.l.b16 %v876
    %v2416 = vunpack.c.h.b16 %v876
    %v2417 = vunpack.c.l.b16 %v877
    %v2418 = vunpack.c.h.b16 %v877
    %v2419 = vunpack.c.l.b16 %v878
    %v2420 = vunpack.c.h.b16 %v878
    %v2421 = vunpack.c.l.b16 %v879
    %v2422 = vunpack.c.h.b16 %v879
    %v2423 = vunpack.c.l.b16 %v880
    %v2424 = vunpack.c.h.b16 %v880
    %v2425 = vunpack.c.l.b16 %v881
    %v2426 = vunpack.c.h.b16 %v881
    %v2427 = vunpack.c.l.b16 %v882
    %v2428 = vunpack.c.h.b16 %v882
    %v2429 = vunpack.c.l.b16 %v883
    %v2430 = vunpack.c.h.b16 %v883
    %v2431 = vunpack.c.l.b16 %v884
    %v2432 = vunpack.c.h.b16 %v884
    %v2433 = vunpack.c.l.b16 %v885
    %v2434 = vunpack.c.h.b16 %v885
    %v2435 = vunpack.c.l.b16 %v886
    %v2436 = vunpack.c.h.b16 %v886
    %v2437 = vunpack.c.l.b16 %v887
    %v2438 = vunpack.c.h.b16 %v887
    %v2439 = vunpack.c.l.b16 %v888
    %v2440 = vunpack.c.h.b16 %v888
    %v2441 = vunpack.c.l.b16 %v889
    %v2442 = vunpack.c.h.b16 %v889
    %v2443 = vunpack.c.l.b16 %v890
    %v2444 = vunpack.c.h.b16 %v890
    %v2445 = vpack.c.b16 %v1429, %v1421
    %v2446 = vpack.c.b16 %v1430, %v1422
    %v2447 = vpack.c.b16 %v1431, %v1423
    %v2448 = vpack.c.b16 %v1432, %v1424
    %v2449 = vpack.c.b16 %v1433, %v1425
    %v2450 = vpack.c.b16 %v1434, %v1426
    %v2451 = vpack.c.b16 %v1435, %v1427
    %v2452 = vpack.c.b16 %v1436, %v1428
    %v2453 = vpack.c.b16 %v1445, %v1437
    %v2454 = vpack.c.b16 %v1446, %v1438
    %v2455 = vpack.c.b16 %v1447, %v1439
    %v2456 = vpack.c.b16 %v1448, %v1440
    %v2457 = vpack.c.b16 %v1449, %v1441
    %v2458 = vpack.c.b16 %v1450, %v1442
    %v2459 = vpack.c.b16 %v1451, %v1443
    %v2460 = vpack.c.b16 %v1452, %v1444
    %v2461 = vpack.c.b16 %v1461, %v1453
    %v2462 = vpack.c.b16 %v1462, %v1454
    %v2463 = vpack.c.b16 %v1463, %v1455
    %v2464 = vpack.c.b16 %v1464, %v1456
    %v2465 = vpack.c.b16 %v1465, %v1457
    %v2466 = vpack.c.b16 %v1466, %v1458
    %v2467 = vpack.c.b16 %v1467, %v1459
    %v2468 = vpack.c.b16 %v1468, %v1460
    %v2469 = vpack.c.b16 %v1477, %v1469
    %v2470 = vpack.c.b16 %v1478, %v1470
    %v2471 = vpack.c.b16 %v1479, %v1471
    %v2472 = vpack.c.b16 %v1480, %v1472
    %v2473 = vpack.c.b16 %v1481, %v1473
    %v2474 = vpack.c.b16 %v1482, %v1474
    %v2475 = vpack.c.b16 %v1483, %v1475
    %v2476 = vpack.c.b16 %v1484, %v1476
    %v2477 = vpack.c.b16 %v1493, %v1485
    %v2478 = vpack.c.b16 %v1494, %v1486
    %v2479 = vpack.c.b16 %v1495, %v1487
    %v2480 = vpack.c.b16 %v1496, %v1488
    %v2481 = vpack.c.b16 %v1497, %v1489
    %v2482 = vpack.c.b16 %v1498, %v1490
    %v2483 = vpack.c.b16 %v1499, %v1491
    %v2484 = vpack.c.b16 %v1500, %v1492
    %v2485 = vpack.c.b16 %v1509, %v1501
    %v2486 = vpack.c.b16 %v1510, %v1502
    %v2487 = vpack.c.b16 %v1511, %v1503
    %v2488 = vpack.c.b16 %v1512, %v1504
    %v2489 = vpack.c.b16 %v1513, %v1505
    %v2490 = vpack.c.b16 %v1514, %v1506
    %v2491 = vpack.c.b16 %v1515, %v1507
    %v2492 = vpack.c.b16 %v1516, %v1508
    %v2493 = vpack.c.b16 %v1525, %v1517
    %v2494 = vpack.c.b16 %v1526, %v1518
    %v2495 = vpack.c.b16 %v1527, %v1519
    %v2496 = vpack.c.b16 %v1528, %v1520
    %v2497 = vpack.c.b16 %v1529, %v1521
    %v2498 = vpack.c.b16 %v1530, %v1522
    %v2499 = vpack.c.b16 %v1531, %v1523
    %v2500 = vpack.c.b16 %v1532, %v1524
    %v2501 = vpack.c.b16 %v1541, %v1533
    %v2502 = vpack.c.b16 %v1542, %v1534
    %v2503 = vpack.c.b16 %v1543, %v1535
    %v2504 = vpack.c.b16 %v1544, %v1536
    %v2505 = vpack.c.b16 %v1545, %v1537
    %v2506 = vpack.c.b16 %v1546, %v1538
    %v2507 = vpack.c.b16 %v1547, %v1539
    %v2508 = vpack.c.b16 %v1548, %v1540
    %v2509 = vpack.c.b16 %v1557, %v1549
    %v2510 = vpack.c.b16 %v1558, %v1550
    %v2511 = vpack.c.b16 %v1559, %v1551
    %v2512 = vpack.c.b16 %v1560, %v1552
    %v2513 = vpack.c.b16 %v1561, %v1553
    %v2514 = vpack.c.b16 %v1562, %v1554
    %v2515 = vpack.c.b16 %v1563, %v1555
    %v2516 = vpack.c.b16 %v1564, %v1556
    %v2517 = vpack.c.b16 %v1573, %v1565
    %v2518 = vpack.c.b16 %v1574, %v1566
    %v2519 = vpack.c.b16 %v1575, %v1567
    %v2520 = vpack.c.b16 %v1576, %v1568
    %v2521 = vpack.c.b16 %v1577, %v1569
    %v2522 = vpack.c.b16 %v1578, %v1570
    %v2523 = vpack.c.b16 %v1579, %v1571
    %v2524 = vpack.c.b16 %v1580, %v1572
    %v2525 = vpack.c.b16 %v1589, %v1581
    %v2526 = vpack.c.b16 %v1590, %v1582
    %v2527 = vpack.c.b16 %v1591, %v1583
    %v2528 = vpack.c.b16 %v1592, %v1584
    %v2529 = vpack.c.b16 %v1593, %v1585
    %v2530 = vpack.c.b16 %v1594, %v1586
    %v2531 = vpack.c.b16 %v1595, %v1587
    %v2532 = vpack.c.b16 %v1596, %v1588
    %v2533 = vpack.c.b16 %v1605, %v1597
    %v2534 = vpack.c.b16 %v1606, %v1598
    %v2535 = vpack.c.b16 %v1607, %v1599
    %v2536 = vpack.c.b16 %v1608, %v1600
    %v2537 = vpack.c.b16 %v1609, %v1601
    %v2538 = vpack.c.b16 %v1610, %v1602
    %v2539 = vpack.c.b16 %v1611, %v1603
    %v2540 = vpack.c.b16 %v1612, %v1604
    %v2541 = vpack.c.b16 %v1621, %v1613
    %v2542 = vpack.c.b16 %v1622, %v1614
    %v2543 = vpack.c.b16 %v1623, %v1615
    %v2544 = vpack.c.b16 %v1624, %v1616
    %v2545 = vpack.c.b16 %v1625, %v1617
    %v2546 = vpack.c.b16 %v1626, %v1618
    %v2547 = vpack.c.b16 %v1627, %v1619
    %v2548 = vpack.c.b16 %v1628, %v1620
    %v2549 = vpack.c.b16 %v1637, %v1629
    %v2550 = vpack.c.b16 %v1638, %v1630
    %v2551 = vpack.c.b16 %v1639, %v1631
    %v2552 = vpack.c.b16 %v1640, %v1632
    %v2553 = vpack.c.b16 %v1641, %v1633
    %v2554 = vpack.c.b16 %v1642, %v1634
    %v2555 = vpack.c.b16 %v1643, %v1635
    %v2556 = vpack.c.b16 %v1644, %v1636
    %v2557 = vpack.c.b16 %v1653, %v1645
    %v2558 = vpack.c.b16 %v1654, %v1646
    %v2559 = vpack.c.b16 %v1655, %v1647
    %v2560 = vpack.c.b16 %v1656, %v1648
    %v2561 = vpack.c.b16 %v1657, %v1649
    %v2562 = vpack.c.b16 %v1658, %v1650
    %v2563 = vpack.c.b16 %v1659, %v1651
    %v2564 = vpack.c.b16 %v1660, %v1652
    %v2565 = vpack.c.b16 %v1669, %v1661
    %v2566 = vpack.c.b16 %v1670, %v1662
    %v2567 = vpack.c.b16 %v1671, %v1663
    %v2568 = vpack.c.b16 %v1672, %v1664
    %v2569 = vpack.c.b16 %v1673, %v1665
    %v2570 = vpack.c.b16 %v1674, %v1666
    %v2571 = vpack.c.b16 %v1675, %v1667
    %v2572 = vpack.c.b16 %v1676, %v1668
    %v2573 = vpack.c.b16 %v1685, %v1677
    %v2574 = vpack.c.b16 %v1686, %v1678
    %v2575 = vpack.c.b16 %v1687, %v1679
    %v2576 = vpack.c.b16 %v1688, %v1680
    %v2577 = vpack.c.b16 %v1689, %v1681
    %v2578 = vpack.c.b16 %v1690, %v1682
    %v2579 = vpack.c.b16 %v1691, %v1683
    %v2580 = vpack.c.b16 %v1692, %v1684
    %v2581 = vpack.c.b16 %v1701, %v1693
    %v2582 = vpack.c.b16 %v1702, %v1694
    %v2583 = vpack.c.b16 %v1703, %v1695
    %v2584 = vpack.c.b16 %v1704, %v1696
    %v2585 = vpack.c.b16 %v1705, %v1697
    %v2586 = vpack.c.b16 %v1706, %v1698
    %v2587 = vpack.c.b16 %v1707, %v1699
    %v2588 = vpack.c.b16 %v1708, %v1700
    %v2589 = vpack.c.b16 %v1717, %v1709
    %v2590 = vpack.c.b16 %v1718, %v1710
    %v2591 = vpack.c.b16 %v1719, %v1711
    %v2592 = vpack.c.b16 %v1720, %v1712
    %v2593 = vpack.c.b16 %v1721, %v1713
    %v2594 = vpack.c.b16 %v1722, %v1714
    %v2595 = vpack.c.b16 %v1723, %v1715
    %v2596 = vpack.c.b16 %v1724, %v1716
    %v2597 = vpack.c.b16 %v1733, %v1725
    %v2598 = vpack.c.b16 %v1734, %v1726
    %v2599 = vpack.c.b16 %v1735, %v1727
    %v2600 = vpack.c.b16 %v1736, %v1728
    %v2601 = vpack.c.b16 %v1737, %v1729
    %v2602 = vpack.c.b16 %v1738, %v1730
    %v2603 = vpack.c.b16 %v1739, %v1731
    %v2604 = vpack.c.b16 %v1740, %v1732
    %v2605 = vpack.c.b16 %v1749, %v1741
    %v2606 = vpack.c.b16 %v1750, %v1742
    %v2607 = vpack.c.b16 %v1751, %v1743
    %v2608 = vpack.c.b16 %v1752, %v1744
    %v2609 = vpack.c.b16 %v1753, %v1745
    %v2610 = vpack.c.b16 %v1754, %v1746
    %v2611 = vpack.c.b16 %v1755, %v1747
    %v2612 = vpack.c.b16 %v1756, %v1748
    %v2613 = vpack.c.b16 %v1765, %v1757
    %v2614 = vpack.c.b16 %v1766, %v1758
    %v2615 = vpack.c.b16 %v1767, %v1759
    %v2616 = vpack.c.b16 %v1768, %v1760
    %v2617 = vpack.c.b16 %v1769, %v1761
    %v2618 = vpack.c.b16 %v1770, %v1762
    %v2619 = vpack.c.b16 %v1771, %v1763
    %v2620 = vpack.c.b16 %v1772, %v1764
    %v2621 = vpack.c.b16 %v1781, %v1773
    %v2622 = vpack.c.b16 %v1782, %v1774
    %v2623 = vpack.c.b16 %v1783, %v1775
    %v2624 = vpack.c.b16 %v1784, %v1776
    %v2625 = vpack.c.b16 %v1785, %v1777
    %v2626 = vpack.c.b16 %v1786, %v1778
    %v2627 = vpack.c.b16 %v1787, %v1779
    %v2628 = vpack.c.b16 %v1788, %v1780
    %v2629 = vpack.c.b16 %v1797, %v1789
    %v2630 = vpack.c.b16 %v1798, %v1790
    %v2631 = vpack.c.b16 %v1799, %v1791
    %v2632 = vpack.c.b16 %v1800, %v1792
    %v2633 = vpack.c.b16 %v1801, %v1793
    %v2634 = vpack.c.b16 %v1802, %v1794
    %v2635 = vpack.c.b16 %v1803, %v1795
    %v2636 = vpack.c.b16 %v1804, %v1796
    %v2637 = vpack.c.b16 %v1813, %v1805
    %v2638 = vpack.c.b16 %v1814, %v1806
    %v2639 = vpack.c.b16 %v1815, %v1807
    %v2640 = vpack.c.b16 %v1816, %v1808
    %v2641 = vpack.c.b16 %v1817, %v1809
    %v2642 = vpack.c.b16 %v1818, %v1810
    %v2643 = vpack.c.b16 %v1819, %v1811
    %v2644 = vpack.c.b16 %v1820, %v1812
    %v2645 = vpack.c.b16 %v1829, %v1821
    %v2646 = vpack.c.b16 %v1830, %v1822
    %v2647 = vpack.c.b16 %v1831, %v1823
    %v2648 = vpack.c.b16 %v1832, %v1824
    %v2649 = vpack.c.b16 %v1833, %v1825
    %v2650 = vpack.c.b16 %v1834, %v1826
    %v2651 = vpack.c.b16 %v1835, %v1827
    %v2652 = vpack.c.b16 %v1836, %v1828
    %v2653 = vpack.c.b16 %v1845, %v1837
    %v2654 = vpack.c.b16 %v1846, %v1838
    %v2655 = vpack.c.b16 %v1847, %v1839
    %v2656 = vpack.c.b16 %v1848, %v1840
    %v2657 = vpack.c.b16 %v1849, %v1841
    %v2658 = vpack.c.b16 %v1850, %v1842
    %v2659 = vpack.c.b16 %v1851, %v1843
    %v2660 = vpack.c.b16 %v1852, %v1844
    %v2661 = vpack.c.b16 %v1861, %v1853
    %v2662 = vpack.c.b16 %v1862, %v1854
    %v2663 = vpack.c.b16 %v1863, %v1855
    %v2664 = vpack.c.b16 %v1864, %v1856
    %v2665 = vpack.c.b16 %v1865, %v1857
    %v2666 = vpack.c.b16 %v1866, %v1858
    %v2667 = vpack.c.b16 %v1867, %v1859
    %v2668 = vpack.c.b16 %v1868, %v1860
    %v2669 = vpack.c.b16 %v1877, %v1869
    %v2670 = vpack.c.b16 %v1878, %v1870
    %v2671 = vpack.c.b16 %v1879, %v1871
    %v2672 = vpack.c.b16 %v1880, %v1872
    %v2673 = vpack.c.b16 %v1881, %v1873
    %v2674 = vpack.c.b16 %v1882, %v1874
    %v2675 = vpack.c.b16 %v1883, %v1875
    %v2676 = vpack.c.b16 %v1884, %v1876
    %v2677 = vpack.c.b16 %v1893, %v1885
    %v2678 = vpack.c.b16 %v1894, %v1886
    %v2679 = vpack.c.b16 %v1895, %v1887
    %v2680 = vpack.c.b16 %v1896, %v1888
    %v2681 = vpack.c.b16 %v1897, %v1889
    %v2682 = vpack.c.b16 %v1898, %v1890
    %v2683 = vpack.c.b16 %v1899, %v1891
    %v2684 = vpack.c.b16 %v1900, %v1892
    %v2685 = vpack.c.b16 %v1909, %v1901
    %v2686 = vpack.c.b16 %v1910, %v1902
    %v2687 = vpack.c.b16 %v1911, %v1903
    %v2688 = vpack.c.b16 %v1912, %v1904
    %v2689 = vpack.c.b16 %v1913, %v1905
    %v2690 = vpack.c.b16 %v1914, %v1906
    %v2691 = vpack.c.b16 %v1915, %v1907
    %v2692 = vpack.c.b16 %v1916, %v1908
    %v2693 = vpack.c.b16 %v1925, %v1917
    %v2694 = vpack.c.b16 %v1926, %v1918
    %v2695 = vpack.c.b16 %v1927, %v1919
    %v2696 = vpack.c.b16 %v1928, %v1920
    %v2697 = vpack.c.b16 %v1929, %v1921
    %v2698 = vpack.c.b16 %v1930, %v1922
    %v2699 = vpack.c.b16 %v1931, %v1923
    %v2700 = vpack.c.b16 %v1932, %v1924
    %v2701 = vpack.c.b16 %v1941, %v1933
    %v2702 = vpack.c.b16 %v1942, %v1934
    %v2703 = vpack.c.b16 %v1943, %v1935
    %v2704 = vpack.c.b16 %v1944, %v1936
    %v2705 = vpack.c.b16 %v1945, %v1937
    %v2706 = vpack.c.b16 %v1946, %v1938
    %v2707 = vpack.c.b16 %v1947, %v1939
    %v2708 = vpack.c.b16 %v1948, %v1940
    %v2709 = vpack.c.b16 %v1957, %v1949
    %v2710 = vpack.c.b16 %v1958, %v1950
    %v2711 = vpack.c.b16 %v1959, %v1951
    %v2712 = vpack.c.b16 %v1960, %v1952
    %v2713 = vpack.c.b16 %v1961, %v1953
    %v2714 = vpack.c.b16 %v1962, %v1954
    %v2715 = vpack.c.b16 %v1963, %v1955
    %v2716 = vpack.c.b16 %v1964, %v1956
    %v2717 = vpack.c.b16 %v1973, %v1965
    %v2718 = vpack.c.b16 %v1974, %v1966
    %v2719 = vpack.c.b16 %v1975, %v1967
    %v2720 = vpack.c.b16 %v1976, %v1968
    %v2721 = vpack.c.b16 %v1977, %v1969
    %v2722 = vpack.c.b16 %v1978, %v1970
    %v2723 = vpack.c.b16 %v1979, %v1971
    %v2724 = vpack.c.b16 %v1980, %v1972
    %v2725 = vpack.c.b16 %v1989, %v1981
    %v2726 = vpack.c.b16 %v1990, %v1982
    %v2727 = vpack.c.b16 %v1991, %v1983
    %v2728 = vpack.c.b16 %v1992, %v1984
    %v2729 = vpack.c.b16 %v1993, %v1985
    %v2730 = vpack.c.b16 %v1994, %v1986
    %v2731 = vpack.c.b16 %v1995, %v1987
    %v2732 = vpack.c.b16 %v1996, %v1988
    %v2733 = vpack.c.b16 %v2005, %v1997
    %v2734 = vpack.c.b16 %v2006, %v1998
    %v2735 = vpack.c.b16 %v2007, %v1999
    %v2736 = vpack.c.b16 %v2008, %v2000
    %v2737 = vpack.c.b16 %v2009, %v2001
    %v2738 = vpack.c.b16 %v2010, %v2002
    %v2739 = vpack.c.b16 %v2011, %v2003
    %v2740 = vpack.c.b16 %v2012, %v2004
    %v2741 = vpack.c.b16 %v2021, %v2013
    %v2742 = vpack.c.b16 %v2022, %v2014
    %v2743 = vpack.c.b16 %v2023, %v2015
    %v2744 = vpack.c.b16 %v2024, %v2016
    %v2745 = vpack.c.b16 %v2025, %v2017
    %v2746 = vpack.c.b16 %v2026, %v2018
    %v2747 = vpack.c.b16 %v2027, %v2019
    %v2748 = vpack.c.b16 %v2028, %v2020
    %v2749 = vpack.c.b16 %v2037, %v2029
    %v2750 = vpack.c.b16 %v2038, %v2030
    %v2751 = vpack.c.b16 %v2039, %v2031
    %v2752 = vpack.c.b16 %v2040, %v2032
    %v2753 = vpack.c.b16 %v2041, %v2033
    %v2754 = vpack.c.b16 %v2042, %v2034
    %v2755 = vpack.c.b16 %v2043, %v2035
    %v2756 = vpack.c.b16 %v2044, %v2036
    %v2757 = vpack.c.b16 %v2053, %v2045
    %v2758 = vpack.c.b16 %v2054, %v2046
    %v2759 = vpack.c.b16 %v2055, %v2047
    %v2760 = vpack.c.b16 %v2056, %v2048
    %v2761 = vpack.c.b16 %v2057, %v2049
    %v2762 = vpack.c.b16 %v2058, %v2050
    %v2763 = vpack.c.b16 %v2059, %v2051
    %v2764 = vpack.c.b16 %v2060, %v2052
    %v2765 = vpack.c.b16 %v2069, %v2061
    %v2766 = vpack.c.b16 %v2070, %v2062
    %v2767 = vpack.c.b16 %v2071, %v2063
    %v2768 = vpack.c.b16 %v2072, %v2064
    %v2769 = vpack.c.b16 %v2073, %v2065
    %v2770 = vpack.c.b16 %v2074, %v2066
    %v2771 = vpack.c.b16 %v2075, %v2067
    %v2772 = vpack.c.b16 %v2076, %v2068
    %v2773 = vpack.c.b16 %v2085, %v2077
    %v2774 = vpack.c.b16 %v2086, %v2078
    %v2775 = vpack.c.b16 %v2087, %v2079
    %v2776 = vpack.c.b16 %v2088, %v2080
    %v2777 = vpack.c.b16 %v2089, %v2081
    %v2778 = vpack.c.b16 %v2090, %v2082
    %v2779 = vpack.c.b16 %v2091, %v2083
    %v2780 = vpack.c.b16 %v2092, %v2084
    %v2781 = vpack.c.b16 %v2101, %v2093
    %v2782 = vpack.c.b16 %v2102, %v2094
    %v2783 = vpack.c.b16 %v2103, %v2095
    %v2784 = vpack.c.b16 %v2104, %v2096
    %v2785 = vpack.c.b16 %v2105, %v2097
    %v2786 = vpack.c.b16 %v2106, %v2098
    %v2787 = vpack.c.b16 %v2107, %v2099
    %v2788 = vpack.c.b16 %v2108, %v2100
    %v2789 = vpack.c.b16 %v2117, %v2109
    %v2790 = vpack.c.b16 %v2118, %v2110
    %v2791 = vpack.c.b16 %v2119, %v2111
    %v2792 = vpack.c.b16 %v2120, %v2112
    %v2793 = vpack.c.b16 %v2121, %v2113
    %v2794 = vpack.c.b16 %v2122, %v2114
    %v2795 = vpack.c.b16 %v2123, %v2115
    %v2796 = vpack.c.b16 %v2124, %v2116
    %v2797 = vpack.c.b16 %v2133, %v2125
    %v2798 = vpack.c.b16 %v2134, %v2126
    %v2799 = vpack.c.b16 %v2135, %v2127
    %v2800 = vpack.c.b16 %v2136, %v2128
    %v2801 = vpack.c.b16 %v2137, %v2129
    %v2802 = vpack.c.b16 %v2138, %v2130
    %v2803 = vpack.c.b16 %v2139, %v2131
    %v2804 = vpack.c.b16 %v2140, %v2132
    %v2805 = vpack.c.b16 %v2149, %v2141
    %v2806 = vpack.c.b16 %v2150, %v2142
    %v2807 = vpack.c.b16 %v2151, %v2143
    %v2808 = vpack.c.b16 %v2152, %v2144
    %v2809 = vpack.c.b16 %v2153, %v2145
    %v2810 = vpack.c.b16 %v2154, %v2146
    %v2811 = vpack.c.b16 %v2155, %v2147
    %v2812 = vpack.c.b16 %v2156, %v2148
    %v2813 = vpack.c.b16 %v2165, %v2157
    %v2814 = vpack.c.b16 %v2166, %v2158
    %v2815 = vpack.c.b16 %v2167, %v2159
    %v2816 = vpack.c.b16 %v2168, %v2160
    %v2817 = vpack.c.b16 %v2169, %v2161
    %v2818 = vpack.c.b16 %v2170, %v2162
    %v2819 = vpack.c.b16 %v2171, %v2163
    %v2820 = vpack.c.b16 %v2172, %v2164
    %v2821 = vpack.c.b16 %v2181, %v2173
    %v2822 = vpack.c.b16 %v2182, %v2174
    %v2823 = vpack.c.b16 %v2183, %v2175
    %v2824 = vpack.c.b16 %v2184, %v2176
    %v2825 = vpack.c.b16 %v2185, %v2177
    %v2826 = vpack.c.b16 %v2186, %v2178
    %v2827 = vpack.c.b16 %v2187, %v2179
    %v2828 = vpack.c.b16 %v2188, %v2180
    %v2829 = vpack.c.b16 %v2197, %v2189
    %v2830 = vpack.c.b16 %v2198, %v2190
    %v2831 = vpack.c.b16 %v2199, %v2191
    %v2832 = vpack.c.b16 %v2200, %v2192
    %v2833 = vpack.c.b16 %v2201, %v2193
    %v2834 = vpack.c.b16 %v2202, %v2194
    %v2835 = vpack.c.b16 %v2203, %v2195
    %v2836 = vpack.c.b16 %v2204, %v2196
    %v2837 = vpack.c.b16 %v2213, %v2205
    %v2838 = vpack.c.b16 %v2214, %v2206
    %v2839 = vpack.c.b16 %v2215, %v2207
    %v2840 = vpack.c.b16 %v2216, %v2208
    %v2841 = vpack.c.b16 %v2217, %v2209
    %v2842 = vpack.c.b16 %v2218, %v2210
    %v2843 = vpack.c.b16 %v2219, %v2211
    %v2844 = vpack.c.b16 %v2220, %v2212
    %v2845 = vpack.c.b16 %v2229, %v2221
    %v2846 = vpack.c.b16 %v2230, %v2222
    %v2847 = vpack.c.b16 %v2231, %v2223
    %v2848 = vpack.c.b16 %v2232, %v2224
    %v2849 = vpack.c.b16 %v2233, %v2225
    %v2850 = vpack.c.b16 %v2234, %v2226
    %v2851 = vpack.c.b16 %v2235, %v2227
    %v2852 = vpack.c.b16 %v2236, %v2228
    %v2853 = vpack.c.b16 %v2245, %v2237
    %v2854 = vpack.c.b16 %v2246, %v2238
    %v2855 = vpack.c.b16 %v2247, %v2239
    %v2856 = vpack.c.b16 %v2248, %v2240
    %v2857 = vpack.c.b16 %v2249, %v2241
    %v2858 = vpack.c.b16 %v2250, %v2242
    %v2859 = vpack.c.b16 %v2251, %v2243
    %v2860 = vpack.c.b16 %v2252, %v2244
    %v2861 = vpack.c.b16 %v2261, %v2253
    %v2862 = vpack.c.b16 %v2262, %v2254
    %v2863 = vpack.c.b16 %v2263, %v2255
    %v2864 = vpack.c.b16 %v2264, %v2256
    %v2865 = vpack.c.b16 %v2265, %v2257
    %v2866 = vpack.c.b16 %v2266, %v2258
    %v2867 = vpack.c.b16 %v2267, %v2259
    %v2868 = vpack.c.b16 %v2268, %v2260
    %v2869 = vpack.c.b16 %v2277, %v2269
    %v2870 = vpack.c.b16 %v2278, %v2270
    %v2871 = vpack.c.b16 %v2279, %v2271
    %v2872 = vpack.c.b16 %v2280, %v2272
    %v2873 = vpack.c.b16 %v2281, %v2273
    %v2874 = vpack.c.b16 %v2282, %v2274
    %v2875 = vpack.c.b16 %v2283, %v2275
    %v2876 = vpack.c.b16 %v2284, %v2276
    %v2877 = vpack.c.b16 %v2293, %v2285
    %v2878 = vpack.c.b16 %v2294, %v2286
    %v2879 = vpack.c.b16 %v2295, %v2287
    %v2880 = vpack.c.b16 %v2296, %v2288
    %v2881 = vpack.c.b16 %v2297, %v2289
    %v2882 = vpack.c.b16 %v2298, %v2290
    %v2883 = vpack.c.b16 %v2299, %v2291
    %v2884 = vpack.c.b16 %v2300, %v2292
    %v2885 = vpack.c.b16 %v2309, %v2301
    %v2886 = vpack.c.b16 %v2310, %v2302
    %v2887 = vpack.c.b16 %v2311, %v2303
    %v2888 = vpack.c.b16 %v2312, %v2304
    %v2889 = vpack.c.b16 %v2313, %v2305
    %v2890 = vpack.c.b16 %v2314, %v2306
    %v2891 = vpack.c.b16 %v2315, %v2307
    %v2892 = vpack.c.b16 %v2316, %v2308
    %v2893 = vpack.c.b16 %v2325, %v2317
    %v2894 = vpack.c.b16 %v2326, %v2318
    %v2895 = vpack.c.b16 %v2327, %v2319
    %v2896 = vpack.c.b16 %v2328, %v2320
    %v2897 = vpack.c.b16 %v2329, %v2321
    %v2898 = vpack.c.b16 %v2330, %v2322
    %v2899 = vpack.c.b16 %v2331, %v2323
    %v2900 = vpack.c.b16 %v2332, %v2324
    %v2901 = vpack.c.b16 %v2341, %v2333
    %v2902 = vpack.c.b16 %v2342, %v2334
    %v2903 = vpack.c.b16 %v2343, %v2335
    %v2904 = vpack.c.b16 %v2344, %v2336
    %v2905 = vpack.c.b16 %v2345, %v2337
    %v2906 = vpack.c.b16 %v2346, %v2338
    %v2907 = vpack.c.b16 %v2347, %v2339
    %v2908 = vpack.c.b16 %v2348, %v2340
    %v2909 = vpack.c.b16 %v2357, %v2349
    %v2910 = vpack.c.b16 %v2358, %v2350
    %v2911 = vpack.c.b16 %v2359, %v2351
    %v2912 = vpack.c.b16 %v2360, %v2352
    %v2913 = vpack.c.b16 %v2361, %v2353
    %v2914 = vpack.c.b16 %v2362, %v2354
    %v2915 = vpack.c.b16 %v2363, %v2355
    %v2916 = vpack.c.b16 %v2364, %v2356
    %v2917 = vpack.c.b16 %v2373, %v2365
    %v2918 = vpack.c.b16 %v2374, %v2366
    %v2919 = vpack.c.b16 %v2375, %v2367
    %v2920 = vpack.c.b16 %v2376, %v2368
    %v2921 = vpack.c.b16 %v2377, %v2369
    %v2922 = vpack.c.b16 %v2378, %v2370
    %v2923 = vpack.c.b16 %v2379, %v2371
    %v2924 = vpack.c.b16 %v2380, %v2372
    %v2925 = vpack.c.b16 %v2389, %v2381
    %v2926 = vpack.c.b16 %v2390, %v2382
    %v2927 = vpack.c.b16 %v2391, %v2383
    %v2928 = vpack.c.b16 %v2392, %v2384
    %v2929 = vpack.c.b16 %v2393, %v2385
    %v2930 = vpack.c.b16 %v2394, %v2386
    %v2931 = vpack.c.b16 %v2395, %v2387
    %v2932 = vpack.c.b16 %v2396, %v2388
    %v2933 = vpack.c.b16 %v2405, %v2397
    %v2934 = vpack.c.b16 %v2406, %v2398
    %v2935 = vpack.c.b16 %v2407, %v2399
    %v2936 = vpack.c.b16 %v2408, %v2400
    %v2937 = vpack.c.b16 %v2409, %v2401
    %v2938 = vpack.c.b16 %v2410, %v2402
    %v2939 = vpack.c.b16 %v2411, %v2403
    %v2940 = vpack.c.b16 %v2412, %v2404
    %v2941 = vpack.c.b16 %v2421, %v2413
    %v2942 = vpack.c.b16 %v2422, %v2414
    %v2943 = vpack.c.b16 %v2423, %v2415
    %v2944 = vpack.c.b16 %v2424, %v2416
    %v2945 = vpack.c.b16 %v2425, %v2417
    %v2946 = vpack.c.b16 %v2426, %v2418
    %v2947 = vpack.c.b16 %v2427, %v2419
    %v2948 = vpack.c.b16 %v2428, %v2420
    %v2949 = vpack.c.b16 %v2437, %v2429
    %v2950 = vpack.c.b16 %v2438, %v2430
    %v2951 = vpack.c.b16 %v2439, %v2431
    %v2952 = vpack.c.b16 %v2440, %v2432
    %v2953 = vpack.c.b16 %v2441, %v2433
    %v2954 = vpack.c.b16 %v2442, %v2434
    %v2955 = vpack.c.b16 %v2443, %v2435
    %v2956 = vpack.c.b16 %v2444, %v2436
    %3469 = vmatpush.bf16.msra.mxu0 %v2501
    %3470 = vmatpush.bf16.msra.mxu0 %v2493
    %3471 = vmatpush.bf16.msra.mxu0 %v2485
    %3472 = vmatpush.bf16.msra.mxu0 %v2477
    %3473 = vmatpush.bf16.msra.mxu0 %v2469
    %3474 = vmatpush.bf16.msra.mxu0 %v2461
    %3475 = vmatpush.bf16.msra.mxu0 %v2453
    %3476 = vmatpush.bf16.msra.mxu0 %v2445
    %3477 = vmatmul.bf16.gmra.mxu0 %v315
    %v3478 = vpop.f32.mrf.mxu0
    %v3479 = vadd.f32 %v893, %v3478
    %v3480 = vpop.f32.mrf.mxu0
    %v3481 = vadd.f32 %v893, %v3480
    %3482 = vmatmul.bf16.gmra.mxu0 %v323
    %v3483 = vpop.f32.mrf.mxu0
    %v3484 = vadd.f32 %v893, %v3483
    %v3485 = vpop.f32.mrf.mxu0
    %v3486 = vadd.f32 %v893, %v3485
    %3487 = vmatmul.bf16.gmra.mxu0 %v331
    %v3488 = vpop.f32.mrf.mxu0
    %v3489 = vadd.f32 %v893, %v3488
    %v3490 = vpop.f32.mrf.mxu0
    %v3491 = vadd.f32 %v893, %v3490
    %3492 = vmatmul.bf16.gmra.mxu0 %v339
    %v3493 = vpop.f32.mrf.mxu0
    %v3494 = vadd.f32 %v893, %v3493
    %v3495 = vpop.f32.mrf.mxu0
    %v3496 = vadd.f32 %v893, %v3495
    %3497 = vmatmul.bf16.gmra.mxu0 %v347
    %v3498 = vpop.f32.mrf.mxu0
    %v3499 = vadd.f32 %v893, %v3498
    %v3500 = vpop.f32.mrf.mxu0
    %v3501 = vadd.f32 %v893, %v3500
    %3502 = vmatmul.bf16.gmra.mxu0 %v355
    %v3503 = vpop.f32.mrf.mxu0
    %v3504 = vadd.f32 %v893, %v3503
    %v3505 = vpop.f32.mrf.mxu0
    %v3506 = vadd.f32 %v893, %v3505
    %3507 = vmatmul.bf16.gmra.mxu0 %v363
    %v3508 = vpop.f32.mrf.mxu0
    %v3509 = vadd.f32 %v893, %v3508
    %v3510 = vpop.f32.mrf.mxu0
    %v3511 = vadd.f32 %v893, %v3510
    %3512 = vmatmul.bf16.gmra.mxu0 %v371
    %v3513 = vpop.f32.mrf.mxu0
    %v3514 = vadd.f32 %v893, %v3513
    %v3515 = vpop.f32.mrf.mxu0
    %v3516 = vadd.f32 %v893, %v3515
    %3517 = vdwg.mxu0
    %3518 = vmatpush.bf16.msra.mxu0 %v2565
    %3519 = vmatpush.bf16.msra.mxu0 %v2557
    %3520 = vmatpush.bf16.msra.mxu0 %v2549
    %3521 = vmatpush.bf16.msra.mxu0 %v2541
    %3522 = vmatpush.bf16.msra.mxu0 %v2533
    %3523 = vmatpush.bf16.msra.mxu0 %v2525
    %3524 = vmatpush.bf16.msra.mxu0 %v2517
    %3525 = vmatpush.bf16.msra.mxu0 %v2509
    %3526 = vmatmul.bf16.gmra.mxu0 %v316
    %v3527 = vpop.f32.mrf.mxu0
    %v3528 = vadd.f32 %v3479, %v3527
    %v3529 = vpop.f32.mrf.mxu0
    %v3530 = vadd.f32 %v3481, %v3529
    %3531 = vmatmul.bf16.gmra.mxu0 %v324
    %v3532 = vpop.f32.mrf.mxu0
    %v3533 = vadd.f32 %v3484, %v3532
    %v3534 = vpop.f32.mrf.mxu0
    %v3535 = vadd.f32 %v3486, %v3534
    %3536 = vmatmul.bf16.gmra.mxu0 %v332
    %v3537 = vpop.f32.mrf.mxu0
    %v3538 = vadd.f32 %v3489, %v3537
    %v3539 = vpop.f32.mrf.mxu0
    %v3540 = vadd.f32 %v3491, %v3539
    %3541 = vmatmul.bf16.gmra.mxu0 %v340
    %v3542 = vpop.f32.mrf.mxu0
    %v3543 = vadd.f32 %v3494, %v3542
    %v3544 = vpop.f32.mrf.mxu0
    %v3545 = vadd.f32 %v3496, %v3544
    %3546 = vmatmul.bf16.gmra.mxu0 %v348
    %v3547 = vpop.f32.mrf.mxu0
    %v3548 = vadd.f32 %v3499, %v3547
    %v3549 = vpop.f32.mrf.mxu0
    %v3550 = vadd.f32 %v3501, %v3549
    %3551 = vmatmul.bf16.gmra.mxu0 %v356
    %v3552 = vpop.f32.mrf.mxu0
    %v3553 = vadd.f32 %v3504, %v3552
    %v3554 = vpop.f32.mrf.mxu0
    %v3555 = vadd.f32 %v3506, %v3554
    %3556 = vmatmul.bf16.gmra.mxu0 %v364
    %v3557 = vpop.f32.mrf.mxu0
    %v3558 = vadd.f32 %v3509, %v3557
    %v3559 = vpop.f32.mrf.mxu0
    %v3560 = vadd.f32 %v3511, %v3559
    %3561 = vmatmul.bf16.gmra.mxu0 %v372
    %v3562 = vpop.f32.mrf.mxu0
    %v3563 = vadd.f32 %v3514, %v3562
    %v3564 = vpop.f32.mrf.mxu0
    %v3565 = vadd.f32 %v3516, %v3564
    %3566 = vdwg.mxu0
    %3567 = vmatpush.bf16.msra.mxu0 %v2629
    %3568 = vmatpush.bf16.msra.mxu0 %v2621
    %3569 = vmatpush.bf16.msra.mxu0 %v2613
    %3570 = vmatpush.bf16.msra.mxu0 %v2605
    %3571 = vmatpush.bf16.msra.mxu0 %v2597
    %3572 = vmatpush.bf16.msra.mxu0 %v2589
    %3573 = vmatpush.bf16.msra.mxu0 %v2581
    %3574 = vmatpush.bf16.msra.mxu0 %v2573
    %3575 = vmatmul.bf16.gmra.mxu0 %v317
    %v3576 = vpop.f32.mrf.mxu0
    %v3577 = vadd.f32 %v3528, %v3576
    %v3578 = vpop.f32.mrf.mxu0
    %v3579 = vadd.f32 %v3530, %v3578
    %3580 = vmatmul.bf16.gmra.mxu0 %v325
    %v3581 = vpop.f32.mrf.mxu0
    %v3582 = vadd.f32 %v3533, %v3581
    %v3583 = vpop.f32.mrf.mxu0
    %v3584 = vadd.f32 %v3535, %v3583
    %3585 = vmatmul.bf16.gmra.mxu0 %v333
    %v3586 = vpop.f32.mrf.mxu0
    %v3587 = vadd.f32 %v3538, %v3586
    %v3588 = vpop.f32.mrf.mxu0
    %v3589 = vadd.f32 %v3540, %v3588
    %3590 = vmatmul.bf16.gmra.mxu0 %v341
    %v3591 = vpop.f32.mrf.mxu0
    %v3592 = vadd.f32 %v3543, %v3591
    %v3593 = vpop.f32.mrf.mxu0
    %v3594 = vadd.f32 %v3545, %v3593
    %3595 = vmatmul.bf16.gmra.mxu0 %v349
    %v3596 = vpop.f32.mrf.mxu0
    %v3597 = vadd.f32 %v3548, %v3596
    %v3598 = vpop.f32.mrf.mxu0
    %v3599 = vadd.f32 %v3550, %v3598
    %3600 = vmatmul.bf16.gmra.mxu0 %v357
    %v3601 = vpop.f32.mrf.mxu0
    %v3602 = vadd.f32 %v3553, %v3601
    %v3603 = vpop.f32.mrf.mxu0
    %v3604 = vadd.f32 %v3555, %v3603
    %3605 = vmatmul.bf16.gmra.mxu0 %v365
    %v3606 = vpop.f32.mrf.mxu0
    %v3607 = vadd.f32 %v3558, %v3606
    %v3608 = vpop.f32.mrf.mxu0
    %v3609 = vadd.f32 %v3560, %v3608
    %3610 = vmatmul.bf16.gmra.mxu0 %v373
    %v3611 = vpop.f32.mrf.mxu0
    %v3612 = vadd.f32 %v3563, %v3611
    %v3613 = vpop.f32.mrf.mxu0
    %v3614 = vadd.f32 %v3565, %v3613
    %3615 = vdwg.mxu0
    %3616 = vmatpush.bf16.msra.mxu0 %v2693
    %3617 = vmatpush.bf16.msra.mxu0 %v2685
    %3618 = vmatpush.bf16.msra.mxu0 %v2677
    %3619 = vmatpush.bf16.msra.mxu0 %v2669
    %3620 = vmatpush.bf16.msra.mxu0 %v2661
    %3621 = vmatpush.bf16.msra.mxu0 %v2653
    %3622 = vmatpush.bf16.msra.mxu0 %v2645
    %3623 = vmatpush.bf16.msra.mxu0 %v2637
    %3624 = vmatmul.bf16.gmra.mxu0 %v318
    %v3625 = vpop.f32.mrf.mxu0
    %v3626 = vadd.f32 %v3577, %v3625
    %v3627 = vpop.f32.mrf.mxu0
    %v3628 = vadd.f32 %v3579, %v3627
    %3629 = vmatmul.bf16.gmra.mxu0 %v326
    %v3630 = vpop.f32.mrf.mxu0
    %v3631 = vadd.f32 %v3582, %v3630
    %v3632 = vpop.f32.mrf.mxu0
    %v3633 = vadd.f32 %v3584, %v3632
    %3634 = vmatmul.bf16.gmra.mxu0 %v334
    %v3635 = vpop.f32.mrf.mxu0
    %v3636 = vadd.f32 %v3587, %v3635
    %v3637 = vpop.f32.mrf.mxu0
    %v3638 = vadd.f32 %v3589, %v3637
    %3639 = vmatmul.bf16.gmra.mxu0 %v342
    %v3640 = vpop.f32.mrf.mxu0
    %v3641 = vadd.f32 %v3592, %v3640
    %v3642 = vpop.f32.mrf.mxu0
    %v3643 = vadd.f32 %v3594, %v3642
    %3644 = vmatmul.bf16.gmra.mxu0 %v350
    %v3645 = vpop.f32.mrf.mxu0
    %v3646 = vadd.f32 %v3597, %v3645
    %v3647 = vpop.f32.mrf.mxu0
    %v3648 = vadd.f32 %v3599, %v3647
    %3649 = vmatmul.bf16.gmra.mxu0 %v358
    %v3650 = vpop.f32.mrf.mxu0
    %v3651 = vadd.f32 %v3602, %v3650
    %v3652 = vpop.f32.mrf.mxu0
    %v3653 = vadd.f32 %v3604, %v3652
    %3654 = vmatmul.bf16.gmra.mxu0 %v366
    %v3655 = vpop.f32.mrf.mxu0
    %v3656 = vadd.f32 %v3607, %v3655
    %v3657 = vpop.f32.mrf.mxu0
    %v3658 = vadd.f32 %v3609, %v3657
    %3659 = vmatmul.bf16.gmra.mxu0 %v374
    %v3660 = vpop.f32.mrf.mxu0
    %v3661 = vadd.f32 %v3612, %v3660
    %v3662 = vpop.f32.mrf.mxu0
    %v3663 = vadd.f32 %v3614, %v3662
    %3664 = vdwg.mxu0
    %3665 = vmatpush.bf16.msra.mxu0 %v2757
    %3666 = vmatpush.bf16.msra.mxu0 %v2749
    %3667 = vmatpush.bf16.msra.mxu0 %v2741
    %3668 = vmatpush.bf16.msra.mxu0 %v2733
    %3669 = vmatpush.bf16.msra.mxu0 %v2725
    %3670 = vmatpush.bf16.msra.mxu0 %v2717
    %3671 = vmatpush.bf16.msra.mxu0 %v2709
    %3672 = vmatpush.bf16.msra.mxu0 %v2701
    %3673 = vmatmul.bf16.gmra.mxu0 %v319
    %v3674 = vpop.f32.mrf.mxu0
    %v3675 = vadd.f32 %v3626, %v3674
    %v3676 = vpop.f32.mrf.mxu0
    %v3677 = vadd.f32 %v3628, %v3676
    %3678 = vmatmul.bf16.gmra.mxu0 %v327
    %v3679 = vpop.f32.mrf.mxu0
    %v3680 = vadd.f32 %v3631, %v3679
    %v3681 = vpop.f32.mrf.mxu0
    %v3682 = vadd.f32 %v3633, %v3681
    %3683 = vmatmul.bf16.gmra.mxu0 %v335
    %v3684 = vpop.f32.mrf.mxu0
    %v3685 = vadd.f32 %v3636, %v3684
    %v3686 = vpop.f32.mrf.mxu0
    %v3687 = vadd.f32 %v3638, %v3686
    %3688 = vmatmul.bf16.gmra.mxu0 %v343
    %v3689 = vpop.f32.mrf.mxu0
    %v3690 = vadd.f32 %v3641, %v3689
    %v3691 = vpop.f32.mrf.mxu0
    %v3692 = vadd.f32 %v3643, %v3691
    %3693 = vmatmul.bf16.gmra.mxu0 %v351
    %v3694 = vpop.f32.mrf.mxu0
    %v3695 = vadd.f32 %v3646, %v3694
    %v3696 = vpop.f32.mrf.mxu0
    %v3697 = vadd.f32 %v3648, %v3696
    %3698 = vmatmul.bf16.gmra.mxu0 %v359
    %v3699 = vpop.f32.mrf.mxu0
    %v3700 = vadd.f32 %v3651, %v3699
    %v3701 = vpop.f32.mrf.mxu0
    %v3702 = vadd.f32 %v3653, %v3701
    %3703 = vmatmul.bf16.gmra.mxu0 %v367
    %v3704 = vpop.f32.mrf.mxu0
    %v3705 = vadd.f32 %v3656, %v3704
    %v3706 = vpop.f32.mrf.mxu0
    %v3707 = vadd.f32 %v3658, %v3706
    %3708 = vmatmul.bf16.gmra.mxu0 %v375
    %v3709 = vpop.f32.mrf.mxu0
    %v3710 = vadd.f32 %v3661, %v3709
    %v3711 = vpop.f32.mrf.mxu0
    %v3712 = vadd.f32 %v3663, %v3711
    %3713 = vdwg.mxu0
    %3714 = vmatpush.bf16.msra.mxu0 %v2821
    %3715 = vmatpush.bf16.msra.mxu0 %v2813
    %3716 = vmatpush.bf16.msra.mxu0 %v2805
    %3717 = vmatpush.bf16.msra.mxu0 %v2797
    %3718 = vmatpush.bf16.msra.mxu0 %v2789
    %3719 = vmatpush.bf16.msra.mxu0 %v2781
    %3720 = vmatpush.bf16.msra.mxu0 %v2773
    %3721 = vmatpush.bf16.msra.mxu0 %v2765
    %3722 = vmatmul.bf16.gmra.mxu0 %v320
    %v3723 = vpop.f32.mrf.mxu0
    %v3724 = vadd.f32 %v3675, %v3723
    %v3725 = vpop.f32.mrf.mxu0
    %v3726 = vadd.f32 %v3677, %v3725
    %3727 = vmatmul.bf16.gmra.mxu0 %v328
    %v3728 = vpop.f32.mrf.mxu0
    %v3729 = vadd.f32 %v3680, %v3728
    %v3730 = vpop.f32.mrf.mxu0
    %v3731 = vadd.f32 %v3682, %v3730
    %3732 = vmatmul.bf16.gmra.mxu0 %v336
    %v3733 = vpop.f32.mrf.mxu0
    %v3734 = vadd.f32 %v3685, %v3733
    %v3735 = vpop.f32.mrf.mxu0
    %v3736 = vadd.f32 %v3687, %v3735
    %3737 = vmatmul.bf16.gmra.mxu0 %v344
    %v3738 = vpop.f32.mrf.mxu0
    %v3739 = vadd.f32 %v3690, %v3738
    %v3740 = vpop.f32.mrf.mxu0
    %v3741 = vadd.f32 %v3692, %v3740
    %3742 = vmatmul.bf16.gmra.mxu0 %v352
    %v3743 = vpop.f32.mrf.mxu0
    %v3744 = vadd.f32 %v3695, %v3743
    %v3745 = vpop.f32.mrf.mxu0
    %v3746 = vadd.f32 %v3697, %v3745
    %3747 = vmatmul.bf16.gmra.mxu0 %v360
    %v3748 = vpop.f32.mrf.mxu0
    %v3749 = vadd.f32 %v3700, %v3748
    %v3750 = vpop.f32.mrf.mxu0
    %v3751 = vadd.f32 %v3702, %v3750
    %3752 = vmatmul.bf16.gmra.mxu0 %v368
    %v3753 = vpop.f32.mrf.mxu0
    %v3754 = vadd.f32 %v3705, %v3753
    %v3755 = vpop.f32.mrf.mxu0
    %v3756 = vadd.f32 %v3707, %v3755
    %3757 = vmatmul.bf16.gmra.mxu0 %v376
    %v3758 = vpop.f32.mrf.mxu0
    %v3759 = vadd.f32 %v3710, %v3758
    %v3760 = vpop.f32.mrf.mxu0
    %v3761 = vadd.f32 %v3712, %v3760
    %3762 = vdwg.mxu0
    %3763 = vmatpush.bf16.msra.mxu0 %v2885
    %3764 = vmatpush.bf16.msra.mxu0 %v2877
    %3765 = vmatpush.bf16.msra.mxu0 %v2869
    %3766 = vmatpush.bf16.msra.mxu0 %v2861
    %3767 = vmatpush.bf16.msra.mxu0 %v2853
    %3768 = vmatpush.bf16.msra.mxu0 %v2845
    %3769 = vmatpush.bf16.msra.mxu0 %v2837
    %3770 = vmatpush.bf16.msra.mxu0 %v2829
    %3771 = vmatmul.bf16.gmra.mxu0 %v321
    %v3772 = vpop.f32.mrf.mxu0
    %v3773 = vadd.f32 %v3724, %v3772
    %v3774 = vpop.f32.mrf.mxu0
    %v3775 = vadd.f32 %v3726, %v3774
    %3776 = vmatmul.bf16.gmra.mxu0 %v329
    %v3777 = vpop.f32.mrf.mxu0
    %v3778 = vadd.f32 %v3729, %v3777
    %v3779 = vpop.f32.mrf.mxu0
    %v3780 = vadd.f32 %v3731, %v3779
    %3781 = vmatmul.bf16.gmra.mxu0 %v337
    %v3782 = vpop.f32.mrf.mxu0
    %v3783 = vadd.f32 %v3734, %v3782
    %v3784 = vpop.f32.mrf.mxu0
    %v3785 = vadd.f32 %v3736, %v3784
    %3786 = vmatmul.bf16.gmra.mxu0 %v345
    %v3787 = vpop.f32.mrf.mxu0
    %v3788 = vadd.f32 %v3739, %v3787
    %v3789 = vpop.f32.mrf.mxu0
    %v3790 = vadd.f32 %v3741, %v3789
    %3791 = vmatmul.bf16.gmra.mxu0 %v353
    %v3792 = vpop.f32.mrf.mxu0
    %v3793 = vadd.f32 %v3744, %v3792
    %v3794 = vpop.f32.mrf.mxu0
    %v3795 = vadd.f32 %v3746, %v3794
    %3796 = vmatmul.bf16.gmra.mxu0 %v361
    %v3797 = vpop.f32.mrf.mxu0
    %v3798 = vadd.f32 %v3749, %v3797
    %v3799 = vpop.f32.mrf.mxu0
    %v3800 = vadd.f32 %v3751, %v3799
    %3801 = vmatmul.bf16.gmra.mxu0 %v369
    %v3802 = vpop.f32.mrf.mxu0
    %v3803 = vadd.f32 %v3754, %v3802
    %v3804 = vpop.f32.mrf.mxu0
    %v3805 = vadd.f32 %v3756, %v3804
    %3806 = vmatmul.bf16.gmra.mxu0 %v377
    %v3807 = vpop.f32.mrf.mxu0
    %v3808 = vadd.f32 %v3759, %v3807
    %v3809 = vpop.f32.mrf.mxu0
    %v3810 = vadd.f32 %v3761, %v3809
    %3811 = vdwg.mxu0
    %3812 = vmatpush.bf16.msra.mxu0 %v2949
    %3813 = vmatpush.bf16.msra.mxu0 %v2941
    %3814 = vmatpush.bf16.msra.mxu0 %v2933
    %3815 = vmatpush.bf16.msra.mxu0 %v2925
    %3816 = vmatpush.bf16.msra.mxu0 %v2917
    %3817 = vmatpush.bf16.msra.mxu0 %v2909
    %3818 = vmatpush.bf16.msra.mxu0 %v2901
    %3819 = vmatpush.bf16.msra.mxu0 %v2893
    %3820 = vmatmul.bf16.gmra.mxu0 %v322
    %v3821 = vpop.f32.mrf.mxu0
    %v3822 = vadd.f32 %v3773, %v3821
    %v3823 = vpop.f32.mrf.mxu0
    %v3824 = vadd.f32 %v3775, %v3823
    %3825 = vmatmul.bf16.gmra.mxu0 %v330
    %v3826 = vpop.f32.mrf.mxu0
    %v3827 = vadd.f32 %v3778, %v3826
    %v3828 = vpop.f32.mrf.mxu0
    %v3829 = vadd.f32 %v3780, %v3828
    %3830 = vmatmul.bf16.gmra.mxu0 %v338
    %v3831 = vpop.f32.mrf.mxu0
    %v3832 = vadd.f32 %v3783, %v3831
    %v3833 = vpop.f32.mrf.mxu0
    %v3834 = vadd.f32 %v3785, %v3833
    %3835 = vmatmul.bf16.gmra.mxu0 %v346
    %v3836 = vpop.f32.mrf.mxu0
    %v3837 = vadd.f32 %v3788, %v3836
    %v3838 = vpop.f32.mrf.mxu0
    %v3839 = vadd.f32 %v3790, %v3838
    %3840 = vmatmul.bf16.gmra.mxu0 %v354
    %v3841 = vpop.f32.mrf.mxu0
    %v3842 = vadd.f32 %v3793, %v3841
    %v3843 = vpop.f32.mrf.mxu0
    %v3844 = vadd.f32 %v3795, %v3843
    %3845 = vmatmul.bf16.gmra.mxu0 %v362
    %v3846 = vpop.f32.mrf.mxu0
    %v3847 = vadd.f32 %v3798, %v3846
    %v3848 = vpop.f32.mrf.mxu0
    %v3849 = vadd.f32 %v3800, %v3848
    %3850 = vmatmul.bf16.gmra.mxu0 %v370
    %v3851 = vpop.f32.mrf.mxu0
    %v3852 = vadd.f32 %v3803, %v3851
    %v3853 = vpop.f32.mrf.mxu0
    %v3854 = vadd.f32 %v3805, %v3853
    %3855 = vmatmul.bf16.gmra.mxu0 %v378
    %v3856 = vpop.f32.mrf.mxu0
    %v3857 = vadd.f32 %v3808, %v3856
    %v3858 = vpop.f32.mrf.mxu0
    %v3859 = vadd.f32 %v3810, %v3858
    %3860 = vdwg.mxu0
    %3861 = vmatpush.bf16.msra.mxu0 %v2502
    %3862 = vmatpush.bf16.msra.mxu0 %v2494
    %3863 = vmatpush.bf16.msra.mxu0 %v2486
    %3864 = vmatpush.bf16.msra.mxu0 %v2478
    %3865 = vmatpush.bf16.msra.mxu0 %v2470
    %3866 = vmatpush.bf16.msra.mxu0 %v2462
    %3867 = vmatpush.bf16.msra.mxu0 %v2454
    %3868 = vmatpush.bf16.msra.mxu0 %v2446
    %3869 = vmatmul.bf16.gmra.mxu0 %v315
    %v3870 = vpop.f32.mrf.mxu0
    %v3871 = vadd.f32 %v894, %v3870
    %v3872 = vpop.f32.mrf.mxu0
    %v3873 = vadd.f32 %v894, %v3872
    %3874 = vmatmul.bf16.gmra.mxu0 %v323
    %v3875 = vpop.f32.mrf.mxu0
    %v3876 = vadd.f32 %v894, %v3875
    %v3877 = vpop.f32.mrf.mxu0
    %v3878 = vadd.f32 %v894, %v3877
    %3879 = vmatmul.bf16.gmra.mxu0 %v331
    %v3880 = vpop.f32.mrf.mxu0
    %v3881 = vadd.f32 %v894, %v3880
    %v3882 = vpop.f32.mrf.mxu0
    %v3883 = vadd.f32 %v894, %v3882
    %3884 = vmatmul.bf16.gmra.mxu0 %v339
    %v3885 = vpop.f32.mrf.mxu0
    %v3886 = vadd.f32 %v894, %v3885
    %v3887 = vpop.f32.mrf.mxu0
    %v3888 = vadd.f32 %v894, %v3887
    %3889 = vmatmul.bf16.gmra.mxu0 %v347
    %v3890 = vpop.f32.mrf.mxu0
    %v3891 = vadd.f32 %v894, %v3890
    %v3892 = vpop.f32.mrf.mxu0
    %v3893 = vadd.f32 %v894, %v3892
    %3894 = vmatmul.bf16.gmra.mxu0 %v355
    %v3895 = vpop.f32.mrf.mxu0
    %v3896 = vadd.f32 %v894, %v3895
    %v3897 = vpop.f32.mrf.mxu0
    %v3898 = vadd.f32 %v894, %v3897
    %3899 = vmatmul.bf16.gmra.mxu0 %v363
    %v3900 = vpop.f32.mrf.mxu0
    %v3901 = vadd.f32 %v894, %v3900
    %v3902 = vpop.f32.mrf.mxu0
    %v3903 = vadd.f32 %v894, %v3902
    %3904 = vmatmul.bf16.gmra.mxu0 %v371
    %v3905 = vpop.f32.mrf.mxu0
    %v3906 = vadd.f32 %v894, %v3905
    %v3907 = vpop.f32.mrf.mxu0
    %v3908 = vadd.f32 %v894, %v3907
    %3909 = vdwg.mxu0
    %3910 = vmatpush.bf16.msra.mxu0 %v2566
    %3911 = vmatpush.bf16.msra.mxu0 %v2558
    %3912 = vmatpush.bf16.msra.mxu0 %v2550
    %3913 = vmatpush.bf16.msra.mxu0 %v2542
    %3914 = vmatpush.bf16.msra.mxu0 %v2534
    %3915 = vmatpush.bf16.msra.mxu0 %v2526
    %3916 = vmatpush.bf16.msra.mxu0 %v2518
    %3917 = vmatpush.bf16.msra.mxu0 %v2510
    %3918 = vmatmul.bf16.gmra.mxu0 %v316
    %v3919 = vpop.f32.mrf.mxu0
    %v3920 = vadd.f32 %v3871, %v3919
    %v3921 = vpop.f32.mrf.mxu0
    %v3922 = vadd.f32 %v3873, %v3921
    %3923 = vmatmul.bf16.gmra.mxu0 %v324
    %v3924 = vpop.f32.mrf.mxu0
    %v3925 = vadd.f32 %v3876, %v3924
    %v3926 = vpop.f32.mrf.mxu0
    %v3927 = vadd.f32 %v3878, %v3926
    %3928 = vmatmul.bf16.gmra.mxu0 %v332
    %v3929 = vpop.f32.mrf.mxu0
    %v3930 = vadd.f32 %v3881, %v3929
    %v3931 = vpop.f32.mrf.mxu0
    %v3932 = vadd.f32 %v3883, %v3931
    %3933 = vmatmul.bf16.gmra.mxu0 %v340
    %v3934 = vpop.f32.mrf.mxu0
    %v3935 = vadd.f32 %v3886, %v3934
    %v3936 = vpop.f32.mrf.mxu0
    %v3937 = vadd.f32 %v3888, %v3936
    %3938 = vmatmul.bf16.gmra.mxu0 %v348
    %v3939 = vpop.f32.mrf.mxu0
    %v3940 = vadd.f32 %v3891, %v3939
    %v3941 = vpop.f32.mrf.mxu0
    %v3942 = vadd.f32 %v3893, %v3941
    %3943 = vmatmul.bf16.gmra.mxu0 %v356
    %v3944 = vpop.f32.mrf.mxu0
    %v3945 = vadd.f32 %v3896, %v3944
    %v3946 = vpop.f32.mrf.mxu0
    %v3947 = vadd.f32 %v3898, %v3946
    %3948 = vmatmul.bf16.gmra.mxu0 %v364
    %v3949 = vpop.f32.mrf.mxu0
    %v3950 = vadd.f32 %v3901, %v3949
    %v3951 = vpop.f32.mrf.mxu0
    %v3952 = vadd.f32 %v3903, %v3951
    %3953 = vmatmul.bf16.gmra.mxu0 %v372
    %v3954 = vpop.f32.mrf.mxu0
    %v3955 = vadd.f32 %v3906, %v3954
    %v3956 = vpop.f32.mrf.mxu0
    %v3957 = vadd.f32 %v3908, %v3956
    %3958 = vdwg.mxu0
    %3959 = vmatpush.bf16.msra.mxu0 %v2630
    %3960 = vmatpush.bf16.msra.mxu0 %v2622
    %3961 = vmatpush.bf16.msra.mxu0 %v2614
    %3962 = vmatpush.bf16.msra.mxu0 %v2606
    %3963 = vmatpush.bf16.msra.mxu0 %v2598
    %3964 = vmatpush.bf16.msra.mxu0 %v2590
    %3965 = vmatpush.bf16.msra.mxu0 %v2582
    %3966 = vmatpush.bf16.msra.mxu0 %v2574
    %3967 = vmatmul.bf16.gmra.mxu0 %v317
    %v3968 = vpop.f32.mrf.mxu0
    %v3969 = vadd.f32 %v3920, %v3968
    %v3970 = vpop.f32.mrf.mxu0
    %v3971 = vadd.f32 %v3922, %v3970
    %3972 = vmatmul.bf16.gmra.mxu0 %v325
    %v3973 = vpop.f32.mrf.mxu0
    %v3974 = vadd.f32 %v3925, %v3973
    %v3975 = vpop.f32.mrf.mxu0
    %v3976 = vadd.f32 %v3927, %v3975
    %3977 = vmatmul.bf16.gmra.mxu0 %v333
    %v3978 = vpop.f32.mrf.mxu0
    %v3979 = vadd.f32 %v3930, %v3978
    %v3980 = vpop.f32.mrf.mxu0
    %v3981 = vadd.f32 %v3932, %v3980
    %3982 = vmatmul.bf16.gmra.mxu0 %v341
    %v3983 = vpop.f32.mrf.mxu0
    %v3984 = vadd.f32 %v3935, %v3983
    %v3985 = vpop.f32.mrf.mxu0
    %v3986 = vadd.f32 %v3937, %v3985
    %3987 = vmatmul.bf16.gmra.mxu0 %v349
    %v3988 = vpop.f32.mrf.mxu0
    %v3989 = vadd.f32 %v3940, %v3988
    %v3990 = vpop.f32.mrf.mxu0
    %v3991 = vadd.f32 %v3942, %v3990
    %3992 = vmatmul.bf16.gmra.mxu0 %v357
    %v3993 = vpop.f32.mrf.mxu0
    %v3994 = vadd.f32 %v3945, %v3993
    %v3995 = vpop.f32.mrf.mxu0
    %v3996 = vadd.f32 %v3947, %v3995
    %3997 = vmatmul.bf16.gmra.mxu0 %v365
    %v3998 = vpop.f32.mrf.mxu0
    %v3999 = vadd.f32 %v3950, %v3998
    %v4000 = vpop.f32.mrf.mxu0
    %v4001 = vadd.f32 %v3952, %v4000
    %4002 = vmatmul.bf16.gmra.mxu0 %v373
    %v4003 = vpop.f32.mrf.mxu0
    %v4004 = vadd.f32 %v3955, %v4003
    %v4005 = vpop.f32.mrf.mxu0
    %v4006 = vadd.f32 %v3957, %v4005
    %4007 = vdwg.mxu0
    %4008 = vmatpush.bf16.msra.mxu0 %v2694
    %4009 = vmatpush.bf16.msra.mxu0 %v2686
    %4010 = vmatpush.bf16.msra.mxu0 %v2678
    %4011 = vmatpush.bf16.msra.mxu0 %v2670
    %4012 = vmatpush.bf16.msra.mxu0 %v2662
    %4013 = vmatpush.bf16.msra.mxu0 %v2654
    %4014 = vmatpush.bf16.msra.mxu0 %v2646
    %4015 = vmatpush.bf16.msra.mxu0 %v2638
    %4016 = vmatmul.bf16.gmra.mxu0 %v318
    %v4017 = vpop.f32.mrf.mxu0
    %v4018 = vadd.f32 %v3969, %v4017
    %v4019 = vpop.f32.mrf.mxu0
    %v4020 = vadd.f32 %v3971, %v4019
    %4021 = vmatmul.bf16.gmra.mxu0 %v326
    %v4022 = vpop.f32.mrf.mxu0
    %v4023 = vadd.f32 %v3974, %v4022
    %v4024 = vpop.f32.mrf.mxu0
    %v4025 = vadd.f32 %v3976, %v4024
    %4026 = vmatmul.bf16.gmra.mxu0 %v334
    %v4027 = vpop.f32.mrf.mxu0
    %v4028 = vadd.f32 %v3979, %v4027
    %v4029 = vpop.f32.mrf.mxu0
    %v4030 = vadd.f32 %v3981, %v4029
    %4031 = vmatmul.bf16.gmra.mxu0 %v342
    %v4032 = vpop.f32.mrf.mxu0
    %v4033 = vadd.f32 %v3984, %v4032
    %v4034 = vpop.f32.mrf.mxu0
    %v4035 = vadd.f32 %v3986, %v4034
    %4036 = vmatmul.bf16.gmra.mxu0 %v350
    %v4037 = vpop.f32.mrf.mxu0
    %v4038 = vadd.f32 %v3989, %v4037
    %v4039 = vpop.f32.mrf.mxu0
    %v4040 = vadd.f32 %v3991, %v4039
    %4041 = vmatmul.bf16.gmra.mxu0 %v358
    %v4042 = vpop.f32.mrf.mxu0
    %v4043 = vadd.f32 %v3994, %v4042
    %v4044 = vpop.f32.mrf.mxu0
    %v4045 = vadd.f32 %v3996, %v4044
    %4046 = vmatmul.bf16.gmra.mxu0 %v366
    %v4047 = vpop.f32.mrf.mxu0
    %v4048 = vadd.f32 %v3999, %v4047
    %v4049 = vpop.f32.mrf.mxu0
    %v4050 = vadd.f32 %v4001, %v4049
    %4051 = vmatmul.bf16.gmra.mxu0 %v374
    %v4052 = vpop.f32.mrf.mxu0
    %v4053 = vadd.f32 %v4004, %v4052
    %v4054 = vpop.f32.mrf.mxu0
    %v4055 = vadd.f32 %v4006, %v4054
    %4056 = vdwg.mxu0
    %4057 = vmatpush.bf16.msra.mxu0 %v2758
    %4058 = vmatpush.bf16.msra.mxu0 %v2750
    %4059 = vmatpush.bf16.msra.mxu0 %v2742
    %4060 = vmatpush.bf16.msra.mxu0 %v2734
    %4061 = vmatpush.bf16.msra.mxu0 %v2726
    %4062 = vmatpush.bf16.msra.mxu0 %v2718
    %4063 = vmatpush.bf16.msra.mxu0 %v2710
    %4064 = vmatpush.bf16.msra.mxu0 %v2702
    %4065 = vmatmul.bf16.gmra.mxu0 %v319
    %v4066 = vpop.f32.mrf.mxu0
    %v4067 = vadd.f32 %v4018, %v4066
    %v4068 = vpop.f32.mrf.mxu0
    %v4069 = vadd.f32 %v4020, %v4068
    %4070 = vmatmul.bf16.gmra.mxu0 %v327
    %v4071 = vpop.f32.mrf.mxu0
    %v4072 = vadd.f32 %v4023, %v4071
    %v4073 = vpop.f32.mrf.mxu0
    %v4074 = vadd.f32 %v4025, %v4073
    %4075 = vmatmul.bf16.gmra.mxu0 %v335
    %v4076 = vpop.f32.mrf.mxu0
    %v4077 = vadd.f32 %v4028, %v4076
    %v4078 = vpop.f32.mrf.mxu0
    %v4079 = vadd.f32 %v4030, %v4078
    %4080 = vmatmul.bf16.gmra.mxu0 %v343
    %v4081 = vpop.f32.mrf.mxu0
    %v4082 = vadd.f32 %v4033, %v4081
    %v4083 = vpop.f32.mrf.mxu0
    %v4084 = vadd.f32 %v4035, %v4083
    %4085 = vmatmul.bf16.gmra.mxu0 %v351
    %v4086 = vpop.f32.mrf.mxu0
    %v4087 = vadd.f32 %v4038, %v4086
    %v4088 = vpop.f32.mrf.mxu0
    %v4089 = vadd.f32 %v4040, %v4088
    %4090 = vmatmul.bf16.gmra.mxu0 %v359
    %v4091 = vpop.f32.mrf.mxu0
    %v4092 = vadd.f32 %v4043, %v4091
    %v4093 = vpop.f32.mrf.mxu0
    %v4094 = vadd.f32 %v4045, %v4093
    %4095 = vmatmul.bf16.gmra.mxu0 %v367
    %v4096 = vpop.f32.mrf.mxu0
    %v4097 = vadd.f32 %v4048, %v4096
    %v4098 = vpop.f32.mrf.mxu0
    %v4099 = vadd.f32 %v4050, %v4098
    %4100 = vmatmul.bf16.gmra.mxu0 %v375
    %v4101 = vpop.f32.mrf.mxu0
    %v4102 = vadd.f32 %v4053, %v4101
    %v4103 = vpop.f32.mrf.mxu0
    %v4104 = vadd.f32 %v4055, %v4103
    %4105 = vdwg.mxu0
    %4106 = vmatpush.bf16.msra.mxu0 %v2822
    %4107 = vmatpush.bf16.msra.mxu0 %v2814
    %4108 = vmatpush.bf16.msra.mxu0 %v2806
    %4109 = vmatpush.bf16.msra.mxu0 %v2798
    %4110 = vmatpush.bf16.msra.mxu0 %v2790
    %4111 = vmatpush.bf16.msra.mxu0 %v2782
    %4112 = vmatpush.bf16.msra.mxu0 %v2774
    %4113 = vmatpush.bf16.msra.mxu0 %v2766
    %4114 = vmatmul.bf16.gmra.mxu0 %v320
    %v4115 = vpop.f32.mrf.mxu0
    %v4116 = vadd.f32 %v4067, %v4115
    %v4117 = vpop.f32.mrf.mxu0
    %v4118 = vadd.f32 %v4069, %v4117
    %4119 = vmatmul.bf16.gmra.mxu0 %v328
    %v4120 = vpop.f32.mrf.mxu0
    %v4121 = vadd.f32 %v4072, %v4120
    %v4122 = vpop.f32.mrf.mxu0
    %v4123 = vadd.f32 %v4074, %v4122
    %4124 = vmatmul.bf16.gmra.mxu0 %v336
    %v4125 = vpop.f32.mrf.mxu0
    %v4126 = vadd.f32 %v4077, %v4125
    %v4127 = vpop.f32.mrf.mxu0
    %v4128 = vadd.f32 %v4079, %v4127
    %4129 = vmatmul.bf16.gmra.mxu0 %v344
    %v4130 = vpop.f32.mrf.mxu0
    %v4131 = vadd.f32 %v4082, %v4130
    %v4132 = vpop.f32.mrf.mxu0
    %v4133 = vadd.f32 %v4084, %v4132
    %4134 = vmatmul.bf16.gmra.mxu0 %v352
    %v4135 = vpop.f32.mrf.mxu0
    %v4136 = vadd.f32 %v4087, %v4135
    %v4137 = vpop.f32.mrf.mxu0
    %v4138 = vadd.f32 %v4089, %v4137
    %4139 = vmatmul.bf16.gmra.mxu0 %v360
    %v4140 = vpop.f32.mrf.mxu0
    %v4141 = vadd.f32 %v4092, %v4140
    %v4142 = vpop.f32.mrf.mxu0
    %v4143 = vadd.f32 %v4094, %v4142
    %4144 = vmatmul.bf16.gmra.mxu0 %v368
    %v4145 = vpop.f32.mrf.mxu0
    %v4146 = vadd.f32 %v4097, %v4145
    %v4147 = vpop.f32.mrf.mxu0
    %v4148 = vadd.f32 %v4099, %v4147
    %4149 = vmatmul.bf16.gmra.mxu0 %v376
    %v4150 = vpop.f32.mrf.mxu0
    %v4151 = vadd.f32 %v4102, %v4150
    %v4152 = vpop.f32.mrf.mxu0
    %v4153 = vadd.f32 %v4104, %v4152
    %4154 = vdwg.mxu0
    %4155 = vmatpush.bf16.msra.mxu0 %v2886
    %4156 = vmatpush.bf16.msra.mxu0 %v2878
    %4157 = vmatpush.bf16.msra.mxu0 %v2870
    %4158 = vmatpush.bf16.msra.mxu0 %v2862
    %4159 = vmatpush.bf16.msra.mxu0 %v2854
    %4160 = vmatpush.bf16.msra.mxu0 %v2846
    %4161 = vmatpush.bf16.msra.mxu0 %v2838
    %4162 = vmatpush.bf16.msra.mxu0 %v2830
    %4163 = vmatmul.bf16.gmra.mxu0 %v321
    %v4164 = vpop.f32.mrf.mxu0
    %v4165 = vadd.f32 %v4116, %v4164
    %v4166 = vpop.f32.mrf.mxu0
    %v4167 = vadd.f32 %v4118, %v4166
    %4168 = vmatmul.bf16.gmra.mxu0 %v329
    %v4169 = vpop.f32.mrf.mxu0
    %v4170 = vadd.f32 %v4121, %v4169
    %v4171 = vpop.f32.mrf.mxu0
    %v4172 = vadd.f32 %v4123, %v4171
    %4173 = vmatmul.bf16.gmra.mxu0 %v337
    %v4174 = vpop.f32.mrf.mxu0
    %v4175 = vadd.f32 %v4126, %v4174
    %v4176 = vpop.f32.mrf.mxu0
    %v4177 = vadd.f32 %v4128, %v4176
    %4178 = vmatmul.bf16.gmra.mxu0 %v345
    %v4179 = vpop.f32.mrf.mxu0
    %v4180 = vadd.f32 %v4131, %v4179
    %v4181 = vpop.f32.mrf.mxu0
    %v4182 = vadd.f32 %v4133, %v4181
    %4183 = vmatmul.bf16.gmra.mxu0 %v353
    %v4184 = vpop.f32.mrf.mxu0
    %v4185 = vadd.f32 %v4136, %v4184
    %v4186 = vpop.f32.mrf.mxu0
    %v4187 = vadd.f32 %v4138, %v4186
    %4188 = vmatmul.bf16.gmra.mxu0 %v361
    %v4189 = vpop.f32.mrf.mxu0
    %v4190 = vadd.f32 %v4141, %v4189
    %v4191 = vpop.f32.mrf.mxu0
    %v4192 = vadd.f32 %v4143, %v4191
    %4193 = vmatmul.bf16.gmra.mxu0 %v369
    %v4194 = vpop.f32.mrf.mxu0
    %v4195 = vadd.f32 %v4146, %v4194
    %v4196 = vpop.f32.mrf.mxu0
    %v4197 = vadd.f32 %v4148, %v4196
    %4198 = vmatmul.bf16.gmra.mxu0 %v377
    %v4199 = vpop.f32.mrf.mxu0
    %v4200 = vadd.f32 %v4151, %v4199
    %v4201 = vpop.f32.mrf.mxu0
    %v4202 = vadd.f32 %v4153, %v4201
    %4203 = vdwg.mxu0
    %4204 = vmatpush.bf16.msra.mxu0 %v2950
    %4205 = vmatpush.bf16.msra.mxu0 %v2942
    %4206 = vmatpush.bf16.msra.mxu0 %v2934
    %4207 = vmatpush.bf16.msra.mxu0 %v2926
    %4208 = vmatpush.bf16.msra.mxu0 %v2918
    %4209 = vmatpush.bf16.msra.mxu0 %v2910
    %4210 = vmatpush.bf16.msra.mxu0 %v2902
    %4211 = vmatpush.bf16.msra.mxu0 %v2894
    %4212 = vmatmul.bf16.gmra.mxu0 %v322
    %v4213 = vpop.f32.mrf.mxu0
    %v4214 = vadd.f32 %v4165, %v4213
    %v4215 = vpop.f32.mrf.mxu0
    %v4216 = vadd.f32 %v4167, %v4215
    %4217 = vmatmul.bf16.gmra.mxu0 %v330
    %v4218 = vpop.f32.mrf.mxu0
    %v4219 = vadd.f32 %v4170, %v4218
    %v4220 = vpop.f32.mrf.mxu0
    %v4221 = vadd.f32 %v4172, %v4220
    %4222 = vmatmul.bf16.gmra.mxu0 %v338
    %v4223 = vpop.f32.mrf.mxu0
    %v4224 = vadd.f32 %v4175, %v4223
    %v4225 = vpop.f32.mrf.mxu0
    %v4226 = vadd.f32 %v4177, %v4225
    %4227 = vmatmul.bf16.gmra.mxu0 %v346
    %v4228 = vpop.f32.mrf.mxu0
    %v4229 = vadd.f32 %v4180, %v4228
    %v4230 = vpop.f32.mrf.mxu0
    %v4231 = vadd.f32 %v4182, %v4230
    %4232 = vmatmul.bf16.gmra.mxu0 %v354
    %v4233 = vpop.f32.mrf.mxu0
    %v4234 = vadd.f32 %v4185, %v4233
    %v4235 = vpop.f32.mrf.mxu0
    %v4236 = vadd.f32 %v4187, %v4235
    %4237 = vmatmul.bf16.gmra.mxu0 %v362
    %v4238 = vpop.f32.mrf.mxu0
    %v4239 = vadd.f32 %v4190, %v4238
    %v4240 = vpop.f32.mrf.mxu0
    %v4241 = vadd.f32 %v4192, %v4240
    %4242 = vmatmul.bf16.gmra.mxu0 %v370
    %v4243 = vpop.f32.mrf.mxu0
    %v4244 = vadd.f32 %v4195, %v4243
    %v4245 = vpop.f32.mrf.mxu0
    %v4246 = vadd.f32 %v4197, %v4245
    %4247 = vmatmul.bf16.gmra.mxu0 %v378
    %v4248 = vpop.f32.mrf.mxu0
    %v4249 = vadd.f32 %v4200, %v4248
    %v4250 = vpop.f32.mrf.mxu0
    %v4251 = vadd.f32 %v4202, %v4250
    %4252 = vdwg.mxu0
    %4253 = vmatpush.bf16.msra.mxu0 %v2503
    %4254 = vmatpush.bf16.msra.mxu0 %v2495
    %4255 = vmatpush.bf16.msra.mxu0 %v2487
    %4256 = vmatpush.bf16.msra.mxu0 %v2479
    %4257 = vmatpush.bf16.msra.mxu0 %v2471
    %4258 = vmatpush.bf16.msra.mxu0 %v2463
    %4259 = vmatpush.bf16.msra.mxu0 %v2455
    %4260 = vmatpush.bf16.msra.mxu0 %v2447
    %4261 = vmatmul.bf16.gmra.mxu0 %v315
    %v4262 = vpop.f32.mrf.mxu0
    %v4263 = vadd.f32 %v895, %v4262
    %v4264 = vpop.f32.mrf.mxu0
    %v4265 = vadd.f32 %v895, %v4264
    %4266 = vmatmul.bf16.gmra.mxu0 %v323
    %v4267 = vpop.f32.mrf.mxu0
    %v4268 = vadd.f32 %v895, %v4267
    %v4269 = vpop.f32.mrf.mxu0
    %v4270 = vadd.f32 %v895, %v4269
    %4271 = vmatmul.bf16.gmra.mxu0 %v331
    %v4272 = vpop.f32.mrf.mxu0
    %v4273 = vadd.f32 %v895, %v4272
    %v4274 = vpop.f32.mrf.mxu0
    %v4275 = vadd.f32 %v895, %v4274
    %4276 = vmatmul.bf16.gmra.mxu0 %v339
    %v4277 = vpop.f32.mrf.mxu0
    %v4278 = vadd.f32 %v895, %v4277
    %v4279 = vpop.f32.mrf.mxu0
    %v4280 = vadd.f32 %v895, %v4279
    %4281 = vmatmul.bf16.gmra.mxu0 %v347
    %v4282 = vpop.f32.mrf.mxu0
    %v4283 = vadd.f32 %v895, %v4282
    %v4284 = vpop.f32.mrf.mxu0
    %v4285 = vadd.f32 %v895, %v4284
    %4286 = vmatmul.bf16.gmra.mxu0 %v355
    %v4287 = vpop.f32.mrf.mxu0
    %v4288 = vadd.f32 %v895, %v4287
    %v4289 = vpop.f32.mrf.mxu0
    %v4290 = vadd.f32 %v895, %v4289
    %4291 = vmatmul.bf16.gmra.mxu0 %v363
    %v4292 = vpop.f32.mrf.mxu0
    %v4293 = vadd.f32 %v895, %v4292
    %v4294 = vpop.f32.mrf.mxu0
    %v4295 = vadd.f32 %v895, %v4294
    %4296 = vmatmul.bf16.gmra.mxu0 %v371
    %v4297 = vpop.f32.mrf.mxu0
    %v4298 = vadd.f32 %v895, %v4297
    %v4299 = vpop.f32.mrf.mxu0
    %v4300 = vadd.f32 %v895, %v4299
    %4301 = vdwg.mxu0
    %4302 = vmatpush.bf16.msra.mxu0 %v2567
    %4303 = vmatpush.bf16.msra.mxu0 %v2559
    %4304 = vmatpush.bf16.msra.mxu0 %v2551
    %4305 = vmatpush.bf16.msra.mxu0 %v2543
    %4306 = vmatpush.bf16.msra.mxu0 %v2535
    %4307 = vmatpush.bf16.msra.mxu0 %v2527
    %4308 = vmatpush.bf16.msra.mxu0 %v2519
    %4309 = vmatpush.bf16.msra.mxu0 %v2511
    %4310 = vmatmul.bf16.gmra.mxu0 %v316
    %v4311 = vpop.f32.mrf.mxu0
    %v4312 = vadd.f32 %v4263, %v4311
    %v4313 = vpop.f32.mrf.mxu0
    %v4314 = vadd.f32 %v4265, %v4313
    %4315 = vmatmul.bf16.gmra.mxu0 %v324
    %v4316 = vpop.f32.mrf.mxu0
    %v4317 = vadd.f32 %v4268, %v4316
    %v4318 = vpop.f32.mrf.mxu0
    %v4319 = vadd.f32 %v4270, %v4318
    %4320 = vmatmul.bf16.gmra.mxu0 %v332
    %v4321 = vpop.f32.mrf.mxu0
    %v4322 = vadd.f32 %v4273, %v4321
    %v4323 = vpop.f32.mrf.mxu0
    %v4324 = vadd.f32 %v4275, %v4323
    %4325 = vmatmul.bf16.gmra.mxu0 %v340
    %v4326 = vpop.f32.mrf.mxu0
    %v4327 = vadd.f32 %v4278, %v4326
    %v4328 = vpop.f32.mrf.mxu0
    %v4329 = vadd.f32 %v4280, %v4328
    %4330 = vmatmul.bf16.gmra.mxu0 %v348
    %v4331 = vpop.f32.mrf.mxu0
    %v4332 = vadd.f32 %v4283, %v4331
    %v4333 = vpop.f32.mrf.mxu0
    %v4334 = vadd.f32 %v4285, %v4333
    %4335 = vmatmul.bf16.gmra.mxu0 %v356
    %v4336 = vpop.f32.mrf.mxu0
    %v4337 = vadd.f32 %v4288, %v4336
    %v4338 = vpop.f32.mrf.mxu0
    %v4339 = vadd.f32 %v4290, %v4338
    %4340 = vmatmul.bf16.gmra.mxu0 %v364
    %v4341 = vpop.f32.mrf.mxu0
    %v4342 = vadd.f32 %v4293, %v4341
    %v4343 = vpop.f32.mrf.mxu0
    %v4344 = vadd.f32 %v4295, %v4343
    %4345 = vmatmul.bf16.gmra.mxu0 %v372
    %v4346 = vpop.f32.mrf.mxu0
    %v4347 = vadd.f32 %v4298, %v4346
    %v4348 = vpop.f32.mrf.mxu0
    %v4349 = vadd.f32 %v4300, %v4348
    %4350 = vdwg.mxu0
    %4351 = vmatpush.bf16.msra.mxu0 %v2631
    %4352 = vmatpush.bf16.msra.mxu0 %v2623
    %4353 = vmatpush.bf16.msra.mxu0 %v2615
    %4354 = vmatpush.bf16.msra.mxu0 %v2607
    %4355 = vmatpush.bf16.msra.mxu0 %v2599
    %4356 = vmatpush.bf16.msra.mxu0 %v2591
    %4357 = vmatpush.bf16.msra.mxu0 %v2583
    %4358 = vmatpush.bf16.msra.mxu0 %v2575
    %4359 = vmatmul.bf16.gmra.mxu0 %v317
    %v4360 = vpop.f32.mrf.mxu0
    %v4361 = vadd.f32 %v4312, %v4360
    %v4362 = vpop.f32.mrf.mxu0
    %v4363 = vadd.f32 %v4314, %v4362
    %4364 = vmatmul.bf16.gmra.mxu0 %v325
    %v4365 = vpop.f32.mrf.mxu0
    %v4366 = vadd.f32 %v4317, %v4365
    %v4367 = vpop.f32.mrf.mxu0
    %v4368 = vadd.f32 %v4319, %v4367
    %4369 = vmatmul.bf16.gmra.mxu0 %v333
    %v4370 = vpop.f32.mrf.mxu0
    %v4371 = vadd.f32 %v4322, %v4370
    %v4372 = vpop.f32.mrf.mxu0
    %v4373 = vadd.f32 %v4324, %v4372
    %4374 = vmatmul.bf16.gmra.mxu0 %v341
    %v4375 = vpop.f32.mrf.mxu0
    %v4376 = vadd.f32 %v4327, %v4375
    %v4377 = vpop.f32.mrf.mxu0
    %v4378 = vadd.f32 %v4329, %v4377
    %4379 = vmatmul.bf16.gmra.mxu0 %v349
    %v4380 = vpop.f32.mrf.mxu0
    %v4381 = vadd.f32 %v4332, %v4380
    %v4382 = vpop.f32.mrf.mxu0
    %v4383 = vadd.f32 %v4334, %v4382
    %4384 = vmatmul.bf16.gmra.mxu0 %v357
    %v4385 = vpop.f32.mrf.mxu0
    %v4386 = vadd.f32 %v4337, %v4385
    %v4387 = vpop.f32.mrf.mxu0
    %v4388 = vadd.f32 %v4339, %v4387
    %4389 = vmatmul.bf16.gmra.mxu0 %v365
    %v4390 = vpop.f32.mrf.mxu0
    %v4391 = vadd.f32 %v4342, %v4390
    %v4392 = vpop.f32.mrf.mxu0
    %v4393 = vadd.f32 %v4344, %v4392
    %4394 = vmatmul.bf16.gmra.mxu0 %v373
    %v4395 = vpop.f32.mrf.mxu0
    %v4396 = vadd.f32 %v4347, %v4395
    %v4397 = vpop.f32.mrf.mxu0
    %v4398 = vadd.f32 %v4349, %v4397
    %4399 = vdwg.mxu0
    %4400 = vmatpush.bf16.msra.mxu0 %v2695
    %4401 = vmatpush.bf16.msra.mxu0 %v2687
    %4402 = vmatpush.bf16.msra.mxu0 %v2679
    %4403 = vmatpush.bf16.msra.mxu0 %v2671
    %4404 = vmatpush.bf16.msra.mxu0 %v2663
    %4405 = vmatpush.bf16.msra.mxu0 %v2655
    %4406 = vmatpush.bf16.msra.mxu0 %v2647
    %4407 = vmatpush.bf16.msra.mxu0 %v2639
    %4408 = vmatmul.bf16.gmra.mxu0 %v318
    %v4409 = vpop.f32.mrf.mxu0
    %v4410 = vadd.f32 %v4361, %v4409
    %v4411 = vpop.f32.mrf.mxu0
    %v4412 = vadd.f32 %v4363, %v4411
    %4413 = vmatmul.bf16.gmra.mxu0 %v326
    %v4414 = vpop.f32.mrf.mxu0
    %v4415 = vadd.f32 %v4366, %v4414
    %v4416 = vpop.f32.mrf.mxu0
    %v4417 = vadd.f32 %v4368, %v4416
    %4418 = vmatmul.bf16.gmra.mxu0 %v334
    %v4419 = vpop.f32.mrf.mxu0
    %v4420 = vadd.f32 %v4371, %v4419
    %v4421 = vpop.f32.mrf.mxu0
    %v4422 = vadd.f32 %v4373, %v4421
    %4423 = vmatmul.bf16.gmra.mxu0 %v342
    %v4424 = vpop.f32.mrf.mxu0
    %v4425 = vadd.f32 %v4376, %v4424
    %v4426 = vpop.f32.mrf.mxu0
    %v4427 = vadd.f32 %v4378, %v4426
    %4428 = vmatmul.bf16.gmra.mxu0 %v350
    %v4429 = vpop.f32.mrf.mxu0
    %v4430 = vadd.f32 %v4381, %v4429
    %v4431 = vpop.f32.mrf.mxu0
    %v4432 = vadd.f32 %v4383, %v4431
    %4433 = vmatmul.bf16.gmra.mxu0 %v358
    %v4434 = vpop.f32.mrf.mxu0
    %v4435 = vadd.f32 %v4386, %v4434
    %v4436 = vpop.f32.mrf.mxu0
    %v4437 = vadd.f32 %v4388, %v4436
    %4438 = vmatmul.bf16.gmra.mxu0 %v366
    %v4439 = vpop.f32.mrf.mxu0
    %v4440 = vadd.f32 %v4391, %v4439
    %v4441 = vpop.f32.mrf.mxu0
    %v4442 = vadd.f32 %v4393, %v4441
    %4443 = vmatmul.bf16.gmra.mxu0 %v374
    %v4444 = vpop.f32.mrf.mxu0
    %v4445 = vadd.f32 %v4396, %v4444
    %v4446 = vpop.f32.mrf.mxu0
    %v4447 = vadd.f32 %v4398, %v4446
    %4448 = vdwg.mxu0
    %4449 = vmatpush.bf16.msra.mxu0 %v2759
    %4450 = vmatpush.bf16.msra.mxu0 %v2751
    %4451 = vmatpush.bf16.msra.mxu0 %v2743
    %4452 = vmatpush.bf16.msra.mxu0 %v2735
    %4453 = vmatpush.bf16.msra.mxu0 %v2727
    %4454 = vmatpush.bf16.msra.mxu0 %v2719
    %4455 = vmatpush.bf16.msra.mxu0 %v2711
    %4456 = vmatpush.bf16.msra.mxu0 %v2703
    %4457 = vmatmul.bf16.gmra.mxu0 %v319
    %v4458 = vpop.f32.mrf.mxu0
    %v4459 = vadd.f32 %v4410, %v4458
    %v4460 = vpop.f32.mrf.mxu0
    %v4461 = vadd.f32 %v4412, %v4460
    %4462 = vmatmul.bf16.gmra.mxu0 %v327
    %v4463 = vpop.f32.mrf.mxu0
    %v4464 = vadd.f32 %v4415, %v4463
    %v4465 = vpop.f32.mrf.mxu0
    %v4466 = vadd.f32 %v4417, %v4465
    %4467 = vmatmul.bf16.gmra.mxu0 %v335
    %v4468 = vpop.f32.mrf.mxu0
    %v4469 = vadd.f32 %v4420, %v4468
    %v4470 = vpop.f32.mrf.mxu0
    %v4471 = vadd.f32 %v4422, %v4470
    %4472 = vmatmul.bf16.gmra.mxu0 %v343
    %v4473 = vpop.f32.mrf.mxu0
    %v4474 = vadd.f32 %v4425, %v4473
    %v4475 = vpop.f32.mrf.mxu0
    %v4476 = vadd.f32 %v4427, %v4475
    %4477 = vmatmul.bf16.gmra.mxu0 %v351
    %v4478 = vpop.f32.mrf.mxu0
    %v4479 = vadd.f32 %v4430, %v4478
    %v4480 = vpop.f32.mrf.mxu0
    %v4481 = vadd.f32 %v4432, %v4480
    %4482 = vmatmul.bf16.gmra.mxu0 %v359
    %v4483 = vpop.f32.mrf.mxu0
    %v4484 = vadd.f32 %v4435, %v4483
    %v4485 = vpop.f32.mrf.mxu0
    %v4486 = vadd.f32 %v4437, %v4485
    %4487 = vmatmul.bf16.gmra.mxu0 %v367
    %v4488 = vpop.f32.mrf.mxu0
    %v4489 = vadd.f32 %v4440, %v4488
    %v4490 = vpop.f32.mrf.mxu0
    %v4491 = vadd.f32 %v4442, %v4490
    %4492 = vmatmul.bf16.gmra.mxu0 %v375
    %v4493 = vpop.f32.mrf.mxu0
    %v4494 = vadd.f32 %v4445, %v4493
    %v4495 = vpop.f32.mrf.mxu0
    %v4496 = vadd.f32 %v4447, %v4495
    %4497 = vdwg.mxu0
    %4498 = vmatpush.bf16.msra.mxu0 %v2823
    %4499 = vmatpush.bf16.msra.mxu0 %v2815
    %4500 = vmatpush.bf16.msra.mxu0 %v2807
    %4501 = vmatpush.bf16.msra.mxu0 %v2799
    %4502 = vmatpush.bf16.msra.mxu0 %v2791
    %4503 = vmatpush.bf16.msra.mxu0 %v2783
    %4504 = vmatpush.bf16.msra.mxu0 %v2775
    %4505 = vmatpush.bf16.msra.mxu0 %v2767
    %4506 = vmatmul.bf16.gmra.mxu0 %v320
    %v4507 = vpop.f32.mrf.mxu0
    %v4508 = vadd.f32 %v4459, %v4507
    %v4509 = vpop.f32.mrf.mxu0
    %v4510 = vadd.f32 %v4461, %v4509
    %4511 = vmatmul.bf16.gmra.mxu0 %v328
    %v4512 = vpop.f32.mrf.mxu0
    %v4513 = vadd.f32 %v4464, %v4512
    %v4514 = vpop.f32.mrf.mxu0
    %v4515 = vadd.f32 %v4466, %v4514
    %4516 = vmatmul.bf16.gmra.mxu0 %v336
    %v4517 = vpop.f32.mrf.mxu0
    %v4518 = vadd.f32 %v4469, %v4517
    %v4519 = vpop.f32.mrf.mxu0
    %v4520 = vadd.f32 %v4471, %v4519
    %4521 = vmatmul.bf16.gmra.mxu0 %v344
    %v4522 = vpop.f32.mrf.mxu0
    %v4523 = vadd.f32 %v4474, %v4522
    %v4524 = vpop.f32.mrf.mxu0
    %v4525 = vadd.f32 %v4476, %v4524
    %4526 = vmatmul.bf16.gmra.mxu0 %v352
    %v4527 = vpop.f32.mrf.mxu0
    %v4528 = vadd.f32 %v4479, %v4527
    %v4529 = vpop.f32.mrf.mxu0
    %v4530 = vadd.f32 %v4481, %v4529
    %4531 = vmatmul.bf16.gmra.mxu0 %v360
    %v4532 = vpop.f32.mrf.mxu0
    %v4533 = vadd.f32 %v4484, %v4532
    %v4534 = vpop.f32.mrf.mxu0
    %v4535 = vadd.f32 %v4486, %v4534
    %4536 = vmatmul.bf16.gmra.mxu0 %v368
    %v4537 = vpop.f32.mrf.mxu0
    %v4538 = vadd.f32 %v4489, %v4537
    %v4539 = vpop.f32.mrf.mxu0
    %v4540 = vadd.f32 %v4491, %v4539
    %4541 = vmatmul.bf16.gmra.mxu0 %v376
    %v4542 = vpop.f32.mrf.mxu0
    %v4543 = vadd.f32 %v4494, %v4542
    %v4544 = vpop.f32.mrf.mxu0
    %v4545 = vadd.f32 %v4496, %v4544
    %4546 = vdwg.mxu0
    %4547 = vmatpush.bf16.msra.mxu0 %v2887
    %4548 = vmatpush.bf16.msra.mxu0 %v2879
    %4549 = vmatpush.bf16.msra.mxu0 %v2871
    %4550 = vmatpush.bf16.msra.mxu0 %v2863
    %4551 = vmatpush.bf16.msra.mxu0 %v2855
    %4552 = vmatpush.bf16.msra.mxu0 %v2847
    %4553 = vmatpush.bf16.msra.mxu0 %v2839
    %4554 = vmatpush.bf16.msra.mxu0 %v2831
    %4555 = vmatmul.bf16.gmra.mxu0 %v321
    %v4556 = vpop.f32.mrf.mxu0
    %v4557 = vadd.f32 %v4508, %v4556
    %v4558 = vpop.f32.mrf.mxu0
    %v4559 = vadd.f32 %v4510, %v4558
    %4560 = vmatmul.bf16.gmra.mxu0 %v329
    %v4561 = vpop.f32.mrf.mxu0
    %v4562 = vadd.f32 %v4513, %v4561
    %v4563 = vpop.f32.mrf.mxu0
    %v4564 = vadd.f32 %v4515, %v4563
    %4565 = vmatmul.bf16.gmra.mxu0 %v337
    %v4566 = vpop.f32.mrf.mxu0
    %v4567 = vadd.f32 %v4518, %v4566
    %v4568 = vpop.f32.mrf.mxu0
    %v4569 = vadd.f32 %v4520, %v4568
    %4570 = vmatmul.bf16.gmra.mxu0 %v345
    %v4571 = vpop.f32.mrf.mxu0
    %v4572 = vadd.f32 %v4523, %v4571
    %v4573 = vpop.f32.mrf.mxu0
    %v4574 = vadd.f32 %v4525, %v4573
    %4575 = vmatmul.bf16.gmra.mxu0 %v353
    %v4576 = vpop.f32.mrf.mxu0
    %v4577 = vadd.f32 %v4528, %v4576
    %v4578 = vpop.f32.mrf.mxu0
    %v4579 = vadd.f32 %v4530, %v4578
    %4580 = vmatmul.bf16.gmra.mxu0 %v361
    %v4581 = vpop.f32.mrf.mxu0
    %v4582 = vadd.f32 %v4533, %v4581
    %v4583 = vpop.f32.mrf.mxu0
    %v4584 = vadd.f32 %v4535, %v4583
    %4585 = vmatmul.bf16.gmra.mxu0 %v369
    %v4586 = vpop.f32.mrf.mxu0
    %v4587 = vadd.f32 %v4538, %v4586
    %v4588 = vpop.f32.mrf.mxu0
    %v4589 = vadd.f32 %v4540, %v4588
    %4590 = vmatmul.bf16.gmra.mxu0 %v377
    %v4591 = vpop.f32.mrf.mxu0
    %v4592 = vadd.f32 %v4543, %v4591
    %v4593 = vpop.f32.mrf.mxu0
    %v4594 = vadd.f32 %v4545, %v4593
    %4595 = vdwg.mxu0
    %4596 = vmatpush.bf16.msra.mxu0 %v2951
    %4597 = vmatpush.bf16.msra.mxu0 %v2943
    %4598 = vmatpush.bf16.msra.mxu0 %v2935
    %4599 = vmatpush.bf16.msra.mxu0 %v2927
    %4600 = vmatpush.bf16.msra.mxu0 %v2919
    %4601 = vmatpush.bf16.msra.mxu0 %v2911
    %4602 = vmatpush.bf16.msra.mxu0 %v2903
    %4603 = vmatpush.bf16.msra.mxu0 %v2895
    %4604 = vmatmul.bf16.gmra.mxu0 %v322
    %v4605 = vpop.f32.mrf.mxu0
    %v4606 = vadd.f32 %v4557, %v4605
    %v4607 = vpop.f32.mrf.mxu0
    %v4608 = vadd.f32 %v4559, %v4607
    %4609 = vmatmul.bf16.gmra.mxu0 %v330
    %v4610 = vpop.f32.mrf.mxu0
    %v4611 = vadd.f32 %v4562, %v4610
    %v4612 = vpop.f32.mrf.mxu0
    %v4613 = vadd.f32 %v4564, %v4612
    %4614 = vmatmul.bf16.gmra.mxu0 %v338
    %v4615 = vpop.f32.mrf.mxu0
    %v4616 = vadd.f32 %v4567, %v4615
    %v4617 = vpop.f32.mrf.mxu0
    %v4618 = vadd.f32 %v4569, %v4617
    %4619 = vmatmul.bf16.gmra.mxu0 %v346
    %v4620 = vpop.f32.mrf.mxu0
    %v4621 = vadd.f32 %v4572, %v4620
    %v4622 = vpop.f32.mrf.mxu0
    %v4623 = vadd.f32 %v4574, %v4622
    %4624 = vmatmul.bf16.gmra.mxu0 %v354
    %v4625 = vpop.f32.mrf.mxu0
    %v4626 = vadd.f32 %v4577, %v4625
    %v4627 = vpop.f32.mrf.mxu0
    %v4628 = vadd.f32 %v4579, %v4627
    %4629 = vmatmul.bf16.gmra.mxu0 %v362
    %v4630 = vpop.f32.mrf.mxu0
    %v4631 = vadd.f32 %v4582, %v4630
    %v4632 = vpop.f32.mrf.mxu0
    %v4633 = vadd.f32 %v4584, %v4632
    %4634 = vmatmul.bf16.gmra.mxu0 %v370
    %v4635 = vpop.f32.mrf.mxu0
    %v4636 = vadd.f32 %v4587, %v4635
    %v4637 = vpop.f32.mrf.mxu0
    %v4638 = vadd.f32 %v4589, %v4637
    %4639 = vmatmul.bf16.gmra.mxu0 %v378
    %v4640 = vpop.f32.mrf.mxu0
    %v4641 = vadd.f32 %v4592, %v4640
    %v4642 = vpop.f32.mrf.mxu0
    %v4643 = vadd.f32 %v4594, %v4642
    %4644 = vdwg.mxu0
    %4645 = vmatpush.bf16.msra.mxu0 %v2504
    %4646 = vmatpush.bf16.msra.mxu0 %v2496
    %4647 = vmatpush.bf16.msra.mxu0 %v2488
    %4648 = vmatpush.bf16.msra.mxu0 %v2480
    %4649 = vmatpush.bf16.msra.mxu0 %v2472
    %4650 = vmatpush.bf16.msra.mxu0 %v2464
    %4651 = vmatpush.bf16.msra.mxu0 %v2456
    %4652 = vmatpush.bf16.msra.mxu0 %v2448
    %4653 = vmatmul.bf16.gmra.mxu0 %v315
    %v4654 = vpop.f32.mrf.mxu0
    %v4655 = vadd.f32 %v896, %v4654
    %v4656 = vpop.f32.mrf.mxu0
    %v4657 = vadd.f32 %v896, %v4656
    %4658 = vmatmul.bf16.gmra.mxu0 %v323
    %v4659 = vpop.f32.mrf.mxu0
    %v4660 = vadd.f32 %v896, %v4659
    %v4661 = vpop.f32.mrf.mxu0
    %v4662 = vadd.f32 %v896, %v4661
    %4663 = vmatmul.bf16.gmra.mxu0 %v331
    %v4664 = vpop.f32.mrf.mxu0
    %v4665 = vadd.f32 %v896, %v4664
    %v4666 = vpop.f32.mrf.mxu0
    %v4667 = vadd.f32 %v896, %v4666
    %4668 = vmatmul.bf16.gmra.mxu0 %v339
    %v4669 = vpop.f32.mrf.mxu0
    %v4670 = vadd.f32 %v896, %v4669
    %v4671 = vpop.f32.mrf.mxu0
    %v4672 = vadd.f32 %v896, %v4671
    %4673 = vmatmul.bf16.gmra.mxu0 %v347
    %v4674 = vpop.f32.mrf.mxu0
    %v4675 = vadd.f32 %v896, %v4674
    %v4676 = vpop.f32.mrf.mxu0
    %v4677 = vadd.f32 %v896, %v4676
    %4678 = vmatmul.bf16.gmra.mxu0 %v355
    %v4679 = vpop.f32.mrf.mxu0
    %v4680 = vadd.f32 %v896, %v4679
    %v4681 = vpop.f32.mrf.mxu0
    %v4682 = vadd.f32 %v896, %v4681
    %4683 = vmatmul.bf16.gmra.mxu0 %v363
    %v4684 = vpop.f32.mrf.mxu0
    %v4685 = vadd.f32 %v896, %v4684
    %v4686 = vpop.f32.mrf.mxu0
    %v4687 = vadd.f32 %v896, %v4686
    %4688 = vmatmul.bf16.gmra.mxu0 %v371
    %v4689 = vpop.f32.mrf.mxu0
    %v4690 = vadd.f32 %v896, %v4689
    %v4691 = vpop.f32.mrf.mxu0
    %v4692 = vadd.f32 %v896, %v4691
    %4693 = vdwg.mxu0
    %4694 = vmatpush.bf16.msra.mxu0 %v2568
    %4695 = vmatpush.bf16.msra.mxu0 %v2560
    %4696 = vmatpush.bf16.msra.mxu0 %v2552
    %4697 = vmatpush.bf16.msra.mxu0 %v2544
    %4698 = vmatpush.bf16.msra.mxu0 %v2536
    %4699 = vmatpush.bf16.msra.mxu0 %v2528
    %4700 = vmatpush.bf16.msra.mxu0 %v2520
    %4701 = vmatpush.bf16.msra.mxu0 %v2512
    %4702 = vmatmul.bf16.gmra.mxu0 %v316
    %v4703 = vpop.f32.mrf.mxu0
    %v4704 = vadd.f32 %v4655, %v4703
    %v4705 = vpop.f32.mrf.mxu0
    %v4706 = vadd.f32 %v4657, %v4705
    %4707 = vmatmul.bf16.gmra.mxu0 %v324
    %v4708 = vpop.f32.mrf.mxu0
    %v4709 = vadd.f32 %v4660, %v4708
    %v4710 = vpop.f32.mrf.mxu0
    %v4711 = vadd.f32 %v4662, %v4710
    %4712 = vmatmul.bf16.gmra.mxu0 %v332
    %v4713 = vpop.f32.mrf.mxu0
    %v4714 = vadd.f32 %v4665, %v4713
    %v4715 = vpop.f32.mrf.mxu0
    %v4716 = vadd.f32 %v4667, %v4715
    %4717 = vmatmul.bf16.gmra.mxu0 %v340
    %v4718 = vpop.f32.mrf.mxu0
    %v4719 = vadd.f32 %v4670, %v4718
    %v4720 = vpop.f32.mrf.mxu0
    %v4721 = vadd.f32 %v4672, %v4720
    %4722 = vmatmul.bf16.gmra.mxu0 %v348
    %v4723 = vpop.f32.mrf.mxu0
    %v4724 = vadd.f32 %v4675, %v4723
    %v4725 = vpop.f32.mrf.mxu0
    %v4726 = vadd.f32 %v4677, %v4725
    %4727 = vmatmul.bf16.gmra.mxu0 %v356
    %v4728 = vpop.f32.mrf.mxu0
    %v4729 = vadd.f32 %v4680, %v4728
    %v4730 = vpop.f32.mrf.mxu0
    %v4731 = vadd.f32 %v4682, %v4730
    %4732 = vmatmul.bf16.gmra.mxu0 %v364
    %v4733 = vpop.f32.mrf.mxu0
    %v4734 = vadd.f32 %v4685, %v4733
    %v4735 = vpop.f32.mrf.mxu0
    %v4736 = vadd.f32 %v4687, %v4735
    %4737 = vmatmul.bf16.gmra.mxu0 %v372
    %v4738 = vpop.f32.mrf.mxu0
    %v4739 = vadd.f32 %v4690, %v4738
    %v4740 = vpop.f32.mrf.mxu0
    %v4741 = vadd.f32 %v4692, %v4740
    %4742 = vdwg.mxu0
    %4743 = vmatpush.bf16.msra.mxu0 %v2632
    %4744 = vmatpush.bf16.msra.mxu0 %v2624
    %4745 = vmatpush.bf16.msra.mxu0 %v2616
    %4746 = vmatpush.bf16.msra.mxu0 %v2608
    %4747 = vmatpush.bf16.msra.mxu0 %v2600
    %4748 = vmatpush.bf16.msra.mxu0 %v2592
    %4749 = vmatpush.bf16.msra.mxu0 %v2584
    %4750 = vmatpush.bf16.msra.mxu0 %v2576
    %4751 = vmatmul.bf16.gmra.mxu0 %v317
    %v4752 = vpop.f32.mrf.mxu0
    %v4753 = vadd.f32 %v4704, %v4752
    %v4754 = vpop.f32.mrf.mxu0
    %v4755 = vadd.f32 %v4706, %v4754
    %4756 = vmatmul.bf16.gmra.mxu0 %v325
    %v4757 = vpop.f32.mrf.mxu0
    %v4758 = vadd.f32 %v4709, %v4757
    %v4759 = vpop.f32.mrf.mxu0
    %v4760 = vadd.f32 %v4711, %v4759
    %4761 = vmatmul.bf16.gmra.mxu0 %v333
    %v4762 = vpop.f32.mrf.mxu0
    %v4763 = vadd.f32 %v4714, %v4762
    %v4764 = vpop.f32.mrf.mxu0
    %v4765 = vadd.f32 %v4716, %v4764
    %4766 = vmatmul.bf16.gmra.mxu0 %v341
    %v4767 = vpop.f32.mrf.mxu0
    %v4768 = vadd.f32 %v4719, %v4767
    %v4769 = vpop.f32.mrf.mxu0
    %v4770 = vadd.f32 %v4721, %v4769
    %4771 = vmatmul.bf16.gmra.mxu0 %v349
    %v4772 = vpop.f32.mrf.mxu0
    %v4773 = vadd.f32 %v4724, %v4772
    %v4774 = vpop.f32.mrf.mxu0
    %v4775 = vadd.f32 %v4726, %v4774
    %4776 = vmatmul.bf16.gmra.mxu0 %v357
    %v4777 = vpop.f32.mrf.mxu0
    %v4778 = vadd.f32 %v4729, %v4777
    %v4779 = vpop.f32.mrf.mxu0
    %v4780 = vadd.f32 %v4731, %v4779
    %4781 = vmatmul.bf16.gmra.mxu0 %v365
    %v4782 = vpop.f32.mrf.mxu0
    %v4783 = vadd.f32 %v4734, %v4782
    %v4784 = vpop.f32.mrf.mxu0
    %v4785 = vadd.f32 %v4736, %v4784
    %4786 = vmatmul.bf16.gmra.mxu0 %v373
    %v4787 = vpop.f32.mrf.mxu0
    %v4788 = vadd.f32 %v4739, %v4787
    %v4789 = vpop.f32.mrf.mxu0
    %v4790 = vadd.f32 %v4741, %v4789
    %4791 = vdwg.mxu0
    %4792 = vmatpush.bf16.msra.mxu0 %v2696
    %4793 = vmatpush.bf16.msra.mxu0 %v2688
    %4794 = vmatpush.bf16.msra.mxu0 %v2680
    %4795 = vmatpush.bf16.msra.mxu0 %v2672
    %4796 = vmatpush.bf16.msra.mxu0 %v2664
    %4797 = vmatpush.bf16.msra.mxu0 %v2656
    %4798 = vmatpush.bf16.msra.mxu0 %v2648
    %4799 = vmatpush.bf16.msra.mxu0 %v2640
    %4800 = vmatmul.bf16.gmra.mxu0 %v318
    %v4801 = vpop.f32.mrf.mxu0
    %v4802 = vadd.f32 %v4753, %v4801
    %v4803 = vpop.f32.mrf.mxu0
    %v4804 = vadd.f32 %v4755, %v4803
    %4805 = vmatmul.bf16.gmra.mxu0 %v326
    %v4806 = vpop.f32.mrf.mxu0
    %v4807 = vadd.f32 %v4758, %v4806
    %v4808 = vpop.f32.mrf.mxu0
    %v4809 = vadd.f32 %v4760, %v4808
    %4810 = vmatmul.bf16.gmra.mxu0 %v334
    %v4811 = vpop.f32.mrf.mxu0
    %v4812 = vadd.f32 %v4763, %v4811
    %v4813 = vpop.f32.mrf.mxu0
    %v4814 = vadd.f32 %v4765, %v4813
    %4815 = vmatmul.bf16.gmra.mxu0 %v342
    %v4816 = vpop.f32.mrf.mxu0
    %v4817 = vadd.f32 %v4768, %v4816
    %v4818 = vpop.f32.mrf.mxu0
    %v4819 = vadd.f32 %v4770, %v4818
    %4820 = vmatmul.bf16.gmra.mxu0 %v350
    %v4821 = vpop.f32.mrf.mxu0
    %v4822 = vadd.f32 %v4773, %v4821
    %v4823 = vpop.f32.mrf.mxu0
    %v4824 = vadd.f32 %v4775, %v4823
    %4825 = vmatmul.bf16.gmra.mxu0 %v358
    %v4826 = vpop.f32.mrf.mxu0
    %v4827 = vadd.f32 %v4778, %v4826
    %v4828 = vpop.f32.mrf.mxu0
    %v4829 = vadd.f32 %v4780, %v4828
    %4830 = vmatmul.bf16.gmra.mxu0 %v366
    %v4831 = vpop.f32.mrf.mxu0
    %v4832 = vadd.f32 %v4783, %v4831
    %v4833 = vpop.f32.mrf.mxu0
    %v4834 = vadd.f32 %v4785, %v4833
    %4835 = vmatmul.bf16.gmra.mxu0 %v374
    %v4836 = vpop.f32.mrf.mxu0
    %v4837 = vadd.f32 %v4788, %v4836
    %v4838 = vpop.f32.mrf.mxu0
    %v4839 = vadd.f32 %v4790, %v4838
    %4840 = vdwg.mxu0
    %4841 = vmatpush.bf16.msra.mxu0 %v2760
    %4842 = vmatpush.bf16.msra.mxu0 %v2752
    %4843 = vmatpush.bf16.msra.mxu0 %v2744
    %4844 = vmatpush.bf16.msra.mxu0 %v2736
    %4845 = vmatpush.bf16.msra.mxu0 %v2728
    %4846 = vmatpush.bf16.msra.mxu0 %v2720
    %4847 = vmatpush.bf16.msra.mxu0 %v2712
    %4848 = vmatpush.bf16.msra.mxu0 %v2704
    %4849 = vmatmul.bf16.gmra.mxu0 %v319
    %v4850 = vpop.f32.mrf.mxu0
    %v4851 = vadd.f32 %v4802, %v4850
    %v4852 = vpop.f32.mrf.mxu0
    %v4853 = vadd.f32 %v4804, %v4852
    %4854 = vmatmul.bf16.gmra.mxu0 %v327
    %v4855 = vpop.f32.mrf.mxu0
    %v4856 = vadd.f32 %v4807, %v4855
    %v4857 = vpop.f32.mrf.mxu0
    %v4858 = vadd.f32 %v4809, %v4857
    %4859 = vmatmul.bf16.gmra.mxu0 %v335
    %v4860 = vpop.f32.mrf.mxu0
    %v4861 = vadd.f32 %v4812, %v4860
    %v4862 = vpop.f32.mrf.mxu0
    %v4863 = vadd.f32 %v4814, %v4862
    %4864 = vmatmul.bf16.gmra.mxu0 %v343
    %v4865 = vpop.f32.mrf.mxu0
    %v4866 = vadd.f32 %v4817, %v4865
    %v4867 = vpop.f32.mrf.mxu0
    %v4868 = vadd.f32 %v4819, %v4867
    %4869 = vmatmul.bf16.gmra.mxu0 %v351
    %v4870 = vpop.f32.mrf.mxu0
    %v4871 = vadd.f32 %v4822, %v4870
    %v4872 = vpop.f32.mrf.mxu0
    %v4873 = vadd.f32 %v4824, %v4872
    %4874 = vmatmul.bf16.gmra.mxu0 %v359
    %v4875 = vpop.f32.mrf.mxu0
    %v4876 = vadd.f32 %v4827, %v4875
    %v4877 = vpop.f32.mrf.mxu0
    %v4878 = vadd.f32 %v4829, %v4877
    %4879 = vmatmul.bf16.gmra.mxu0 %v367
    %v4880 = vpop.f32.mrf.mxu0
    %v4881 = vadd.f32 %v4832, %v4880
    %v4882 = vpop.f32.mrf.mxu0
    %v4883 = vadd.f32 %v4834, %v4882
    %4884 = vmatmul.bf16.gmra.mxu0 %v375
    %v4885 = vpop.f32.mrf.mxu0
    %v4886 = vadd.f32 %v4837, %v4885
    %v4887 = vpop.f32.mrf.mxu0
    %v4888 = vadd.f32 %v4839, %v4887
    %4889 = vdwg.mxu0
    %4890 = vmatpush.bf16.msra.mxu0 %v2824
    %4891 = vmatpush.bf16.msra.mxu0 %v2816
    %4892 = vmatpush.bf16.msra.mxu0 %v2808
    %4893 = vmatpush.bf16.msra.mxu0 %v2800
    %4894 = vmatpush.bf16.msra.mxu0 %v2792
    %4895 = vmatpush.bf16.msra.mxu0 %v2784
    %4896 = vmatpush.bf16.msra.mxu0 %v2776
    %4897 = vmatpush.bf16.msra.mxu0 %v2768
    %4898 = vmatmul.bf16.gmra.mxu0 %v320
    %v4899 = vpop.f32.mrf.mxu0
    %v4900 = vadd.f32 %v4851, %v4899
    %v4901 = vpop.f32.mrf.mxu0
    %v4902 = vadd.f32 %v4853, %v4901
    %4903 = vmatmul.bf16.gmra.mxu0 %v328
    %v4904 = vpop.f32.mrf.mxu0
    %v4905 = vadd.f32 %v4856, %v4904
    %v4906 = vpop.f32.mrf.mxu0
    %v4907 = vadd.f32 %v4858, %v4906
    %4908 = vmatmul.bf16.gmra.mxu0 %v336
    %v4909 = vpop.f32.mrf.mxu0
    %v4910 = vadd.f32 %v4861, %v4909
    %v4911 = vpop.f32.mrf.mxu0
    %v4912 = vadd.f32 %v4863, %v4911
    %4913 = vmatmul.bf16.gmra.mxu0 %v344
    %v4914 = vpop.f32.mrf.mxu0
    %v4915 = vadd.f32 %v4866, %v4914
    %v4916 = vpop.f32.mrf.mxu0
    %v4917 = vadd.f32 %v4868, %v4916
    %4918 = vmatmul.bf16.gmra.mxu0 %v352
    %v4919 = vpop.f32.mrf.mxu0
    %v4920 = vadd.f32 %v4871, %v4919
    %v4921 = vpop.f32.mrf.mxu0
    %v4922 = vadd.f32 %v4873, %v4921
    %4923 = vmatmul.bf16.gmra.mxu0 %v360
    %v4924 = vpop.f32.mrf.mxu0
    %v4925 = vadd.f32 %v4876, %v4924
    %v4926 = vpop.f32.mrf.mxu0
    %v4927 = vadd.f32 %v4878, %v4926
    %4928 = vmatmul.bf16.gmra.mxu0 %v368
    %v4929 = vpop.f32.mrf.mxu0
    %v4930 = vadd.f32 %v4881, %v4929
    %v4931 = vpop.f32.mrf.mxu0
    %v4932 = vadd.f32 %v4883, %v4931
    %4933 = vmatmul.bf16.gmra.mxu0 %v376
    %v4934 = vpop.f32.mrf.mxu0
    %v4935 = vadd.f32 %v4886, %v4934
    %v4936 = vpop.f32.mrf.mxu0
    %v4937 = vadd.f32 %v4888, %v4936
    %4938 = vdwg.mxu0
    %4939 = vmatpush.bf16.msra.mxu0 %v2888
    %4940 = vmatpush.bf16.msra.mxu0 %v2880
    %4941 = vmatpush.bf16.msra.mxu0 %v2872
    %4942 = vmatpush.bf16.msra.mxu0 %v2864
    %4943 = vmatpush.bf16.msra.mxu0 %v2856
    %4944 = vmatpush.bf16.msra.mxu0 %v2848
    %4945 = vmatpush.bf16.msra.mxu0 %v2840
    %4946 = vmatpush.bf16.msra.mxu0 %v2832
    %4947 = vmatmul.bf16.gmra.mxu0 %v321
    %v4948 = vpop.f32.mrf.mxu0
    %v4949 = vadd.f32 %v4900, %v4948
    %v4950 = vpop.f32.mrf.mxu0
    %v4951 = vadd.f32 %v4902, %v4950
    %4952 = vmatmul.bf16.gmra.mxu0 %v329
    %v4953 = vpop.f32.mrf.mxu0
    %v4954 = vadd.f32 %v4905, %v4953
    %v4955 = vpop.f32.mrf.mxu0
    %v4956 = vadd.f32 %v4907, %v4955
    %4957 = vmatmul.bf16.gmra.mxu0 %v337
    %v4958 = vpop.f32.mrf.mxu0
    %v4959 = vadd.f32 %v4910, %v4958
    %v4960 = vpop.f32.mrf.mxu0
    %v4961 = vadd.f32 %v4912, %v4960
    %4962 = vmatmul.bf16.gmra.mxu0 %v345
    %v4963 = vpop.f32.mrf.mxu0
    %v4964 = vadd.f32 %v4915, %v4963
    %v4965 = vpop.f32.mrf.mxu0
    %v4966 = vadd.f32 %v4917, %v4965
    %4967 = vmatmul.bf16.gmra.mxu0 %v353
    %v4968 = vpop.f32.mrf.mxu0
    %v4969 = vadd.f32 %v4920, %v4968
    %v4970 = vpop.f32.mrf.mxu0
    %v4971 = vadd.f32 %v4922, %v4970
    %4972 = vmatmul.bf16.gmra.mxu0 %v361
    %v4973 = vpop.f32.mrf.mxu0
    %v4974 = vadd.f32 %v4925, %v4973
    %v4975 = vpop.f32.mrf.mxu0
    %v4976 = vadd.f32 %v4927, %v4975
    %4977 = vmatmul.bf16.gmra.mxu0 %v369
    %v4978 = vpop.f32.mrf.mxu0
    %v4979 = vadd.f32 %v4930, %v4978
    %v4980 = vpop.f32.mrf.mxu0
    %v4981 = vadd.f32 %v4932, %v4980
    %4982 = vmatmul.bf16.gmra.mxu0 %v377
    %v4983 = vpop.f32.mrf.mxu0
    %v4984 = vadd.f32 %v4935, %v4983
    %v4985 = vpop.f32.mrf.mxu0
    %v4986 = vadd.f32 %v4937, %v4985
    %4987 = vdwg.mxu0
    %4988 = vmatpush.bf16.msra.mxu0 %v2952
    %4989 = vmatpush.bf16.msra.mxu0 %v2944
    %4990 = vmatpush.bf16.msra.mxu0 %v2936
    %4991 = vmatpush.bf16.msra.mxu0 %v2928
    %4992 = vmatpush.bf16.msra.mxu0 %v2920
    %4993 = vmatpush.bf16.msra.mxu0 %v2912
    %4994 = vmatpush.bf16.msra.mxu0 %v2904
    %4995 = vmatpush.bf16.msra.mxu0 %v2896
    %4996 = vmatmul.bf16.gmra.mxu0 %v322
    %v4997 = vpop.f32.mrf.mxu0
    %v4998 = vadd.f32 %v4949, %v4997
    %v4999 = vpop.f32.mrf.mxu0
    %v5000 = vadd.f32 %v4951, %v4999
    %5001 = vmatmul.bf16.gmra.mxu0 %v330
    %v5002 = vpop.f32.mrf.mxu0
    %v5003 = vadd.f32 %v4954, %v5002
    %v5004 = vpop.f32.mrf.mxu0
    %v5005 = vadd.f32 %v4956, %v5004
    %5006 = vmatmul.bf16.gmra.mxu0 %v338
    %v5007 = vpop.f32.mrf.mxu0
    %v5008 = vadd.f32 %v4959, %v5007
    %v5009 = vpop.f32.mrf.mxu0
    %v5010 = vadd.f32 %v4961, %v5009
    %5011 = vmatmul.bf16.gmra.mxu0 %v346
    %v5012 = vpop.f32.mrf.mxu0
    %v5013 = vadd.f32 %v4964, %v5012
    %v5014 = vpop.f32.mrf.mxu0
    %v5015 = vadd.f32 %v4966, %v5014
    %5016 = vmatmul.bf16.gmra.mxu0 %v354
    %v5017 = vpop.f32.mrf.mxu0
    %v5018 = vadd.f32 %v4969, %v5017
    %v5019 = vpop.f32.mrf.mxu0
    %v5020 = vadd.f32 %v4971, %v5019
    %5021 = vmatmul.bf16.gmra.mxu0 %v362
    %v5022 = vpop.f32.mrf.mxu0
    %v5023 = vadd.f32 %v4974, %v5022
    %v5024 = vpop.f32.mrf.mxu0
    %v5025 = vadd.f32 %v4976, %v5024
    %5026 = vmatmul.bf16.gmra.mxu0 %v370
    %v5027 = vpop.f32.mrf.mxu0
    %v5028 = vadd.f32 %v4979, %v5027
    %v5029 = vpop.f32.mrf.mxu0
    %v5030 = vadd.f32 %v4981, %v5029
    %5031 = vmatmul.bf16.gmra.mxu0 %v378
    %v5032 = vpop.f32.mrf.mxu0
    %v5033 = vadd.f32 %v4984, %v5032
    %v5034 = vpop.f32.mrf.mxu0
    %v5035 = vadd.f32 %v4986, %v5034
    %5036 = vdwg.mxu0
    %5037 = vmatpush.bf16.msra.mxu0 %v2505
    %5038 = vmatpush.bf16.msra.mxu0 %v2497
    %5039 = vmatpush.bf16.msra.mxu0 %v2489
    %5040 = vmatpush.bf16.msra.mxu0 %v2481
    %5041 = vmatpush.bf16.msra.mxu0 %v2473
    %5042 = vmatpush.bf16.msra.mxu0 %v2465
    %5043 = vmatpush.bf16.msra.mxu0 %v2457
    %5044 = vmatpush.bf16.msra.mxu0 %v2449
    %5045 = vmatmul.bf16.gmra.mxu0 %v315
    %v5046 = vpop.f32.mrf.mxu0
    %v5047 = vadd.f32 %v897, %v5046
    %v5048 = vpop.f32.mrf.mxu0
    %v5049 = vadd.f32 %v897, %v5048
    %5050 = vmatmul.bf16.gmra.mxu0 %v323
    %v5051 = vpop.f32.mrf.mxu0
    %v5052 = vadd.f32 %v897, %v5051
    %v5053 = vpop.f32.mrf.mxu0
    %v5054 = vadd.f32 %v897, %v5053
    %5055 = vmatmul.bf16.gmra.mxu0 %v331
    %v5056 = vpop.f32.mrf.mxu0
    %v5057 = vadd.f32 %v897, %v5056
    %v5058 = vpop.f32.mrf.mxu0
    %v5059 = vadd.f32 %v897, %v5058
    %5060 = vmatmul.bf16.gmra.mxu0 %v339
    %v5061 = vpop.f32.mrf.mxu0
    %v5062 = vadd.f32 %v897, %v5061
    %v5063 = vpop.f32.mrf.mxu0
    %v5064 = vadd.f32 %v897, %v5063
    %5065 = vmatmul.bf16.gmra.mxu0 %v347
    %v5066 = vpop.f32.mrf.mxu0
    %v5067 = vadd.f32 %v897, %v5066
    %v5068 = vpop.f32.mrf.mxu0
    %v5069 = vadd.f32 %v897, %v5068
    %5070 = vmatmul.bf16.gmra.mxu0 %v355
    %v5071 = vpop.f32.mrf.mxu0
    %v5072 = vadd.f32 %v897, %v5071
    %v5073 = vpop.f32.mrf.mxu0
    %v5074 = vadd.f32 %v897, %v5073
    %5075 = vmatmul.bf16.gmra.mxu0 %v363
    %v5076 = vpop.f32.mrf.mxu0
    %v5077 = vadd.f32 %v897, %v5076
    %v5078 = vpop.f32.mrf.mxu0
    %v5079 = vadd.f32 %v897, %v5078
    %5080 = vmatmul.bf16.gmra.mxu0 %v371
    %v5081 = vpop.f32.mrf.mxu0
    %v5082 = vadd.f32 %v897, %v5081
    %v5083 = vpop.f32.mrf.mxu0
    %v5084 = vadd.f32 %v897, %v5083
    %5085 = vdwg.mxu0
    %5086 = vmatpush.bf16.msra.mxu0 %v2569
    %5087 = vmatpush.bf16.msra.mxu0 %v2561
    %5088 = vmatpush.bf16.msra.mxu0 %v2553
    %5089 = vmatpush.bf16.msra.mxu0 %v2545
    %5090 = vmatpush.bf16.msra.mxu0 %v2537
    %5091 = vmatpush.bf16.msra.mxu0 %v2529
    %5092 = vmatpush.bf16.msra.mxu0 %v2521
    %5093 = vmatpush.bf16.msra.mxu0 %v2513
    %5094 = vmatmul.bf16.gmra.mxu0 %v316
    %v5095 = vpop.f32.mrf.mxu0
    %v5096 = vadd.f32 %v5047, %v5095
    %v5097 = vpop.f32.mrf.mxu0
    %v5098 = vadd.f32 %v5049, %v5097
    %5099 = vmatmul.bf16.gmra.mxu0 %v324
    %v5100 = vpop.f32.mrf.mxu0
    %v5101 = vadd.f32 %v5052, %v5100
    %v5102 = vpop.f32.mrf.mxu0
    %v5103 = vadd.f32 %v5054, %v5102
    %5104 = vmatmul.bf16.gmra.mxu0 %v332
    %v5105 = vpop.f32.mrf.mxu0
    %v5106 = vadd.f32 %v5057, %v5105
    %v5107 = vpop.f32.mrf.mxu0
    %v5108 = vadd.f32 %v5059, %v5107
    %5109 = vmatmul.bf16.gmra.mxu0 %v340
    %v5110 = vpop.f32.mrf.mxu0
    %v5111 = vadd.f32 %v5062, %v5110
    %v5112 = vpop.f32.mrf.mxu0
    %v5113 = vadd.f32 %v5064, %v5112
    %5114 = vmatmul.bf16.gmra.mxu0 %v348
    %v5115 = vpop.f32.mrf.mxu0
    %v5116 = vadd.f32 %v5067, %v5115
    %v5117 = vpop.f32.mrf.mxu0
    %v5118 = vadd.f32 %v5069, %v5117
    %5119 = vmatmul.bf16.gmra.mxu0 %v356
    %v5120 = vpop.f32.mrf.mxu0
    %v5121 = vadd.f32 %v5072, %v5120
    %v5122 = vpop.f32.mrf.mxu0
    %v5123 = vadd.f32 %v5074, %v5122
    %5124 = vmatmul.bf16.gmra.mxu0 %v364
    %v5125 = vpop.f32.mrf.mxu0
    %v5126 = vadd.f32 %v5077, %v5125
    %v5127 = vpop.f32.mrf.mxu0
    %v5128 = vadd.f32 %v5079, %v5127
    %5129 = vmatmul.bf16.gmra.mxu0 %v372
    %v5130 = vpop.f32.mrf.mxu0
    %v5131 = vadd.f32 %v5082, %v5130
    %v5132 = vpop.f32.mrf.mxu0
    %v5133 = vadd.f32 %v5084, %v5132
    %5134 = vdwg.mxu0
    %5135 = vmatpush.bf16.msra.mxu0 %v2633
    %5136 = vmatpush.bf16.msra.mxu0 %v2625
    %5137 = vmatpush.bf16.msra.mxu0 %v2617
    %5138 = vmatpush.bf16.msra.mxu0 %v2609
    %5139 = vmatpush.bf16.msra.mxu0 %v2601
    %5140 = vmatpush.bf16.msra.mxu0 %v2593
    %5141 = vmatpush.bf16.msra.mxu0 %v2585
    %5142 = vmatpush.bf16.msra.mxu0 %v2577
    %5143 = vmatmul.bf16.gmra.mxu0 %v317
    %v5144 = vpop.f32.mrf.mxu0
    %v5145 = vadd.f32 %v5096, %v5144
    %v5146 = vpop.f32.mrf.mxu0
    %v5147 = vadd.f32 %v5098, %v5146
    %5148 = vmatmul.bf16.gmra.mxu0 %v325
    %v5149 = vpop.f32.mrf.mxu0
    %v5150 = vadd.f32 %v5101, %v5149
    %v5151 = vpop.f32.mrf.mxu0
    %v5152 = vadd.f32 %v5103, %v5151
    %5153 = vmatmul.bf16.gmra.mxu0 %v333
    %v5154 = vpop.f32.mrf.mxu0
    %v5155 = vadd.f32 %v5106, %v5154
    %v5156 = vpop.f32.mrf.mxu0
    %v5157 = vadd.f32 %v5108, %v5156
    %5158 = vmatmul.bf16.gmra.mxu0 %v341
    %v5159 = vpop.f32.mrf.mxu0
    %v5160 = vadd.f32 %v5111, %v5159
    %v5161 = vpop.f32.mrf.mxu0
    %v5162 = vadd.f32 %v5113, %v5161
    %5163 = vmatmul.bf16.gmra.mxu0 %v349
    %v5164 = vpop.f32.mrf.mxu0
    %v5165 = vadd.f32 %v5116, %v5164
    %v5166 = vpop.f32.mrf.mxu0
    %v5167 = vadd.f32 %v5118, %v5166
    %5168 = vmatmul.bf16.gmra.mxu0 %v357
    %v5169 = vpop.f32.mrf.mxu0
    %v5170 = vadd.f32 %v5121, %v5169
    %v5171 = vpop.f32.mrf.mxu0
    %v5172 = vadd.f32 %v5123, %v5171
    %5173 = vmatmul.bf16.gmra.mxu0 %v365
    %v5174 = vpop.f32.mrf.mxu0
    %v5175 = vadd.f32 %v5126, %v5174
    %v5176 = vpop.f32.mrf.mxu0
    %v5177 = vadd.f32 %v5128, %v5176
    %5178 = vmatmul.bf16.gmra.mxu0 %v373
    %v5179 = vpop.f32.mrf.mxu0
    %v5180 = vadd.f32 %v5131, %v5179
    %v5181 = vpop.f32.mrf.mxu0
    %v5182 = vadd.f32 %v5133, %v5181
    %5183 = vdwg.mxu0
    %5184 = vmatpush.bf16.msra.mxu0 %v2697
    %5185 = vmatpush.bf16.msra.mxu0 %v2689
    %5186 = vmatpush.bf16.msra.mxu0 %v2681
    %5187 = vmatpush.bf16.msra.mxu0 %v2673
    %5188 = vmatpush.bf16.msra.mxu0 %v2665
    %5189 = vmatpush.bf16.msra.mxu0 %v2657
    %5190 = vmatpush.bf16.msra.mxu0 %v2649
    %5191 = vmatpush.bf16.msra.mxu0 %v2641
    %5192 = vmatmul.bf16.gmra.mxu0 %v318
    %v5193 = vpop.f32.mrf.mxu0
    %v5194 = vadd.f32 %v5145, %v5193
    %v5195 = vpop.f32.mrf.mxu0
    %v5196 = vadd.f32 %v5147, %v5195
    %5197 = vmatmul.bf16.gmra.mxu0 %v326
    %v5198 = vpop.f32.mrf.mxu0
    %v5199 = vadd.f32 %v5150, %v5198
    %v5200 = vpop.f32.mrf.mxu0
    %v5201 = vadd.f32 %v5152, %v5200
    %5202 = vmatmul.bf16.gmra.mxu0 %v334
    %v5203 = vpop.f32.mrf.mxu0
    %v5204 = vadd.f32 %v5155, %v5203
    %v5205 = vpop.f32.mrf.mxu0
    %v5206 = vadd.f32 %v5157, %v5205
    %5207 = vmatmul.bf16.gmra.mxu0 %v342
    %v5208 = vpop.f32.mrf.mxu0
    %v5209 = vadd.f32 %v5160, %v5208
    %v5210 = vpop.f32.mrf.mxu0
    %v5211 = vadd.f32 %v5162, %v5210
    %5212 = vmatmul.bf16.gmra.mxu0 %v350
    %v5213 = vpop.f32.mrf.mxu0
    %v5214 = vadd.f32 %v5165, %v5213
    %v5215 = vpop.f32.mrf.mxu0
    %v5216 = vadd.f32 %v5167, %v5215
    %5217 = vmatmul.bf16.gmra.mxu0 %v358
    %v5218 = vpop.f32.mrf.mxu0
    %v5219 = vadd.f32 %v5170, %v5218
    %v5220 = vpop.f32.mrf.mxu0
    %v5221 = vadd.f32 %v5172, %v5220
    %5222 = vmatmul.bf16.gmra.mxu0 %v366
    %v5223 = vpop.f32.mrf.mxu0
    %v5224 = vadd.f32 %v5175, %v5223
    %v5225 = vpop.f32.mrf.mxu0
    %v5226 = vadd.f32 %v5177, %v5225
    %5227 = vmatmul.bf16.gmra.mxu0 %v374
    %v5228 = vpop.f32.mrf.mxu0
    %v5229 = vadd.f32 %v5180, %v5228
    %v5230 = vpop.f32.mrf.mxu0
    %v5231 = vadd.f32 %v5182, %v5230
    %5232 = vdwg.mxu0
    %5233 = vmatpush.bf16.msra.mxu0 %v2761
    %5234 = vmatpush.bf16.msra.mxu0 %v2753
    %5235 = vmatpush.bf16.msra.mxu0 %v2745
    %5236 = vmatpush.bf16.msra.mxu0 %v2737
    %5237 = vmatpush.bf16.msra.mxu0 %v2729
    %5238 = vmatpush.bf16.msra.mxu0 %v2721
    %5239 = vmatpush.bf16.msra.mxu0 %v2713
    %5240 = vmatpush.bf16.msra.mxu0 %v2705
    %5241 = vmatmul.bf16.gmra.mxu0 %v319
    %v5242 = vpop.f32.mrf.mxu0
    %v5243 = vadd.f32 %v5194, %v5242
    %v5244 = vpop.f32.mrf.mxu0
    %v5245 = vadd.f32 %v5196, %v5244
    %5246 = vmatmul.bf16.gmra.mxu0 %v327
    %v5247 = vpop.f32.mrf.mxu0
    %v5248 = vadd.f32 %v5199, %v5247
    %v5249 = vpop.f32.mrf.mxu0
    %v5250 = vadd.f32 %v5201, %v5249
    %5251 = vmatmul.bf16.gmra.mxu0 %v335
    %v5252 = vpop.f32.mrf.mxu0
    %v5253 = vadd.f32 %v5204, %v5252
    %v5254 = vpop.f32.mrf.mxu0
    %v5255 = vadd.f32 %v5206, %v5254
    %5256 = vmatmul.bf16.gmra.mxu0 %v343
    %v5257 = vpop.f32.mrf.mxu0
    %v5258 = vadd.f32 %v5209, %v5257
    %v5259 = vpop.f32.mrf.mxu0
    %v5260 = vadd.f32 %v5211, %v5259
    %5261 = vmatmul.bf16.gmra.mxu0 %v351
    %v5262 = vpop.f32.mrf.mxu0
    %v5263 = vadd.f32 %v5214, %v5262
    %v5264 = vpop.f32.mrf.mxu0
    %v5265 = vadd.f32 %v5216, %v5264
    %5266 = vmatmul.bf16.gmra.mxu0 %v359
    %v5267 = vpop.f32.mrf.mxu0
    %v5268 = vadd.f32 %v5219, %v5267
    %v5269 = vpop.f32.mrf.mxu0
    %v5270 = vadd.f32 %v5221, %v5269
    %5271 = vmatmul.bf16.gmra.mxu0 %v367
    %v5272 = vpop.f32.mrf.mxu0
    %v5273 = vadd.f32 %v5224, %v5272
    %v5274 = vpop.f32.mrf.mxu0
    %v5275 = vadd.f32 %v5226, %v5274
    %5276 = vmatmul.bf16.gmra.mxu0 %v375
    %v5277 = vpop.f32.mrf.mxu0
    %v5278 = vadd.f32 %v5229, %v5277
    %v5279 = vpop.f32.mrf.mxu0
    %v5280 = vadd.f32 %v5231, %v5279
    %5281 = vdwg.mxu0
    %5282 = vmatpush.bf16.msra.mxu0 %v2825
    %5283 = vmatpush.bf16.msra.mxu0 %v2817
    %5284 = vmatpush.bf16.msra.mxu0 %v2809
    %5285 = vmatpush.bf16.msra.mxu0 %v2801
    %5286 = vmatpush.bf16.msra.mxu0 %v2793
    %5287 = vmatpush.bf16.msra.mxu0 %v2785
    %5288 = vmatpush.bf16.msra.mxu0 %v2777
    %5289 = vmatpush.bf16.msra.mxu0 %v2769
    %5290 = vmatmul.bf16.gmra.mxu0 %v320
    %v5291 = vpop.f32.mrf.mxu0
    %v5292 = vadd.f32 %v5243, %v5291
    %v5293 = vpop.f32.mrf.mxu0
    %v5294 = vadd.f32 %v5245, %v5293
    %5295 = vmatmul.bf16.gmra.mxu0 %v328
    %v5296 = vpop.f32.mrf.mxu0
    %v5297 = vadd.f32 %v5248, %v5296
    %v5298 = vpop.f32.mrf.mxu0
    %v5299 = vadd.f32 %v5250, %v5298
    %5300 = vmatmul.bf16.gmra.mxu0 %v336
    %v5301 = vpop.f32.mrf.mxu0
    %v5302 = vadd.f32 %v5253, %v5301
    %v5303 = vpop.f32.mrf.mxu0
    %v5304 = vadd.f32 %v5255, %v5303
    %5305 = vmatmul.bf16.gmra.mxu0 %v344
    %v5306 = vpop.f32.mrf.mxu0
    %v5307 = vadd.f32 %v5258, %v5306
    %v5308 = vpop.f32.mrf.mxu0
    %v5309 = vadd.f32 %v5260, %v5308
    %5310 = vmatmul.bf16.gmra.mxu0 %v352
    %v5311 = vpop.f32.mrf.mxu0
    %v5312 = vadd.f32 %v5263, %v5311
    %v5313 = vpop.f32.mrf.mxu0
    %v5314 = vadd.f32 %v5265, %v5313
    %5315 = vmatmul.bf16.gmra.mxu0 %v360
    %v5316 = vpop.f32.mrf.mxu0
    %v5317 = vadd.f32 %v5268, %v5316
    %v5318 = vpop.f32.mrf.mxu0
    %v5319 = vadd.f32 %v5270, %v5318
    %5320 = vmatmul.bf16.gmra.mxu0 %v368
    %v5321 = vpop.f32.mrf.mxu0
    %v5322 = vadd.f32 %v5273, %v5321
    %v5323 = vpop.f32.mrf.mxu0
    %v5324 = vadd.f32 %v5275, %v5323
    %5325 = vmatmul.bf16.gmra.mxu0 %v376
    %v5326 = vpop.f32.mrf.mxu0
    %v5327 = vadd.f32 %v5278, %v5326
    %v5328 = vpop.f32.mrf.mxu0
    %v5329 = vadd.f32 %v5280, %v5328
    %5330 = vdwg.mxu0
    %5331 = vmatpush.bf16.msra.mxu0 %v2889
    %5332 = vmatpush.bf16.msra.mxu0 %v2881
    %5333 = vmatpush.bf16.msra.mxu0 %v2873
    %5334 = vmatpush.bf16.msra.mxu0 %v2865
    %5335 = vmatpush.bf16.msra.mxu0 %v2857
    %5336 = vmatpush.bf16.msra.mxu0 %v2849
    %5337 = vmatpush.bf16.msra.mxu0 %v2841
    %5338 = vmatpush.bf16.msra.mxu0 %v2833
    %5339 = vmatmul.bf16.gmra.mxu0 %v321
    %v5340 = vpop.f32.mrf.mxu0
    %v5341 = vadd.f32 %v5292, %v5340
    %v5342 = vpop.f32.mrf.mxu0
    %v5343 = vadd.f32 %v5294, %v5342
    %5344 = vmatmul.bf16.gmra.mxu0 %v329
    %v5345 = vpop.f32.mrf.mxu0
    %v5346 = vadd.f32 %v5297, %v5345
    %v5347 = vpop.f32.mrf.mxu0
    %v5348 = vadd.f32 %v5299, %v5347
    %5349 = vmatmul.bf16.gmra.mxu0 %v337
    %v5350 = vpop.f32.mrf.mxu0
    %v5351 = vadd.f32 %v5302, %v5350
    %v5352 = vpop.f32.mrf.mxu0
    %v5353 = vadd.f32 %v5304, %v5352
    %5354 = vmatmul.bf16.gmra.mxu0 %v345
    %v5355 = vpop.f32.mrf.mxu0
    %v5356 = vadd.f32 %v5307, %v5355
    %v5357 = vpop.f32.mrf.mxu0
    %v5358 = vadd.f32 %v5309, %v5357
    %5359 = vmatmul.bf16.gmra.mxu0 %v353
    %v5360 = vpop.f32.mrf.mxu0
    %v5361 = vadd.f32 %v5312, %v5360
    %v5362 = vpop.f32.mrf.mxu0
    %v5363 = vadd.f32 %v5314, %v5362
    %5364 = vmatmul.bf16.gmra.mxu0 %v361
    %v5365 = vpop.f32.mrf.mxu0
    %v5366 = vadd.f32 %v5317, %v5365
    %v5367 = vpop.f32.mrf.mxu0
    %v5368 = vadd.f32 %v5319, %v5367
    %5369 = vmatmul.bf16.gmra.mxu0 %v369
    %v5370 = vpop.f32.mrf.mxu0
    %v5371 = vadd.f32 %v5322, %v5370
    %v5372 = vpop.f32.mrf.mxu0
    %v5373 = vadd.f32 %v5324, %v5372
    %5374 = vmatmul.bf16.gmra.mxu0 %v377
    %v5375 = vpop.f32.mrf.mxu0
    %v5376 = vadd.f32 %v5327, %v5375
    %v5377 = vpop.f32.mrf.mxu0
    %v5378 = vadd.f32 %v5329, %v5377
    %5379 = vdwg.mxu0
    %5380 = vmatpush.bf16.msra.mxu0 %v2953
    %5381 = vmatpush.bf16.msra.mxu0 %v2945
    %5382 = vmatpush.bf16.msra.mxu0 %v2937
    %5383 = vmatpush.bf16.msra.mxu0 %v2929
    %5384 = vmatpush.bf16.msra.mxu0 %v2921
    %5385 = vmatpush.bf16.msra.mxu0 %v2913
    %5386 = vmatpush.bf16.msra.mxu0 %v2905
    %5387 = vmatpush.bf16.msra.mxu0 %v2897
    %5388 = vmatmul.bf16.gmra.mxu0 %v322
    %v5389 = vpop.f32.mrf.mxu0
    %v5390 = vadd.f32 %v5341, %v5389
    %v5391 = vpop.f32.mrf.mxu0
    %v5392 = vadd.f32 %v5343, %v5391
    %5393 = vmatmul.bf16.gmra.mxu0 %v330
    %v5394 = vpop.f32.mrf.mxu0
    %v5395 = vadd.f32 %v5346, %v5394
    %v5396 = vpop.f32.mrf.mxu0
    %v5397 = vadd.f32 %v5348, %v5396
    %5398 = vmatmul.bf16.gmra.mxu0 %v338
    %v5399 = vpop.f32.mrf.mxu0
    %v5400 = vadd.f32 %v5351, %v5399
    %v5401 = vpop.f32.mrf.mxu0
    %v5402 = vadd.f32 %v5353, %v5401
    %5403 = vmatmul.bf16.gmra.mxu0 %v346
    %v5404 = vpop.f32.mrf.mxu0
    %v5405 = vadd.f32 %v5356, %v5404
    %v5406 = vpop.f32.mrf.mxu0
    %v5407 = vadd.f32 %v5358, %v5406
    %5408 = vmatmul.bf16.gmra.mxu0 %v354
    %v5409 = vpop.f32.mrf.mxu0
    %v5410 = vadd.f32 %v5361, %v5409
    %v5411 = vpop.f32.mrf.mxu0
    %v5412 = vadd.f32 %v5363, %v5411
    %5413 = vmatmul.bf16.gmra.mxu0 %v362
    %v5414 = vpop.f32.mrf.mxu0
    %v5415 = vadd.f32 %v5366, %v5414
    %v5416 = vpop.f32.mrf.mxu0
    %v5417 = vadd.f32 %v5368, %v5416
    %5418 = vmatmul.bf16.gmra.mxu0 %v370
    %v5419 = vpop.f32.mrf.mxu0
    %v5420 = vadd.f32 %v5371, %v5419
    %v5421 = vpop.f32.mrf.mxu0
    %v5422 = vadd.f32 %v5373, %v5421
    %5423 = vmatmul.bf16.gmra.mxu0 %v378
    %v5424 = vpop.f32.mrf.mxu0
    %v5425 = vadd.f32 %v5376, %v5424
    %v5426 = vpop.f32.mrf.mxu0
    %v5427 = vadd.f32 %v5378, %v5426
    %5428 = vdwg.mxu0
    %5429 = vmatpush.bf16.msra.mxu0 %v2506
    %5430 = vmatpush.bf16.msra.mxu0 %v2498
    %5431 = vmatpush.bf16.msra.mxu0 %v2490
    %5432 = vmatpush.bf16.msra.mxu0 %v2482
    %5433 = vmatpush.bf16.msra.mxu0 %v2474
    %5434 = vmatpush.bf16.msra.mxu0 %v2466
    %5435 = vmatpush.bf16.msra.mxu0 %v2458
    %5436 = vmatpush.bf16.msra.mxu0 %v2450
    %5437 = vmatmul.bf16.gmra.mxu0 %v315
    %v5438 = vpop.f32.mrf.mxu0
    %v5439 = vadd.f32 %v898, %v5438
    %v5440 = vpop.f32.mrf.mxu0
    %v5441 = vadd.f32 %v898, %v5440
    %5442 = vmatmul.bf16.gmra.mxu0 %v323
    %v5443 = vpop.f32.mrf.mxu0
    %v5444 = vadd.f32 %v898, %v5443
    %v5445 = vpop.f32.mrf.mxu0
    %v5446 = vadd.f32 %v898, %v5445
    %5447 = vmatmul.bf16.gmra.mxu0 %v331
    %v5448 = vpop.f32.mrf.mxu0
    %v5449 = vadd.f32 %v898, %v5448
    %v5450 = vpop.f32.mrf.mxu0
    %v5451 = vadd.f32 %v898, %v5450
    %5452 = vmatmul.bf16.gmra.mxu0 %v339
    %v5453 = vpop.f32.mrf.mxu0
    %v5454 = vadd.f32 %v898, %v5453
    %v5455 = vpop.f32.mrf.mxu0
    %v5456 = vadd.f32 %v898, %v5455
    %5457 = vmatmul.bf16.gmra.mxu0 %v347
    %v5458 = vpop.f32.mrf.mxu0
    %v5459 = vadd.f32 %v898, %v5458
    %v5460 = vpop.f32.mrf.mxu0
    %v5461 = vadd.f32 %v898, %v5460
    %5462 = vmatmul.bf16.gmra.mxu0 %v355
    %v5463 = vpop.f32.mrf.mxu0
    %v5464 = vadd.f32 %v898, %v5463
    %v5465 = vpop.f32.mrf.mxu0
    %v5466 = vadd.f32 %v898, %v5465
    %5467 = vmatmul.bf16.gmra.mxu0 %v363
    %v5468 = vpop.f32.mrf.mxu0
    %v5469 = vadd.f32 %v898, %v5468
    %v5470 = vpop.f32.mrf.mxu0
    %v5471 = vadd.f32 %v898, %v5470
    %5472 = vmatmul.bf16.gmra.mxu0 %v371
    %v5473 = vpop.f32.mrf.mxu0
    %v5474 = vadd.f32 %v898, %v5473
    %v5475 = vpop.f32.mrf.mxu0
    %v5476 = vadd.f32 %v898, %v5475
    %5477 = vdwg.mxu0
    %5478 = vmatpush.bf16.msra.mxu0 %v2570
    %5479 = vmatpush.bf16.msra.mxu0 %v2562
    %5480 = vmatpush.bf16.msra.mxu0 %v2554
    %5481 = vmatpush.bf16.msra.mxu0 %v2546
    %5482 = vmatpush.bf16.msra.mxu0 %v2538
    %5483 = vmatpush.bf16.msra.mxu0 %v2530
    %5484 = vmatpush.bf16.msra.mxu0 %v2522
    %5485 = vmatpush.bf16.msra.mxu0 %v2514
    %5486 = vmatmul.bf16.gmra.mxu0 %v316
    %v5487 = vpop.f32.mrf.mxu0
    %v5488 = vadd.f32 %v5439, %v5487
    %v5489 = vpop.f32.mrf.mxu0
    %v5490 = vadd.f32 %v5441, %v5489
    %5491 = vmatmul.bf16.gmra.mxu0 %v324
    %v5492 = vpop.f32.mrf.mxu0
    %v5493 = vadd.f32 %v5444, %v5492
    %v5494 = vpop.f32.mrf.mxu0
    %v5495 = vadd.f32 %v5446, %v5494
    %5496 = vmatmul.bf16.gmra.mxu0 %v332
    %v5497 = vpop.f32.mrf.mxu0
    %v5498 = vadd.f32 %v5449, %v5497
    %v5499 = vpop.f32.mrf.mxu0
    %v5500 = vadd.f32 %v5451, %v5499
    %5501 = vmatmul.bf16.gmra.mxu0 %v340
    %v5502 = vpop.f32.mrf.mxu0
    %v5503 = vadd.f32 %v5454, %v5502
    %v5504 = vpop.f32.mrf.mxu0
    %v5505 = vadd.f32 %v5456, %v5504
    %5506 = vmatmul.bf16.gmra.mxu0 %v348
    %v5507 = vpop.f32.mrf.mxu0
    %v5508 = vadd.f32 %v5459, %v5507
    %v5509 = vpop.f32.mrf.mxu0
    %v5510 = vadd.f32 %v5461, %v5509
    %5511 = vmatmul.bf16.gmra.mxu0 %v356
    %v5512 = vpop.f32.mrf.mxu0
    %v5513 = vadd.f32 %v5464, %v5512
    %v5514 = vpop.f32.mrf.mxu0
    %v5515 = vadd.f32 %v5466, %v5514
    %5516 = vmatmul.bf16.gmra.mxu0 %v364
    %v5517 = vpop.f32.mrf.mxu0
    %v5518 = vadd.f32 %v5469, %v5517
    %v5519 = vpop.f32.mrf.mxu0
    %v5520 = vadd.f32 %v5471, %v5519
    %5521 = vmatmul.bf16.gmra.mxu0 %v372
    %v5522 = vpop.f32.mrf.mxu0
    %v5523 = vadd.f32 %v5474, %v5522
    %v5524 = vpop.f32.mrf.mxu0
    %v5525 = vadd.f32 %v5476, %v5524
    %5526 = vdwg.mxu0
    %5527 = vmatpush.bf16.msra.mxu0 %v2634
    %5528 = vmatpush.bf16.msra.mxu0 %v2626
    %5529 = vmatpush.bf16.msra.mxu0 %v2618
    %5530 = vmatpush.bf16.msra.mxu0 %v2610
    %5531 = vmatpush.bf16.msra.mxu0 %v2602
    %5532 = vmatpush.bf16.msra.mxu0 %v2594
    %5533 = vmatpush.bf16.msra.mxu0 %v2586
    %5534 = vmatpush.bf16.msra.mxu0 %v2578
    %5535 = vmatmul.bf16.gmra.mxu0 %v317
    %v5536 = vpop.f32.mrf.mxu0
    %v5537 = vadd.f32 %v5488, %v5536
    %v5538 = vpop.f32.mrf.mxu0
    %v5539 = vadd.f32 %v5490, %v5538
    %5540 = vmatmul.bf16.gmra.mxu0 %v325
    %v5541 = vpop.f32.mrf.mxu0
    %v5542 = vadd.f32 %v5493, %v5541
    %v5543 = vpop.f32.mrf.mxu0
    %v5544 = vadd.f32 %v5495, %v5543
    %5545 = vmatmul.bf16.gmra.mxu0 %v333
    %v5546 = vpop.f32.mrf.mxu0
    %v5547 = vadd.f32 %v5498, %v5546
    %v5548 = vpop.f32.mrf.mxu0
    %v5549 = vadd.f32 %v5500, %v5548
    %5550 = vmatmul.bf16.gmra.mxu0 %v341
    %v5551 = vpop.f32.mrf.mxu0
    %v5552 = vadd.f32 %v5503, %v5551
    %v5553 = vpop.f32.mrf.mxu0
    %v5554 = vadd.f32 %v5505, %v5553
    %5555 = vmatmul.bf16.gmra.mxu0 %v349
    %v5556 = vpop.f32.mrf.mxu0
    %v5557 = vadd.f32 %v5508, %v5556
    %v5558 = vpop.f32.mrf.mxu0
    %v5559 = vadd.f32 %v5510, %v5558
    %5560 = vmatmul.bf16.gmra.mxu0 %v357
    %v5561 = vpop.f32.mrf.mxu0
    %v5562 = vadd.f32 %v5513, %v5561
    %v5563 = vpop.f32.mrf.mxu0
    %v5564 = vadd.f32 %v5515, %v5563
    %5565 = vmatmul.bf16.gmra.mxu0 %v365
    %v5566 = vpop.f32.mrf.mxu0
    %v5567 = vadd.f32 %v5518, %v5566
    %v5568 = vpop.f32.mrf.mxu0
    %v5569 = vadd.f32 %v5520, %v5568
    %5570 = vmatmul.bf16.gmra.mxu0 %v373
    %v5571 = vpop.f32.mrf.mxu0
    %v5572 = vadd.f32 %v5523, %v5571
    %v5573 = vpop.f32.mrf.mxu0
    %v5574 = vadd.f32 %v5525, %v5573
    %5575 = vdwg.mxu0
    %5576 = vmatpush.bf16.msra.mxu0 %v2698
    %5577 = vmatpush.bf16.msra.mxu0 %v2690
    %5578 = vmatpush.bf16.msra.mxu0 %v2682
    %5579 = vmatpush.bf16.msra.mxu0 %v2674
    %5580 = vmatpush.bf16.msra.mxu0 %v2666
    %5581 = vmatpush.bf16.msra.mxu0 %v2658
    %5582 = vmatpush.bf16.msra.mxu0 %v2650
    %5583 = vmatpush.bf16.msra.mxu0 %v2642
    %5584 = vmatmul.bf16.gmra.mxu0 %v318
    %v5585 = vpop.f32.mrf.mxu0
    %v5586 = vadd.f32 %v5537, %v5585
    %v5587 = vpop.f32.mrf.mxu0
    %v5588 = vadd.f32 %v5539, %v5587
    %5589 = vmatmul.bf16.gmra.mxu0 %v326
    %v5590 = vpop.f32.mrf.mxu0
    %v5591 = vadd.f32 %v5542, %v5590
    %v5592 = vpop.f32.mrf.mxu0
    %v5593 = vadd.f32 %v5544, %v5592
    %5594 = vmatmul.bf16.gmra.mxu0 %v334
    %v5595 = vpop.f32.mrf.mxu0
    %v5596 = vadd.f32 %v5547, %v5595
    %v5597 = vpop.f32.mrf.mxu0
    %v5598 = vadd.f32 %v5549, %v5597
    %5599 = vmatmul.bf16.gmra.mxu0 %v342
    %v5600 = vpop.f32.mrf.mxu0
    %v5601 = vadd.f32 %v5552, %v5600
    %v5602 = vpop.f32.mrf.mxu0
    %v5603 = vadd.f32 %v5554, %v5602
    %5604 = vmatmul.bf16.gmra.mxu0 %v350
    %v5605 = vpop.f32.mrf.mxu0
    %v5606 = vadd.f32 %v5557, %v5605
    %v5607 = vpop.f32.mrf.mxu0
    %v5608 = vadd.f32 %v5559, %v5607
    %5609 = vmatmul.bf16.gmra.mxu0 %v358
    %v5610 = vpop.f32.mrf.mxu0
    %v5611 = vadd.f32 %v5562, %v5610
    %v5612 = vpop.f32.mrf.mxu0
    %v5613 = vadd.f32 %v5564, %v5612
    %5614 = vmatmul.bf16.gmra.mxu0 %v366
    %v5615 = vpop.f32.mrf.mxu0
    %v5616 = vadd.f32 %v5567, %v5615
    %v5617 = vpop.f32.mrf.mxu0
    %v5618 = vadd.f32 %v5569, %v5617
    %5619 = vmatmul.bf16.gmra.mxu0 %v374
    %v5620 = vpop.f32.mrf.mxu0
    %v5621 = vadd.f32 %v5572, %v5620
    %v5622 = vpop.f32.mrf.mxu0
    %v5623 = vadd.f32 %v5574, %v5622
    %5624 = vdwg.mxu0
    %5625 = vmatpush.bf16.msra.mxu0 %v2762
    %5626 = vmatpush.bf16.msra.mxu0 %v2754
    %5627 = vmatpush.bf16.msra.mxu0 %v2746
    %5628 = vmatpush.bf16.msra.mxu0 %v2738
    %5629 = vmatpush.bf16.msra.mxu0 %v2730
    %5630 = vmatpush.bf16.msra.mxu0 %v2722
    %5631 = vmatpush.bf16.msra.mxu0 %v2714
    %5632 = vmatpush.bf16.msra.mxu0 %v2706
    %5633 = vmatmul.bf16.gmra.mxu0 %v319
    %v5634 = vpop.f32.mrf.mxu0
    %v5635 = vadd.f32 %v5586, %v5634
    %v5636 = vpop.f32.mrf.mxu0
    %v5637 = vadd.f32 %v5588, %v5636
    %5638 = vmatmul.bf16.gmra.mxu0 %v327
    %v5639 = vpop.f32.mrf.mxu0
    %v5640 = vadd.f32 %v5591, %v5639
    %v5641 = vpop.f32.mrf.mxu0
    %v5642 = vadd.f32 %v5593, %v5641
    %5643 = vmatmul.bf16.gmra.mxu0 %v335
    %v5644 = vpop.f32.mrf.mxu0
    %v5645 = vadd.f32 %v5596, %v5644
    %v5646 = vpop.f32.mrf.mxu0
    %v5647 = vadd.f32 %v5598, %v5646
    %5648 = vmatmul.bf16.gmra.mxu0 %v343
    %v5649 = vpop.f32.mrf.mxu0
    %v5650 = vadd.f32 %v5601, %v5649
    %v5651 = vpop.f32.mrf.mxu0
    %v5652 = vadd.f32 %v5603, %v5651
    %5653 = vmatmul.bf16.gmra.mxu0 %v351
    %v5654 = vpop.f32.mrf.mxu0
    %v5655 = vadd.f32 %v5606, %v5654
    %v5656 = vpop.f32.mrf.mxu0
    %v5657 = vadd.f32 %v5608, %v5656
    %5658 = vmatmul.bf16.gmra.mxu0 %v359
    %v5659 = vpop.f32.mrf.mxu0
    %v5660 = vadd.f32 %v5611, %v5659
    %v5661 = vpop.f32.mrf.mxu0
    %v5662 = vadd.f32 %v5613, %v5661
    %5663 = vmatmul.bf16.gmra.mxu0 %v367
    %v5664 = vpop.f32.mrf.mxu0
    %v5665 = vadd.f32 %v5616, %v5664
    %v5666 = vpop.f32.mrf.mxu0
    %v5667 = vadd.f32 %v5618, %v5666
    %5668 = vmatmul.bf16.gmra.mxu0 %v375
    %v5669 = vpop.f32.mrf.mxu0
    %v5670 = vadd.f32 %v5621, %v5669
    %v5671 = vpop.f32.mrf.mxu0
    %v5672 = vadd.f32 %v5623, %v5671
    %5673 = vdwg.mxu0
    %5674 = vmatpush.bf16.msra.mxu0 %v2826
    %5675 = vmatpush.bf16.msra.mxu0 %v2818
    %5676 = vmatpush.bf16.msra.mxu0 %v2810
    %5677 = vmatpush.bf16.msra.mxu0 %v2802
    %5678 = vmatpush.bf16.msra.mxu0 %v2794
    %5679 = vmatpush.bf16.msra.mxu0 %v2786
    %5680 = vmatpush.bf16.msra.mxu0 %v2778
    %5681 = vmatpush.bf16.msra.mxu0 %v2770
    %5682 = vmatmul.bf16.gmra.mxu0 %v320
    %v5683 = vpop.f32.mrf.mxu0
    %v5684 = vadd.f32 %v5635, %v5683
    %v5685 = vpop.f32.mrf.mxu0
    %v5686 = vadd.f32 %v5637, %v5685
    %5687 = vmatmul.bf16.gmra.mxu0 %v328
    %v5688 = vpop.f32.mrf.mxu0
    %v5689 = vadd.f32 %v5640, %v5688
    %v5690 = vpop.f32.mrf.mxu0
    %v5691 = vadd.f32 %v5642, %v5690
    %5692 = vmatmul.bf16.gmra.mxu0 %v336
    %v5693 = vpop.f32.mrf.mxu0
    %v5694 = vadd.f32 %v5645, %v5693
    %v5695 = vpop.f32.mrf.mxu0
    %v5696 = vadd.f32 %v5647, %v5695
    %5697 = vmatmul.bf16.gmra.mxu0 %v344
    %v5698 = vpop.f32.mrf.mxu0
    %v5699 = vadd.f32 %v5650, %v5698
    %v5700 = vpop.f32.mrf.mxu0
    %v5701 = vadd.f32 %v5652, %v5700
    %5702 = vmatmul.bf16.gmra.mxu0 %v352
    %v5703 = vpop.f32.mrf.mxu0
    %v5704 = vadd.f32 %v5655, %v5703
    %v5705 = vpop.f32.mrf.mxu0
    %v5706 = vadd.f32 %v5657, %v5705
    %5707 = vmatmul.bf16.gmra.mxu0 %v360
    %v5708 = vpop.f32.mrf.mxu0
    %v5709 = vadd.f32 %v5660, %v5708
    %v5710 = vpop.f32.mrf.mxu0
    %v5711 = vadd.f32 %v5662, %v5710
    %5712 = vmatmul.bf16.gmra.mxu0 %v368
    %v5713 = vpop.f32.mrf.mxu0
    %v5714 = vadd.f32 %v5665, %v5713
    %v5715 = vpop.f32.mrf.mxu0
    %v5716 = vadd.f32 %v5667, %v5715
    %5717 = vmatmul.bf16.gmra.mxu0 %v376
    %v5718 = vpop.f32.mrf.mxu0
    %v5719 = vadd.f32 %v5670, %v5718
    %v5720 = vpop.f32.mrf.mxu0
    %v5721 = vadd.f32 %v5672, %v5720
    %5722 = vdwg.mxu0
    %5723 = vmatpush.bf16.msra.mxu0 %v2890
    %5724 = vmatpush.bf16.msra.mxu0 %v2882
    %5725 = vmatpush.bf16.msra.mxu0 %v2874
    %5726 = vmatpush.bf16.msra.mxu0 %v2866
    %5727 = vmatpush.bf16.msra.mxu0 %v2858
    %5728 = vmatpush.bf16.msra.mxu0 %v2850
    %5729 = vmatpush.bf16.msra.mxu0 %v2842
    %5730 = vmatpush.bf16.msra.mxu0 %v2834
    %5731 = vmatmul.bf16.gmra.mxu0 %v321
    %v5732 = vpop.f32.mrf.mxu0
    %v5733 = vadd.f32 %v5684, %v5732
    %v5734 = vpop.f32.mrf.mxu0
    %v5735 = vadd.f32 %v5686, %v5734
    %5736 = vmatmul.bf16.gmra.mxu0 %v329
    %v5737 = vpop.f32.mrf.mxu0
    %v5738 = vadd.f32 %v5689, %v5737
    %v5739 = vpop.f32.mrf.mxu0
    %v5740 = vadd.f32 %v5691, %v5739
    %5741 = vmatmul.bf16.gmra.mxu0 %v337
    %v5742 = vpop.f32.mrf.mxu0
    %v5743 = vadd.f32 %v5694, %v5742
    %v5744 = vpop.f32.mrf.mxu0
    %v5745 = vadd.f32 %v5696, %v5744
    %5746 = vmatmul.bf16.gmra.mxu0 %v345
    %v5747 = vpop.f32.mrf.mxu0
    %v5748 = vadd.f32 %v5699, %v5747
    %v5749 = vpop.f32.mrf.mxu0
    %v5750 = vadd.f32 %v5701, %v5749
    %5751 = vmatmul.bf16.gmra.mxu0 %v353
    %v5752 = vpop.f32.mrf.mxu0
    %v5753 = vadd.f32 %v5704, %v5752
    %v5754 = vpop.f32.mrf.mxu0
    %v5755 = vadd.f32 %v5706, %v5754
    %5756 = vmatmul.bf16.gmra.mxu0 %v361
    %v5757 = vpop.f32.mrf.mxu0
    %v5758 = vadd.f32 %v5709, %v5757
    %v5759 = vpop.f32.mrf.mxu0
    %v5760 = vadd.f32 %v5711, %v5759
    %5761 = vmatmul.bf16.gmra.mxu0 %v369
    %v5762 = vpop.f32.mrf.mxu0
    %v5763 = vadd.f32 %v5714, %v5762
    %v5764 = vpop.f32.mrf.mxu0
    %v5765 = vadd.f32 %v5716, %v5764
    %5766 = vmatmul.bf16.gmra.mxu0 %v377
    %v5767 = vpop.f32.mrf.mxu0
    %v5768 = vadd.f32 %v5719, %v5767
    %v5769 = vpop.f32.mrf.mxu0
    %v5770 = vadd.f32 %v5721, %v5769
    %5771 = vdwg.mxu0
    %5772 = vmatpush.bf16.msra.mxu0 %v2954
    %5773 = vmatpush.bf16.msra.mxu0 %v2946
    %5774 = vmatpush.bf16.msra.mxu0 %v2938
    %5775 = vmatpush.bf16.msra.mxu0 %v2930
    %5776 = vmatpush.bf16.msra.mxu0 %v2922
    %5777 = vmatpush.bf16.msra.mxu0 %v2914
    %5778 = vmatpush.bf16.msra.mxu0 %v2906
    %5779 = vmatpush.bf16.msra.mxu0 %v2898
    %5780 = vmatmul.bf16.gmra.mxu0 %v322
    %v5781 = vpop.f32.mrf.mxu0
    %v5782 = vadd.f32 %v5733, %v5781
    %v5783 = vpop.f32.mrf.mxu0
    %v5784 = vadd.f32 %v5735, %v5783
    %5785 = vmatmul.bf16.gmra.mxu0 %v330
    %v5786 = vpop.f32.mrf.mxu0
    %v5787 = vadd.f32 %v5738, %v5786
    %v5788 = vpop.f32.mrf.mxu0
    %v5789 = vadd.f32 %v5740, %v5788
    %5790 = vmatmul.bf16.gmra.mxu0 %v338
    %v5791 = vpop.f32.mrf.mxu0
    %v5792 = vadd.f32 %v5743, %v5791
    %v5793 = vpop.f32.mrf.mxu0
    %v5794 = vadd.f32 %v5745, %v5793
    %5795 = vmatmul.bf16.gmra.mxu0 %v346
    %v5796 = vpop.f32.mrf.mxu0
    %v5797 = vadd.f32 %v5748, %v5796
    %v5798 = vpop.f32.mrf.mxu0
    %v5799 = vadd.f32 %v5750, %v5798
    %5800 = vmatmul.bf16.gmra.mxu0 %v354
    %v5801 = vpop.f32.mrf.mxu0
    %v5802 = vadd.f32 %v5753, %v5801
    %v5803 = vpop.f32.mrf.mxu0
    %v5804 = vadd.f32 %v5755, %v5803
    %5805 = vmatmul.bf16.gmra.mxu0 %v362
    %v5806 = vpop.f32.mrf.mxu0
    %v5807 = vadd.f32 %v5758, %v5806
    %v5808 = vpop.f32.mrf.mxu0
    %v5809 = vadd.f32 %v5760, %v5808
    %5810 = vmatmul.bf16.gmra.mxu0 %v370
    %v5811 = vpop.f32.mrf.mxu0
    %v5812 = vadd.f32 %v5763, %v5811
    %v5813 = vpop.f32.mrf.mxu0
    %v5814 = vadd.f32 %v5765, %v5813
    %5815 = vmatmul.bf16.gmra.mxu0 %v378
    %v5816 = vpop.f32.mrf.mxu0
    %v5817 = vadd.f32 %v5768, %v5816
    %v5818 = vpop.f32.mrf.mxu0
    %v5819 = vadd.f32 %v5770, %v5818
    %5820 = vdwg.mxu0
    %5821 = vmatpush.bf16.msra.mxu0 %v2507
    %5822 = vmatpush.bf16.msra.mxu0 %v2499
    %5823 = vmatpush.bf16.msra.mxu0 %v2491
    %5824 = vmatpush.bf16.msra.mxu0 %v2483
    %5825 = vmatpush.bf16.msra.mxu0 %v2475
    %5826 = vmatpush.bf16.msra.mxu0 %v2467
    %5827 = vmatpush.bf16.msra.mxu0 %v2459
    %5828 = vmatpush.bf16.msra.mxu0 %v2451
    %5829 = vmatmul.bf16.gmra.mxu0 %v315
    %v5830 = vpop.f32.mrf.mxu0
    %v5831 = vadd.f32 %v899, %v5830
    %v5832 = vpop.f32.mrf.mxu0
    %v5833 = vadd.f32 %v899, %v5832
    %5834 = vmatmul.bf16.gmra.mxu0 %v323
    %v5835 = vpop.f32.mrf.mxu0
    %v5836 = vadd.f32 %v899, %v5835
    %v5837 = vpop.f32.mrf.mxu0
    %v5838 = vadd.f32 %v899, %v5837
    %5839 = vmatmul.bf16.gmra.mxu0 %v331
    %v5840 = vpop.f32.mrf.mxu0
    %v5841 = vadd.f32 %v899, %v5840
    %v5842 = vpop.f32.mrf.mxu0
    %v5843 = vadd.f32 %v899, %v5842
    %5844 = vmatmul.bf16.gmra.mxu0 %v339
    %v5845 = vpop.f32.mrf.mxu0
    %v5846 = vadd.f32 %v899, %v5845
    %v5847 = vpop.f32.mrf.mxu0
    %v5848 = vadd.f32 %v899, %v5847
    %5849 = vmatmul.bf16.gmra.mxu0 %v347
    %v5850 = vpop.f32.mrf.mxu0
    %v5851 = vadd.f32 %v899, %v5850
    %v5852 = vpop.f32.mrf.mxu0
    %v5853 = vadd.f32 %v899, %v5852
    %5854 = vmatmul.bf16.gmra.mxu0 %v355
    %v5855 = vpop.f32.mrf.mxu0
    %v5856 = vadd.f32 %v899, %v5855
    %v5857 = vpop.f32.mrf.mxu0
    %v5858 = vadd.f32 %v899, %v5857
    %5859 = vmatmul.bf16.gmra.mxu0 %v363
    %v5860 = vpop.f32.mrf.mxu0
    %v5861 = vadd.f32 %v899, %v5860
    %v5862 = vpop.f32.mrf.mxu0
    %v5863 = vadd.f32 %v899, %v5862
    %5864 = vmatmul.bf16.gmra.mxu0 %v371
    %v5865 = vpop.f32.mrf.mxu0
    %v5866 = vadd.f32 %v899, %v5865
    %v5867 = vpop.f32.mrf.mxu0
    %v5868 = vadd.f32 %v899, %v5867
    %5869 = vdwg.mxu0
    %5870 = vmatpush.bf16.msra.mxu0 %v2571
    %5871 = vmatpush.bf16.msra.mxu0 %v2563
    %5872 = vmatpush.bf16.msra.mxu0 %v2555
    %5873 = vmatpush.bf16.msra.mxu0 %v2547
    %5874 = vmatpush.bf16.msra.mxu0 %v2539
    %5875 = vmatpush.bf16.msra.mxu0 %v2531
    %5876 = vmatpush.bf16.msra.mxu0 %v2523
    %5877 = vmatpush.bf16.msra.mxu0 %v2515
    %5878 = vmatmul.bf16.gmra.mxu0 %v316
    %v5879 = vpop.f32.mrf.mxu0
    %v5880 = vadd.f32 %v5831, %v5879
    %v5881 = vpop.f32.mrf.mxu0
    %v5882 = vadd.f32 %v5833, %v5881
    %5883 = vmatmul.bf16.gmra.mxu0 %v324
    %v5884 = vpop.f32.mrf.mxu0
    %v5885 = vadd.f32 %v5836, %v5884
    %v5886 = vpop.f32.mrf.mxu0
    %v5887 = vadd.f32 %v5838, %v5886
    %5888 = vmatmul.bf16.gmra.mxu0 %v332
    %v5889 = vpop.f32.mrf.mxu0
    %v5890 = vadd.f32 %v5841, %v5889
    %v5891 = vpop.f32.mrf.mxu0
    %v5892 = vadd.f32 %v5843, %v5891
    %5893 = vmatmul.bf16.gmra.mxu0 %v340
    %v5894 = vpop.f32.mrf.mxu0
    %v5895 = vadd.f32 %v5846, %v5894
    %v5896 = vpop.f32.mrf.mxu0
    %v5897 = vadd.f32 %v5848, %v5896
    %5898 = vmatmul.bf16.gmra.mxu0 %v348
    %v5899 = vpop.f32.mrf.mxu0
    %v5900 = vadd.f32 %v5851, %v5899
    %v5901 = vpop.f32.mrf.mxu0
    %v5902 = vadd.f32 %v5853, %v5901
    %5903 = vmatmul.bf16.gmra.mxu0 %v356
    %v5904 = vpop.f32.mrf.mxu0
    %v5905 = vadd.f32 %v5856, %v5904
    %v5906 = vpop.f32.mrf.mxu0
    %v5907 = vadd.f32 %v5858, %v5906
    %5908 = vmatmul.bf16.gmra.mxu0 %v364
    %v5909 = vpop.f32.mrf.mxu0
    %v5910 = vadd.f32 %v5861, %v5909
    %v5911 = vpop.f32.mrf.mxu0
    %v5912 = vadd.f32 %v5863, %v5911
    %5913 = vmatmul.bf16.gmra.mxu0 %v372
    %v5914 = vpop.f32.mrf.mxu0
    %v5915 = vadd.f32 %v5866, %v5914
    %v5916 = vpop.f32.mrf.mxu0
    %v5917 = vadd.f32 %v5868, %v5916
    %5918 = vdwg.mxu0
    %5919 = vmatpush.bf16.msra.mxu0 %v2635
    %5920 = vmatpush.bf16.msra.mxu0 %v2627
    %5921 = vmatpush.bf16.msra.mxu0 %v2619
    %5922 = vmatpush.bf16.msra.mxu0 %v2611
    %5923 = vmatpush.bf16.msra.mxu0 %v2603
    %5924 = vmatpush.bf16.msra.mxu0 %v2595
    %5925 = vmatpush.bf16.msra.mxu0 %v2587
    %5926 = vmatpush.bf16.msra.mxu0 %v2579
    %5927 = vmatmul.bf16.gmra.mxu0 %v317
    %v5928 = vpop.f32.mrf.mxu0
    %v5929 = vadd.f32 %v5880, %v5928
    %v5930 = vpop.f32.mrf.mxu0
    %v5931 = vadd.f32 %v5882, %v5930
    %5932 = vmatmul.bf16.gmra.mxu0 %v325
    %v5933 = vpop.f32.mrf.mxu0
    %v5934 = vadd.f32 %v5885, %v5933
    %v5935 = vpop.f32.mrf.mxu0
    %v5936 = vadd.f32 %v5887, %v5935
    %5937 = vmatmul.bf16.gmra.mxu0 %v333
    %v5938 = vpop.f32.mrf.mxu0
    %v5939 = vadd.f32 %v5890, %v5938
    %v5940 = vpop.f32.mrf.mxu0
    %v5941 = vadd.f32 %v5892, %v5940
    %5942 = vmatmul.bf16.gmra.mxu0 %v341
    %v5943 = vpop.f32.mrf.mxu0
    %v5944 = vadd.f32 %v5895, %v5943
    %v5945 = vpop.f32.mrf.mxu0
    %v5946 = vadd.f32 %v5897, %v5945
    %5947 = vmatmul.bf16.gmra.mxu0 %v349
    %v5948 = vpop.f32.mrf.mxu0
    %v5949 = vadd.f32 %v5900, %v5948
    %v5950 = vpop.f32.mrf.mxu0
    %v5951 = vadd.f32 %v5902, %v5950
    %5952 = vmatmul.bf16.gmra.mxu0 %v357
    %v5953 = vpop.f32.mrf.mxu0
    %v5954 = vadd.f32 %v5905, %v5953
    %v5955 = vpop.f32.mrf.mxu0
    %v5956 = vadd.f32 %v5907, %v5955
    %5957 = vmatmul.bf16.gmra.mxu0 %v365
    %v5958 = vpop.f32.mrf.mxu0
    %v5959 = vadd.f32 %v5910, %v5958
    %v5960 = vpop.f32.mrf.mxu0
    %v5961 = vadd.f32 %v5912, %v5960
    %5962 = vmatmul.bf16.gmra.mxu0 %v373
    %v5963 = vpop.f32.mrf.mxu0
    %v5964 = vadd.f32 %v5915, %v5963
    %v5965 = vpop.f32.mrf.mxu0
    %v5966 = vadd.f32 %v5917, %v5965
    %5967 = vdwg.mxu0
    %5968 = vmatpush.bf16.msra.mxu0 %v2699
    %5969 = vmatpush.bf16.msra.mxu0 %v2691
    %5970 = vmatpush.bf16.msra.mxu0 %v2683
    %5971 = vmatpush.bf16.msra.mxu0 %v2675
    %5972 = vmatpush.bf16.msra.mxu0 %v2667
    %5973 = vmatpush.bf16.msra.mxu0 %v2659
    %5974 = vmatpush.bf16.msra.mxu0 %v2651
    %5975 = vmatpush.bf16.msra.mxu0 %v2643
    %5976 = vmatmul.bf16.gmra.mxu0 %v318
    %v5977 = vpop.f32.mrf.mxu0
    %v5978 = vadd.f32 %v5929, %v5977
    %v5979 = vpop.f32.mrf.mxu0
    %v5980 = vadd.f32 %v5931, %v5979
    %5981 = vmatmul.bf16.gmra.mxu0 %v326
    %v5982 = vpop.f32.mrf.mxu0
    %v5983 = vadd.f32 %v5934, %v5982
    %v5984 = vpop.f32.mrf.mxu0
    %v5985 = vadd.f32 %v5936, %v5984
    %5986 = vmatmul.bf16.gmra.mxu0 %v334
    %v5987 = vpop.f32.mrf.mxu0
    %v5988 = vadd.f32 %v5939, %v5987
    %v5989 = vpop.f32.mrf.mxu0
    %v5990 = vadd.f32 %v5941, %v5989
    %5991 = vmatmul.bf16.gmra.mxu0 %v342
    %v5992 = vpop.f32.mrf.mxu0
    %v5993 = vadd.f32 %v5944, %v5992
    %v5994 = vpop.f32.mrf.mxu0
    %v5995 = vadd.f32 %v5946, %v5994
    %5996 = vmatmul.bf16.gmra.mxu0 %v350
    %v5997 = vpop.f32.mrf.mxu0
    %v5998 = vadd.f32 %v5949, %v5997
    %v5999 = vpop.f32.mrf.mxu0
    %v6000 = vadd.f32 %v5951, %v5999
    %6001 = vmatmul.bf16.gmra.mxu0 %v358
    %v6002 = vpop.f32.mrf.mxu0
    %v6003 = vadd.f32 %v5954, %v6002
    %v6004 = vpop.f32.mrf.mxu0
    %v6005 = vadd.f32 %v5956, %v6004
    %6006 = vmatmul.bf16.gmra.mxu0 %v366
    %v6007 = vpop.f32.mrf.mxu0
    %v6008 = vadd.f32 %v5959, %v6007
    %v6009 = vpop.f32.mrf.mxu0
    %v6010 = vadd.f32 %v5961, %v6009
    %6011 = vmatmul.bf16.gmra.mxu0 %v374
    %v6012 = vpop.f32.mrf.mxu0
    %v6013 = vadd.f32 %v5964, %v6012
    %v6014 = vpop.f32.mrf.mxu0
    %v6015 = vadd.f32 %v5966, %v6014
    %6016 = vdwg.mxu0
    %6017 = vmatpush.bf16.msra.mxu0 %v2763
    %6018 = vmatpush.bf16.msra.mxu0 %v2755
    %6019 = vmatpush.bf16.msra.mxu0 %v2747
    %6020 = vmatpush.bf16.msra.mxu0 %v2739
    %6021 = vmatpush.bf16.msra.mxu0 %v2731
    %6022 = vmatpush.bf16.msra.mxu0 %v2723
    %6023 = vmatpush.bf16.msra.mxu0 %v2715
    %6024 = vmatpush.bf16.msra.mxu0 %v2707
    %6025 = vmatmul.bf16.gmra.mxu0 %v319
    %v6026 = vpop.f32.mrf.mxu0
    %v6027 = vadd.f32 %v5978, %v6026
    %v6028 = vpop.f32.mrf.mxu0
    %v6029 = vadd.f32 %v5980, %v6028
    %6030 = vmatmul.bf16.gmra.mxu0 %v327
    %v6031 = vpop.f32.mrf.mxu0
    %v6032 = vadd.f32 %v5983, %v6031
    %v6033 = vpop.f32.mrf.mxu0
    %v6034 = vadd.f32 %v5985, %v6033
    %6035 = vmatmul.bf16.gmra.mxu0 %v335
    %v6036 = vpop.f32.mrf.mxu0
    %v6037 = vadd.f32 %v5988, %v6036
    %v6038 = vpop.f32.mrf.mxu0
    %v6039 = vadd.f32 %v5990, %v6038
    %6040 = vmatmul.bf16.gmra.mxu0 %v343
    %v6041 = vpop.f32.mrf.mxu0
    %v6042 = vadd.f32 %v5993, %v6041
    %v6043 = vpop.f32.mrf.mxu0
    %v6044 = vadd.f32 %v5995, %v6043
    %6045 = vmatmul.bf16.gmra.mxu0 %v351
    %v6046 = vpop.f32.mrf.mxu0
    %v6047 = vadd.f32 %v5998, %v6046
    %v6048 = vpop.f32.mrf.mxu0
    %v6049 = vadd.f32 %v6000, %v6048
    %6050 = vmatmul.bf16.gmra.mxu0 %v359
    %v6051 = vpop.f32.mrf.mxu0
    %v6052 = vadd.f32 %v6003, %v6051
    %v6053 = vpop.f32.mrf.mxu0
    %v6054 = vadd.f32 %v6005, %v6053
    %6055 = vmatmul.bf16.gmra.mxu0 %v367
    %v6056 = vpop.f32.mrf.mxu0
    %v6057 = vadd.f32 %v6008, %v6056
    %v6058 = vpop.f32.mrf.mxu0
    %v6059 = vadd.f32 %v6010, %v6058
    %6060 = vmatmul.bf16.gmra.mxu0 %v375
    %v6061 = vpop.f32.mrf.mxu0
    %v6062 = vadd.f32 %v6013, %v6061
    %v6063 = vpop.f32.mrf.mxu0
    %v6064 = vadd.f32 %v6015, %v6063
    %6065 = vdwg.mxu0
    %6066 = vmatpush.bf16.msra.mxu0 %v2827
    %6067 = vmatpush.bf16.msra.mxu0 %v2819
    %6068 = vmatpush.bf16.msra.mxu0 %v2811
    %6069 = vmatpush.bf16.msra.mxu0 %v2803
    %6070 = vmatpush.bf16.msra.mxu0 %v2795
    %6071 = vmatpush.bf16.msra.mxu0 %v2787
    %6072 = vmatpush.bf16.msra.mxu0 %v2779
    %6073 = vmatpush.bf16.msra.mxu0 %v2771
    %6074 = vmatmul.bf16.gmra.mxu0 %v320
    %v6075 = vpop.f32.mrf.mxu0
    %v6076 = vadd.f32 %v6027, %v6075
    %v6077 = vpop.f32.mrf.mxu0
    %v6078 = vadd.f32 %v6029, %v6077
    %6079 = vmatmul.bf16.gmra.mxu0 %v328
    %v6080 = vpop.f32.mrf.mxu0
    %v6081 = vadd.f32 %v6032, %v6080
    %v6082 = vpop.f32.mrf.mxu0
    %v6083 = vadd.f32 %v6034, %v6082
    %6084 = vmatmul.bf16.gmra.mxu0 %v336
    %v6085 = vpop.f32.mrf.mxu0
    %v6086 = vadd.f32 %v6037, %v6085
    %v6087 = vpop.f32.mrf.mxu0
    %v6088 = vadd.f32 %v6039, %v6087
    %6089 = vmatmul.bf16.gmra.mxu0 %v344
    %v6090 = vpop.f32.mrf.mxu0
    %v6091 = vadd.f32 %v6042, %v6090
    %v6092 = vpop.f32.mrf.mxu0
    %v6093 = vadd.f32 %v6044, %v6092
    %6094 = vmatmul.bf16.gmra.mxu0 %v352
    %v6095 = vpop.f32.mrf.mxu0
    %v6096 = vadd.f32 %v6047, %v6095
    %v6097 = vpop.f32.mrf.mxu0
    %v6098 = vadd.f32 %v6049, %v6097
    %6099 = vmatmul.bf16.gmra.mxu0 %v360
    %v6100 = vpop.f32.mrf.mxu0
    %v6101 = vadd.f32 %v6052, %v6100
    %v6102 = vpop.f32.mrf.mxu0
    %v6103 = vadd.f32 %v6054, %v6102
    %6104 = vmatmul.bf16.gmra.mxu0 %v368
    %v6105 = vpop.f32.mrf.mxu0
    %v6106 = vadd.f32 %v6057, %v6105
    %v6107 = vpop.f32.mrf.mxu0
    %v6108 = vadd.f32 %v6059, %v6107
    %6109 = vmatmul.bf16.gmra.mxu0 %v376
    %v6110 = vpop.f32.mrf.mxu0
    %v6111 = vadd.f32 %v6062, %v6110
    %v6112 = vpop.f32.mrf.mxu0
    %v6113 = vadd.f32 %v6064, %v6112
    %6114 = vdwg.mxu0
    %6115 = vmatpush.bf16.msra.mxu0 %v2891
    %6116 = vmatpush.bf16.msra.mxu0 %v2883
    %6117 = vmatpush.bf16.msra.mxu0 %v2875
    %6118 = vmatpush.bf16.msra.mxu0 %v2867
    %6119 = vmatpush.bf16.msra.mxu0 %v2859
    %6120 = vmatpush.bf16.msra.mxu0 %v2851
    %6121 = vmatpush.bf16.msra.mxu0 %v2843
    %6122 = vmatpush.bf16.msra.mxu0 %v2835
    %6123 = vmatmul.bf16.gmra.mxu0 %v321
    %v6124 = vpop.f32.mrf.mxu0
    %v6125 = vadd.f32 %v6076, %v6124
    %v6126 = vpop.f32.mrf.mxu0
    %v6127 = vadd.f32 %v6078, %v6126
    %6128 = vmatmul.bf16.gmra.mxu0 %v329
    %v6129 = vpop.f32.mrf.mxu0
    %v6130 = vadd.f32 %v6081, %v6129
    %v6131 = vpop.f32.mrf.mxu0
    %v6132 = vadd.f32 %v6083, %v6131
    %6133 = vmatmul.bf16.gmra.mxu0 %v337
    %v6134 = vpop.f32.mrf.mxu0
    %v6135 = vadd.f32 %v6086, %v6134
    %v6136 = vpop.f32.mrf.mxu0
    %v6137 = vadd.f32 %v6088, %v6136
    %6138 = vmatmul.bf16.gmra.mxu0 %v345
    %v6139 = vpop.f32.mrf.mxu0
    %v6140 = vadd.f32 %v6091, %v6139
    %v6141 = vpop.f32.mrf.mxu0
    %v6142 = vadd.f32 %v6093, %v6141
    %6143 = vmatmul.bf16.gmra.mxu0 %v353
    %v6144 = vpop.f32.mrf.mxu0
    %v6145 = vadd.f32 %v6096, %v6144
    %v6146 = vpop.f32.mrf.mxu0
    %v6147 = vadd.f32 %v6098, %v6146
    %6148 = vmatmul.bf16.gmra.mxu0 %v361
    %v6149 = vpop.f32.mrf.mxu0
    %v6150 = vadd.f32 %v6101, %v6149
    %v6151 = vpop.f32.mrf.mxu0
    %v6152 = vadd.f32 %v6103, %v6151
    %6153 = vmatmul.bf16.gmra.mxu0 %v369
    %v6154 = vpop.f32.mrf.mxu0
    %v6155 = vadd.f32 %v6106, %v6154
    %v6156 = vpop.f32.mrf.mxu0
    %v6157 = vadd.f32 %v6108, %v6156
    %6158 = vmatmul.bf16.gmra.mxu0 %v377
    %v6159 = vpop.f32.mrf.mxu0
    %v6160 = vadd.f32 %v6111, %v6159
    %v6161 = vpop.f32.mrf.mxu0
    %v6162 = vadd.f32 %v6113, %v6161
    %6163 = vdwg.mxu0
    %6164 = vmatpush.bf16.msra.mxu0 %v2955
    %6165 = vmatpush.bf16.msra.mxu0 %v2947
    %6166 = vmatpush.bf16.msra.mxu0 %v2939
    %6167 = vmatpush.bf16.msra.mxu0 %v2931
    %6168 = vmatpush.bf16.msra.mxu0 %v2923
    %6169 = vmatpush.bf16.msra.mxu0 %v2915
    %6170 = vmatpush.bf16.msra.mxu0 %v2907
    %6171 = vmatpush.bf16.msra.mxu0 %v2899
    %6172 = vmatmul.bf16.gmra.mxu0 %v322
    %v6173 = vpop.f32.mrf.mxu0
    %v6174 = vadd.f32 %v6125, %v6173
    %v6175 = vpop.f32.mrf.mxu0
    %v6176 = vadd.f32 %v6127, %v6175
    %6177 = vmatmul.bf16.gmra.mxu0 %v330
    %v6178 = vpop.f32.mrf.mxu0
    %v6179 = vadd.f32 %v6130, %v6178
    %v6180 = vpop.f32.mrf.mxu0
    %v6181 = vadd.f32 %v6132, %v6180
    %6182 = vmatmul.bf16.gmra.mxu0 %v338
    %v6183 = vpop.f32.mrf.mxu0
    %v6184 = vadd.f32 %v6135, %v6183
    %v6185 = vpop.f32.mrf.mxu0
    %v6186 = vadd.f32 %v6137, %v6185
    %6187 = vmatmul.bf16.gmra.mxu0 %v346
    %v6188 = vpop.f32.mrf.mxu0
    %v6189 = vadd.f32 %v6140, %v6188
    %v6190 = vpop.f32.mrf.mxu0
    %v6191 = vadd.f32 %v6142, %v6190
    %6192 = vmatmul.bf16.gmra.mxu0 %v354
    %v6193 = vpop.f32.mrf.mxu0
    %v6194 = vadd.f32 %v6145, %v6193
    %v6195 = vpop.f32.mrf.mxu0
    %v6196 = vadd.f32 %v6147, %v6195
    %6197 = vmatmul.bf16.gmra.mxu0 %v362
    %v6198 = vpop.f32.mrf.mxu0
    %v6199 = vadd.f32 %v6150, %v6198
    %v6200 = vpop.f32.mrf.mxu0
    %v6201 = vadd.f32 %v6152, %v6200
    %6202 = vmatmul.bf16.gmra.mxu0 %v370
    %v6203 = vpop.f32.mrf.mxu0
    %v6204 = vadd.f32 %v6155, %v6203
    %v6205 = vpop.f32.mrf.mxu0
    %v6206 = vadd.f32 %v6157, %v6205
    %6207 = vmatmul.bf16.gmra.mxu0 %v378
    %v6208 = vpop.f32.mrf.mxu0
    %v6209 = vadd.f32 %v6160, %v6208
    %v6210 = vpop.f32.mrf.mxu0
    %v6211 = vadd.f32 %v6162, %v6210
    %6212 = vdwg.mxu0
    %6213 = vmatpush.bf16.msra.mxu0 %v2508
    %6214 = vmatpush.bf16.msra.mxu0 %v2500
    %6215 = vmatpush.bf16.msra.mxu0 %v2492
    %6216 = vmatpush.bf16.msra.mxu0 %v2484
    %6217 = vmatpush.bf16.msra.mxu0 %v2476
    %6218 = vmatpush.bf16.msra.mxu0 %v2468
    %6219 = vmatpush.bf16.msra.mxu0 %v2460
    %6220 = vmatpush.bf16.msra.mxu0 %v2452
    %6221 = vmatmul.bf16.gmra.mxu0 %v315
    %v6222 = vpop.f32.mrf.mxu0
    %v6223 = vadd.f32 %v900, %v6222
    %v6224 = vpop.f32.mrf.mxu0
    %v6225 = vadd.f32 %v900, %v6224
    %6226 = vmatmul.bf16.gmra.mxu0 %v323
    %v6227 = vpop.f32.mrf.mxu0
    %v6228 = vadd.f32 %v900, %v6227
    %v6229 = vpop.f32.mrf.mxu0
    %v6230 = vadd.f32 %v900, %v6229
    %6231 = vmatmul.bf16.gmra.mxu0 %v331
    %v6232 = vpop.f32.mrf.mxu0
    %v6233 = vadd.f32 %v900, %v6232
    %v6234 = vpop.f32.mrf.mxu0
    %v6235 = vadd.f32 %v900, %v6234
    %6236 = vmatmul.bf16.gmra.mxu0 %v339
    %v6237 = vpop.f32.mrf.mxu0
    %v6238 = vadd.f32 %v900, %v6237
    %v6239 = vpop.f32.mrf.mxu0
    %v6240 = vadd.f32 %v900, %v6239
    %6241 = vmatmul.bf16.gmra.mxu0 %v347
    %v6242 = vpop.f32.mrf.mxu0
    %v6243 = vadd.f32 %v900, %v6242
    %v6244 = vpop.f32.mrf.mxu0
    %v6245 = vadd.f32 %v900, %v6244
    %6246 = vmatmul.bf16.gmra.mxu0 %v355
    %v6247 = vpop.f32.mrf.mxu0
    %v6248 = vadd.f32 %v900, %v6247
    %v6249 = vpop.f32.mrf.mxu0
    %v6250 = vadd.f32 %v900, %v6249
    %6251 = vmatmul.bf16.gmra.mxu0 %v363
    %v6252 = vpop.f32.mrf.mxu0
    %v6253 = vadd.f32 %v900, %v6252
    %v6254 = vpop.f32.mrf.mxu0
    %v6255 = vadd.f32 %v900, %v6254
    %6256 = vmatmul.bf16.gmra.mxu0 %v371
    %v6257 = vpop.f32.mrf.mxu0
    %v6258 = vadd.f32 %v900, %v6257
    %v6259 = vpop.f32.mrf.mxu0
    %v6260 = vadd.f32 %v900, %v6259
    %6261 = vdwg.mxu0
    %6262 = vmatpush.bf16.msra.mxu0 %v2572
    %6263 = vmatpush.bf16.msra.mxu0 %v2564
    %6264 = vmatpush.bf16.msra.mxu0 %v2556
    %6265 = vmatpush.bf16.msra.mxu0 %v2548
    %6266 = vmatpush.bf16.msra.mxu0 %v2540
    %6267 = vmatpush.bf16.msra.mxu0 %v2532
    %6268 = vmatpush.bf16.msra.mxu0 %v2524
    %6269 = vmatpush.bf16.msra.mxu0 %v2516
    %6270 = vmatmul.bf16.gmra.mxu0 %v316
    %v6271 = vpop.f32.mrf.mxu0
    %v6272 = vadd.f32 %v6223, %v6271
    %v6273 = vpop.f32.mrf.mxu0
    %v6274 = vadd.f32 %v6225, %v6273
    %6275 = vmatmul.bf16.gmra.mxu0 %v324
    %v6276 = vpop.f32.mrf.mxu0
    %v6277 = vadd.f32 %v6228, %v6276
    %v6278 = vpop.f32.mrf.mxu0
    %v6279 = vadd.f32 %v6230, %v6278
    %6280 = vmatmul.bf16.gmra.mxu0 %v332
    %v6281 = vpop.f32.mrf.mxu0
    %v6282 = vadd.f32 %v6233, %v6281
    %v6283 = vpop.f32.mrf.mxu0
    %v6284 = vadd.f32 %v6235, %v6283
    %6285 = vmatmul.bf16.gmra.mxu0 %v340
    %v6286 = vpop.f32.mrf.mxu0
    %v6287 = vadd.f32 %v6238, %v6286
    %v6288 = vpop.f32.mrf.mxu0
    %v6289 = vadd.f32 %v6240, %v6288
    %6290 = vmatmul.bf16.gmra.mxu0 %v348
    %v6291 = vpop.f32.mrf.mxu0
    %v6292 = vadd.f32 %v6243, %v6291
    %v6293 = vpop.f32.mrf.mxu0
    %v6294 = vadd.f32 %v6245, %v6293
    %6295 = vmatmul.bf16.gmra.mxu0 %v356
    %v6296 = vpop.f32.mrf.mxu0
    %v6297 = vadd.f32 %v6248, %v6296
    %v6298 = vpop.f32.mrf.mxu0
    %v6299 = vadd.f32 %v6250, %v6298
    %6300 = vmatmul.bf16.gmra.mxu0 %v364
    %v6301 = vpop.f32.mrf.mxu0
    %v6302 = vadd.f32 %v6253, %v6301
    %v6303 = vpop.f32.mrf.mxu0
    %v6304 = vadd.f32 %v6255, %v6303
    %6305 = vmatmul.bf16.gmra.mxu0 %v372
    %v6306 = vpop.f32.mrf.mxu0
    %v6307 = vadd.f32 %v6258, %v6306
    %v6308 = vpop.f32.mrf.mxu0
    %v6309 = vadd.f32 %v6260, %v6308
    %6310 = vdwg.mxu0
    %6311 = vmatpush.bf16.msra.mxu0 %v2636
    %6312 = vmatpush.bf16.msra.mxu0 %v2628
    %6313 = vmatpush.bf16.msra.mxu0 %v2620
    %6314 = vmatpush.bf16.msra.mxu0 %v2612
    %6315 = vmatpush.bf16.msra.mxu0 %v2604
    %6316 = vmatpush.bf16.msra.mxu0 %v2596
    %6317 = vmatpush.bf16.msra.mxu0 %v2588
    %6318 = vmatpush.bf16.msra.mxu0 %v2580
    %6319 = vmatmul.bf16.gmra.mxu0 %v317
    %v6320 = vpop.f32.mrf.mxu0
    %v6321 = vadd.f32 %v6272, %v6320
    %v6322 = vpop.f32.mrf.mxu0
    %v6323 = vadd.f32 %v6274, %v6322
    %6324 = vmatmul.bf16.gmra.mxu0 %v325
    %v6325 = vpop.f32.mrf.mxu0
    %v6326 = vadd.f32 %v6277, %v6325
    %v6327 = vpop.f32.mrf.mxu0
    %v6328 = vadd.f32 %v6279, %v6327
    %6329 = vmatmul.bf16.gmra.mxu0 %v333
    %v6330 = vpop.f32.mrf.mxu0
    %v6331 = vadd.f32 %v6282, %v6330
    %v6332 = vpop.f32.mrf.mxu0
    %v6333 = vadd.f32 %v6284, %v6332
    %6334 = vmatmul.bf16.gmra.mxu0 %v341
    %v6335 = vpop.f32.mrf.mxu0
    %v6336 = vadd.f32 %v6287, %v6335
    %v6337 = vpop.f32.mrf.mxu0
    %v6338 = vadd.f32 %v6289, %v6337
    %6339 = vmatmul.bf16.gmra.mxu0 %v349
    %v6340 = vpop.f32.mrf.mxu0
    %v6341 = vadd.f32 %v6292, %v6340
    %v6342 = vpop.f32.mrf.mxu0
    %v6343 = vadd.f32 %v6294, %v6342
    %6344 = vmatmul.bf16.gmra.mxu0 %v357
    %v6345 = vpop.f32.mrf.mxu0
    %v6346 = vadd.f32 %v6297, %v6345
    %v6347 = vpop.f32.mrf.mxu0
    %v6348 = vadd.f32 %v6299, %v6347
    %6349 = vmatmul.bf16.gmra.mxu0 %v365
    %v6350 = vpop.f32.mrf.mxu0
    %v6351 = vadd.f32 %v6302, %v6350
    %v6352 = vpop.f32.mrf.mxu0
    %v6353 = vadd.f32 %v6304, %v6352
    %6354 = vmatmul.bf16.gmra.mxu0 %v373
    %v6355 = vpop.f32.mrf.mxu0
    %v6356 = vadd.f32 %v6307, %v6355
    %v6357 = vpop.f32.mrf.mxu0
    %v6358 = vadd.f32 %v6309, %v6357
    %6359 = vdwg.mxu0
    %6360 = vmatpush.bf16.msra.mxu0 %v2700
    %6361 = vmatpush.bf16.msra.mxu0 %v2692
    %6362 = vmatpush.bf16.msra.mxu0 %v2684
    %6363 = vmatpush.bf16.msra.mxu0 %v2676
    %6364 = vmatpush.bf16.msra.mxu0 %v2668
    %6365 = vmatpush.bf16.msra.mxu0 %v2660
    %6366 = vmatpush.bf16.msra.mxu0 %v2652
    %6367 = vmatpush.bf16.msra.mxu0 %v2644
    %6368 = vmatmul.bf16.gmra.mxu0 %v318
    %v6369 = vpop.f32.mrf.mxu0
    %v6370 = vadd.f32 %v6321, %v6369
    %v6371 = vpop.f32.mrf.mxu0
    %v6372 = vadd.f32 %v6323, %v6371
    %6373 = vmatmul.bf16.gmra.mxu0 %v326
    %v6374 = vpop.f32.mrf.mxu0
    %v6375 = vadd.f32 %v6326, %v6374
    %v6376 = vpop.f32.mrf.mxu0
    %v6377 = vadd.f32 %v6328, %v6376
    %6378 = vmatmul.bf16.gmra.mxu0 %v334
    %v6379 = vpop.f32.mrf.mxu0
    %v6380 = vadd.f32 %v6331, %v6379
    %v6381 = vpop.f32.mrf.mxu0
    %v6382 = vadd.f32 %v6333, %v6381
    %6383 = vmatmul.bf16.gmra.mxu0 %v342
    %v6384 = vpop.f32.mrf.mxu0
    %v6385 = vadd.f32 %v6336, %v6384
    %v6386 = vpop.f32.mrf.mxu0
    %v6387 = vadd.f32 %v6338, %v6386
    %6388 = vmatmul.bf16.gmra.mxu0 %v350
    %v6389 = vpop.f32.mrf.mxu0
    %v6390 = vadd.f32 %v6341, %v6389
    %v6391 = vpop.f32.mrf.mxu0
    %v6392 = vadd.f32 %v6343, %v6391
    %6393 = vmatmul.bf16.gmra.mxu0 %v358
    %v6394 = vpop.f32.mrf.mxu0
    %v6395 = vadd.f32 %v6346, %v6394
    %v6396 = vpop.f32.mrf.mxu0
    %v6397 = vadd.f32 %v6348, %v6396
    %6398 = vmatmul.bf16.gmra.mxu0 %v366
    %v6399 = vpop.f32.mrf.mxu0
    %v6400 = vadd.f32 %v6351, %v6399
    %v6401 = vpop.f32.mrf.mxu0
    %v6402 = vadd.f32 %v6353, %v6401
    %6403 = vmatmul.bf16.gmra.mxu0 %v374
    %v6404 = vpop.f32.mrf.mxu0
    %v6405 = vadd.f32 %v6356, %v6404
    %v6406 = vpop.f32.mrf.mxu0
    %v6407 = vadd.f32 %v6358, %v6406
    %6408 = vdwg.mxu0
    %6409 = vmatpush.bf16.msra.mxu0 %v2764
    %6410 = vmatpush.bf16.msra.mxu0 %v2756
    %6411 = vmatpush.bf16.msra.mxu0 %v2748
    %6412 = vmatpush.bf16.msra.mxu0 %v2740
    %6413 = vmatpush.bf16.msra.mxu0 %v2732
    %6414 = vmatpush.bf16.msra.mxu0 %v2724
    %6415 = vmatpush.bf16.msra.mxu0 %v2716
    %6416 = vmatpush.bf16.msra.mxu0 %v2708
    %6417 = vmatmul.bf16.gmra.mxu0 %v319
    %v6418 = vpop.f32.mrf.mxu0
    %v6419 = vadd.f32 %v6370, %v6418
    %v6420 = vpop.f32.mrf.mxu0
    %v6421 = vadd.f32 %v6372, %v6420
    %6422 = vmatmul.bf16.gmra.mxu0 %v327
    %v6423 = vpop.f32.mrf.mxu0
    %v6424 = vadd.f32 %v6375, %v6423
    %v6425 = vpop.f32.mrf.mxu0
    %v6426 = vadd.f32 %v6377, %v6425
    %6427 = vmatmul.bf16.gmra.mxu0 %v335
    %v6428 = vpop.f32.mrf.mxu0
    %v6429 = vadd.f32 %v6380, %v6428
    %v6430 = vpop.f32.mrf.mxu0
    %v6431 = vadd.f32 %v6382, %v6430
    %6432 = vmatmul.bf16.gmra.mxu0 %v343
    %v6433 = vpop.f32.mrf.mxu0
    %v6434 = vadd.f32 %v6385, %v6433
    %v6435 = vpop.f32.mrf.mxu0
    %v6436 = vadd.f32 %v6387, %v6435
    %6437 = vmatmul.bf16.gmra.mxu0 %v351
    %v6438 = vpop.f32.mrf.mxu0
    %v6439 = vadd.f32 %v6390, %v6438
    %v6440 = vpop.f32.mrf.mxu0
    %v6441 = vadd.f32 %v6392, %v6440
    %6442 = vmatmul.bf16.gmra.mxu0 %v359
    %v6443 = vpop.f32.mrf.mxu0
    %v6444 = vadd.f32 %v6395, %v6443
    %v6445 = vpop.f32.mrf.mxu0
    %v6446 = vadd.f32 %v6397, %v6445
    %6447 = vmatmul.bf16.gmra.mxu0 %v367
    %v6448 = vpop.f32.mrf.mxu0
    %v6449 = vadd.f32 %v6400, %v6448
    %v6450 = vpop.f32.mrf.mxu0
    %v6451 = vadd.f32 %v6402, %v6450
    %6452 = vmatmul.bf16.gmra.mxu0 %v375
    %v6453 = vpop.f32.mrf.mxu0
    %v6454 = vadd.f32 %v6405, %v6453
    %v6455 = vpop.f32.mrf.mxu0
    %v6456 = vadd.f32 %v6407, %v6455
    %6457 = vdwg.mxu0
    %6458 = vmatpush.bf16.msra.mxu0 %v2828
    %6459 = vmatpush.bf16.msra.mxu0 %v2820
    %6460 = vmatpush.bf16.msra.mxu0 %v2812
    %6461 = vmatpush.bf16.msra.mxu0 %v2804
    %6462 = vmatpush.bf16.msra.mxu0 %v2796
    %6463 = vmatpush.bf16.msra.mxu0 %v2788
    %6464 = vmatpush.bf16.msra.mxu0 %v2780
    %6465 = vmatpush.bf16.msra.mxu0 %v2772
    %6466 = vmatmul.bf16.gmra.mxu0 %v320
    %v6467 = vpop.f32.mrf.mxu0
    %v6468 = vadd.f32 %v6419, %v6467
    %v6469 = vpop.f32.mrf.mxu0
    %v6470 = vadd.f32 %v6421, %v6469
    %6471 = vmatmul.bf16.gmra.mxu0 %v328
    %v6472 = vpop.f32.mrf.mxu0
    %v6473 = vadd.f32 %v6424, %v6472
    %v6474 = vpop.f32.mrf.mxu0
    %v6475 = vadd.f32 %v6426, %v6474
    %6476 = vmatmul.bf16.gmra.mxu0 %v336
    %v6477 = vpop.f32.mrf.mxu0
    %v6478 = vadd.f32 %v6429, %v6477
    %v6479 = vpop.f32.mrf.mxu0
    %v6480 = vadd.f32 %v6431, %v6479
    %6481 = vmatmul.bf16.gmra.mxu0 %v344
    %v6482 = vpop.f32.mrf.mxu0
    %v6483 = vadd.f32 %v6434, %v6482
    %v6484 = vpop.f32.mrf.mxu0
    %v6485 = vadd.f32 %v6436, %v6484
    %6486 = vmatmul.bf16.gmra.mxu0 %v352
    %v6487 = vpop.f32.mrf.mxu0
    %v6488 = vadd.f32 %v6439, %v6487
    %v6489 = vpop.f32.mrf.mxu0
    %v6490 = vadd.f32 %v6441, %v6489
    %6491 = vmatmul.bf16.gmra.mxu0 %v360
    %v6492 = vpop.f32.mrf.mxu0
    %v6493 = vadd.f32 %v6444, %v6492
    %v6494 = vpop.f32.mrf.mxu0
    %v6495 = vadd.f32 %v6446, %v6494
    %6496 = vmatmul.bf16.gmra.mxu0 %v368
    %v6497 = vpop.f32.mrf.mxu0
    %v6498 = vadd.f32 %v6449, %v6497
    %v6499 = vpop.f32.mrf.mxu0
    %v6500 = vadd.f32 %v6451, %v6499
    %6501 = vmatmul.bf16.gmra.mxu0 %v376
    %v6502 = vpop.f32.mrf.mxu0
    %v6503 = vadd.f32 %v6454, %v6502
    %v6504 = vpop.f32.mrf.mxu0
    %v6505 = vadd.f32 %v6456, %v6504
    %6506 = vdwg.mxu0
    %6507 = vmatpush.bf16.msra.mxu0 %v2892
    %6508 = vmatpush.bf16.msra.mxu0 %v2884
    %6509 = vmatpush.bf16.msra.mxu0 %v2876
    %6510 = vmatpush.bf16.msra.mxu0 %v2868
    %6511 = vmatpush.bf16.msra.mxu0 %v2860
    %6512 = vmatpush.bf16.msra.mxu0 %v2852
    %6513 = vmatpush.bf16.msra.mxu0 %v2844
    %6514 = vmatpush.bf16.msra.mxu0 %v2836
    %6515 = vmatmul.bf16.gmra.mxu0 %v321
    %v6516 = vpop.f32.mrf.mxu0
    %v6517 = vadd.f32 %v6468, %v6516
    %v6518 = vpop.f32.mrf.mxu0
    %v6519 = vadd.f32 %v6470, %v6518
    %6520 = vmatmul.bf16.gmra.mxu0 %v329
    %v6521 = vpop.f32.mrf.mxu0
    %v6522 = vadd.f32 %v6473, %v6521
    %v6523 = vpop.f32.mrf.mxu0
    %v6524 = vadd.f32 %v6475, %v6523
    %6525 = vmatmul.bf16.gmra.mxu0 %v337
    %v6526 = vpop.f32.mrf.mxu0
    %v6527 = vadd.f32 %v6478, %v6526
    %v6528 = vpop.f32.mrf.mxu0
    %v6529 = vadd.f32 %v6480, %v6528
    %6530 = vmatmul.bf16.gmra.mxu0 %v345
    %v6531 = vpop.f32.mrf.mxu0
    %v6532 = vadd.f32 %v6483, %v6531
    %v6533 = vpop.f32.mrf.mxu0
    %v6534 = vadd.f32 %v6485, %v6533
    %6535 = vmatmul.bf16.gmra.mxu0 %v353
    %v6536 = vpop.f32.mrf.mxu0
    %v6537 = vadd.f32 %v6488, %v6536
    %v6538 = vpop.f32.mrf.mxu0
    %v6539 = vadd.f32 %v6490, %v6538
    %6540 = vmatmul.bf16.gmra.mxu0 %v361
    %v6541 = vpop.f32.mrf.mxu0
    %v6542 = vadd.f32 %v6493, %v6541
    %v6543 = vpop.f32.mrf.mxu0
    %v6544 = vadd.f32 %v6495, %v6543
    %6545 = vmatmul.bf16.gmra.mxu0 %v369
    %v6546 = vpop.f32.mrf.mxu0
    %v6547 = vadd.f32 %v6498, %v6546
    %v6548 = vpop.f32.mrf.mxu0
    %v6549 = vadd.f32 %v6500, %v6548
    %6550 = vmatmul.bf16.gmra.mxu0 %v377
    %v6551 = vpop.f32.mrf.mxu0
    %v6552 = vadd.f32 %v6503, %v6551
    %v6553 = vpop.f32.mrf.mxu0
    %v6554 = vadd.f32 %v6505, %v6553
    %6555 = vdwg.mxu0
    %6556 = vmatpush.bf16.msra.mxu0 %v2956
    %6557 = vmatpush.bf16.msra.mxu0 %v2948
    %6558 = vmatpush.bf16.msra.mxu0 %v2940
    %6559 = vmatpush.bf16.msra.mxu0 %v2932
    %6560 = vmatpush.bf16.msra.mxu0 %v2924
    %6561 = vmatpush.bf16.msra.mxu0 %v2916
    %6562 = vmatpush.bf16.msra.mxu0 %v2908
    %6563 = vmatpush.bf16.msra.mxu0 %v2900
    %6564 = vmatmul.bf16.gmra.mxu0 %v322
    %v6565 = vpop.f32.mrf.mxu0
    %v6566 = vadd.f32 %v6517, %v6565
    %v6567 = vpop.f32.mrf.mxu0
    %v6568 = vadd.f32 %v6519, %v6567
    %6569 = vmatmul.bf16.gmra.mxu0 %v330
    %v6570 = vpop.f32.mrf.mxu0
    %v6571 = vadd.f32 %v6522, %v6570
    %v6572 = vpop.f32.mrf.mxu0
    %v6573 = vadd.f32 %v6524, %v6572
    %6574 = vmatmul.bf16.gmra.mxu0 %v338
    %v6575 = vpop.f32.mrf.mxu0
    %v6576 = vadd.f32 %v6527, %v6575
    %v6577 = vpop.f32.mrf.mxu0
    %v6578 = vadd.f32 %v6529, %v6577
    %6579 = vmatmul.bf16.gmra.mxu0 %v346
    %v6580 = vpop.f32.mrf.mxu0
    %v6581 = vadd.f32 %v6532, %v6580
    %v6582 = vpop.f32.mrf.mxu0
    %v6583 = vadd.f32 %v6534, %v6582
    %6584 = vmatmul.bf16.gmra.mxu0 %v354
    %v6585 = vpop.f32.mrf.mxu0
    %v6586 = vadd.f32 %v6537, %v6585
    %v6587 = vpop.f32.mrf.mxu0
    %v6588 = vadd.f32 %v6539, %v6587
    %6589 = vmatmul.bf16.gmra.mxu0 %v362
    %v6590 = vpop.f32.mrf.mxu0
    %v6591 = vadd.f32 %v6542, %v6590
    %v6592 = vpop.f32.mrf.mxu0
    %v6593 = vadd.f32 %v6544, %v6592
    %6594 = vmatmul.bf16.gmra.mxu0 %v370
    %v6595 = vpop.f32.mrf.mxu0
    %v6596 = vadd.f32 %v6547, %v6595
    %v6597 = vpop.f32.mrf.mxu0
    %v6598 = vadd.f32 %v6549, %v6597
    %6599 = vmatmul.bf16.gmra.mxu0 %v378
    %v6600 = vpop.f32.mrf.mxu0
    %v6601 = vadd.f32 %v6552, %v6600
    %v6602 = vpop.f32.mrf.mxu0
    %v6603 = vadd.f32 %v6554, %v6602
    %6604 = vdwg.mxu0
    %v6605 = vmul.f32 %v3822, 0.2
    %v6606 = vmul.f32 %v4214, 0.2
    %v6607 = vmul.f32 %v4606, 0.2
    %v6608 = vmul.f32 %v4998, 0.2
    %v6609 = vmul.f32 %v5390, 0.2
    %v6610 = vmul.f32 %v5782, 0.2
    %v6611 = vmul.f32 %v6174, 0.2
    %v6612 = vmul.f32 %v6566, 0.2
    %v6613 = vmul.f32 %v3824, 0.2
    %v6614 = vmul.f32 %v4216, 0.2
    %v6615 = vmul.f32 %v4608, 0.2
    %v6616 = vmul.f32 %v5000, 0.2
    %v6617 = vmul.f32 %v5392, 0.2
    %v6618 = vmul.f32 %v5784, 0.2
    %v6619 = vmul.f32 %v6176, 0.2
    %v6620 = vmul.f32 %v6568, 0.2
    %v6621 = vmul.f32 %v3827, 0.2
    %v6622 = vmul.f32 %v4219, 0.2
    %v6623 = vmul.f32 %v4611, 0.2
    %v6624 = vmul.f32 %v5003, 0.2
    %v6625 = vmul.f32 %v5395, 0.2
    %v6626 = vmul.f32 %v5787, 0.2
    %v6627 = vmul.f32 %v6179, 0.2
    %v6628 = vmul.f32 %v6571, 0.2
    %v6629 = vmul.f32 %v3829, 0.2
    %v6630 = vmul.f32 %v4221, 0.2
    %v6631 = vmul.f32 %v4613, 0.2
    %v6632 = vmul.f32 %v5005, 0.2
    %v6633 = vmul.f32 %v5397, 0.2
    %v6634 = vmul.f32 %v5789, 0.2
    %v6635 = vmul.f32 %v6181, 0.2
    %v6636 = vmul.f32 %v6573, 0.2
    %v6637 = vmul.f32 %v3832, 0.2
    %v6638 = vmul.f32 %v4224, 0.2
    %v6639 = vmul.f32 %v4616, 0.2
    %v6640 = vmul.f32 %v5008, 0.2
    %v6641 = vmul.f32 %v5400, 0.2
    %v6642 = vmul.f32 %v5792, 0.2
    %v6643 = vmul.f32 %v6184, 0.2
    %v6644 = vmul.f32 %v6576, 0.2
    %v6645 = vmul.f32 %v3834, 0.2
    %v6646 = vmul.f32 %v4226, 0.2
    %v6647 = vmul.f32 %v4618, 0.2
    %v6648 = vmul.f32 %v5010, 0.2
    %v6649 = vmul.f32 %v5402, 0.2
    %v6650 = vmul.f32 %v5794, 0.2
    %v6651 = vmul.f32 %v6186, 0.2
    %v6652 = vmul.f32 %v6578, 0.2
    %v6653 = vmul.f32 %v3837, 0.2
    %v6654 = vmul.f32 %v4229, 0.2
    %v6655 = vmul.f32 %v4621, 0.2
    %v6656 = vmul.f32 %v5013, 0.2
    %v6657 = vmul.f32 %v5405, 0.2
    %v6658 = vmul.f32 %v5797, 0.2
    %v6659 = vmul.f32 %v6189, 0.2
    %v6660 = vmul.f32 %v6581, 0.2
    %v6661 = vmul.f32 %v3839, 0.2
    %v6662 = vmul.f32 %v4231, 0.2
    %v6663 = vmul.f32 %v4623, 0.2
    %v6664 = vmul.f32 %v5015, 0.2
    %v6665 = vmul.f32 %v5407, 0.2
    %v6666 = vmul.f32 %v5799, 0.2
    %v6667 = vmul.f32 %v6191, 0.2
    %v6668 = vmul.f32 %v6583, 0.2
    %v6669 = vmul.f32 %v3842, 0.2
    %v6670 = vmul.f32 %v4234, 0.2
    %v6671 = vmul.f32 %v4626, 0.2
    %v6672 = vmul.f32 %v5018, 0.2
    %v6673 = vmul.f32 %v5410, 0.2
    %v6674 = vmul.f32 %v5802, 0.2
    %v6675 = vmul.f32 %v6194, 0.2
    %v6676 = vmul.f32 %v6586, 0.2
    %v6677 = vmul.f32 %v3844, 0.2
    %v6678 = vmul.f32 %v4236, 0.2
    %v6679 = vmul.f32 %v4628, 0.2
    %v6680 = vmul.f32 %v5020, 0.2
    %v6681 = vmul.f32 %v5412, 0.2
    %v6682 = vmul.f32 %v5804, 0.2
    %v6683 = vmul.f32 %v6196, 0.2
    %v6684 = vmul.f32 %v6588, 0.2
    %v6685 = vmul.f32 %v3847, 0.2
    %v6686 = vmul.f32 %v4239, 0.2
    %v6687 = vmul.f32 %v4631, 0.2
    %v6688 = vmul.f32 %v5023, 0.2
    %v6689 = vmul.f32 %v5415, 0.2
    %v6690 = vmul.f32 %v5807, 0.2
    %v6691 = vmul.f32 %v6199, 0.2
    %v6692 = vmul.f32 %v6591, 0.2
    %v6693 = vmul.f32 %v3849, 0.2
    %v6694 = vmul.f32 %v4241, 0.2
    %v6695 = vmul.f32 %v4633, 0.2
    %v6696 = vmul.f32 %v5025, 0.2
    %v6697 = vmul.f32 %v5417, 0.2
    %v6698 = vmul.f32 %v5809, 0.2
    %v6699 = vmul.f32 %v6201, 0.2
    %v6700 = vmul.f32 %v6593, 0.2
    %v6701 = vmul.f32 %v3852, 0.2
    %v6702 = vmul.f32 %v4244, 0.2
    %v6703 = vmul.f32 %v4636, 0.2
    %v6704 = vmul.f32 %v5028, 0.2
    %v6705 = vmul.f32 %v5420, 0.2
    %v6706 = vmul.f32 %v5812, 0.2
    %v6707 = vmul.f32 %v6204, 0.2
    %v6708 = vmul.f32 %v6596, 0.2
    %v6709 = vmul.f32 %v3854, 0.2
    %v6710 = vmul.f32 %v4246, 0.2
    %v6711 = vmul.f32 %v4638, 0.2
    %v6712 = vmul.f32 %v5030, 0.2
    %v6713 = vmul.f32 %v5422, 0.2
    %v6714 = vmul.f32 %v5814, 0.2
    %v6715 = vmul.f32 %v6206, 0.2
    %v6716 = vmul.f32 %v6598, 0.2
    %v6717 = vmul.f32 %v3857, 0.2
    %v6718 = vmul.f32 %v4249, 0.2
    %v6719 = vmul.f32 %v4641, 0.2
    %v6720 = vmul.f32 %v5033, 0.2
    %v6721 = vmul.f32 %v5425, 0.2
    %v6722 = vmul.f32 %v5817, 0.2
    %v6723 = vmul.f32 %v6209, 0.2
    %v6724 = vmul.f32 %v6601, 0.2
    %v6725 = vmul.f32 %v3859, 0.2
    %v6726 = vmul.f32 %v4251, 0.2
    %v6727 = vmul.f32 %v4643, 0.2
    %v6728 = vmul.f32 %v5035, 0.2
    %v6729 = vmul.f32 %v5427, 0.2
    %v6730 = vmul.f32 %v5819, 0.2
    %v6731 = vmul.f32 %v6211, 0.2
    %v6732 = vmul.f32 %v6603, 0.2
    %v6733 = vmax.f32 %v3822, %v6605
    %v6734 = vmax.f32 %v4214, %v6606
    %v6735 = vmax.f32 %v4606, %v6607
    %v6736 = vmax.f32 %v4998, %v6608
    %v6737 = vmax.f32 %v5390, %v6609
    %v6738 = vmax.f32 %v5782, %v6610
    %v6739 = vmax.f32 %v6174, %v6611
    %v6740 = vmax.f32 %v6566, %v6612
    %v6741 = vmax.f32 %v3824, %v6613
    %v6742 = vmax.f32 %v4216, %v6614
    %v6743 = vmax.f32 %v4608, %v6615
    %v6744 = vmax.f32 %v5000, %v6616
    %v6745 = vmax.f32 %v5392, %v6617
    %v6746 = vmax.f32 %v5784, %v6618
    %v6747 = vmax.f32 %v6176, %v6619
    %v6748 = vmax.f32 %v6568, %v6620
    %v6749 = vmax.f32 %v3827, %v6621
    %v6750 = vmax.f32 %v4219, %v6622
    %v6751 = vmax.f32 %v4611, %v6623
    %v6752 = vmax.f32 %v5003, %v6624
    %v6753 = vmax.f32 %v5395, %v6625
    %v6754 = vmax.f32 %v5787, %v6626
    %v6755 = vmax.f32 %v6179, %v6627
    %v6756 = vmax.f32 %v6571, %v6628
    %v6757 = vmax.f32 %v3829, %v6629
    %v6758 = vmax.f32 %v4221, %v6630
    %v6759 = vmax.f32 %v4613, %v6631
    %v6760 = vmax.f32 %v5005, %v6632
    %v6761 = vmax.f32 %v5397, %v6633
    %v6762 = vmax.f32 %v5789, %v6634
    %v6763 = vmax.f32 %v6181, %v6635
    %v6764 = vmax.f32 %v6573, %v6636
    %v6765 = vmax.f32 %v3832, %v6637
    %v6766 = vmax.f32 %v4224, %v6638
    %v6767 = vmax.f32 %v4616, %v6639
    %v6768 = vmax.f32 %v5008, %v6640
    %v6769 = vmax.f32 %v5400, %v6641
    %v6770 = vmax.f32 %v5792, %v6642
    %v6771 = vmax.f32 %v6184, %v6643
    %v6772 = vmax.f32 %v6576, %v6644
    %v6773 = vmax.f32 %v3834, %v6645
    %v6774 = vmax.f32 %v4226, %v6646
    %v6775 = vmax.f32 %v4618, %v6647
    %v6776 = vmax.f32 %v5010, %v6648
    %v6777 = vmax.f32 %v5402, %v6649
    %v6778 = vmax.f32 %v5794, %v6650
    %v6779 = vmax.f32 %v6186, %v6651
    %v6780 = vmax.f32 %v6578, %v6652
    %v6781 = vmax.f32 %v3837, %v6653
    %v6782 = vmax.f32 %v4229, %v6654
    %v6783 = vmax.f32 %v4621, %v6655
    %v6784 = vmax.f32 %v5013, %v6656
    %v6785 = vmax.f32 %v5405, %v6657
    %v6786 = vmax.f32 %v5797, %v6658
    %v6787 = vmax.f32 %v6189, %v6659
    %v6788 = vmax.f32 %v6581, %v6660
    %v6789 = vmax.f32 %v3839, %v6661
    %v6790 = vmax.f32 %v4231, %v6662
    %v6791 = vmax.f32 %v4623, %v6663
    %v6792 = vmax.f32 %v5015, %v6664
    %v6793 = vmax.f32 %v5407, %v6665
    %v6794 = vmax.f32 %v5799, %v6666
    %v6795 = vmax.f32 %v6191, %v6667
    %v6796 = vmax.f32 %v6583, %v6668
    %v6797 = vmax.f32 %v3842, %v6669
    %v6798 = vmax.f32 %v4234, %v6670
    %v6799 = vmax.f32 %v4626, %v6671
    %v6800 = vmax.f32 %v5018, %v6672
    %v6801 = vmax.f32 %v5410, %v6673
    %v6802 = vmax.f32 %v5802, %v6674
    %v6803 = vmax.f32 %v6194, %v6675
    %v6804 = vmax.f32 %v6586, %v6676
    %v6805 = vmax.f32 %v3844, %v6677
    %v6806 = vmax.f32 %v4236, %v6678
    %v6807 = vmax.f32 %v4628, %v6679
    %v6808 = vmax.f32 %v5020, %v6680
    %v6809 = vmax.f32 %v5412, %v6681
    %v6810 = vmax.f32 %v5804, %v6682
    %v6811 = vmax.f32 %v6196, %v6683
    %v6812 = vmax.f32 %v6588, %v6684
    %v6813 = vmax.f32 %v3847, %v6685
    %v6814 = vmax.f32 %v4239, %v6686
    %v6815 = vmax.f32 %v4631, %v6687
    %v6816 = vmax.f32 %v5023, %v6688
    %v6817 = vmax.f32 %v5415, %v6689
    %v6818 = vmax.f32 %v5807, %v6690
    %v6819 = vmax.f32 %v6199, %v6691
    %v6820 = vmax.f32 %v6591, %v6692
    %v6821 = vmax.f32 %v3849, %v6693
    %v6822 = vmax.f32 %v4241, %v6694
    %v6823 = vmax.f32 %v4633, %v6695
    %v6824 = vmax.f32 %v5025, %v6696
    %v6825 = vmax.f32 %v5417, %v6697
    %v6826 = vmax.f32 %v5809, %v6698
    %v6827 = vmax.f32 %v6201, %v6699
    %v6828 = vmax.f32 %v6593, %v6700
    %v6829 = vmax.f32 %v3852, %v6701
    %v6830 = vmax.f32 %v4244, %v6702
    %v6831 = vmax.f32 %v4636, %v6703
    %v6832 = vmax.f32 %v5028, %v6704
    %v6833 = vmax.f32 %v5420, %v6705
    %v6834 = vmax.f32 %v5812, %v6706
    %v6835 = vmax.f32 %v6204, %v6707
    %v6836 = vmax.f32 %v6596, %v6708
    %v6837 = vmax.f32 %v3854, %v6709
    %v6838 = vmax.f32 %v4246, %v6710
    %v6839 = vmax.f32 %v4638, %v6711
    %v6840 = vmax.f32 %v5030, %v6712
    %v6841 = vmax.f32 %v5422, %v6713
    %v6842 = vmax.f32 %v5814, %v6714
    %v6843 = vmax.f32 %v6206, %v6715
    %v6844 = vmax.f32 %v6598, %v6716
    %v6845 = vmax.f32 %v3857, %v6717
    %v6846 = vmax.f32 %v4249, %v6718
    %v6847 = vmax.f32 %v4641, %v6719
    %v6848 = vmax.f32 %v5033, %v6720
    %v6849 = vmax.f32 %v5425, %v6721
    %v6850 = vmax.f32 %v5817, %v6722
    %v6851 = vmax.f32 %v6209, %v6723
    %v6852 = vmax.f32 %v6601, %v6724
    %v6853 = vmax.f32 %v3859, %v6725
    %v6854 = vmax.f32 %v4251, %v6726
    %v6855 = vmax.f32 %v4643, %v6727
    %v6856 = vmax.f32 %v5035, %v6728
    %v6857 = vmax.f32 %v5427, %v6729
    %v6858 = vmax.f32 %v5819, %v6730
    %v6859 = vmax.f32 %v6211, %v6731
    %v6860 = vmax.f32 %v6603, %v6732
    %v6861 = vpack.c.bf16 %v6741, %v6733
    %v6862 = vpack.c.bf16 %v6742, %v6734
    %v6863 = vpack.c.bf16 %v6743, %v6735
    %v6864 = vpack.c.bf16 %v6744, %v6736
    %v6865 = vpack.c.bf16 %v6745, %v6737
    %v6866 = vpack.c.bf16 %v6746, %v6738
    %v6867 = vpack.c.bf16 %v6747, %v6739
    %v6868 = vpack.c.bf16 %v6748, %v6740
    %v6869 = vpack.c.bf16 %v6757, %v6749
    %v6870 = vpack.c.bf16 %v6758, %v6750
    %v6871 = vpack.c.bf16 %v6759, %v6751
    %v6872 = vpack.c.bf16 %v6760, %v6752
    %v6873 = vpack.c.bf16 %v6761, %v6753
    %v6874 = vpack.c.bf16 %v6762, %v6754
    %v6875 = vpack.c.bf16 %v6763, %v6755
    %v6876 = vpack.c.bf16 %v6764, %v6756
    %v6877 = vpack.c.bf16 %v6773, %v6765
    %v6878 = vpack.c.bf16 %v6774, %v6766
    %v6879 = vpack.c.bf16 %v6775, %v6767
    %v6880 = vpack.c.bf16 %v6776, %v6768
    %v6881 = vpack.c.bf16 %v6777, %v6769
    %v6882 = vpack.c.bf16 %v6778, %v6770
    %v6883 = vpack.c.bf16 %v6779, %v6771
    %v6884 = vpack.c.bf16 %v6780, %v6772
    %v6885 = vpack.c.bf16 %v6789, %v6781
    %v6886 = vpack.c.bf16 %v6790, %v6782
    %v6887 = vpack.c.bf16 %v6791, %v6783
    %v6888 = vpack.c.bf16 %v6792, %v6784
    %v6889 = vpack.c.bf16 %v6793, %v6785
    %v6890 = vpack.c.bf16 %v6794, %v6786
    %v6891 = vpack.c.bf16 %v6795, %v6787
    %v6892 = vpack.c.bf16 %v6796, %v6788
    %v6893 = vpack.c.bf16 %v6805, %v6797
    %v6894 = vpack.c.bf16 %v6806, %v6798
    %v6895 = vpack.c.bf16 %v6807, %v6799
    %v6896 = vpack.c.bf16 %v6808, %v6800
    %v6897 = vpack.c.bf16 %v6809, %v6801
    %v6898 = vpack.c.bf16 %v6810, %v6802
    %v6899 = vpack.c.bf16 %v6811, %v6803
    %v6900 = vpack.c.bf16 %v6812, %v6804
    %v6901 = vpack.c.bf16 %v6821, %v6813
    %v6902 = vpack.c.bf16 %v6822, %v6814
    %v6903 = vpack.c.bf16 %v6823, %v6815
    %v6904 = vpack.c.bf16 %v6824, %v6816
    %v6905 = vpack.c.bf16 %v6825, %v6817
    %v6906 = vpack.c.bf16 %v6826, %v6818
    %v6907 = vpack.c.bf16 %v6827, %v6819
    %v6908 = vpack.c.bf16 %v6828, %v6820
    %v6909 = vpack.c.bf16 %v6837, %v6829
    %v6910 = vpack.c.bf16 %v6838, %v6830
    %v6911 = vpack.c.bf16 %v6839, %v6831
    %v6912 = vpack.c.bf16 %v6840, %v6832
    %v6913 = vpack.c.bf16 %v6841, %v6833
    %v6914 = vpack.c.bf16 %v6842, %v6834
    %v6915 = vpack.c.bf16 %v6843, %v6835
    %v6916 = vpack.c.bf16 %v6844, %v6836
    %v6917 = vpack.c.bf16 %v6853, %v6845
    %v6918 = vpack.c.bf16 %v6854, %v6846
    %v6919 = vpack.c.bf16 %v6855, %v6847
    %v6920 = vpack.c.bf16 %v6856, %v6848
    %v6921 = vpack.c.bf16 %v6857, %v6849
    %v6922 = vpack.c.bf16 %v6858, %v6850
    %v6923 = vpack.c.bf16 %v6859, %v6851
    %v6924 = vpack.c.bf16 %v6860, %v6852
    %v6925 = vld [vmem:[#allocation9] sm:$0xff]
    %v6926 = vld [vmem:[#allocation9 + $0x8] sm:$0xff]
    %v6927 = vld [vmem:[#allocation9 + $0x10] sm:$0xff]
    %v6928 = vld [vmem:[#allocation9 + $0x18] sm:$0xff]
    %v6929 = vld [vmem:[#allocation9 + $0x20] sm:$0xff]
    %v6930 = vld [vmem:[#allocation9 + $0x28] sm:$0xff]
    %v6931 = vld [vmem:[#allocation9 + $0x30] sm:$0xff]
    %v6932 = vld [vmem:[#allocation9 + $0x38] sm:$0xff]
    %v6933 = vld [vmem:[#allocation9 + $0x40] sm:$0xff]
    %v6934 = vld [vmem:[#allocation9 + $0x48] sm:$0xff]
    %v6935 = vld [vmem:[#allocation9 + $0x50] sm:$0xff]
    %v6936 = vld [vmem:[#allocation9 + $0x58] sm:$0xff]
    %v6937 = vld [vmem:[#allocation9 + $0x60] sm:$0xff]
    %v6938 = vld [vmem:[#allocation9 + $0x68] sm:$0xff]
    %v6939 = vld [vmem:[#allocation9 + $0x70] sm:$0xff]
    %v6940 = vld [vmem:[#allocation9 + $0x78] sm:$0xff]
    %v6941 = vld [vmem:[#allocation9 + $0x80] sm:$0xff]
    %v6942 = vld [vmem:[#allocation9 + $0x88] sm:$0xff]
    %v6943 = vld [vmem:[#allocation9 + $0x90] sm:$0xff]
    %v6944 = vld [vmem:[#allocation9 + $0x98] sm:$0xff]
    %v6945 = vld [vmem:[#allocation9 + $0xa0] sm:$0xff]
    %v6946 = vld [vmem:[#allocation9 + $0xa8] sm:$0xff]
    %v6947 = vld [vmem:[#allocation9 + $0xb0] sm:$0xff]
    %v6948 = vld [vmem:[#allocation9 + $0xb8] sm:$0xff]
    %v6949 = vld [vmem:[#allocation9 + $0xc0] sm:$0xff]
    %v6950 = vld [vmem:[#allocation9 + $0xc8] sm:$0xff]
    %v6951 = vld [vmem:[#allocation9 + $0xd0] sm:$0xff]
    %v6952 = vld [vmem:[#allocation9 + $0xd8] sm:$0xff]
    %v6953 = vld [vmem:[#allocation9 + $0xe0] sm:$0xff]
    %v6954 = vld [vmem:[#allocation9 + $0xe8] sm:$0xff]
    %v6955 = vld [vmem:[#allocation9 + $0xf0] sm:$0xff]
    %v6956 = vld [vmem:[#allocation9 + $0xf8] sm:$0xff]
    %v6957 = vld [vmem:[#allocation9 + $0x100] sm:$0xff]
    %v6958 = vld [vmem:[#allocation9 + $0x108] sm:$0xff]
    %v6959 = vld [vmem:[#allocation9 + $0x110] sm:$0xff]
    %v6960 = vld [vmem:[#allocation9 + $0x118] sm:$0xff]
    %v6961 = vld [vmem:[#allocation9 + $0x120] sm:$0xff]
    %v6962 = vld [vmem:[#allocation9 + $0x128] sm:$0xff]
    %v6963 = vld [vmem:[#allocation9 + $0x130] sm:$0xff]
    %v6964 = vld [vmem:[#allocation9 + $0x138] sm:$0xff]
    %v6965 = vld [vmem:[#allocation9 + $0x140] sm:$0xff]
    %v6966 = vld [vmem:[#allocation9 + $0x148] sm:$0xff]
    %v6967 = vld [vmem:[#allocation9 + $0x150] sm:$0xff]
    %v6968 = vld [vmem:[#allocation9 + $0x158] sm:$0xff]
    %v6969 = vld [vmem:[#allocation9 + $0x160] sm:$0xff]
    %v6970 = vld [vmem:[#allocation9 + $0x168] sm:$0xff]
    %v6971 = vld [vmem:[#allocation9 + $0x170] sm:$0xff]
    %v6972 = vld [vmem:[#allocation9 + $0x178] sm:$0xff]
    %v6973 = vld [vmem:[#allocation9 + $0x180] sm:$0xff]
    %v6974 = vld [vmem:[#allocation9 + $0x188] sm:$0xff]
    %v6975 = vld [vmem:[#allocation9 + $0x190] sm:$0xff]
    %v6976 = vld [vmem:[#allocation9 + $0x198] sm:$0xff]
    %v6977 = vld [vmem:[#allocation9 + $0x1a0] sm:$0xff]
    %v6978 = vld [vmem:[#allocation9 + $0x1a8] sm:$0xff]
    %v6979 = vld [vmem:[#allocation9 + $0x1b0] sm:$0xff]
    %v6980 = vld [vmem:[#allocation9 + $0x1b8] sm:$0xff]
    %v6981 = vld [vmem:[#allocation9 + $0x1c0] sm:$0xff]
    %v6982 = vld [vmem:[#allocation9 + $0x1c8] sm:$0xff]
    %v6983 = vld [vmem:[#allocation9 + $0x1d0] sm:$0xff]
    %v6984 = vld [vmem:[#allocation9 + $0x1d8] sm:$0xff]
    %v6985 = vld [vmem:[#allocation9 + $0x1e0] sm:$0xff]
    %v6986 = vld [vmem:[#allocation9 + $0x1e8] sm:$0xff]
    %v6987 = vld [vmem:[#allocation9 + $0x1f0] sm:$0xff]
    %v6988 = vld [vmem:[#allocation9 + $0x1f8] sm:$0xff]
    %v6989 = vld [vmem:[#allocation9 + $0x200] sm:$0xff]
    %v6990 = vld [vmem:[#allocation9 + $0x208] sm:$0xff]
    %v6991 = vld [vmem:[#allocation9 + $0x210] sm:$0xff]
    %v6992 = vld [vmem:[#allocation9 + $0x218] sm:$0xff]
    %v6993 = vld [vmem:[#allocation9 + $0x220] sm:$0xff]
    %v6994 = vld [vmem:[#allocation9 + $0x228] sm:$0xff]
    %v6995 = vld [vmem:[#allocation9 + $0x230] sm:$0xff]
    %v6996 = vld [vmem:[#allocation9 + $0x238] sm:$0xff]
    %v6997 = vld [vmem:[#allocation9 + $0x240] sm:$0xff]
    %v6998 = vld [vmem:[#allocation9 + $0x248] sm:$0xff]
    %v6999 = vld [vmem:[#allocation9 + $0x250] sm:$0xff]
    %v7000 = vld [vmem:[#allocation9 + $0x258] sm:$0xff]
    %v7001 = vld [vmem:[#allocation9 + $0x260] sm:$0xff]
    %v7002 = vld [vmem:[#allocation9 + $0x268] sm:$0xff]
    %v7003 = vld [vmem:[#allocation9 + $0x270] sm:$0xff]
    %v7004 = vld [vmem:[#allocation9 + $0x278] sm:$0xff]
    %v7005 = vld [vmem:[#allocation9 + $0x280] sm:$0xff]
    %v7006 = vld [vmem:[#allocation9 + $0x288] sm:$0xff]
    %v7007 = vld [vmem:[#allocation9 + $0x290] sm:$0xff]
    %v7008 = vld [vmem:[#allocation9 + $0x298] sm:$0xff]
    %v7009 = vld [vmem:[#allocation9 + $0x2a0] sm:$0xff]
    %v7010 = vld [vmem:[#allocation9 + $0x2a8] sm:$0xff]
    %v7011 = vld [vmem:[#allocation9 + $0x2b0] sm:$0xff]
    %v7012 = vld [vmem:[#allocation9 + $0x2b8] sm:$0xff]
    %v7013 = vld [vmem:[#allocation9 + $0x2c0] sm:$0xff]
    %v7014 = vld [vmem:[#allocation9 + $0x2c8] sm:$0xff]
    %v7015 = vld [vmem:[#allocation9 + $0x2d0] sm:$0xff]
    %v7016 = vld [vmem:[#allocation9 + $0x2d8] sm:$0xff]
    %v7017 = vld [vmem:[#allocation9 + $0x2e0] sm:$0xff]
    %v7018 = vld [vmem:[#allocation9 + $0x2e8] sm:$0xff]
    %v7019 = vld [vmem:[#allocation9 + $0x2f0] sm:$0xff]
    %v7020 = vld [vmem:[#allocation9 + $0x2f8] sm:$0xff]
    %v7021 = vld [vmem:[#allocation9 + $0x300] sm:$0xff]
    %v7022 = vld [vmem:[#allocation9 + $0x308] sm:$0xff]
    %v7023 = vld [vmem:[#allocation9 + $0x310] sm:$0xff]
    %v7024 = vld [vmem:[#allocation9 + $0x318] sm:$0xff]
    %v7025 = vld [vmem:[#allocation9 + $0x320] sm:$0xff]
    %v7026 = vld [vmem:[#allocation9 + $0x328] sm:$0xff]
    %v7027 = vld [vmem:[#allocation9 + $0x330] sm:$0xff]
    %v7028 = vld [vmem:[#allocation9 + $0x338] sm:$0xff]
    %v7029 = vld [vmem:[#allocation9 + $0x340] sm:$0xff]
    %v7030 = vld [vmem:[#allocation9 + $0x348] sm:$0xff]
    %v7031 = vld [vmem:[#allocation9 + $0x350] sm:$0xff]
    %v7032 = vld [vmem:[#allocation9 + $0x358] sm:$0xff]
    %v7033 = vld [vmem:[#allocation9 + $0x360] sm:$0xff]
    %v7034 = vld [vmem:[#allocation9 + $0x368] sm:$0xff]
    %v7035 = vld [vmem:[#allocation9 + $0x370] sm:$0xff]
    %v7036 = vld [vmem:[#allocation9 + $0x378] sm:$0xff]
    %v7037 = vld [vmem:[#allocation9 + $0x380] sm:$0xff]
    %v7038 = vld [vmem:[#allocation9 + $0x388] sm:$0xff]
    %v7039 = vld [vmem:[#allocation9 + $0x390] sm:$0xff]
    %v7040 = vld [vmem:[#allocation9 + $0x398] sm:$0xff]
    %v7041 = vld [vmem:[#allocation9 + $0x3a0] sm:$0xff]
    %v7042 = vld [vmem:[#allocation9 + $0x3a8] sm:$0xff]
    %v7043 = vld [vmem:[#allocation9 + $0x3b0] sm:$0xff]
    %v7044 = vld [vmem:[#allocation9 + $0x3b8] sm:$0xff]
    %v7045 = vld [vmem:[#allocation9 + $0x3c0] sm:$0xff]
    %v7046 = vld [vmem:[#allocation9 + $0x3c8] sm:$0xff]
    %v7047 = vld [vmem:[#allocation9 + $0x3d0] sm:$0xff]
    %v7048 = vld [vmem:[#allocation9 + $0x3d8] sm:$0xff]
    %v7049 = vld [vmem:[#allocation9 + $0x3e0] sm:$0xff]
    %v7050 = vld [vmem:[#allocation9 + $0x3e8] sm:$0xff]
    %v7051 = vld [vmem:[#allocation9 + $0x3f0] sm:$0xff]
    %v7052 = vld [vmem:[#allocation9 + $0x3f8] sm:$0xff]
    %v7053 = vld [vmem:[#allocation9 + $0x400] sm:$0xff]
    %v7054 = vld [vmem:[#allocation9 + $0x408] sm:$0xff]
    %v7055 = vld [vmem:[#allocation9 + $0x410] sm:$0xff]
    %v7056 = vld [vmem:[#allocation9 + $0x418] sm:$0xff]
    %v7057 = vld [vmem:[#allocation9 + $0x420] sm:$0xff]
    %v7058 = vld [vmem:[#allocation9 + $0x428] sm:$0xff]
    %v7059 = vld [vmem:[#allocation9 + $0x430] sm:$0xff]
    %v7060 = vld [vmem:[#allocation9 + $0x438] sm:$0xff]
    %v7061 = vld [vmem:[#allocation9 + $0x440] sm:$0xff]
    %v7062 = vld [vmem:[#allocation9 + $0x448] sm:$0xff]
    %v7063 = vld [vmem:[#allocation9 + $0x450] sm:$0xff]
    %v7064 = vld [vmem:[#allocation9 + $0x458] sm:$0xff]
    %v7065 = vld [vmem:[#allocation9 + $0x460] sm:$0xff]
    %v7066 = vld [vmem:[#allocation9 + $0x468] sm:$0xff]
    %v7067 = vld [vmem:[#allocation9 + $0x470] sm:$0xff]
    %v7068 = vld [vmem:[#allocation9 + $0x478] sm:$0xff]
    %v7069 = vld [vmem:[#allocation9 + $0x480] sm:$0xff]
    %v7070 = vld [vmem:[#allocation9 + $0x488] sm:$0xff]
    %v7071 = vld [vmem:[#allocation9 + $0x490] sm:$0xff]
    %v7072 = vld [vmem:[#allocation9 + $0x498] sm:$0xff]
    %v7073 = vld [vmem:[#allocation9 + $0x4a0] sm:$0xff]
    %v7074 = vld [vmem:[#allocation9 + $0x4a8] sm:$0xff]
    %v7075 = vld [vmem:[#allocation9 + $0x4b0] sm:$0xff]
    %v7076 = vld [vmem:[#allocation9 + $0x4b8] sm:$0xff]
    %v7077 = vld [vmem:[#allocation9 + $0x4c0] sm:$0xff]
    %v7078 = vld [vmem:[#allocation9 + $0x4c8] sm:$0xff]
    %v7079 = vld [vmem:[#allocation9 + $0x4d0] sm:$0xff]
    %v7080 = vld [vmem:[#allocation9 + $0x4d8] sm:$0xff]
    %v7081 = vld [vmem:[#allocation9 + $0x4e0] sm:$0xff]
    %v7082 = vld [vmem:[#allocation9 + $0x4e8] sm:$0xff]
    %v7083 = vld [vmem:[#allocation9 + $0x4f0] sm:$0xff]
    %v7084 = vld [vmem:[#allocation9 + $0x4f8] sm:$0xff]
    %v7085 = vld [vmem:[#allocation9 + $0x500] sm:$0xff]
    %v7086 = vld [vmem:[#allocation9 + $0x508] sm:$0xff]
    %v7087 = vld [vmem:[#allocation9 + $0x510] sm:$0xff]
    %v7088 = vld [vmem:[#allocation9 + $0x518] sm:$0xff]
    %v7089 = vld [vmem:[#allocation9 + $0x520] sm:$0xff]
    %v7090 = vld [vmem:[#allocation9 + $0x528] sm:$0xff]
    %v7091 = vld [vmem:[#allocation9 + $0x530] sm:$0xff]
    %v7092 = vld [vmem:[#allocation9 + $0x538] sm:$0xff]
    %v7093 = vld [vmem:[#allocation9 + $0x540] sm:$0xff]
    %v7094 = vld [vmem:[#allocation9 + $0x548] sm:$0xff]
    %v7095 = vld [vmem:[#allocation9 + $0x550] sm:$0xff]
    %v7096 = vld [vmem:[#allocation9 + $0x558] sm:$0xff]
    %v7097 = vld [vmem:[#allocation9 + $0x560] sm:$0xff]
    %v7098 = vld [vmem:[#allocation9 + $0x568] sm:$0xff]
    %v7099 = vld [vmem:[#allocation9 + $0x570] sm:$0xff]
    %v7100 = vld [vmem:[#allocation9 + $0x578] sm:$0xff]
    %v7101 = vld [vmem:[#allocation9 + $0x580] sm:$0xff]
    %v7102 = vld [vmem:[#allocation9 + $0x588] sm:$0xff]
    %v7103 = vld [vmem:[#allocation9 + $0x590] sm:$0xff]
    %v7104 = vld [vmem:[#allocation9 + $0x598] sm:$0xff]
    %v7105 = vld [vmem:[#allocation9 + $0x5a0] sm:$0xff]
    %v7106 = vld [vmem:[#allocation9 + $0x5a8] sm:$0xff]
    %v7107 = vld [vmem:[#allocation9 + $0x5b0] sm:$0xff]
    %v7108 = vld [vmem:[#allocation9 + $0x5b8] sm:$0xff]
    %v7109 = vld [vmem:[#allocation9 + $0x5c0] sm:$0xff]
    %v7110 = vld [vmem:[#allocation9 + $0x5c8] sm:$0xff]
    %v7111 = vld [vmem:[#allocation9 + $0x5d0] sm:$0xff]
    %v7112 = vld [vmem:[#allocation9 + $0x5d8] sm:$0xff]
    %v7113 = vld [vmem:[#allocation9 + $0x5e0] sm:$0xff]
    %v7114 = vld [vmem:[#allocation9 + $0x5e8] sm:$0xff]
    %v7115 = vld [vmem:[#allocation9 + $0x5f0] sm:$0xff]
    %v7116 = vld [vmem:[#allocation9 + $0x5f8] sm:$0xff]
    %v7117 = vld [vmem:[#allocation9 + $0x600] sm:$0xff]
    %v7118 = vld [vmem:[#allocation9 + $0x608] sm:$0xff]
    %v7119 = vld [vmem:[#allocation9 + $0x610] sm:$0xff]
    %v7120 = vld [vmem:[#allocation9 + $0x618] sm:$0xff]
    %v7121 = vld [vmem:[#allocation9 + $0x620] sm:$0xff]
    %v7122 = vld [vmem:[#allocation9 + $0x628] sm:$0xff]
    %v7123 = vld [vmem:[#allocation9 + $0x630] sm:$0xff]
    %v7124 = vld [vmem:[#allocation9 + $0x638] sm:$0xff]
    %v7125 = vld [vmem:[#allocation9 + $0x640] sm:$0xff]
    %v7126 = vld [vmem:[#allocation9 + $0x648] sm:$0xff]
    %v7127 = vld [vmem:[#allocation9 + $0x650] sm:$0xff]
    %v7128 = vld [vmem:[#allocation9 + $0x658] sm:$0xff]
    %v7129 = vld [vmem:[#allocation9 + $0x660] sm:$0xff]
    %v7130 = vld [vmem:[#allocation9 + $0x668] sm:$0xff]
    %v7131 = vld [vmem:[#allocation9 + $0x670] sm:$0xff]
    %v7132 = vld [vmem:[#allocation9 + $0x678] sm:$0xff]
    %v7133 = vld [vmem:[#allocation9 + $0x680] sm:$0xff]
    %v7134 = vld [vmem:[#allocation9 + $0x688] sm:$0xff]
    %v7135 = vld [vmem:[#allocation9 + $0x690] sm:$0xff]
    %v7136 = vld [vmem:[#allocation9 + $0x698] sm:$0xff]
    %v7137 = vld [vmem:[#allocation9 + $0x6a0] sm:$0xff]
    %v7138 = vld [vmem:[#allocation9 + $0x6a8] sm:$0xff]
    %v7139 = vld [vmem:[#allocation9 + $0x6b0] sm:$0xff]
    %v7140 = vld [vmem:[#allocation9 + $0x6b8] sm:$0xff]
    %v7141 = vld [vmem:[#allocation9 + $0x6c0] sm:$0xff]
    %v7142 = vld [vmem:[#allocation9 + $0x6c8] sm:$0xff]
    %v7143 = vld [vmem:[#allocation9 + $0x6d0] sm:$0xff]
    %v7144 = vld [vmem:[#allocation9 + $0x6d8] sm:$0xff]
    %v7145 = vld [vmem:[#allocation9 + $0x6e0] sm:$0xff]
    %v7146 = vld [vmem:[#allocation9 + $0x6e8] sm:$0xff]
    %v7147 = vld [vmem:[#allocation9 + $0x6f0] sm:$0xff]
    %v7148 = vld [vmem:[#allocation9 + $0x6f8] sm:$0xff]
    %v7149 = vld [vmem:[#allocation9 + $0x700] sm:$0xff]
    %v7150 = vld [vmem:[#allocation9 + $0x708] sm:$0xff]
    %v7151 = vld [vmem:[#allocation9 + $0x710] sm:$0xff]
    %v7152 = vld [vmem:[#allocation9 + $0x718] sm:$0xff]
    %v7153 = vld [vmem:[#allocation9 + $0x720] sm:$0xff]
    %v7154 = vld [vmem:[#allocation9 + $0x728] sm:$0xff]
    %v7155 = vld [vmem:[#allocation9 + $0x730] sm:$0xff]
    %v7156 = vld [vmem:[#allocation9 + $0x738] sm:$0xff]
    %v7157 = vld [vmem:[#allocation9 + $0x740] sm:$0xff]
    %v7158 = vld [vmem:[#allocation9 + $0x748] sm:$0xff]
    %v7159 = vld [vmem:[#allocation9 + $0x750] sm:$0xff]
    %v7160 = vld [vmem:[#allocation9 + $0x758] sm:$0xff]
    %v7161 = vld [vmem:[#allocation9 + $0x760] sm:$0xff]
    %v7162 = vld [vmem:[#allocation9 + $0x768] sm:$0xff]
    %v7163 = vld [vmem:[#allocation9 + $0x770] sm:$0xff]
    %v7164 = vld [vmem:[#allocation9 + $0x778] sm:$0xff]
    %v7165 = vld [vmem:[#allocation9 + $0x780] sm:$0xff]
    %v7166 = vld [vmem:[#allocation9 + $0x788] sm:$0xff]
    %v7167 = vld [vmem:[#allocation9 + $0x790] sm:$0xff]
    %v7168 = vld [vmem:[#allocation9 + $0x798] sm:$0xff]
    %v7169 = vld [vmem:[#allocation9 + $0x7a0] sm:$0xff]
    %v7170 = vld [vmem:[#allocation9 + $0x7a8] sm:$0xff]
    %v7171 = vld [vmem:[#allocation9 + $0x7b0] sm:$0xff]
    %v7172 = vld [vmem:[#allocation9 + $0x7b8] sm:$0xff]
    %v7173 = vld [vmem:[#allocation9 + $0x7c0] sm:$0xff]
    %v7174 = vld [vmem:[#allocation9 + $0x7c8] sm:$0xff]
    %v7175 = vld [vmem:[#allocation9 + $0x7d0] sm:$0xff]
    %v7176 = vld [vmem:[#allocation9 + $0x7d8] sm:$0xff]
    %v7177 = vld [vmem:[#allocation9 + $0x7e0] sm:$0xff]
    %v7178 = vld [vmem:[#allocation9 + $0x7e8] sm:$0xff]
    %v7179 = vld [vmem:[#allocation9 + $0x7f0] sm:$0xff]
    %v7180 = vld [vmem:[#allocation9 + $0x7f8] sm:$0xff]
    %v7181 = vld [vmem:[#allocation11] sm:$0xf]
    %v7183 = vperm.slane %v7181, 0
    %v7184 = vperm.slane %v7181, 1
    %v7185 = vperm.slane %v7181, 2
    %v7186 = vperm.slane %v7181, 3
    %v7447 = vunpack.c.l.b16 %v6925
    %v7448 = vunpack.c.h.b16 %v6925
    %v7449 = vunpack.c.l.b16 %v6926
    %v7450 = vunpack.c.h.b16 %v6926
    %v7451 = vunpack.c.l.b16 %v6927
    %v7452 = vunpack.c.h.b16 %v6927
    %v7453 = vunpack.c.l.b16 %v6928
    %v7454 = vunpack.c.h.b16 %v6928
    %v7455 = vunpack.c.l.b16 %v6929
    %v7456 = vunpack.c.h.b16 %v6929
    %v7457 = vunpack.c.l.b16 %v6930
    %v7458 = vunpack.c.h.b16 %v6930
    %v7459 = vunpack.c.l.b16 %v6931
    %v7460 = vunpack.c.h.b16 %v6931
    %v7461 = vunpack.c.l.b16 %v6932
    %v7462 = vunpack.c.h.b16 %v6932
    %v7463 = vunpack.c.l.b16 %v6933
    %v7464 = vunpack.c.h.b16 %v6933
    %v7465 = vunpack.c.l.b16 %v6934
    %v7466 = vunpack.c.h.b16 %v6934
    %v7467 = vunpack.c.l.b16 %v6935
    %v7468 = vunpack.c.h.b16 %v6935
    %v7469 = vunpack.c.l.b16 %v6936
    %v7470 = vunpack.c.h.b16 %v6936
    %v7471 = vunpack.c.l.b16 %v6937
    %v7472 = vunpack.c.h.b16 %v6937
    %v7473 = vunpack.c.l.b16 %v6938
    %v7474 = vunpack.c.h.b16 %v6938
    %v7475 = vunpack.c.l.b16 %v6939
    %v7476 = vunpack.c.h.b16 %v6939
    %v7477 = vunpack.c.l.b16 %v6940
    %v7478 = vunpack.c.h.b16 %v6940
    %v7479 = vunpack.c.l.b16 %v6941
    %v7480 = vunpack.c.h.b16 %v6941
    %v7481 = vunpack.c.l.b16 %v6942
    %v7482 = vunpack.c.h.b16 %v6942
    %v7483 = vunpack.c.l.b16 %v6943
    %v7484 = vunpack.c.h.b16 %v6943
    %v7485 = vunpack.c.l.b16 %v6944
    %v7486 = vunpack.c.h.b16 %v6944
    %v7487 = vunpack.c.l.b16 %v6945
    %v7488 = vunpack.c.h.b16 %v6945
    %v7489 = vunpack.c.l.b16 %v6946
    %v7490 = vunpack.c.h.b16 %v6946
    %v7491 = vunpack.c.l.b16 %v6947
    %v7492 = vunpack.c.h.b16 %v6947
    %v7493 = vunpack.c.l.b16 %v6948
    %v7494 = vunpack.c.h.b16 %v6948
    %v7495 = vunpack.c.l.b16 %v6949
    %v7496 = vunpack.c.h.b16 %v6949
    %v7497 = vunpack.c.l.b16 %v6950
    %v7498 = vunpack.c.h.b16 %v6950
    %v7499 = vunpack.c.l.b16 %v6951
    %v7500 = vunpack.c.h.b16 %v6951
    %v7501 = vunpack.c.l.b16 %v6952
    %v7502 = vunpack.c.h.b16 %v6952
    %v7503 = vunpack.c.l.b16 %v6953
    %v7504 = vunpack.c.h.b16 %v6953
    %v7505 = vunpack.c.l.b16 %v6954
    %v7506 = vunpack.c.h.b16 %v6954
    %v7507 = vunpack.c.l.b16 %v6955
    %v7508 = vunpack.c.h.b16 %v6955
    %v7509 = vunpack.c.l.b16 %v6956
    %v7510 = vunpack.c.h.b16 %v6956
    %v7511 = vunpack.c.l.b16 %v6957
    %v7512 = vunpack.c.h.b16 %v6957
    %v7513 = vunpack.c.l.b16 %v6958
    %v7514 = vunpack.c.h.b16 %v6958
    %v7515 = vunpack.c.l.b16 %v6959
    %v7516 = vunpack.c.h.b16 %v6959
    %v7517 = vunpack.c.l.b16 %v6960
    %v7518 = vunpack.c.h.b16 %v6960
    %v7519 = vunpack.c.l.b16 %v6961
    %v7520 = vunpack.c.h.b16 %v6961
    %v7521 = vunpack.c.l.b16 %v6962
    %v7522 = vunpack.c.h.b16 %v6962
    %v7523 = vunpack.c.l.b16 %v6963
    %v7524 = vunpack.c.h.b16 %v6963
    %v7525 = vunpack.c.l.b16 %v6964
    %v7526 = vunpack.c.h.b16 %v6964
    %v7527 = vunpack.c.l.b16 %v6965
    %v7528 = vunpack.c.h.b16 %v6965
    %v7529 = vunpack.c.l.b16 %v6966
    %v7530 = vunpack.c.h.b16 %v6966
    %v7531 = vunpack.c.l.b16 %v6967
    %v7532 = vunpack.c.h.b16 %v6967
    %v7533 = vunpack.c.l.b16 %v6968
    %v7534 = vunpack.c.h.b16 %v6968
    %v7535 = vunpack.c.l.b16 %v6969
    %v7536 = vunpack.c.h.b16 %v6969
    %v7537 = vunpack.c.l.b16 %v6970
    %v7538 = vunpack.c.h.b16 %v6970
    %v7539 = vunpack.c.l.b16 %v6971
    %v7540 = vunpack.c.h.b16 %v6971
    %v7541 = vunpack.c.l.b16 %v6972
    %v7542 = vunpack.c.h.b16 %v6972
    %v7543 = vunpack.c.l.b16 %v6973
    %v7544 = vunpack.c.h.b16 %v6973
    %v7545 = vunpack.c.l.b16 %v6974
    %v7546 = vunpack.c.h.b16 %v6974
    %v7547 = vunpack.c.l.b16 %v6975
    %v7548 = vunpack.c.h.b16 %v6975
    %v7549 = vunpack.c.l.b16 %v6976
    %v7550 = vunpack.c.h.b16 %v6976
    %v7551 = vunpack.c.l.b16 %v6977
    %v7552 = vunpack.c.h.b16 %v6977
    %v7553 = vunpack.c.l.b16 %v6978
    %v7554 = vunpack.c.h.b16 %v6978
    %v7555 = vunpack.c.l.b16 %v6979
    %v7556 = vunpack.c.h.b16 %v6979
    %v7557 = vunpack.c.l.b16 %v6980
    %v7558 = vunpack.c.h.b16 %v6980
    %v7559 = vunpack.c.l.b16 %v6981
    %v7560 = vunpack.c.h.b16 %v6981
    %v7561 = vunpack.c.l.b16 %v6982
    %v7562 = vunpack.c.h.b16 %v6982
    %v7563 = vunpack.c.l.b16 %v6983
    %v7564 = vunpack.c.h.b16 %v6983
    %v7565 = vunpack.c.l.b16 %v6984
    %v7566 = vunpack.c.h.b16 %v6984
    %v7567 = vunpack.c.l.b16 %v6985
    %v7568 = vunpack.c.h.b16 %v6985
    %v7569 = vunpack.c.l.b16 %v6986
    %v7570 = vunpack.c.h.b16 %v6986
    %v7571 = vunpack.c.l.b16 %v6987
    %v7572 = vunpack.c.h.b16 %v6987
    %v7573 = vunpack.c.l.b16 %v6988
    %v7574 = vunpack.c.h.b16 %v6988
    %v7575 = vunpack.c.l.b16 %v6989
    %v7576 = vunpack.c.h.b16 %v6989
    %v7577 = vunpack.c.l.b16 %v6990
    %v7578 = vunpack.c.h.b16 %v6990
    %v7579 = vunpack.c.l.b16 %v6991
    %v7580 = vunpack.c.h.b16 %v6991
    %v7581 = vunpack.c.l.b16 %v6992
    %v7582 = vunpack.c.h.b16 %v6992
    %v7583 = vunpack.c.l.b16 %v6993
    %v7584 = vunpack.c.h.b16 %v6993
    %v7585 = vunpack.c.l.b16 %v6994
    %v7586 = vunpack.c.h.b16 %v6994
    %v7587 = vunpack.c.l.b16 %v6995
    %v7588 = vunpack.c.h.b16 %v6995
    %v7589 = vunpack.c.l.b16 %v6996
    %v7590 = vunpack.c.h.b16 %v6996
    %v7591 = vunpack.c.l.b16 %v6997
    %v7592 = vunpack.c.h.b16 %v6997
    %v7593 = vunpack.c.l.b16 %v6998
    %v7594 = vunpack.c.h.b16 %v6998
    %v7595 = vunpack.c.l.b16 %v6999
    %v7596 = vunpack.c.h.b16 %v6999
    %v7597 = vunpack.c.l.b16 %v7000
    %v7598 = vunpack.c.h.b16 %v7000
    %v7599 = vunpack.c.l.b16 %v7001
    %v7600 = vunpack.c.h.b16 %v7001
    %v7601 = vunpack.c.l.b16 %v7002
    %v7602 = vunpack.c.h.b16 %v7002
    %v7603 = vunpack.c.l.b16 %v7003
    %v7604 = vunpack.c.h.b16 %v7003
    %v7605 = vunpack.c.l.b16 %v7004
    %v7606 = vunpack.c.h.b16 %v7004
    %v7607 = vunpack.c.l.b16 %v7005
    %v7608 = vunpack.c.h.b16 %v7005
    %v7609 = vunpack.c.l.b16 %v7006
    %v7610 = vunpack.c.h.b16 %v7006
    %v7611 = vunpack.c.l.b16 %v7007
    %v7612 = vunpack.c.h.b16 %v7007
    %v7613 = vunpack.c.l.b16 %v7008
    %v7614 = vunpack.c.h.b16 %v7008
    %v7615 = vunpack.c.l.b16 %v7009
    %v7616 = vunpack.c.h.b16 %v7009
    %v7617 = vunpack.c.l.b16 %v7010
    %v7618 = vunpack.c.h.b16 %v7010
    %v7619 = vunpack.c.l.b16 %v7011
    %v7620 = vunpack.c.h.b16 %v7011
    %v7621 = vunpack.c.l.b16 %v7012
    %v7622 = vunpack.c.h.b16 %v7012
    %v7623 = vunpack.c.l.b16 %v7013
    %v7624 = vunpack.c.h.b16 %v7013
    %v7625 = vunpack.c.l.b16 %v7014
    %v7626 = vunpack.c.h.b16 %v7014
    %v7627 = vunpack.c.l.b16 %v7015
    %v7628 = vunpack.c.h.b16 %v7015
    %v7629 = vunpack.c.l.b16 %v7016
    %v7630 = vunpack.c.h.b16 %v7016
    %v7631 = vunpack.c.l.b16 %v7017
    %v7632 = vunpack.c.h.b16 %v7017
    %v7633 = vunpack.c.l.b16 %v7018
    %v7634 = vunpack.c.h.b16 %v7018
    %v7635 = vunpack.c.l.b16 %v7019
    %v7636 = vunpack.c.h.b16 %v7019
    %v7637 = vunpack.c.l.b16 %v7020
    %v7638 = vunpack.c.h.b16 %v7020
    %v7639 = vunpack.c.l.b16 %v7021
    %v7640 = vunpack.c.h.b16 %v7021
    %v7641 = vunpack.c.l.b16 %v7022
    %v7642 = vunpack.c.h.b16 %v7022
    %v7643 = vunpack.c.l.b16 %v7023
    %v7644 = vunpack.c.h.b16 %v7023
    %v7645 = vunpack.c.l.b16 %v7024
    %v7646 = vunpack.c.h.b16 %v7024
    %v7647 = vunpack.c.l.b16 %v7025
    %v7648 = vunpack.c.h.b16 %v7025
    %v7649 = vunpack.c.l.b16 %v7026
    %v7650 = vunpack.c.h.b16 %v7026
    %v7651 = vunpack.c.l.b16 %v7027
    %v7652 = vunpack.c.h.b16 %v7027
    %v7653 = vunpack.c.l.b16 %v7028
    %v7654 = vunpack.c.h.b16 %v7028
    %v7655 = vunpack.c.l.b16 %v7029
    %v7656 = vunpack.c.h.b16 %v7029
    %v7657 = vunpack.c.l.b16 %v7030
    %v7658 = vunpack.c.h.b16 %v7030
    %v7659 = vunpack.c.l.b16 %v7031
    %v7660 = vunpack.c.h.b16 %v7031
    %v7661 = vunpack.c.l.b16 %v7032
    %v7662 = vunpack.c.h.b16 %v7032
    %v7663 = vunpack.c.l.b16 %v7033
    %v7664 = vunpack.c.h.b16 %v7033
    %v7665 = vunpack.c.l.b16 %v7034
    %v7666 = vunpack.c.h.b16 %v7034
    %v7667 = vunpack.c.l.b16 %v7035
    %v7668 = vunpack.c.h.b16 %v7035
    %v7669 = vunpack.c.l.b16 %v7036
    %v7670 = vunpack.c.h.b16 %v7036
    %v7671 = vunpack.c.l.b16 %v7037
    %v7672 = vunpack.c.h.b16 %v7037
    %v7673 = vunpack.c.l.b16 %v7038
    %v7674 = vunpack.c.h.b16 %v7038
    %v7675 = vunpack.c.l.b16 %v7039
    %v7676 = vunpack.c.h.b16 %v7039
    %v7677 = vunpack.c.l.b16 %v7040
    %v7678 = vunpack.c.h.b16 %v7040
    %v7679 = vunpack.c.l.b16 %v7041
    %v7680 = vunpack.c.h.b16 %v7041
    %v7681 = vunpack.c.l.b16 %v7042
    %v7682 = vunpack.c.h.b16 %v7042
    %v7683 = vunpack.c.l.b16 %v7043
    %v7684 = vunpack.c.h.b16 %v7043
    %v7685 = vunpack.c.l.b16 %v7044
    %v7686 = vunpack.c.h.b16 %v7044
    %v7687 = vunpack.c.l.b16 %v7045
    %v7688 = vunpack.c.h.b16 %v7045
    %v7689 = vunpack.c.l.b16 %v7046
    %v7690 = vunpack.c.h.b16 %v7046
    %v7691 = vunpack.c.l.b16 %v7047
    %v7692 = vunpack.c.h.b16 %v7047
    %v7693 = vunpack.c.l.b16 %v7048
    %v7694 = vunpack.c.h.b16 %v7048
    %v7695 = vunpack.c.l.b16 %v7049
    %v7696 = vunpack.c.h.b16 %v7049
    %v7697 = vunpack.c.l.b16 %v7050
    %v7698 = vunpack.c.h.b16 %v7050
    %v7699 = vunpack.c.l.b16 %v7051
    %v7700 = vunpack.c.h.b16 %v7051
    %v7701 = vunpack.c.l.b16 %v7052
    %v7702 = vunpack.c.h.b16 %v7052
    %v7703 = vunpack.c.l.b16 %v7053
    %v7704 = vunpack.c.h.b16 %v7053
    %v7705 = vunpack.c.l.b16 %v7054
    %v7706 = vunpack.c.h.b16 %v7054
    %v7707 = vunpack.c.l.b16 %v7055
    %v7708 = vunpack.c.h.b16 %v7055
    %v7709 = vunpack.c.l.b16 %v7056
    %v7710 = vunpack.c.h.b16 %v7056
    %v7711 = vunpack.c.l.b16 %v7057
    %v7712 = vunpack.c.h.b16 %v7057
    %v7713 = vunpack.c.l.b16 %v7058
    %v7714 = vunpack.c.h.b16 %v7058
    %v7715 = vunpack.c.l.b16 %v7059
    %v7716 = vunpack.c.h.b16 %v7059
    %v7717 = vunpack.c.l.b16 %v7060
    %v7718 = vunpack.c.h.b16 %v7060
    %v7719 = vunpack.c.l.b16 %v7061
    %v7720 = vunpack.c.h.b16 %v7061
    %v7721 = vunpack.c.l.b16 %v7062
    %v7722 = vunpack.c.h.b16 %v7062
    %v7723 = vunpack.c.l.b16 %v7063
    %v7724 = vunpack.c.h.b16 %v7063
    %v7725 = vunpack.c.l.b16 %v7064
    %v7726 = vunpack.c.h.b16 %v7064
    %v7727 = vunpack.c.l.b16 %v7065
    %v7728 = vunpack.c.h.b16 %v7065
    %v7729 = vunpack.c.l.b16 %v7066
    %v7730 = vunpack.c.h.b16 %v7066
    %v7731 = vunpack.c.l.b16 %v7067
    %v7732 = vunpack.c.h.b16 %v7067
    %v7733 = vunpack.c.l.b16 %v7068
    %v7734 = vunpack.c.h.b16 %v7068
    %v7735 = vunpack.c.l.b16 %v7069
    %v7736 = vunpack.c.h.b16 %v7069
    %v7737 = vunpack.c.l.b16 %v7070
    %v7738 = vunpack.c.h.b16 %v7070
    %v7739 = vunpack.c.l.b16 %v7071
    %v7740 = vunpack.c.h.b16 %v7071
    %v7741 = vunpack.c.l.b16 %v7072
    %v7742 = vunpack.c.h.b16 %v7072
    %v7743 = vunpack.c.l.b16 %v7073
    %v7744 = vunpack.c.h.b16 %v7073
    %v7745 = vunpack.c.l.b16 %v7074
    %v7746 = vunpack.c.h.b16 %v7074
    %v7747 = vunpack.c.l.b16 %v7075
    %v7748 = vunpack.c.h.b16 %v7075
    %v7749 = vunpack.c.l.b16 %v7076
    %v7750 = vunpack.c.h.b16 %v7076
    %v7751 = vunpack.c.l.b16 %v7077
    %v7752 = vunpack.c.h.b16 %v7077
    %v7753 = vunpack.c.l.b16 %v7078
    %v7754 = vunpack.c.h.b16 %v7078
    %v7755 = vunpack.c.l.b16 %v7079
    %v7756 = vunpack.c.h.b16 %v7079
    %v7757 = vunpack.c.l.b16 %v7080
    %v7758 = vunpack.c.h.b16 %v7080
    %v7759 = vunpack.c.l.b16 %v7081
    %v7760 = vunpack.c.h.b16 %v7081
    %v7761 = vunpack.c.l.b16 %v7082
    %v7762 = vunpack.c.h.b16 %v7082
    %v7763 = vunpack.c.l.b16 %v7083
    %v7764 = vunpack.c.h.b16 %v7083
    %v7765 = vunpack.c.l.b16 %v7084
    %v7766 = vunpack.c.h.b16 %v7084
    %v7767 = vunpack.c.l.b16 %v7085
    %v7768 = vunpack.c.h.b16 %v7085
    %v7769 = vunpack.c.l.b16 %v7086
    %v7770 = vunpack.c.h.b16 %v7086
    %v7771 = vunpack.c.l.b16 %v7087
    %v7772 = vunpack.c.h.b16 %v7087
    %v7773 = vunpack.c.l.b16 %v7088
    %v7774 = vunpack.c.h.b16 %v7088
    %v7775 = vunpack.c.l.b16 %v7089
    %v7776 = vunpack.c.h.b16 %v7089
    %v7777 = vunpack.c.l.b16 %v7090
    %v7778 = vunpack.c.h.b16 %v7090
    %v7779 = vunpack.c.l.b16 %v7091
    %v7780 = vunpack.c.h.b16 %v7091
    %v7781 = vunpack.c.l.b16 %v7092
    %v7782 = vunpack.c.h.b16 %v7092
    %v7783 = vunpack.c.l.b16 %v7093
    %v7784 = vunpack.c.h.b16 %v7093
    %v7785 = vunpack.c.l.b16 %v7094
    %v7786 = vunpack.c.h.b16 %v7094
    %v7787 = vunpack.c.l.b16 %v7095
    %v7788 = vunpack.c.h.b16 %v7095
    %v7789 = vunpack.c.l.b16 %v7096
    %v7790 = vunpack.c.h.b16 %v7096
    %v7791 = vunpack.c.l.b16 %v7097
    %v7792 = vunpack.c.h.b16 %v7097
    %v7793 = vunpack.c.l.b16 %v7098
    %v7794 = vunpack.c.h.b16 %v7098
    %v7795 = vunpack.c.l.b16 %v7099
    %v7796 = vunpack.c.h.b16 %v7099
    %v7797 = vunpack.c.l.b16 %v7100
    %v7798 = vunpack.c.h.b16 %v7100
    %v7799 = vunpack.c.l.b16 %v7101
    %v7800 = vunpack.c.h.b16 %v7101
    %v7801 = vunpack.c.l.b16 %v7102
    %v7802 = vunpack.c.h.b16 %v7102
    %v7803 = vunpack.c.l.b16 %v7103
    %v7804 = vunpack.c.h.b16 %v7103
    %v7805 = vunpack.c.l.b16 %v7104
    %v7806 = vunpack.c.h.b16 %v7104
    %v7807 = vunpack.c.l.b16 %v7105
    %v7808 = vunpack.c.h.b16 %v7105
    %v7809 = vunpack.c.l.b16 %v7106
    %v7810 = vunpack.c.h.b16 %v7106
    %v7811 = vunpack.c.l.b16 %v7107
    %v7812 = vunpack.c.h.b16 %v7107
    %v7813 = vunpack.c.l.b16 %v7108
    %v7814 = vunpack.c.h.b16 %v7108
    %v7815 = vunpack.c.l.b16 %v7109
    %v7816 = vunpack.c.h.b16 %v7109
    %v7817 = vunpack.c.l.b16 %v7110
    %v7818 = vunpack.c.h.b16 %v7110
    %v7819 = vunpack.c.l.b16 %v7111
    %v7820 = vunpack.c.h.b16 %v7111
    %v7821 = vunpack.c.l.b16 %v7112
    %v7822 = vunpack.c.h.b16 %v7112
    %v7823 = vunpack.c.l.b16 %v7113
    %v7824 = vunpack.c.h.b16 %v7113
    %v7825 = vunpack.c.l.b16 %v7114
    %v7826 = vunpack.c.h.b16 %v7114
    %v7827 = vunpack.c.l.b16 %v7115
    %v7828 = vunpack.c.h.b16 %v7115
    %v7829 = vunpack.c.l.b16 %v7116
    %v7830 = vunpack.c.h.b16 %v7116
    %v7831 = vunpack.c.l.b16 %v7117
    %v7832 = vunpack.c.h.b16 %v7117
    %v7833 = vunpack.c.l.b16 %v7118
    %v7834 = vunpack.c.h.b16 %v7118
    %v7835 = vunpack.c.l.b16 %v7119
    %v7836 = vunpack.c.h.b16 %v7119
    %v7837 = vunpack.c.l.b16 %v7120
    %v7838 = vunpack.c.h.b16 %v7120
    %v7839 = vunpack.c.l.b16 %v7121
    %v7840 = vunpack.c.h.b16 %v7121
    %v7841 = vunpack.c.l.b16 %v7122
    %v7842 = vunpack.c.h.b16 %v7122
    %v7843 = vunpack.c.l.b16 %v7123
    %v7844 = vunpack.c.h.b16 %v7123
    %v7845 = vunpack.c.l.b16 %v7124
    %v7846 = vunpack.c.h.b16 %v7124
    %v7847 = vunpack.c.l.b16 %v7125
    %v7848 = vunpack.c.h.b16 %v7125
    %v7849 = vunpack.c.l.b16 %v7126
    %v7850 = vunpack.c.h.b16 %v7126
    %v7851 = vunpack.c.l.b16 %v7127
    %v7852 = vunpack.c.h.b16 %v7127
    %v7853 = vunpack.c.l.b16 %v7128
    %v7854 = vunpack.c.h.b16 %v7128
    %v7855 = vunpack.c.l.b16 %v7129
    %v7856 = vunpack.c.h.b16 %v7129
    %v7857 = vunpack.c.l.b16 %v7130
    %v7858 = vunpack.c.h.b16 %v7130
    %v7859 = vunpack.c.l.b16 %v7131
    %v7860 = vunpack.c.h.b16 %v7131
    %v7861 = vunpack.c.l.b16 %v7132
    %v7862 = vunpack.c.h.b16 %v7132
    %v7863 = vunpack.c.l.b16 %v7133
    %v7864 = vunpack.c.h.b16 %v7133
    %v7865 = vunpack.c.l.b16 %v7134
    %v7866 = vunpack.c.h.b16 %v7134
    %v7867 = vunpack.c.l.b16 %v7135
    %v7868 = vunpack.c.h.b16 %v7135
    %v7869 = vunpack.c.l.b16 %v7136
    %v7870 = vunpack.c.h.b16 %v7136
    %v7871 = vunpack.c.l.b16 %v7137
    %v7872 = vunpack.c.h.b16 %v7137
    %v7873 = vunpack.c.l.b16 %v7138
    %v7874 = vunpack.c.h.b16 %v7138
    %v7875 = vunpack.c.l.b16 %v7139
    %v7876 = vunpack.c.h.b16 %v7139
    %v7877 = vunpack.c.l.b16 %v7140
    %v7878 = vunpack.c.h.b16 %v7140
    %v7879 = vunpack.c.l.b16 %v7141
    %v7880 = vunpack.c.h.b16 %v7141
    %v7881 = vunpack.c.l.b16 %v7142
    %v7882 = vunpack.c.h.b16 %v7142
    %v7883 = vunpack.c.l.b16 %v7143
    %v7884 = vunpack.c.h.b16 %v7143
    %v7885 = vunpack.c.l.b16 %v7144
    %v7886 = vunpack.c.h.b16 %v7144
    %v7887 = vunpack.c.l.b16 %v7145
    %v7888 = vunpack.c.h.b16 %v7145
    %v7889 = vunpack.c.l.b16 %v7146
    %v7890 = vunpack.c.h.b16 %v7146
    %v7891 = vunpack.c.l.b16 %v7147
    %v7892 = vunpack.c.h.b16 %v7147
    %v7893 = vunpack.c.l.b16 %v7148
    %v7894 = vunpack.c.h.b16 %v7148
    %v7895 = vunpack.c.l.b16 %v7149
    %v7896 = vunpack.c.h.b16 %v7149
    %v7897 = vunpack.c.l.b16 %v7150
    %v7898 = vunpack.c.h.b16 %v7150
    %v7899 = vunpack.c.l.b16 %v7151
    %v7900 = vunpack.c.h.b16 %v7151
    %v7901 = vunpack.c.l.b16 %v7152
    %v7902 = vunpack.c.h.b16 %v7152
    %v7903 = vunpack.c.l.b16 %v7153
    %v7904 = vunpack.c.h.b16 %v7153
    %v7905 = vunpack.c.l.b16 %v7154
    %v7906 = vunpack.c.h.b16 %v7154
    %v7907 = vunpack.c.l.b16 %v7155
    %v7908 = vunpack.c.h.b16 %v7155
    %v7909 = vunpack.c.l.b16 %v7156
    %v7910 = vunpack.c.h.b16 %v7156
    %v7911 = vunpack.c.l.b16 %v7157
    %v7912 = vunpack.c.h.b16 %v7157
    %v7913 = vunpack.c.l.b16 %v7158
    %v7914 = vunpack.c.h.b16 %v7158
    %v7915 = vunpack.c.l.b16 %v7159
    %v7916 = vunpack.c.h.b16 %v7159
    %v7917 = vunpack.c.l.b16 %v7160
    %v7918 = vunpack.c.h.b16 %v7160
    %v7919 = vunpack.c.l.b16 %v7161
    %v7920 = vunpack.c.h.b16 %v7161
    %v7921 = vunpack.c.l.b16 %v7162
    %v7922 = vunpack.c.h.b16 %v7162
    %v7923 = vunpack.c.l.b16 %v7163
    %v7924 = vunpack.c.h.b16 %v7163
    %v7925 = vunpack.c.l.b16 %v7164
    %v7926 = vunpack.c.h.b16 %v7164
    %v7927 = vunpack.c.l.b16 %v7165
    %v7928 = vunpack.c.h.b16 %v7165
    %v7929 = vunpack.c.l.b16 %v7166
    %v7930 = vunpack.c.h.b16 %v7166
    %v7931 = vunpack.c.l.b16 %v7167
    %v7932 = vunpack.c.h.b16 %v7167
    %v7933 = vunpack.c.l.b16 %v7168
    %v7934 = vunpack.c.h.b16 %v7168
    %v7935 = vunpack.c.l.b16 %v7169
    %v7936 = vunpack.c.h.b16 %v7169
    %v7937 = vunpack.c.l.b16 %v7170
    %v7938 = vunpack.c.h.b16 %v7170
    %v7939 = vunpack.c.l.b16 %v7171
    %v7940 = vunpack.c.h.b16 %v7171
    %v7941 = vunpack.c.l.b16 %v7172
    %v7942 = vunpack.c.h.b16 %v7172
    %v7943 = vunpack.c.l.b16 %v7173
    %v7944 = vunpack.c.h.b16 %v7173
    %v7945 = vunpack.c.l.b16 %v7174
    %v7946 = vunpack.c.h.b16 %v7174
    %v7947 = vunpack.c.l.b16 %v7175
    %v7948 = vunpack.c.h.b16 %v7175
    %v7949 = vunpack.c.l.b16 %v7176
    %v7950 = vunpack.c.h.b16 %v7176
    %v7951 = vunpack.c.l.b16 %v7177
    %v7952 = vunpack.c.h.b16 %v7177
    %v7953 = vunpack.c.l.b16 %v7178
    %v7954 = vunpack.c.h.b16 %v7178
    %v7955 = vunpack.c.l.b16 %v7179
    %v7956 = vunpack.c.h.b16 %v7179
    %v7957 = vunpack.c.l.b16 %v7180
    %v7958 = vunpack.c.h.b16 %v7180
    %v7959 = vpack.c.b16 %v7451, %v7447
    %v7960 = vpack.c.b16 %v7452, %v7448
    %v7961 = vpack.c.b16 %v7453, %v7449
    %v7962 = vpack.c.b16 %v7454, %v7450
    %v7963 = vpack.c.b16 %v7459, %v7455
    %v7964 = vpack.c.b16 %v7460, %v7456
    %v7965 = vpack.c.b16 %v7461, %v7457
    %v7966 = vpack.c.b16 %v7462, %v7458
    %v7967 = vpack.c.b16 %v7467, %v7463
    %v7968 = vpack.c.b16 %v7468, %v7464
    %v7969 = vpack.c.b16 %v7469, %v7465
    %v7970 = vpack.c.b16 %v7470, %v7466
    %v7971 = vpack.c.b16 %v7475, %v7471
    %v7972 = vpack.c.b16 %v7476, %v7472
    %v7973 = vpack.c.b16 %v7477, %v7473
    %v7974 = vpack.c.b16 %v7478, %v7474
    %v7975 = vpack.c.b16 %v7483, %v7479
    %v7976 = vpack.c.b16 %v7484, %v7480
    %v7977 = vpack.c.b16 %v7485, %v7481
    %v7978 = vpack.c.b16 %v7486, %v7482
    %v7979 = vpack.c.b16 %v7491, %v7487
    %v7980 = vpack.c.b16 %v7492, %v7488
    %v7981 = vpack.c.b16 %v7493, %v7489
    %v7982 = vpack.c.b16 %v7494, %v7490
    %v7983 = vpack.c.b16 %v7499, %v7495
    %v7984 = vpack.c.b16 %v7500, %v7496
    %v7985 = vpack.c.b16 %v7501, %v7497
    %v7986 = vpack.c.b16 %v7502, %v7498
    %v7987 = vpack.c.b16 %v7507, %v7503
    %v7988 = vpack.c.b16 %v7508, %v7504
    %v7989 = vpack.c.b16 %v7509, %v7505
    %v7990 = vpack.c.b16 %v7510, %v7506
    %v7991 = vpack.c.b16 %v7515, %v7511
    %v7992 = vpack.c.b16 %v7516, %v7512
    %v7993 = vpack.c.b16 %v7517, %v7513
    %v7994 = vpack.c.b16 %v7518, %v7514
    %v7995 = vpack.c.b16 %v7523, %v7519
    %v7996 = vpack.c.b16 %v7524, %v7520
    %v7997 = vpack.c.b16 %v7525, %v7521
    %v7998 = vpack.c.b16 %v7526, %v7522
    %v7999 = vpack.c.b16 %v7531, %v7527
    %v8000 = vpack.c.b16 %v7532, %v7528
    %v8001 = vpack.c.b16 %v7533, %v7529
    %v8002 = vpack.c.b16 %v7534, %v7530
    %v8003 = vpack.c.b16 %v7539, %v7535
    %v8004 = vpack.c.b16 %v7540, %v7536
    %v8005 = vpack.c.b16 %v7541, %v7537
    %v8006 = vpack.c.b16 %v7542, %v7538
    %v8007 = vpack.c.b16 %v7547, %v7543
    %v8008 = vpack.c.b16 %v7548, %v7544
    %v8009 = vpack.c.b16 %v7549, %v7545
    %v8010 = vpack.c.b16 %v7550, %v7546
    %v8011 = vpack.c.b16 %v7555, %v7551
    %v8012 = vpack.c.b16 %v7556, %v7552
    %v8013 = vpack.c.b16 %v7557, %v7553
    %v8014 = vpack.c.b16 %v7558, %v7554
    %v8015 = vpack.c.b16 %v7563, %v7559
    %v8016 = vpack.c.b16 %v7564, %v7560
    %v8017 = vpack.c.b16 %v7565, %v7561
    %v8018 = vpack.c.b16 %v7566, %v7562
    %v8019 = vpack.c.b16 %v7571, %v7567
    %v8020 = vpack.c.b16 %v7572, %v7568
    %v8021 = vpack.c.b16 %v7573, %v7569
    %v8022 = vpack.c.b16 %v7574, %v7570
    %v8023 = vpack.c.b16 %v7579, %v7575
    %v8024 = vpack.c.b16 %v7580, %v7576
    %v8025 = vpack.c.b16 %v7581, %v7577
    %v8026 = vpack.c.b16 %v7582, %v7578
    %v8027 = vpack.c.b16 %v7587, %v7583
    %v8028 = vpack.c.b16 %v7588, %v7584
    %v8029 = vpack.c.b16 %v7589, %v7585
    %v8030 = vpack.c.b16 %v7590, %v7586
    %v8031 = vpack.c.b16 %v7595, %v7591
    %v8032 = vpack.c.b16 %v7596, %v7592
    %v8033 = vpack.c.b16 %v7597, %v7593
    %v8034 = vpack.c.b16 %v7598, %v7594
    %v8035 = vpack.c.b16 %v7603, %v7599
    %v8036 = vpack.c.b16 %v7604, %v7600
    %v8037 = vpack.c.b16 %v7605, %v7601
    %v8038 = vpack.c.b16 %v7606, %v7602
    %v8039 = vpack.c.b16 %v7611, %v7607
    %v8040 = vpack.c.b16 %v7612, %v7608
    %v8041 = vpack.c.b16 %v7613, %v7609
    %v8042 = vpack.c.b16 %v7614, %v7610
    %v8043 = vpack.c.b16 %v7619, %v7615
    %v8044 = vpack.c.b16 %v7620, %v7616
    %v8045 = vpack.c.b16 %v7621, %v7617
    %v8046 = vpack.c.b16 %v7622, %v7618
    %v8047 = vpack.c.b16 %v7627, %v7623
    %v8048 = vpack.c.b16 %v7628, %v7624
    %v8049 = vpack.c.b16 %v7629, %v7625
    %v8050 = vpack.c.b16 %v7630, %v7626
    %v8051 = vpack.c.b16 %v7635, %v7631
    %v8052 = vpack.c.b16 %v7636, %v7632
    %v8053 = vpack.c.b16 %v7637, %v7633
    %v8054 = vpack.c.b16 %v7638, %v7634
    %v8055 = vpack.c.b16 %v7643, %v7639
    %v8056 = vpack.c.b16 %v7644, %v7640
    %v8057 = vpack.c.b16 %v7645, %v7641
    %v8058 = vpack.c.b16 %v7646, %v7642
    %v8059 = vpack.c.b16 %v7651, %v7647
    %v8060 = vpack.c.b16 %v7652, %v7648
    %v8061 = vpack.c.b16 %v7653, %v7649
    %v8062 = vpack.c.b16 %v7654, %v7650
    %v8063 = vpack.c.b16 %v7659, %v7655
    %v8064 = vpack.c.b16 %v7660, %v7656
    %v8065 = vpack.c.b16 %v7661, %v7657
    %v8066 = vpack.c.b16 %v7662, %v7658
    %v8067 = vpack.c.b16 %v7667, %v7663
    %v8068 = vpack.c.b16 %v7668, %v7664
    %v8069 = vpack.c.b16 %v7669, %v7665
    %v8070 = vpack.c.b16 %v7670, %v7666
    %v8071 = vpack.c.b16 %v7675, %v7671
    %v8072 = vpack.c.b16 %v7676, %v7672
    %v8073 = vpack.c.b16 %v7677, %v7673
    %v8074 = vpack.c.b16 %v7678, %v7674
    %v8075 = vpack.c.b16 %v7683, %v7679
    %v8076 = vpack.c.b16 %v7684, %v7680
    %v8077 = vpack.c.b16 %v7685, %v7681
    %v8078 = vpack.c.b16 %v7686, %v7682
    %v8079 = vpack.c.b16 %v7691, %v7687
    %v8080 = vpack.c.b16 %v7692, %v7688
    %v8081 = vpack.c.b16 %v7693, %v7689
    %v8082 = vpack.c.b16 %v7694, %v7690
    %v8083 = vpack.c.b16 %v7699, %v7695
    %v8084 = vpack.c.b16 %v7700, %v7696
    %v8085 = vpack.c.b16 %v7701, %v7697
    %v8086 = vpack.c.b16 %v7702, %v7698
    %v8087 = vpack.c.b16 %v7707, %v7703
    %v8088 = vpack.c.b16 %v7708, %v7704
    %v8089 = vpack.c.b16 %v7709, %v7705
    %v8090 = vpack.c.b16 %v7710, %v7706
    %v8091 = vpack.c.b16 %v7715, %v7711
    %v8092 = vpack.c.b16 %v7716, %v7712
    %v8093 = vpack.c.b16 %v7717, %v7713
    %v8094 = vpack.c.b16 %v7718, %v7714
    %v8095 = vpack.c.b16 %v7723, %v7719
    %v8096 = vpack.c.b16 %v7724, %v7720
    %v8097 = vpack.c.b16 %v7725, %v7721
    %v8098 = vpack.c.b16 %v7726, %v7722
    %v8099 = vpack.c.b16 %v7731, %v7727
    %v8100 = vpack.c.b16 %v7732, %v7728
    %v8101 = vpack.c.b16 %v7733, %v7729
    %v8102 = vpack.c.b16 %v7734, %v7730
    %v8103 = vpack.c.b16 %v7739, %v7735
    %v8104 = vpack.c.b16 %v7740, %v7736
    %v8105 = vpack.c.b16 %v7741, %v7737
    %v8106 = vpack.c.b16 %v7742, %v7738
    %v8107 = vpack.c.b16 %v7747, %v7743
    %v8108 = vpack.c.b16 %v7748, %v7744
    %v8109 = vpack.c.b16 %v7749, %v7745
    %v8110 = vpack.c.b16 %v7750, %v7746
    %v8111 = vpack.c.b16 %v7755, %v7751
    %v8112 = vpack.c.b16 %v7756, %v7752
    %v8113 = vpack.c.b16 %v7757, %v7753
    %v8114 = vpack.c.b16 %v7758, %v7754
    %v8115 = vpack.c.b16 %v7763, %v7759
    %v8116 = vpack.c.b16 %v7764, %v7760
    %v8117 = vpack.c.b16 %v7765, %v7761
    %v8118 = vpack.c.b16 %v7766, %v7762
    %v8119 = vpack.c.b16 %v7771, %v7767
    %v8120 = vpack.c.b16 %v7772, %v7768
    %v8121 = vpack.c.b16 %v7773, %v7769
    %v8122 = vpack.c.b16 %v7774, %v7770
    %v8123 = vpack.c.b16 %v7779, %v7775
    %v8124 = vpack.c.b16 %v7780, %v7776
    %v8125 = vpack.c.b16 %v7781, %v7777
    %v8126 = vpack.c.b16 %v7782, %v7778
    %v8127 = vpack.c.b16 %v7787, %v7783
    %v8128 = vpack.c.b16 %v7788, %v7784
    %v8129 = vpack.c.b16 %v7789, %v7785
    %v8130 = vpack.c.b16 %v7790, %v7786
    %v8131 = vpack.c.b16 %v7795, %v7791
    %v8132 = vpack.c.b16 %v7796, %v7792
    %v8133 = vpack.c.b16 %v7797, %v7793
    %v8134 = vpack.c.b16 %v7798, %v7794
    %v8135 = vpack.c.b16 %v7803, %v7799
    %v8136 = vpack.c.b16 %v7804, %v7800
    %v8137 = vpack.c.b16 %v7805, %v7801
    %v8138 = vpack.c.b16 %v7806, %v7802
    %v8139 = vpack.c.b16 %v7811, %v7807
    %v8140 = vpack.c.b16 %v7812, %v7808
    %v8141 = vpack.c.b16 %v7813, %v7809
    %v8142 = vpack.c.b16 %v7814, %v7810
    %v8143 = vpack.c.b16 %v7819, %v7815
    %v8144 = vpack.c.b16 %v7820, %v7816
    %v8145 = vpack.c.b16 %v7821, %v7817
    %v8146 = vpack.c.b16 %v7822, %v7818
    %v8147 = vpack.c.b16 %v7827, %v7823
    %v8148 = vpack.c.b16 %v7828, %v7824
    %v8149 = vpack.c.b16 %v7829, %v7825
    %v8150 = vpack.c.b16 %v7830, %v7826
    %v8151 = vpack.c.b16 %v7835, %v7831
    %v8152 = vpack.c.b16 %v7836, %v7832
    %v8153 = vpack.c.b16 %v7837, %v7833
    %v8154 = vpack.c.b16 %v7838, %v7834
    %v8155 = vpack.c.b16 %v7843, %v7839
    %v8156 = vpack.c.b16 %v7844, %v7840
    %v8157 = vpack.c.b16 %v7845, %v7841
    %v8158 = vpack.c.b16 %v7846, %v7842
    %v8159 = vpack.c.b16 %v7851, %v7847
    %v8160 = vpack.c.b16 %v7852, %v7848
    %v8161 = vpack.c.b16 %v7853, %v7849
    %v8162 = vpack.c.b16 %v7854, %v7850
    %v8163 = vpack.c.b16 %v7859, %v7855
    %v8164 = vpack.c.b16 %v7860, %v7856
    %v8165 = vpack.c.b16 %v7861, %v7857
    %v8166 = vpack.c.b16 %v7862, %v7858
    %v8167 = vpack.c.b16 %v7867, %v7863
    %v8168 = vpack.c.b16 %v7868, %v7864
    %v8169 = vpack.c.b16 %v7869, %v7865
    %v8170 = vpack.c.b16 %v7870, %v7866
    %v8171 = vpack.c.b16 %v7875, %v7871
    %v8172 = vpack.c.b16 %v7876, %v7872
    %v8173 = vpack.c.b16 %v7877, %v7873
    %v8174 = vpack.c.b16 %v7878, %v7874
    %v8175 = vpack.c.b16 %v7883, %v7879
    %v8176 = vpack.c.b16 %v7884, %v7880
    %v8177 = vpack.c.b16 %v7885, %v7881
    %v8178 = vpack.c.b16 %v7886, %v7882
    %v8179 = vpack.c.b16 %v7891, %v7887
    %v8180 = vpack.c.b16 %v7892, %v7888
    %v8181 = vpack.c.b16 %v7893, %v7889
    %v8182 = vpack.c.b16 %v7894, %v7890
    %v8183 = vpack.c.b16 %v7899, %v7895
    %v8184 = vpack.c.b16 %v7900, %v7896
    %v8185 = vpack.c.b16 %v7901, %v7897
    %v8186 = vpack.c.b16 %v7902, %v7898
    %v8187 = vpack.c.b16 %v7907, %v7903
    %v8188 = vpack.c.b16 %v7908, %v7904
    %v8189 = vpack.c.b16 %v7909, %v7905
    %v8190 = vpack.c.b16 %v7910, %v7906
    %v8191 = vpack.c.b16 %v7915, %v7911
    %v8192 = vpack.c.b16 %v7916, %v7912
    %v8193 = vpack.c.b16 %v7917, %v7913
    %v8194 = vpack.c.b16 %v7918, %v7914
    %v8195 = vpack.c.b16 %v7923, %v7919
    %v8196 = vpack.c.b16 %v7924, %v7920
    %v8197 = vpack.c.b16 %v7925, %v7921
    %v8198 = vpack.c.b16 %v7926, %v7922
    %v8199 = vpack.c.b16 %v7931, %v7927
    %v8200 = vpack.c.b16 %v7932, %v7928
    %v8201 = vpack.c.b16 %v7933, %v7929
    %v8202 = vpack.c.b16 %v7934, %v7930
    %v8203 = vpack.c.b16 %v7939, %v7935
    %v8204 = vpack.c.b16 %v7940, %v7936
    %v8205 = vpack.c.b16 %v7941, %v7937
    %v8206 = vpack.c.b16 %v7942, %v7938
    %v8207 = vpack.c.b16 %v7947, %v7943
    %v8208 = vpack.c.b16 %v7948, %v7944
    %v8209 = vpack.c.b16 %v7949, %v7945
    %v8210 = vpack.c.b16 %v7950, %v7946
    %v8211 = vpack.c.b16 %v7955, %v7951
    %v8212 = vpack.c.b16 %v7956, %v7952
    %v8213 = vpack.c.b16 %v7957, %v7953
    %v8214 = vpack.c.b16 %v7958, %v7954
    %8471 = vmatpush.bf16.msra.mxu0 %v7987
    %8472 = vmatpush.bf16.msra.mxu0 %v7983
    %8473 = vmatpush.bf16.msra.mxu0 %v7979
    %8474 = vmatpush.bf16.msra.mxu0 %v7975
    %8475 = vmatpush.bf16.msra.mxu0 %v7971
    %8476 = vmatpush.bf16.msra.mxu0 %v7967
    %8477 = vmatpush.bf16.msra.mxu0 %v7963
    %8478 = vmatpush.bf16.msra.mxu0 %v7959
    %8479 = vmatmul.bf16.gmra.mxu0 %v6861
    %v8480 = vpop.f32.mrf.mxu0
    %v8481 = vadd.f32 %v7183, %v8480
    %v8482 = vpop.f32.mrf.mxu0
    %v8483 = vadd.f32 %v7183, %v8482
    %8484 = vmatmul.bf16.gmra.mxu0 %v6869
    %v8485 = vpop.f32.mrf.mxu0
    %v8486 = vadd.f32 %v7183, %v8485
    %v8487 = vpop.f32.mrf.mxu0
    %v8488 = vadd.f32 %v7183, %v8487
    %8489 = vmatmul.bf16.gmra.mxu0 %v6877
    %v8490 = vpop.f32.mrf.mxu0
    %v8491 = vadd.f32 %v7183, %v8490
    %v8492 = vpop.f32.mrf.mxu0
    %v8493 = vadd.f32 %v7183, %v8492
    %8494 = vmatmul.bf16.gmra.mxu0 %v6885
    %v8495 = vpop.f32.mrf.mxu0
    %v8496 = vadd.f32 %v7183, %v8495
    %v8497 = vpop.f32.mrf.mxu0
    %v8498 = vadd.f32 %v7183, %v8497
    %8499 = vmatmul.bf16.gmra.mxu0 %v6893
    %v8500 = vpop.f32.mrf.mxu0
    %v8501 = vadd.f32 %v7183, %v8500
    %v8502 = vpop.f32.mrf.mxu0
    %v8503 = vadd.f32 %v7183, %v8502
    %8504 = vmatmul.bf16.gmra.mxu0 %v6901
    %v8505 = vpop.f32.mrf.mxu0
    %v8506 = vadd.f32 %v7183, %v8505
    %v8507 = vpop.f32.mrf.mxu0
    %v8508 = vadd.f32 %v7183, %v8507
    %8509 = vmatmul.bf16.gmra.mxu0 %v6909
    %v8510 = vpop.f32.mrf.mxu0
    %v8511 = vadd.f32 %v7183, %v8510
    %v8512 = vpop.f32.mrf.mxu0
    %v8513 = vadd.f32 %v7183, %v8512
    %8514 = vmatmul.bf16.gmra.mxu0 %v6917
    %v8515 = vpop.f32.mrf.mxu0
    %v8516 = vadd.f32 %v7183, %v8515
    %v8517 = vpop.f32.mrf.mxu0
    %v8518 = vadd.f32 %v7183, %v8517
    %8519 = vdwg.mxu0
    %8520 = vmatpush.bf16.msra.mxu0 %v8019
    %8521 = vmatpush.bf16.msra.mxu0 %v8015
    %8522 = vmatpush.bf16.msra.mxu0 %v8011
    %8523 = vmatpush.bf16.msra.mxu0 %v8007
    %8524 = vmatpush.bf16.msra.mxu0 %v8003
    %8525 = vmatpush.bf16.msra.mxu0 %v7999
    %8526 = vmatpush.bf16.msra.mxu0 %v7995
    %8527 = vmatpush.bf16.msra.mxu0 %v7991
    %8528 = vmatmul.bf16.gmra.mxu0 %v6862
    %v8529 = vpop.f32.mrf.mxu0
    %v8530 = vadd.f32 %v8481, %v8529
    %v8531 = vpop.f32.mrf.mxu0
    %v8532 = vadd.f32 %v8483, %v8531
    %8533 = vmatmul.bf16.gmra.mxu0 %v6870
    %v8534 = vpop.f32.mrf.mxu0
    %v8535 = vadd.f32 %v8486, %v8534
    %v8536 = vpop.f32.mrf.mxu0
    %v8537 = vadd.f32 %v8488, %v8536
    %8538 = vmatmul.bf16.gmra.mxu0 %v6878
    %v8539 = vpop.f32.mrf.mxu0
    %v8540 = vadd.f32 %v8491, %v8539
    %v8541 = vpop.f32.mrf.mxu0
    %v8542 = vadd.f32 %v8493, %v8541
    %8543 = vmatmul.bf16.gmra.mxu0 %v6886
    %v8544 = vpop.f32.mrf.mxu0
    %v8545 = vadd.f32 %v8496, %v8544
    %v8546 = vpop.f32.mrf.mxu0
    %v8547 = vadd.f32 %v8498, %v8546
    %8548 = vmatmul.bf16.gmra.mxu0 %v6894
    %v8549 = vpop.f32.mrf.mxu0
    %v8550 = vadd.f32 %v8501, %v8549
    %v8551 = vpop.f32.mrf.mxu0
    %v8552 = vadd.f32 %v8503, %v8551
    %8553 = vmatmul.bf16.gmra.mxu0 %v6902
    %v8554 = vpop.f32.mrf.mxu0
    %v8555 = vadd.f32 %v8506, %v8554
    %v8556 = vpop.f32.mrf.mxu0
    %v8557 = vadd.f32 %v8508, %v8556
    %8558 = vmatmul.bf16.gmra.mxu0 %v6910
    %v8559 = vpop.f32.mrf.mxu0
    %v8560 = vadd.f32 %v8511, %v8559
    %v8561 = vpop.f32.mrf.mxu0
    %v8562 = vadd.f32 %v8513, %v8561
    %8563 = vmatmul.bf16.gmra.mxu0 %v6918
    %v8564 = vpop.f32.mrf.mxu0
    %v8565 = vadd.f32 %v8516, %v8564
    %v8566 = vpop.f32.mrf.mxu0
    %v8567 = vadd.f32 %v8518, %v8566
    %8568 = vdwg.mxu0
    %8569 = vmatpush.bf16.msra.mxu0 %v8051
    %8570 = vmatpush.bf16.msra.mxu0 %v8047
    %8571 = vmatpush.bf16.msra.mxu0 %v8043
    %8572 = vmatpush.bf16.msra.mxu0 %v8039
    %8573 = vmatpush.bf16.msra.mxu0 %v8035
    %8574 = vmatpush.bf16.msra.mxu0 %v8031
    %8575 = vmatpush.bf16.msra.mxu0 %v8027
    %8576 = vmatpush.bf16.msra.mxu0 %v8023
    %8577 = vmatmul.bf16.gmra.mxu0 %v6863
    %v8578 = vpop.f32.mrf.mxu0
    %v8579 = vadd.f32 %v8530, %v8578
    %v8580 = vpop.f32.mrf.mxu0
    %v8581 = vadd.f32 %v8532, %v8580
    %8582 = vmatmul.bf16.gmra.mxu0 %v6871
    %v8583 = vpop.f32.mrf.mxu0
    %v8584 = vadd.f32 %v8535, %v8583
    %v8585 = vpop.f32.mrf.mxu0
    %v8586 = vadd.f32 %v8537, %v8585
    %8587 = vmatmul.bf16.gmra.mxu0 %v6879
    %v8588 = vpop.f32.mrf.mxu0
    %v8589 = vadd.f32 %v8540, %v8588
    %v8590 = vpop.f32.mrf.mxu0
    %v8591 = vadd.f32 %v8542, %v8590
    %8592 = vmatmul.bf16.gmra.mxu0 %v6887
    %v8593 = vpop.f32.mrf.mxu0
    %v8594 = vadd.f32 %v8545, %v8593
    %v8595 = vpop.f32.mrf.mxu0
    %v8596 = vadd.f32 %v8547, %v8595
    %8597 = vmatmul.bf16.gmra.mxu0 %v6895
    %v8598 = vpop.f32.mrf.mxu0
    %v8599 = vadd.f32 %v8550, %v8598
    %v8600 = vpop.f32.mrf.mxu0
    %v8601 = vadd.f32 %v8552, %v8600
    %8602 = vmatmul.bf16.gmra.mxu0 %v6903
    %v8603 = vpop.f32.mrf.mxu0
    %v8604 = vadd.f32 %v8555, %v8603
    %v8605 = vpop.f32.mrf.mxu0
    %v8606 = vadd.f32 %v8557, %v8605
    %8607 = vmatmul.bf16.gmra.mxu0 %v6911
    %v8608 = vpop.f32.mrf.mxu0
    %v8609 = vadd.f32 %v8560, %v8608
    %v8610 = vpop.f32.mrf.mxu0
    %v8611 = vadd.f32 %v8562, %v8610
    %8612 = vmatmul.bf16.gmra.mxu0 %v6919
    %v8613 = vpop.f32.mrf.mxu0
    %v8614 = vadd.f32 %v8565, %v8613
    %v8615 = vpop.f32.mrf.mxu0
    %v8616 = vadd.f32 %v8567, %v8615
    %8617 = vdwg.mxu0
    %8618 = vmatpush.bf16.msra.mxu0 %v8083
    %8619 = vmatpush.bf16.msra.mxu0 %v8079
    %8620 = vmatpush.bf16.msra.mxu0 %v8075
    %8621 = vmatpush.bf16.msra.mxu0 %v8071
    %8622 = vmatpush.bf16.msra.mxu0 %v8067
    %8623 = vmatpush.bf16.msra.mxu0 %v8063
    %8624 = vmatpush.bf16.msra.mxu0 %v8059
    %8625 = vmatpush.bf16.msra.mxu0 %v8055
    %8626 = vmatmul.bf16.gmra.mxu0 %v6864
    %v8627 = vpop.f32.mrf.mxu0
    %v8628 = vadd.f32 %v8579, %v8627
    %v8629 = vpop.f32.mrf.mxu0
    %v8630 = vadd.f32 %v8581, %v8629
    %8631 = vmatmul.bf16.gmra.mxu0 %v6872
    %v8632 = vpop.f32.mrf.mxu0
    %v8633 = vadd.f32 %v8584, %v8632
    %v8634 = vpop.f32.mrf.mxu0
    %v8635 = vadd.f32 %v8586, %v8634
    %8636 = vmatmul.bf16.gmra.mxu0 %v6880
    %v8637 = vpop.f32.mrf.mxu0
    %v8638 = vadd.f32 %v8589, %v8637
    %v8639 = vpop.f32.mrf.mxu0
    %v8640 = vadd.f32 %v8591, %v8639
    %8641 = vmatmul.bf16.gmra.mxu0 %v6888
    %v8642 = vpop.f32.mrf.mxu0
    %v8643 = vadd.f32 %v8594, %v8642
    %v8644 = vpop.f32.mrf.mxu0
    %v8645 = vadd.f32 %v8596, %v8644
    %8646 = vmatmul.bf16.gmra.mxu0 %v6896
    %v8647 = vpop.f32.mrf.mxu0
    %v8648 = vadd.f32 %v8599, %v8647
    %v8649 = vpop.f32.mrf.mxu0
    %v8650 = vadd.f32 %v8601, %v8649
    %8651 = vmatmul.bf16.gmra.mxu0 %v6904
    %v8652 = vpop.f32.mrf.mxu0
    %v8653 = vadd.f32 %v8604, %v8652
    %v8654 = vpop.f32.mrf.mxu0
    %v8655 = vadd.f32 %v8606, %v8654
    %8656 = vmatmul.bf16.gmra.mxu0 %v6912
    %v8657 = vpop.f32.mrf.mxu0
    %v8658 = vadd.f32 %v8609, %v8657
    %v8659 = vpop.f32.mrf.mxu0
    %v8660 = vadd.f32 %v8611, %v8659
    %8661 = vmatmul.bf16.gmra.mxu0 %v6920
    %v8662 = vpop.f32.mrf.mxu0
    %v8663 = vadd.f32 %v8614, %v8662
    %v8664 = vpop.f32.mrf.mxu0
    %v8665 = vadd.f32 %v8616, %v8664
    %8666 = vdwg.mxu0
    %8667 = vmatpush.bf16.msra.mxu0 %v8115
    %8668 = vmatpush.bf16.msra.mxu0 %v8111
    %8669 = vmatpush.bf16.msra.mxu0 %v8107
    %8670 = vmatpush.bf16.msra.mxu0 %v8103
    %8671 = vmatpush.bf16.msra.mxu0 %v8099
    %8672 = vmatpush.bf16.msra.mxu0 %v8095
    %8673 = vmatpush.bf16.msra.mxu0 %v8091
    %8674 = vmatpush.bf16.msra.mxu0 %v8087
    %8675 = vmatmul.bf16.gmra.mxu0 %v6865
    %v8676 = vpop.f32.mrf.mxu0
    %v8677 = vadd.f32 %v8628, %v8676
    %v8678 = vpop.f32.mrf.mxu0
    %v8679 = vadd.f32 %v8630, %v8678
    %8680 = vmatmul.bf16.gmra.mxu0 %v6873
    %v8681 = vpop.f32.mrf.mxu0
    %v8682 = vadd.f32 %v8633, %v8681
    %v8683 = vpop.f32.mrf.mxu0
    %v8684 = vadd.f32 %v8635, %v8683
    %8685 = vmatmul.bf16.gmra.mxu0 %v6881
    %v8686 = vpop.f32.mrf.mxu0
    %v8687 = vadd.f32 %v8638, %v8686
    %v8688 = vpop.f32.mrf.mxu0
    %v8689 = vadd.f32 %v8640, %v8688
    %8690 = vmatmul.bf16.gmra.mxu0 %v6889
    %v8691 = vpop.f32.mrf.mxu0
    %v8692 = vadd.f32 %v8643, %v8691
    %v8693 = vpop.f32.mrf.mxu0
    %v8694 = vadd.f32 %v8645, %v8693
    %8695 = vmatmul.bf16.gmra.mxu0 %v6897
    %v8696 = vpop.f32.mrf.mxu0
    %v8697 = vadd.f32 %v8648, %v8696
    %v8698 = vpop.f32.mrf.mxu0
    %v8699 = vadd.f32 %v8650, %v8698
    %8700 = vmatmul.bf16.gmra.mxu0 %v6905
    %v8701 = vpop.f32.mrf.mxu0
    %v8702 = vadd.f32 %v8653, %v8701
    %v8703 = vpop.f32.mrf.mxu0
    %v8704 = vadd.f32 %v8655, %v8703
    %8705 = vmatmul.bf16.gmra.mxu0 %v6913
    %v8706 = vpop.f32.mrf.mxu0
    %v8707 = vadd.f32 %v8658, %v8706
    %v8708 = vpop.f32.mrf.mxu0
    %v8709 = vadd.f32 %v8660, %v8708
    %8710 = vmatmul.bf16.gmra.mxu0 %v6921
    %v8711 = vpop.f32.mrf.mxu0
    %v8712 = vadd.f32 %v8663, %v8711
    %v8713 = vpop.f32.mrf.mxu0
    %v8714 = vadd.f32 %v8665, %v8713
    %8715 = vdwg.mxu0
    %8716 = vmatpush.bf16.msra.mxu0 %v8147
    %8717 = vmatpush.bf16.msra.mxu0 %v8143
    %8718 = vmatpush.bf16.msra.mxu0 %v8139
    %8719 = vmatpush.bf16.msra.mxu0 %v8135
    %8720 = vmatpush.bf16.msra.mxu0 %v8131
    %8721 = vmatpush.bf16.msra.mxu0 %v8127
    %8722 = vmatpush.bf16.msra.mxu0 %v8123
    %8723 = vmatpush.bf16.msra.mxu0 %v8119
    %8724 = vmatmul.bf16.gmra.mxu0 %v6866
    %v8725 = vpop.f32.mrf.mxu0
    %v8726 = vadd.f32 %v8677, %v8725
    %v8727 = vpop.f32.mrf.mxu0
    %v8728 = vadd.f32 %v8679, %v8727
    %8729 = vmatmul.bf16.gmra.mxu0 %v6874
    %v8730 = vpop.f32.mrf.mxu0
    %v8731 = vadd.f32 %v8682, %v8730
    %v8732 = vpop.f32.mrf.mxu0
    %v8733 = vadd.f32 %v8684, %v8732
    %8734 = vmatmul.bf16.gmra.mxu0 %v6882
    %v8735 = vpop.f32.mrf.mxu0
    %v8736 = vadd.f32 %v8687, %v8735
    %v8737 = vpop.f32.mrf.mxu0
    %v8738 = vadd.f32 %v8689, %v8737
    %8739 = vmatmul.bf16.gmra.mxu0 %v6890
    %v8740 = vpop.f32.mrf.mxu0
    %v8741 = vadd.f32 %v8692, %v8740
    %v8742 = vpop.f32.mrf.mxu0
    %v8743 = vadd.f32 %v8694, %v8742
    %8744 = vmatmul.bf16.gmra.mxu0 %v6898
    %v8745 = vpop.f32.mrf.mxu0
    %v8746 = vadd.f32 %v8697, %v8745
    %v8747 = vpop.f32.mrf.mxu0
    %v8748 = vadd.f32 %v8699, %v8747
    %8749 = vmatmul.bf16.gmra.mxu0 %v6906
    %v8750 = vpop.f32.mrf.mxu0
    %v8751 = vadd.f32 %v8702, %v8750
    %v8752 = vpop.f32.mrf.mxu0
    %v8753 = vadd.f32 %v8704, %v8752
    %8754 = vmatmul.bf16.gmra.mxu0 %v6914
    %v8755 = vpop.f32.mrf.mxu0
    %v8756 = vadd.f32 %v8707, %v8755
    %v8757 = vpop.f32.mrf.mxu0
    %v8758 = vadd.f32 %v8709, %v8757
    %8759 = vmatmul.bf16.gmra.mxu0 %v6922
    %v8760 = vpop.f32.mrf.mxu0
    %v8761 = vadd.f32 %v8712, %v8760
    %v8762 = vpop.f32.mrf.mxu0
    %v8763 = vadd.f32 %v8714, %v8762
    %8764 = vdwg.mxu0
    %8765 = vmatpush.bf16.msra.mxu0 %v8179
    %8766 = vmatpush.bf16.msra.mxu0 %v8175
    %8767 = vmatpush.bf16.msra.mxu0 %v8171
    %8768 = vmatpush.bf16.msra.mxu0 %v8167
    %8769 = vmatpush.bf16.msra.mxu0 %v8163
    %8770 = vmatpush.bf16.msra.mxu0 %v8159
    %8771 = vmatpush.bf16.msra.mxu0 %v8155
    %8772 = vmatpush.bf16.msra.mxu0 %v8151
    %8773 = vmatmul.bf16.gmra.mxu0 %v6867
    %v8774 = vpop.f32.mrf.mxu0
    %v8775 = vadd.f32 %v8726, %v8774
    %v8776 = vpop.f32.mrf.mxu0
    %v8777 = vadd.f32 %v8728, %v8776
    %8778 = vmatmul.bf16.gmra.mxu0 %v6875
    %v8779 = vpop.f32.mrf.mxu0
    %v8780 = vadd.f32 %v8731, %v8779
    %v8781 = vpop.f32.mrf.mxu0
    %v8782 = vadd.f32 %v8733, %v8781
    %8783 = vmatmul.bf16.gmra.mxu0 %v6883
    %v8784 = vpop.f32.mrf.mxu0
    %v8785 = vadd.f32 %v8736, %v8784
    %v8786 = vpop.f32.mrf.mxu0
    %v8787 = vadd.f32 %v8738, %v8786
    %8788 = vmatmul.bf16.gmra.mxu0 %v6891
    %v8789 = vpop.f32.mrf.mxu0
    %v8790 = vadd.f32 %v8741, %v8789
    %v8791 = vpop.f32.mrf.mxu0
    %v8792 = vadd.f32 %v8743, %v8791
    %8793 = vmatmul.bf16.gmra.mxu0 %v6899
    %v8794 = vpop.f32.mrf.mxu0
    %v8795 = vadd.f32 %v8746, %v8794
    %v8796 = vpop.f32.mrf.mxu0
    %v8797 = vadd.f32 %v8748, %v8796
    %8798 = vmatmul.bf16.gmra.mxu0 %v6907
    %v8799 = vpop.f32.mrf.mxu0
    %v8800 = vadd.f32 %v8751, %v8799
    %v8801 = vpop.f32.mrf.mxu0
    %v8802 = vadd.f32 %v8753, %v8801
    %8803 = vmatmul.bf16.gmra.mxu0 %v6915
    %v8804 = vpop.f32.mrf.mxu0
    %v8805 = vadd.f32 %v8756, %v8804
    %v8806 = vpop.f32.mrf.mxu0
    %v8807 = vadd.f32 %v8758, %v8806
    %8808 = vmatmul.bf16.gmra.mxu0 %v6923
    %v8809 = vpop.f32.mrf.mxu0
    %v8810 = vadd.f32 %v8761, %v8809
    %v8811 = vpop.f32.mrf.mxu0
    %v8812 = vadd.f32 %v8763, %v8811
    %8813 = vdwg.mxu0
    %8814 = vmatpush.bf16.msra.mxu0 %v8211
    %8815 = vmatpush.bf16.msra.mxu0 %v8207
    %8816 = vmatpush.bf16.msra.mxu0 %v8203
    %8817 = vmatpush.bf16.msra.mxu0 %v8199
    %8818 = vmatpush.bf16.msra.mxu0 %v8195
    %8819 = vmatpush.bf16.msra.mxu0 %v8191
    %8820 = vmatpush.bf16.msra.mxu0 %v8187
    %8821 = vmatpush.bf16.msra.mxu0 %v8183
    %8822 = vmatmul.bf16.gmra.mxu0 %v6868
    %v8823 = vpop.f32.mrf.mxu0
    %v8824 = vadd.f32 %v8775, %v8823
    %v8825 = vpop.f32.mrf.mxu0
    %v8826 = vadd.f32 %v8777, %v8825
    %8827 = vmatmul.bf16.gmra.mxu0 %v6876
    %v8828 = vpop.f32.mrf.mxu0
    %v8829 = vadd.f32 %v8780, %v8828
    %v8830 = vpop.f32.mrf.mxu0
    %v8831 = vadd.f32 %v8782, %v8830
    %8832 = vmatmul.bf16.gmra.mxu0 %v6884
    %v8833 = vpop.f32.mrf.mxu0
    %v8834 = vadd.f32 %v8785, %v8833
    %v8835 = vpop.f32.mrf.mxu0
    %v8836 = vadd.f32 %v8787, %v8835
    %8837 = vmatmul.bf16.gmra.mxu0 %v6892
    %v8838 = vpop.f32.mrf.mxu0
    %v8839 = vadd.f32 %v8790, %v8838
    %v8840 = vpop.f32.mrf.mxu0
    %v8841 = vadd.f32 %v8792, %v8840
    %8842 = vmatmul.bf16.gmra.mxu0 %v6900
    %v8843 = vpop.f32.mrf.mxu0
    %v8844 = vadd.f32 %v8795, %v8843
    %v8845 = vpop.f32.mrf.mxu0
    %v8846 = vadd.f32 %v8797, %v8845
    %8847 = vmatmul.bf16.gmra.mxu0 %v6908
    %v8848 = vpop.f32.mrf.mxu0
    %v8849 = vadd.f32 %v8800, %v8848
    %v8850 = vpop.f32.mrf.mxu0
    %v8851 = vadd.f32 %v8802, %v8850
    %8852 = vmatmul.bf16.gmra.mxu0 %v6916
    %v8853 = vpop.f32.mrf.mxu0
    %v8854 = vadd.f32 %v8805, %v8853
    %v8855 = vpop.f32.mrf.mxu0
    %v8856 = vadd.f32 %v8807, %v8855
    %8857 = vmatmul.bf16.gmra.mxu0 %v6924
    %v8858 = vpop.f32.mrf.mxu0
    %v8859 = vadd.f32 %v8810, %v8858
    %v8860 = vpop.f32.mrf.mxu0
    %v8861 = vadd.f32 %v8812, %v8860
    %8862 = vdwg.mxu0
    %8863 = vmatpush.bf16.msra.mxu0 %v7988
    %8864 = vmatpush.bf16.msra.mxu0 %v7984
    %8865 = vmatpush.bf16.msra.mxu0 %v7980
    %8866 = vmatpush.bf16.msra.mxu0 %v7976
    %8867 = vmatpush.bf16.msra.mxu0 %v7972
    %8868 = vmatpush.bf16.msra.mxu0 %v7968
    %8869 = vmatpush.bf16.msra.mxu0 %v7964
    %8870 = vmatpush.bf16.msra.mxu0 %v7960
    %8871 = vmatmul.bf16.gmra.mxu0 %v6861
    %v8872 = vpop.f32.mrf.mxu0
    %v8873 = vadd.f32 %v7184, %v8872
    %v8874 = vpop.f32.mrf.mxu0
    %v8875 = vadd.f32 %v7184, %v8874
    %8876 = vmatmul.bf16.gmra.mxu0 %v6869
    %v8877 = vpop.f32.mrf.mxu0
    %v8878 = vadd.f32 %v7184, %v8877
    %v8879 = vpop.f32.mrf.mxu0
    %v8880 = vadd.f32 %v7184, %v8879
    %8881 = vmatmul.bf16.gmra.mxu0 %v6877
    %v8882 = vpop.f32.mrf.mxu0
    %v8883 = vadd.f32 %v7184, %v8882
    %v8884 = vpop.f32.mrf.mxu0
    %v8885 = vadd.f32 %v7184, %v8884
    %8886 = vmatmul.bf16.gmra.mxu0 %v6885
    %v8887 = vpop.f32.mrf.mxu0
    %v8888 = vadd.f32 %v7184, %v8887
    %v8889 = vpop.f32.mrf.mxu0
    %v8890 = vadd.f32 %v7184, %v8889
    %8891 = vmatmul.bf16.gmra.mxu0 %v6893
    %v8892 = vpop.f32.mrf.mxu0
    %v8893 = vadd.f32 %v7184, %v8892
    %v8894 = vpop.f32.mrf.mxu0
    %v8895 = vadd.f32 %v7184, %v8894
    %8896 = vmatmul.bf16.gmra.mxu0 %v6901
    %v8897 = vpop.f32.mrf.mxu0
    %v8898 = vadd.f32 %v7184, %v8897
    %v8899 = vpop.f32.mrf.mxu0
    %v8900 = vadd.f32 %v7184, %v8899
    %8901 = vmatmul.bf16.gmra.mxu0 %v6909
    %v8902 = vpop.f32.mrf.mxu0
    %v8903 = vadd.f32 %v7184, %v8902
    %v8904 = vpop.f32.mrf.mxu0
    %v8905 = vadd.f32 %v7184, %v8904
    %8906 = vmatmul.bf16.gmra.mxu0 %v6917
    %v8907 = vpop.f32.mrf.mxu0
    %v8908 = vadd.f32 %v7184, %v8907
    %v8909 = vpop.f32.mrf.mxu0
    %v8910 = vadd.f32 %v7184, %v8909
    %8911 = vdwg.mxu0
    %8912 = vmatpush.bf16.msra.mxu0 %v8020
    %8913 = vmatpush.bf16.msra.mxu0 %v8016
    %8914 = vmatpush.bf16.msra.mxu0 %v8012
    %8915 = vmatpush.bf16.msra.mxu0 %v8008
    %8916 = vmatpush.bf16.msra.mxu0 %v8004
    %8917 = vmatpush.bf16.msra.mxu0 %v8000
    %8918 = vmatpush.bf16.msra.mxu0 %v7996
    %8919 = vmatpush.bf16.msra.mxu0 %v7992
    %8920 = vmatmul.bf16.gmra.mxu0 %v6862
    %v8921 = vpop.f32.mrf.mxu0
    %v8922 = vadd.f32 %v8873, %v8921
    %v8923 = vpop.f32.mrf.mxu0
    %v8924 = vadd.f32 %v8875, %v8923
    %8925 = vmatmul.bf16.gmra.mxu0 %v6870
    %v8926 = vpop.f32.mrf.mxu0
    %v8927 = vadd.f32 %v8878, %v8926
    %v8928 = vpop.f32.mrf.mxu0
    %v8929 = vadd.f32 %v8880, %v8928
    %8930 = vmatmul.bf16.gmra.mxu0 %v6878
    %v8931 = vpop.f32.mrf.mxu0
    %v8932 = vadd.f32 %v8883, %v8931
    %v8933 = vpop.f32.mrf.mxu0
    %v8934 = vadd.f32 %v8885, %v8933
    %8935 = vmatmul.bf16.gmra.mxu0 %v6886
    %v8936 = vpop.f32.mrf.mxu0
    %v8937 = vadd.f32 %v8888, %v8936
    %v8938 = vpop.f32.mrf.mxu0
    %v8939 = vadd.f32 %v8890, %v8938
    %8940 = vmatmul.bf16.gmra.mxu0 %v6894
    %v8941 = vpop.f32.mrf.mxu0
    %v8942 = vadd.f32 %v8893, %v8941
    %v8943 = vpop.f32.mrf.mxu0
    %v8944 = vadd.f32 %v8895, %v8943
    %8945 = vmatmul.bf16.gmra.mxu0 %v6902
    %v8946 = vpop.f32.mrf.mxu0
    %v8947 = vadd.f32 %v8898, %v8946
    %v8948 = vpop.f32.mrf.mxu0
    %v8949 = vadd.f32 %v8900, %v8948
    %8950 = vmatmul.bf16.gmra.mxu0 %v6910
    %v8951 = vpop.f32.mrf.mxu0
    %v8952 = vadd.f32 %v8903, %v8951
    %v8953 = vpop.f32.mrf.mxu0
    %v8954 = vadd.f32 %v8905, %v8953
    %8955 = vmatmul.bf16.gmra.mxu0 %v6918
    %v8956 = vpop.f32.mrf.mxu0
    %v8957 = vadd.f32 %v8908, %v8956
    %v8958 = vpop.f32.mrf.mxu0
    %v8959 = vadd.f32 %v8910, %v8958
    %8960 = vdwg.mxu0
    %8961 = vmatpush.bf16.msra.mxu0 %v8052
    %8962 = vmatpush.bf16.msra.mxu0 %v8048
    %8963 = vmatpush.bf16.msra.mxu0 %v8044
    %8964 = vmatpush.bf16.msra.mxu0 %v8040
    %8965 = vmatpush.bf16.msra.mxu0 %v8036
    %8966 = vmatpush.bf16.msra.mxu0 %v8032
    %8967 = vmatpush.bf16.msra.mxu0 %v8028
    %8968 = vmatpush.bf16.msra.mxu0 %v8024
    %8969 = vmatmul.bf16.gmra.mxu0 %v6863
    %v8970 = vpop.f32.mrf.mxu0
    %v8971 = vadd.f32 %v8922, %v8970
    %v8972 = vpop.f32.mrf.mxu0
    %v8973 = vadd.f32 %v8924, %v8972
    %8974 = vmatmul.bf16.gmra.mxu0 %v6871
    %v8975 = vpop.f32.mrf.mxu0
    %v8976 = vadd.f32 %v8927, %v8975
    %v8977 = vpop.f32.mrf.mxu0
    %v8978 = vadd.f32 %v8929, %v8977
    %8979 = vmatmul.bf16.gmra.mxu0 %v6879
    %v8980 = vpop.f32.mrf.mxu0
    %v8981 = vadd.f32 %v8932, %v8980
    %v8982 = vpop.f32.mrf.mxu0
    %v8983 = vadd.f32 %v8934, %v8982
    %8984 = vmatmul.bf16.gmra.mxu0 %v6887
    %v8985 = vpop.f32.mrf.mxu0
    %v8986 = vadd.f32 %v8937, %v8985
    %v8987 = vpop.f32.mrf.mxu0
    %v8988 = vadd.f32 %v8939, %v8987
    %8989 = vmatmul.bf16.gmra.mxu0 %v6895
    %v8990 = vpop.f32.mrf.mxu0
    %v8991 = vadd.f32 %v8942, %v8990
    %v8992 = vpop.f32.mrf.mxu0
    %v8993 = vadd.f32 %v8944, %v8992
    %8994 = vmatmul.bf16.gmra.mxu0 %v6903
    %v8995 = vpop.f32.mrf.mxu0
    %v8996 = vadd.f32 %v8947, %v8995
    %v8997 = vpop.f32.mrf.mxu0
    %v8998 = vadd.f32 %v8949, %v8997
    %8999 = vmatmul.bf16.gmra.mxu0 %v6911
    %v9000 = vpop.f32.mrf.mxu0
    %v9001 = vadd.f32 %v8952, %v9000
    %v9002 = vpop.f32.mrf.mxu0
    %v9003 = vadd.f32 %v8954, %v9002
    %9004 = vmatmul.bf16.gmra.mxu0 %v6919
    %v9005 = vpop.f32.mrf.mxu0
    %v9006 = vadd.f32 %v8957, %v9005
    %v9007 = vpop.f32.mrf.mxu0
    %v9008 = vadd.f32 %v8959, %v9007
    %9009 = vdwg.mxu0
    %9010 = vmatpush.bf16.msra.mxu0 %v8084
    %9011 = vmatpush.bf16.msra.mxu0 %v8080
    %9012 = vmatpush.bf16.msra.mxu0 %v8076
    %9013 = vmatpush.bf16.msra.mxu0 %v8072
    %9014 = vmatpush.bf16.msra.mxu0 %v8068
    %9015 = vmatpush.bf16.msra.mxu0 %v8064
    %9016 = vmatpush.bf16.msra.mxu0 %v8060
    %9017 = vmatpush.bf16.msra.mxu0 %v8056
    %9018 = vmatmul.bf16.gmra.mxu0 %v6864
    %v9019 = vpop.f32.mrf.mxu0
    %v9020 = vadd.f32 %v8971, %v9019
    %v9021 = vpop.f32.mrf.mxu0
    %v9022 = vadd.f32 %v8973, %v9021
    %9023 = vmatmul.bf16.gmra.mxu0 %v6872
    %v9024 = vpop.f32.mrf.mxu0
    %v9025 = vadd.f32 %v8976, %v9024
    %v9026 = vpop.f32.mrf.mxu0
    %v9027 = vadd.f32 %v8978, %v9026
    %9028 = vmatmul.bf16.gmra.mxu0 %v6880
    %v9029 = vpop.f32.mrf.mxu0
    %v9030 = vadd.f32 %v8981, %v9029
    %v9031 = vpop.f32.mrf.mxu0
    %v9032 = vadd.f32 %v8983, %v9031
    %9033 = vmatmul.bf16.gmra.mxu0 %v6888
    %v9034 = vpop.f32.mrf.mxu0
    %v9035 = vadd.f32 %v8986, %v9034
    %v9036 = vpop.f32.mrf.mxu0
    %v9037 = vadd.f32 %v8988, %v9036
    %9038 = vmatmul.bf16.gmra.mxu0 %v6896
    %v9039 = vpop.f32.mrf.mxu0
    %v9040 = vadd.f32 %v8991, %v9039
    %v9041 = vpop.f32.mrf.mxu0
    %v9042 = vadd.f32 %v8993, %v9041
    %9043 = vmatmul.bf16.gmra.mxu0 %v6904
    %v9044 = vpop.f32.mrf.mxu0
    %v9045 = vadd.f32 %v8996, %v9044
    %v9046 = vpop.f32.mrf.mxu0
    %v9047 = vadd.f32 %v8998, %v9046
    %9048 = vmatmul.bf16.gmra.mxu0 %v6912
    %v9049 = vpop.f32.mrf.mxu0
    %v9050 = vadd.f32 %v9001, %v9049
    %v9051 = vpop.f32.mrf.mxu0
    %v9052 = vadd.f32 %v9003, %v9051
    %9053 = vmatmul.bf16.gmra.mxu0 %v6920
    %v9054 = vpop.f32.mrf.mxu0
    %v9055 = vadd.f32 %v9006, %v9054
    %v9056 = vpop.f32.mrf.mxu0
    %v9057 = vadd.f32 %v9008, %v9056
    %9058 = vdwg.mxu0
    %9059 = vmatpush.bf16.msra.mxu0 %v8116
    %9060 = vmatpush.bf16.msra.mxu0 %v8112
    %9061 = vmatpush.bf16.msra.mxu0 %v8108
    %9062 = vmatpush.bf16.msra.mxu0 %v8104
    %9063 = vmatpush.bf16.msra.mxu0 %v8100
    %9064 = vmatpush.bf16.msra.mxu0 %v8096
    %9065 = vmatpush.bf16.msra.mxu0 %v8092
    %9066 = vmatpush.bf16.msra.mxu0 %v8088
    %9067 = vmatmul.bf16.gmra.mxu0 %v6865
    %v9068 = vpop.f32.mrf.mxu0
    %v9069 = vadd.f32 %v9020, %v9068
    %v9070 = vpop.f32.mrf.mxu0
    %v9071 = vadd.f32 %v9022, %v9070
    %9072 = vmatmul.bf16.gmra.mxu0 %v6873
    %v9073 = vpop.f32.mrf.mxu0
    %v9074 = vadd.f32 %v9025, %v9073
    %v9075 = vpop.f32.mrf.mxu0
    %v9076 = vadd.f32 %v9027, %v9075
    %9077 = vmatmul.bf16.gmra.mxu0 %v6881
    %v9078 = vpop.f32.mrf.mxu0
    %v9079 = vadd.f32 %v9030, %v9078
    %v9080 = vpop.f32.mrf.mxu0
    %v9081 = vadd.f32 %v9032, %v9080
    %9082 = vmatmul.bf16.gmra.mxu0 %v6889
    %v9083 = vpop.f32.mrf.mxu0
    %v9084 = vadd.f32 %v9035, %v9083
    %v9085 = vpop.f32.mrf.mxu0
    %v9086 = vadd.f32 %v9037, %v9085
    %9087 = vmatmul.bf16.gmra.mxu0 %v6897
    %v9088 = vpop.f32.mrf.mxu0
    %v9089 = vadd.f32 %v9040, %v9088
    %v9090 = vpop.f32.mrf.mxu0
    %v9091 = vadd.f32 %v9042, %v9090
    %9092 = vmatmul.bf16.gmra.mxu0 %v6905
    %v9093 = vpop.f32.mrf.mxu0
    %v9094 = vadd.f32 %v9045, %v9093
    %v9095 = vpop.f32.mrf.mxu0
    %v9096 = vadd.f32 %v9047, %v9095
    %9097 = vmatmul.bf16.gmra.mxu0 %v6913
    %v9098 = vpop.f32.mrf.mxu0
    %v9099 = vadd.f32 %v9050, %v9098
    %v9100 = vpop.f32.mrf.mxu0
    %v9101 = vadd.f32 %v9052, %v9100
    %9102 = vmatmul.bf16.gmra.mxu0 %v6921
    %v9103 = vpop.f32.mrf.mxu0
    %v9104 = vadd.f32 %v9055, %v9103
    %v9105 = vpop.f32.mrf.mxu0
    %v9106 = vadd.f32 %v9057, %v9105
    %9107 = vdwg.mxu0
    %9108 = vmatpush.bf16.msra.mxu0 %v8148
    %9109 = vmatpush.bf16.msra.mxu0 %v8144
    %9110 = vmatpush.bf16.msra.mxu0 %v8140
    %9111 = vmatpush.bf16.msra.mxu0 %v8136
    %9112 = vmatpush.bf16.msra.mxu0 %v8132
    %9113 = vmatpush.bf16.msra.mxu0 %v8128
    %9114 = vmatpush.bf16.msra.mxu0 %v8124
    %9115 = vmatpush.bf16.msra.mxu0 %v8120
    %9116 = vmatmul.bf16.gmra.mxu0 %v6866
    %v9117 = vpop.f32.mrf.mxu0
    %v9118 = vadd.f32 %v9069, %v9117
    %v9119 = vpop.f32.mrf.mxu0
    %v9120 = vadd.f32 %v9071, %v9119
    %9121 = vmatmul.bf16.gmra.mxu0 %v6874
    %v9122 = vpop.f32.mrf.mxu0
    %v9123 = vadd.f32 %v9074, %v9122
    %v9124 = vpop.f32.mrf.mxu0
    %v9125 = vadd.f32 %v9076, %v9124
    %9126 = vmatmul.bf16.gmra.mxu0 %v6882
    %v9127 = vpop.f32.mrf.mxu0
    %v9128 = vadd.f32 %v9079, %v9127
    %v9129 = vpop.f32.mrf.mxu0
    %v9130 = vadd.f32 %v9081, %v9129
    %9131 = vmatmul.bf16.gmra.mxu0 %v6890
    %v9132 = vpop.f32.mrf.mxu0
    %v9133 = vadd.f32 %v9084, %v9132
    %v9134 = vpop.f32.mrf.mxu0
    %v9135 = vadd.f32 %v9086, %v9134
    %9136 = vmatmul.bf16.gmra.mxu0 %v6898
    %v9137 = vpop.f32.mrf.mxu0
    %v9138 = vadd.f32 %v9089, %v9137
    %v9139 = vpop.f32.mrf.mxu0
    %v9140 = vadd.f32 %v9091, %v9139
    %9141 = vmatmul.bf16.gmra.mxu0 %v6906
    %v9142 = vpop.f32.mrf.mxu0
    %v9143 = vadd.f32 %v9094, %v9142
    %v9144 = vpop.f32.mrf.mxu0
    %v9145 = vadd.f32 %v9096, %v9144
    %9146 = vmatmul.bf16.gmra.mxu0 %v6914
    %v9147 = vpop.f32.mrf.mxu0
    %v9148 = vadd.f32 %v9099, %v9147
    %v9149 = vpop.f32.mrf.mxu0
    %v9150 = vadd.f32 %v9101, %v9149
    %9151 = vmatmul.bf16.gmra.mxu0 %v6922
    %v9152 = vpop.f32.mrf.mxu0
    %v9153 = vadd.f32 %v9104, %v9152
    %v9154 = vpop.f32.mrf.mxu0
    %v9155 = vadd.f32 %v9106, %v9154
    %9156 = vdwg.mxu0
    %9157 = vmatpush.bf16.msra.mxu0 %v8180
    %9158 = vmatpush.bf16.msra.mxu0 %v8176
    %9159 = vmatpush.bf16.msra.mxu0 %v8172
    %9160 = vmatpush.bf16.msra.mxu0 %v8168
    %9161 = vmatpush.bf16.msra.mxu0 %v8164
    %9162 = vmatpush.bf16.msra.mxu0 %v8160
    %9163 = vmatpush.bf16.msra.mxu0 %v8156
    %9164 = vmatpush.bf16.msra.mxu0 %v8152
    %9165 = vmatmul.bf16.gmra.mxu0 %v6867
    %v9166 = vpop.f32.mrf.mxu0
    %v9167 = vadd.f32 %v9118, %v9166
    %v9168 = vpop.f32.mrf.mxu0
    %v9169 = vadd.f32 %v9120, %v9168
    %9170 = vmatmul.bf16.gmra.mxu0 %v6875
    %v9171 = vpop.f32.mrf.mxu0
    %v9172 = vadd.f32 %v9123, %v9171
    %v9173 = vpop.f32.mrf.mxu0
    %v9174 = vadd.f32 %v9125, %v9173
    %9175 = vmatmul.bf16.gmra.mxu0 %v6883
    %v9176 = vpop.f32.mrf.mxu0
    %v9177 = vadd.f32 %v9128, %v9176
    %v9178 = vpop.f32.mrf.mxu0
    %v9179 = vadd.f32 %v9130, %v9178
    %9180 = vmatmul.bf16.gmra.mxu0 %v6891
    %v9181 = vpop.f32.mrf.mxu0
    %v9182 = vadd.f32 %v9133, %v9181
    %v9183 = vpop.f32.mrf.mxu0
    %v9184 = vadd.f32 %v9135, %v9183
    %9185 = vmatmul.bf16.gmra.mxu0 %v6899
    %v9186 = vpop.f32.mrf.mxu0
    %v9187 = vadd.f32 %v9138, %v9186
    %v9188 = vpop.f32.mrf.mxu0
    %v9189 = vadd.f32 %v9140, %v9188
    %9190 = vmatmul.bf16.gmra.mxu0 %v6907
    %v9191 = vpop.f32.mrf.mxu0
    %v9192 = vadd.f32 %v9143, %v9191
    %v9193 = vpop.f32.mrf.mxu0
    %v9194 = vadd.f32 %v9145, %v9193
    %9195 = vmatmul.bf16.gmra.mxu0 %v6915
    %v9196 = vpop.f32.mrf.mxu0
    %v9197 = vadd.f32 %v9148, %v9196
    %v9198 = vpop.f32.mrf.mxu0
    %v9199 = vadd.f32 %v9150, %v9198
    %9200 = vmatmul.bf16.gmra.mxu0 %v6923
    %v9201 = vpop.f32.mrf.mxu0
    %v9202 = vadd.f32 %v9153, %v9201
    %v9203 = vpop.f32.mrf.mxu0
    %v9204 = vadd.f32 %v9155, %v9203
    %9205 = vdwg.mxu0
    %9206 = vmatpush.bf16.msra.mxu0 %v8212
    %9207 = vmatpush.bf16.msra.mxu0 %v8208
    %9208 = vmatpush.bf16.msra.mxu0 %v8204
    %9209 = vmatpush.bf16.msra.mxu0 %v8200
    %9210 = vmatpush.bf16.msra.mxu0 %v8196
    %9211 = vmatpush.bf16.msra.mxu0 %v8192
    %9212 = vmatpush.bf16.msra.mxu0 %v8188
    %9213 = vmatpush.bf16.msra.mxu0 %v8184
    %9214 = vmatmul.bf16.gmra.mxu0 %v6868
    %v9215 = vpop.f32.mrf.mxu0
    %v9216 = vadd.f32 %v9167, %v9215
    %v9217 = vpop.f32.mrf.mxu0
    %v9218 = vadd.f32 %v9169, %v9217
    %9219 = vmatmul.bf16.gmra.mxu0 %v6876
    %v9220 = vpop.f32.mrf.mxu0
    %v9221 = vadd.f32 %v9172, %v9220
    %v9222 = vpop.f32.mrf.mxu0
    %v9223 = vadd.f32 %v9174, %v9222
    %9224 = vmatmul.bf16.gmra.mxu0 %v6884
    %v9225 = vpop.f32.mrf.mxu0
    %v9226 = vadd.f32 %v9177, %v9225
    %v9227 = vpop.f32.mrf.mxu0
    %v9228 = vadd.f32 %v9179, %v9227
    %9229 = vmatmul.bf16.gmra.mxu0 %v6892
    %v9230 = vpop.f32.mrf.mxu0
    %v9231 = vadd.f32 %v9182, %v9230
    %v9232 = vpop.f32.mrf.mxu0
    %v9233 = vadd.f32 %v9184, %v9232
    %9234 = vmatmul.bf16.gmra.mxu0 %v6900
    %v9235 = vpop.f32.mrf.mxu0
    %v9236 = vadd.f32 %v9187, %v9235
    %v9237 = vpop.f32.mrf.mxu0
    %v9238 = vadd.f32 %v9189, %v9237
    %9239 = vmatmul.bf16.gmra.mxu0 %v6908
    %v9240 = vpop.f32.mrf.mxu0
    %v9241 = vadd.f32 %v9192, %v9240
    %v9242 = vpop.f32.mrf.mxu0
    %v9243 = vadd.f32 %v9194, %v9242
    %9244 = vmatmul.bf16.gmra.mxu0 %v6916
    %v9245 = vpop.f32.mrf.mxu0
    %v9246 = vadd.f32 %v9197, %v9245
    %v9247 = vpop.f32.mrf.mxu0
    %v9248 = vadd.f32 %v9199, %v9247
    %9249 = vmatmul.bf16.gmra.mxu0 %v6924
    %v9250 = vpop.f32.mrf.mxu0
    %v9251 = vadd.f32 %v9202, %v9250
    %v9252 = vpop.f32.mrf.mxu0
    %v9253 = vadd.f32 %v9204, %v9252
    %9254 = vdwg.mxu0
    %9255 = vmatpush.bf16.msra.mxu0 %v7989
    %9256 = vmatpush.bf16.msra.mxu0 %v7985
    %9257 = vmatpush.bf16.msra.mxu0 %v7981
    %9258 = vmatpush.bf16.msra.mxu0 %v7977
    %9259 = vmatpush.bf16.msra.mxu0 %v7973
    %9260 = vmatpush.bf16.msra.mxu0 %v7969
    %9261 = vmatpush.bf16.msra.mxu0 %v7965
    %9262 = vmatpush.bf16.msra.mxu0 %v7961
    %9263 = vmatmul.bf16.gmra.mxu0 %v6861
    %v9264 = vpop.f32.mrf.mxu0
    %v9265 = vadd.f32 %v7185, %v9264
    %v9266 = vpop.f32.mrf.mxu0
    %v9267 = vadd.f32 %v7185, %v9266
    %9268 = vmatmul.bf16.gmra.mxu0 %v6869
    %v9269 = vpop.f32.mrf.mxu0
    %v9270 = vadd.f32 %v7185, %v9269
    %v9271 = vpop.f32.mrf.mxu0
    %v9272 = vadd.f32 %v7185, %v9271
    %9273 = vmatmul.bf16.gmra.mxu0 %v6877
    %v9274 = vpop.f32.mrf.mxu0
    %v9275 = vadd.f32 %v7185, %v9274
    %v9276 = vpop.f32.mrf.mxu0
    %v9277 = vadd.f32 %v7185, %v9276
    %9278 = vmatmul.bf16.gmra.mxu0 %v6885
    %v9279 = vpop.f32.mrf.mxu0
    %v9280 = vadd.f32 %v7185, %v9279
    %v9281 = vpop.f32.mrf.mxu0
    %v9282 = vadd.f32 %v7185, %v9281
    %9283 = vmatmul.bf16.gmra.mxu0 %v6893
    %v9284 = vpop.f32.mrf.mxu0
    %v9285 = vadd.f32 %v7185, %v9284
    %v9286 = vpop.f32.mrf.mxu0
    %v9287 = vadd.f32 %v7185, %v9286
    %9288 = vmatmul.bf16.gmra.mxu0 %v6901
    %v9289 = vpop.f32.mrf.mxu0
    %v9290 = vadd.f32 %v7185, %v9289
    %v9291 = vpop.f32.mrf.mxu0
    %v9292 = vadd.f32 %v7185, %v9291
    %9293 = vmatmul.bf16.gmra.mxu0 %v6909
    %v9294 = vpop.f32.mrf.mxu0
    %v9295 = vadd.f32 %v7185, %v9294
    %v9296 = vpop.f32.mrf.mxu0
    %v9297 = vadd.f32 %v7185, %v9296
    %9298 = vmatmul.bf16.gmra.mxu0 %v6917
    %v9299 = vpop.f32.mrf.mxu0
    %v9300 = vadd.f32 %v7185, %v9299
    %v9301 = vpop.f32.mrf.mxu0
    %v9302 = vadd.f32 %v7185, %v9301
    %9303 = vdwg.mxu0
    %9304 = vmatpush.bf16.msra.mxu0 %v8021
    %9305 = vmatpush.bf16.msra.mxu0 %v8017
    %9306 = vmatpush.bf16.msra.mxu0 %v8013
    %9307 = vmatpush.bf16.msra.mxu0 %v8009
    %9308 = vmatpush.bf16.msra.mxu0 %v8005
    %9309 = vmatpush.bf16.msra.mxu0 %v8001
    %9310 = vmatpush.bf16.msra.mxu0 %v7997
    %9311 = vmatpush.bf16.msra.mxu0 %v7993
    %9312 = vmatmul.bf16.gmra.mxu0 %v6862
    %v9313 = vpop.f32.mrf.mxu0
    %v9314 = vadd.f32 %v9265, %v9313
    %v9315 = vpop.f32.mrf.mxu0
    %v9316 = vadd.f32 %v9267, %v9315
    %9317 = vmatmul.bf16.gmra.mxu0 %v6870
    %v9318 = vpop.f32.mrf.mxu0
    %v9319 = vadd.f32 %v9270, %v9318
    %v9320 = vpop.f32.mrf.mxu0
    %v9321 = vadd.f32 %v9272, %v9320
    %9322 = vmatmul.bf16.gmra.mxu0 %v6878
    %v9323 = vpop.f32.mrf.mxu0
    %v9324 = vadd.f32 %v9275, %v9323
    %v9325 = vpop.f32.mrf.mxu0
    %v9326 = vadd.f32 %v9277, %v9325
    %9327 = vmatmul.bf16.gmra.mxu0 %v6886
    %v9328 = vpop.f32.mrf.mxu0
    %v9329 = vadd.f32 %v9280, %v9328
    %v9330 = vpop.f32.mrf.mxu0
    %v9331 = vadd.f32 %v9282, %v9330
    %9332 = vmatmul.bf16.gmra.mxu0 %v6894
    %v9333 = vpop.f32.mrf.mxu0
    %v9334 = vadd.f32 %v9285, %v9333
    %v9335 = vpop.f32.mrf.mxu0
    %v9336 = vadd.f32 %v9287, %v9335
    %9337 = vmatmul.bf16.gmra.mxu0 %v6902
    %v9338 = vpop.f32.mrf.mxu0
    %v9339 = vadd.f32 %v9290, %v9338
    %v9340 = vpop.f32.mrf.mxu0
    %v9341 = vadd.f32 %v9292, %v9340
    %9342 = vmatmul.bf16.gmra.mxu0 %v6910
    %v9343 = vpop.f32.mrf.mxu0
    %v9344 = vadd.f32 %v9295, %v9343
    %v9345 = vpop.f32.mrf.mxu0
    %v9346 = vadd.f32 %v9297, %v9345
    %9347 = vmatmul.bf16.gmra.mxu0 %v6918
    %v9348 = vpop.f32.mrf.mxu0
    %v9349 = vadd.f32 %v9300, %v9348
    %v9350 = vpop.f32.mrf.mxu0
    %v9351 = vadd.f32 %v9302, %v9350
    %9352 = vdwg.mxu0
    %9353 = vmatpush.bf16.msra.mxu0 %v8053
    %9354 = vmatpush.bf16.msra.mxu0 %v8049
    %9355 = vmatpush.bf16.msra.mxu0 %v8045
    %9356 = vmatpush.bf16.msra.mxu0 %v8041
    %9357 = vmatpush.bf16.msra.mxu0 %v8037
    %9358 = vmatpush.bf16.msra.mxu0 %v8033
    %9359 = vmatpush.bf16.msra.mxu0 %v8029
    %9360 = vmatpush.bf16.msra.mxu0 %v8025
    %9361 = vmatmul.bf16.gmra.mxu0 %v6863
    %v9362 = vpop.f32.mrf.mxu0
    %v9363 = vadd.f32 %v9314, %v9362
    %v9364 = vpop.f32.mrf.mxu0
    %v9365 = vadd.f32 %v9316, %v9364
    %9366 = vmatmul.bf16.gmra.mxu0 %v6871
    %v9367 = vpop.f32.mrf.mxu0
    %v9368 = vadd.f32 %v9319, %v9367
    %v9369 = vpop.f32.mrf.mxu0
    %v9370 = vadd.f32 %v9321, %v9369
    %9371 = vmatmul.bf16.gmra.mxu0 %v6879
    %v9372 = vpop.f32.mrf.mxu0
    %v9373 = vadd.f32 %v9324, %v9372
    %v9374 = vpop.f32.mrf.mxu0
    %v9375 = vadd.f32 %v9326, %v9374
    %9376 = vmatmul.bf16.gmra.mxu0 %v6887
    %v9377 = vpop.f32.mrf.mxu0
    %v9378 = vadd.f32 %v9329, %v9377
    %v9379 = vpop.f32.mrf.mxu0
    %v9380 = vadd.f32 %v9331, %v9379
    %9381 = vmatmul.bf16.gmra.mxu0 %v6895
    %v9382 = vpop.f32.mrf.mxu0
    %v9383 = vadd.f32 %v9334, %v9382
    %v9384 = vpop.f32.mrf.mxu0
    %v9385 = vadd.f32 %v9336, %v9384
    %9386 = vmatmul.bf16.gmra.mxu0 %v6903
    %v9387 = vpop.f32.mrf.mxu0
    %v9388 = vadd.f32 %v9339, %v9387
    %v9389 = vpop.f32.mrf.mxu0
    %v9390 = vadd.f32 %v9341, %v9389
    %9391 = vmatmul.bf16.gmra.mxu0 %v6911
    %v9392 = vpop.f32.mrf.mxu0
    %v9393 = vadd.f32 %v9344, %v9392
    %v9394 = vpop.f32.mrf.mxu0
    %v9395 = vadd.f32 %v9346, %v9394
    %9396 = vmatmul.bf16.gmra.mxu0 %v6919
    %v9397 = vpop.f32.mrf.mxu0
    %v9398 = vadd.f32 %v9349, %v9397
    %v9399 = vpop.f32.mrf.mxu0
    %v9400 = vadd.f32 %v9351, %v9399
    %9401 = vdwg.mxu0
    %9402 = vmatpush.bf16.msra.mxu0 %v8085
    %9403 = vmatpush.bf16.msra.mxu0 %v8081
    %9404 = vmatpush.bf16.msra.mxu0 %v8077
    %9405 = vmatpush.bf16.msra.mxu0 %v8073
    %9406 = vmatpush.bf16.msra.mxu0 %v8069
    %9407 = vmatpush.bf16.msra.mxu0 %v8065
    %9408 = vmatpush.bf16.msra.mxu0 %v8061
    %9409 = vmatpush.bf16.msra.mxu0 %v8057
    %9410 = vmatmul.bf16.gmra.mxu0 %v6864
    %v9411 = vpop.f32.mrf.mxu0
    %v9412 = vadd.f32 %v9363, %v9411
    %v9413 = vpop.f32.mrf.mxu0
    %v9414 = vadd.f32 %v9365, %v9413
    %9415 = vmatmul.bf16.gmra.mxu0 %v6872
    %v9416 = vpop.f32.mrf.mxu0
    %v9417 = vadd.f32 %v9368, %v9416
    %v9418 = vpop.f32.mrf.mxu0
    %v9419 = vadd.f32 %v9370, %v9418
    %9420 = vmatmul.bf16.gmra.mxu0 %v6880
    %v9421 = vpop.f32.mrf.mxu0
    %v9422 = vadd.f32 %v9373, %v9421
    %v9423 = vpop.f32.mrf.mxu0
    %v9424 = vadd.f32 %v9375, %v9423
    %9425 = vmatmul.bf16.gmra.mxu0 %v6888
    %v9426 = vpop.f32.mrf.mxu0
    %v9427 = vadd.f32 %v9378, %v9426
    %v9428 = vpop.f32.mrf.mxu0
    %v9429 = vadd.f32 %v9380, %v9428
    %9430 = vmatmul.bf16.gmra.mxu0 %v6896
    %v9431 = vpop.f32.mrf.mxu0
    %v9432 = vadd.f32 %v9383, %v9431
    %v9433 = vpop.f32.mrf.mxu0
    %v9434 = vadd.f32 %v9385, %v9433
    %9435 = vmatmul.bf16.gmra.mxu0 %v6904
    %v9436 = vpop.f32.mrf.mxu0
    %v9437 = vadd.f32 %v9388, %v9436
    %v9438 = vpop.f32.mrf.mxu0
    %v9439 = vadd.f32 %v9390, %v9438
    %9440 = vmatmul.bf16.gmra.mxu0 %v6912
    %v9441 = vpop.f32.mrf.mxu0
    %v9442 = vadd.f32 %v9393, %v9441
    %v9443 = vpop.f32.mrf.mxu0
    %v9444 = vadd.f32 %v9395, %v9443
    %9445 = vmatmul.bf16.gmra.mxu0 %v6920
    %v9446 = vpop.f32.mrf.mxu0
    %v9447 = vadd.f32 %v9398, %v9446
    %v9448 = vpop.f32.mrf.mxu0
    %v9449 = vadd.f32 %v9400, %v9448
    %9450 = vdwg.mxu0
    %9451 = vmatpush.bf16.msra.mxu0 %v8117
    %9452 = vmatpush.bf16.msra.mxu0 %v8113
    %9453 = vmatpush.bf16.msra.mxu0 %v8109
    %9454 = vmatpush.bf16.msra.mxu0 %v8105
    %9455 = vmatpush.bf16.msra.mxu0 %v8101
    %9456 = vmatpush.bf16.msra.mxu0 %v8097
    %9457 = vmatpush.bf16.msra.mxu0 %v8093
    %9458 = vmatpush.bf16.msra.mxu0 %v8089
    %9459 = vmatmul.bf16.gmra.mxu0 %v6865
    %v9460 = vpop.f32.mrf.mxu0
    %v9461 = vadd.f32 %v9412, %v9460
    %v9462 = vpop.f32.mrf.mxu0
    %v9463 = vadd.f32 %v9414, %v9462
    %9464 = vmatmul.bf16.gmra.mxu0 %v6873
    %v9465 = vpop.f32.mrf.mxu0
    %v9466 = vadd.f32 %v9417, %v9465
    %v9467 = vpop.f32.mrf.mxu0
    %v9468 = vadd.f32 %v9419, %v9467
    %9469 = vmatmul.bf16.gmra.mxu0 %v6881
    %v9470 = vpop.f32.mrf.mxu0
    %v9471 = vadd.f32 %v9422, %v9470
    %v9472 = vpop.f32.mrf.mxu0
    %v9473 = vadd.f32 %v9424, %v9472
    %9474 = vmatmul.bf16.gmra.mxu0 %v6889
    %v9475 = vpop.f32.mrf.mxu0
    %v9476 = vadd.f32 %v9427, %v9475
    %v9477 = vpop.f32.mrf.mxu0
    %v9478 = vadd.f32 %v9429, %v9477
    %9479 = vmatmul.bf16.gmra.mxu0 %v6897
    %v9480 = vpop.f32.mrf.mxu0
    %v9481 = vadd.f32 %v9432, %v9480
    %v9482 = vpop.f32.mrf.mxu0
    %v9483 = vadd.f32 %v9434, %v9482
    %9484 = vmatmul.bf16.gmra.mxu0 %v6905
    %v9485 = vpop.f32.mrf.mxu0
    %v9486 = vadd.f32 %v9437, %v9485
    %v9487 = vpop.f32.mrf.mxu0
    %v9488 = vadd.f32 %v9439, %v9487
    %9489 = vmatmul.bf16.gmra.mxu0 %v6913
    %v9490 = vpop.f32.mrf.mxu0
    %v9491 = vadd.f32 %v9442, %v9490
    %v9492 = vpop.f32.mrf.mxu0
    %v9493 = vadd.f32 %v9444, %v9492
    %9494 = vmatmul.bf16.gmra.mxu0 %v6921
    %v9495 = vpop.f32.mrf.mxu0
    %v9496 = vadd.f32 %v9447, %v9495
    %v9497 = vpop.f32.mrf.mxu0
    %v9498 = vadd.f32 %v9449, %v9497
    %9499 = vdwg.mxu0
    %9500 = vmatpush.bf16.msra.mxu0 %v8149
    %9501 = vmatpush.bf16.msra.mxu0 %v8145
    %9502 = vmatpush.bf16.msra.mxu0 %v8141
    %9503 = vmatpush.bf16.msra.mxu0 %v8137
    %9504 = vmatpush.bf16.msra.mxu0 %v8133
    %9505 = vmatpush.bf16.msra.mxu0 %v8129
    %9506 = vmatpush.bf16.msra.mxu0 %v8125
    %9507 = vmatpush.bf16.msra.mxu0 %v8121
    %9508 = vmatmul.bf16.gmra.mxu0 %v6866
    %v9509 = vpop.f32.mrf.mxu0
    %v9510 = vadd.f32 %v9461, %v9509
    %v9511 = vpop.f32.mrf.mxu0
    %v9512 = vadd.f32 %v9463, %v9511
    %9513 = vmatmul.bf16.gmra.mxu0 %v6874
    %v9514 = vpop.f32.mrf.mxu0
    %v9515 = vadd.f32 %v9466, %v9514
    %v9516 = vpop.f32.mrf.mxu0
    %v9517 = vadd.f32 %v9468, %v9516
    %9518 = vmatmul.bf16.gmra.mxu0 %v6882
    %v9519 = vpop.f32.mrf.mxu0
    %v9520 = vadd.f32 %v9471, %v9519
    %v9521 = vpop.f32.mrf.mxu0
    %v9522 = vadd.f32 %v9473, %v9521
    %9523 = vmatmul.bf16.gmra.mxu0 %v6890
    %v9524 = vpop.f32.mrf.mxu0
    %v9525 = vadd.f32 %v9476, %v9524
    %v9526 = vpop.f32.mrf.mxu0
    %v9527 = vadd.f32 %v9478, %v9526
    %9528 = vmatmul.bf16.gmra.mxu0 %v6898
    %v9529 = vpop.f32.mrf.mxu0
    %v9530 = vadd.f32 %v9481, %v9529
    %v9531 = vpop.f32.mrf.mxu0
    %v9532 = vadd.f32 %v9483, %v9531
    %9533 = vmatmul.bf16.gmra.mxu0 %v6906
    %v9534 = vpop.f32.mrf.mxu0
    %v9535 = vadd.f32 %v9486, %v9534
    %v9536 = vpop.f32.mrf.mxu0
    %v9537 = vadd.f32 %v9488, %v9536
    %9538 = vmatmul.bf16.gmra.mxu0 %v6914
    %v9539 = vpop.f32.mrf.mxu0
    %v9540 = vadd.f32 %v9491, %v9539
    %v9541 = vpop.f32.mrf.mxu0
    %v9542 = vadd.f32 %v9493, %v9541
    %9543 = vmatmul.bf16.gmra.mxu0 %v6922
    %v9544 = vpop.f32.mrf.mxu0
    %v9545 = vadd.f32 %v9496, %v9544
    %v9546 = vpop.f32.mrf.mxu0
    %v9547 = vadd.f32 %v9498, %v9546
    %9548 = vdwg.mxu0
    %9549 = vmatpush.bf16.msra.mxu0 %v8181
    %9550 = vmatpush.bf16.msra.mxu0 %v8177
    %9551 = vmatpush.bf16.msra.mxu0 %v8173
    %9552 = vmatpush.bf16.msra.mxu0 %v8169
    %9553 = vmatpush.bf16.msra.mxu0 %v8165
    %9554 = vmatpush.bf16.msra.mxu0 %v8161
    %9555 = vmatpush.bf16.msra.mxu0 %v8157
    %9556 = vmatpush.bf16.msra.mxu0 %v8153
    %9557 = vmatmul.bf16.gmra.mxu0 %v6867
    %v9558 = vpop.f32.mrf.mxu0
    %v9559 = vadd.f32 %v9510, %v9558
    %v9560 = vpop.f32.mrf.mxu0
    %v9561 = vadd.f32 %v9512, %v9560
    %9562 = vmatmul.bf16.gmra.mxu0 %v6875
    %v9563 = vpop.f32.mrf.mxu0
    %v9564 = vadd.f32 %v9515, %v9563
    %v9565 = vpop.f32.mrf.mxu0
    %v9566 = vadd.f32 %v9517, %v9565
    %9567 = vmatmul.bf16.gmra.mxu0 %v6883
    %v9568 = vpop.f32.mrf.mxu0
    %v9569 = vadd.f32 %v9520, %v9568
    %v9570 = vpop.f32.mrf.mxu0
    %v9571 = vadd.f32 %v9522, %v9570
    %9572 = vmatmul.bf16.gmra.mxu0 %v6891
    %v9573 = vpop.f32.mrf.mxu0
    %v9574 = vadd.f32 %v9525, %v9573
    %v9575 = vpop.f32.mrf.mxu0
    %v9576 = vadd.f32 %v9527, %v9575
    %9577 = vmatmul.bf16.gmra.mxu0 %v6899
    %v9578 = vpop.f32.mrf.mxu0
    %v9579 = vadd.f32 %v9530, %v9578
    %v9580 = vpop.f32.mrf.mxu0
    %v9581 = vadd.f32 %v9532, %v9580
    %9582 = vmatmul.bf16.gmra.mxu0 %v6907
    %v9583 = vpop.f32.mrf.mxu0
    %v9584 = vadd.f32 %v9535, %v9583
    %v9585 = vpop.f32.mrf.mxu0
    %v9586 = vadd.f32 %v9537, %v9585
    %9587 = vmatmul.bf16.gmra.mxu0 %v6915
    %v9588 = vpop.f32.mrf.mxu0
    %v9589 = vadd.f32 %v9540, %v9588
    %v9590 = vpop.f32.mrf.mxu0
    %v9591 = vadd.f32 %v9542, %v9590
    %9592 = vmatmul.bf16.gmra.mxu0 %v6923
    %v9593 = vpop.f32.mrf.mxu0
    %v9594 = vadd.f32 %v9545, %v9593
    %v9595 = vpop.f32.mrf.mxu0
    %v9596 = vadd.f32 %v9547, %v9595
    %9597 = vdwg.mxu0
    %9598 = vmatpush.bf16.msra.mxu0 %v8213
    %9599 = vmatpush.bf16.msra.mxu0 %v8209
    %9600 = vmatpush.bf16.msra.mxu0 %v8205
    %9601 = vmatpush.bf16.msra.mxu0 %v8201
    %9602 = vmatpush.bf16.msra.mxu0 %v8197
    %9603 = vmatpush.bf16.msra.mxu0 %v8193
    %9604 = vmatpush.bf16.msra.mxu0 %v8189
    %9605 = vmatpush.bf16.msra.mxu0 %v8185
    %9606 = vmatmul.bf16.gmra.mxu0 %v6868
    %v9607 = vpop.f32.mrf.mxu0
    %v9608 = vadd.f32 %v9559, %v9607
    %v9609 = vpop.f32.mrf.mxu0
    %v9610 = vadd.f32 %v9561, %v9609
    %9611 = vmatmul.bf16.gmra.mxu0 %v6876
    %v9612 = vpop.f32.mrf.mxu0
    %v9613 = vadd.f32 %v9564, %v9612
    %v9614 = vpop.f32.mrf.mxu0
    %v9615 = vadd.f32 %v9566, %v9614
    %9616 = vmatmul.bf16.gmra.mxu0 %v6884
    %v9617 = vpop.f32.mrf.mxu0
    %v9618 = vadd.f32 %v9569, %v9617
    %v9619 = vpop.f32.mrf.mxu0
    %v9620 = vadd.f32 %v9571, %v9619
    %9621 = vmatmul.bf16.gmra.mxu0 %v6892
    %v9622 = vpop.f32.mrf.mxu0
    %v9623 = vadd.f32 %v9574, %v9622
    %v9624 = vpop.f32.mrf.mxu0
    %v9625 = vadd.f32 %v9576, %v9624
    %9626 = vmatmul.bf16.gmra.mxu0 %v6900
    %v9627 = vpop.f32.mrf.mxu0
    %v9628 = vadd.f32 %v9579, %v9627
    %v9629 = vpop.f32.mrf.mxu0
    %v9630 = vadd.f32 %v9581, %v9629
    %9631 = vmatmul.bf16.gmra.mxu0 %v6908
    %v9632 = vpop.f32.mrf.mxu0
    %v9633 = vadd.f32 %v9584, %v9632
    %v9634 = vpop.f32.mrf.mxu0
    %v9635 = vadd.f32 %v9586, %v9634
    %9636 = vmatmul.bf16.gmra.mxu0 %v6916
    %v9637 = vpop.f32.mrf.mxu0
    %v9638 = vadd.f32 %v9589, %v9637
    %v9639 = vpop.f32.mrf.mxu0
    %v9640 = vadd.f32 %v9591, %v9639
    %9641 = vmatmul.bf16.gmra.mxu0 %v6924
    %v9642 = vpop.f32.mrf.mxu0
    %v9643 = vadd.f32 %v9594, %v9642
    %v9644 = vpop.f32.mrf.mxu0
    %v9645 = vadd.f32 %v9596, %v9644
    %9646 = vdwg.mxu0
    %9647 = vmatpush.bf16.msra.mxu0 %v7990
    %9648 = vmatpush.bf16.msra.mxu0 %v7986
    %9649 = vmatpush.bf16.msra.mxu0 %v7982
    %9650 = vmatpush.bf16.msra.mxu0 %v7978
    %9651 = vmatpush.bf16.msra.mxu0 %v7974
    %9652 = vmatpush.bf16.msra.mxu0 %v7970
    %9653 = vmatpush.bf16.msra.mxu0 %v7966
    %9654 = vmatpush.bf16.msra.mxu0 %v7962
    %9655 = vmatmul.bf16.gmra.mxu0 %v6861
    %v9656 = vpop.f32.mrf.mxu0
    %v9657 = vadd.f32 %v7186, %v9656
    %v9658 = vpop.f32.mrf.mxu0
    %v9659 = vadd.f32 %v7186, %v9658
    %9660 = vmatmul.bf16.gmra.mxu0 %v6869
    %v9661 = vpop.f32.mrf.mxu0
    %v9662 = vadd.f32 %v7186, %v9661
    %v9663 = vpop.f32.mrf.mxu0
    %v9664 = vadd.f32 %v7186, %v9663
    %9665 = vmatmul.bf16.gmra.mxu0 %v6877
    %v9666 = vpop.f32.mrf.mxu0
    %v9667 = vadd.f32 %v7186, %v9666
    %v9668 = vpop.f32.mrf.mxu0
    %v9669 = vadd.f32 %v7186, %v9668
    %9670 = vmatmul.bf16.gmra.mxu0 %v6885
    %v9671 = vpop.f32.mrf.mxu0
    %v9672 = vadd.f32 %v7186, %v9671
    %v9673 = vpop.f32.mrf.mxu0
    %v9674 = vadd.f32 %v7186, %v9673
    %9675 = vmatmul.bf16.gmra.mxu0 %v6893
    %v9676 = vpop.f32.mrf.mxu0
    %v9677 = vadd.f32 %v7186, %v9676
    %v9678 = vpop.f32.mrf.mxu0
    %v9679 = vadd.f32 %v7186, %v9678
    %9680 = vmatmul.bf16.gmra.mxu0 %v6901
    %v9681 = vpop.f32.mrf.mxu0
    %v9682 = vadd.f32 %v7186, %v9681
    %v9683 = vpop.f32.mrf.mxu0
    %v9684 = vadd.f32 %v7186, %v9683
    %9685 = vmatmul.bf16.gmra.mxu0 %v6909
    %v9686 = vpop.f32.mrf.mxu0
    %v9687 = vadd.f32 %v7186, %v9686
    %v9688 = vpop.f32.mrf.mxu0
    %v9689 = vadd.f32 %v7186, %v9688
    %9690 = vmatmul.bf16.gmra.mxu0 %v6917
    %v9691 = vpop.f32.mrf.mxu0
    %v9692 = vadd.f32 %v7186, %v9691
    %v9693 = vpop.f32.mrf.mxu0
    %v9694 = vadd.f32 %v7186, %v9693
    %9695 = vdwg.mxu0
    %9696 = vmatpush.bf16.msra.mxu0 %v8022
    %9697 = vmatpush.bf16.msra.mxu0 %v8018
    %9698 = vmatpush.bf16.msra.mxu0 %v8014
    %9699 = vmatpush.bf16.msra.mxu0 %v8010
    %9700 = vmatpush.bf16.msra.mxu0 %v8006
    %9701 = vmatpush.bf16.msra.mxu0 %v8002
    %9702 = vmatpush.bf16.msra.mxu0 %v7998
    %9703 = vmatpush.bf16.msra.mxu0 %v7994
    %9704 = vmatmul.bf16.gmra.mxu0 %v6862
    %v9705 = vpop.f32.mrf.mxu0
    %v9706 = vadd.f32 %v9657, %v9705
    %v9707 = vpop.f32.mrf.mxu0
    %v9708 = vadd.f32 %v9659, %v9707
    %9709 = vmatmul.bf16.gmra.mxu0 %v6870
    %v9710 = vpop.f32.mrf.mxu0
    %v9711 = vadd.f32 %v9662, %v9710
    %v9712 = vpop.f32.mrf.mxu0
    %v9713 = vadd.f32 %v9664, %v9712
    %9714 = vmatmul.bf16.gmra.mxu0 %v6878
    %v9715 = vpop.f32.mrf.mxu0
    %v9716 = vadd.f32 %v9667, %v9715
    %v9717 = vpop.f32.mrf.mxu0
    %v9718 = vadd.f32 %v9669, %v9717
    %9719 = vmatmul.bf16.gmra.mxu0 %v6886
    %v9720 = vpop.f32.mrf.mxu0
    %v9721 = vadd.f32 %v9672, %v9720
    %v9722 = vpop.f32.mrf.mxu0
    %v9723 = vadd.f32 %v9674, %v9722
    %9724 = vmatmul.bf16.gmra.mxu0 %v6894
    %v9725 = vpop.f32.mrf.mxu0
    %v9726 = vadd.f32 %v9677, %v9725
    %v9727 = vpop.f32.mrf.mxu0
    %v9728 = vadd.f32 %v9679, %v9727
    %9729 = vmatmul.bf16.gmra.mxu0 %v6902
    %v9730 = vpop.f32.mrf.mxu0
    %v9731 = vadd.f32 %v9682, %v9730
    %v9732 = vpop.f32.mrf.mxu0
    %v9733 = vadd.f32 %v9684, %v9732
    %9734 = vmatmul.bf16.gmra.mxu0 %v6910
    %v9735 = vpop.f32.mrf.mxu0
    %v9736 = vadd.f32 %v9687, %v9735
    %v9737 = vpop.f32.mrf.mxu0
    %v9738 = vadd.f32 %v9689, %v9737
    %9739 = vmatmul.bf16.gmra.mxu0 %v6918
    %v9740 = vpop.f32.mrf.mxu0
    %v9741 = vadd.f32 %v9692, %v9740
    %v9742 = vpop.f32.mrf.mxu0
    %v9743 = vadd.f32 %v9694, %v9742
    %9744 = vdwg.mxu0
    %9745 = vmatpush.bf16.msra.mxu0 %v8054
    %9746 = vmatpush.bf16.msra.mxu0 %v8050
    %9747 = vmatpush.bf16.msra.mxu0 %v8046
    %9748 = vmatpush.bf16.msra.mxu0 %v8042
    %9749 = vmatpush.bf16.msra.mxu0 %v8038
    %9750 = vmatpush.bf16.msra.mxu0 %v8034
    %9751 = vmatpush.bf16.msra.mxu0 %v8030
    %9752 = vmatpush.bf16.msra.mxu0 %v8026
    %9753 = vmatmul.bf16.gmra.mxu0 %v6863
    %v9754 = vpop.f32.mrf.mxu0
    %v9755 = vadd.f32 %v9706, %v9754
    %v9756 = vpop.f32.mrf.mxu0
    %v9757 = vadd.f32 %v9708, %v9756
    %9758 = vmatmul.bf16.gmra.mxu0 %v6871
    %v9759 = vpop.f32.mrf.mxu0
    %v9760 = vadd.f32 %v9711, %v9759
    %v9761 = vpop.f32.mrf.mxu0
    %v9762 = vadd.f32 %v9713, %v9761
    %9763 = vmatmul.bf16.gmra.mxu0 %v6879
    %v9764 = vpop.f32.mrf.mxu0
    %v9765 = vadd.f32 %v9716, %v9764
    %v9766 = vpop.f32.mrf.mxu0
    %v9767 = vadd.f32 %v9718, %v9766
    %9768 = vmatmul.bf16.gmra.mxu0 %v6887
    %v9769 = vpop.f32.mrf.mxu0
    %v9770 = vadd.f32 %v9721, %v9769
    %v9771 = vpop.f32.mrf.mxu0
    %v9772 = vadd.f32 %v9723, %v9771
    %9773 = vmatmul.bf16.gmra.mxu0 %v6895
    %v9774 = vpop.f32.mrf.mxu0
    %v9775 = vadd.f32 %v9726, %v9774
    %v9776 = vpop.f32.mrf.mxu0
    %v9777 = vadd.f32 %v9728, %v9776
    %9778 = vmatmul.bf16.gmra.mxu0 %v6903
    %v9779 = vpop.f32.mrf.mxu0
    %v9780 = vadd.f32 %v9731, %v9779
    %v9781 = vpop.f32.mrf.mxu0
    %v9782 = vadd.f32 %v9733, %v9781
    %9783 = vmatmul.bf16.gmra.mxu0 %v6911
    %v9784 = vpop.f32.mrf.mxu0
    %v9785 = vadd.f32 %v9736, %v9784
    %v9786 = vpop.f32.mrf.mxu0
    %v9787 = vadd.f32 %v9738, %v9786
    %9788 = vmatmul.bf16.gmra.mxu0 %v6919
    %v9789 = vpop.f32.mrf.mxu0
    %v9790 = vadd.f32 %v9741, %v9789
    %v9791 = vpop.f32.mrf.mxu0
    %v9792 = vadd.f32 %v9743, %v9791
    %9793 = vdwg.mxu0
    %9794 = vmatpush.bf16.msra.mxu0 %v8086
    %9795 = vmatpush.bf16.msra.mxu0 %v8082
    %9796 = vmatpush.bf16.msra.mxu0 %v8078
    %9797 = vmatpush.bf16.msra.mxu0 %v8074
    %9798 = vmatpush.bf16.msra.mxu0 %v8070
    %9799 = vmatpush.bf16.msra.mxu0 %v8066
    %9800 = vmatpush.bf16.msra.mxu0 %v8062
    %9801 = vmatpush.bf16.msra.mxu0 %v8058
    %9802 = vmatmul.bf16.gmra.mxu0 %v6864
    %v9803 = vpop.f32.mrf.mxu0
    %v9804 = vadd.f32 %v9755, %v9803
    %v9805 = vpop.f32.mrf.mxu0
    %v9806 = vadd.f32 %v9757, %v9805
    %9807 = vmatmul.bf16.gmra.mxu0 %v6872
    %v9808 = vpop.f32.mrf.mxu0
    %v9809 = vadd.f32 %v9760, %v9808
    %v9810 = vpop.f32.mrf.mxu0
    %v9811 = vadd.f32 %v9762, %v9810
    %9812 = vmatmul.bf16.gmra.mxu0 %v6880
    %v9813 = vpop.f32.mrf.mxu0
    %v9814 = vadd.f32 %v9765, %v9813
    %v9815 = vpop.f32.mrf.mxu0
    %v9816 = vadd.f32 %v9767, %v9815
    %9817 = vmatmul.bf16.gmra.mxu0 %v6888
    %v9818 = vpop.f32.mrf.mxu0
    %v9819 = vadd.f32 %v9770, %v9818
    %v9820 = vpop.f32.mrf.mxu0
    %v9821 = vadd.f32 %v9772, %v9820
    %9822 = vmatmul.bf16.gmra.mxu0 %v6896
    %v9823 = vpop.f32.mrf.mxu0
    %v9824 = vadd.f32 %v9775, %v9823
    %v9825 = vpop.f32.mrf.mxu0
    %v9826 = vadd.f32 %v9777, %v9825
    %9827 = vmatmul.bf16.gmra.mxu0 %v6904
    %v9828 = vpop.f32.mrf.mxu0
    %v9829 = vadd.f32 %v9780, %v9828
    %v9830 = vpop.f32.mrf.mxu0
    %v9831 = vadd.f32 %v9782, %v9830
    %9832 = vmatmul.bf16.gmra.mxu0 %v6912
    %v9833 = vpop.f32.mrf.mxu0
    %v9834 = vadd.f32 %v9785, %v9833
    %v9835 = vpop.f32.mrf.mxu0
    %v9836 = vadd.f32 %v9787, %v9835
    %9837 = vmatmul.bf16.gmra.mxu0 %v6920
    %v9838 = vpop.f32.mrf.mxu0
    %v9839 = vadd.f32 %v9790, %v9838
    %v9840 = vpop.f32.mrf.mxu0
    %v9841 = vadd.f32 %v9792, %v9840
    %9842 = vdwg.mxu0
    %9843 = vmatpush.bf16.msra.mxu0 %v8118
    %9844 = vmatpush.bf16.msra.mxu0 %v8114
    %9845 = vmatpush.bf16.msra.mxu0 %v8110
    %9846 = vmatpush.bf16.msra.mxu0 %v8106
    %9847 = vmatpush.bf16.msra.mxu0 %v8102
    %9848 = vmatpush.bf16.msra.mxu0 %v8098
    %9849 = vmatpush.bf16.msra.mxu0 %v8094
    %9850 = vmatpush.bf16.msra.mxu0 %v8090
    %9851 = vmatmul.bf16.gmra.mxu0 %v6865
    %v9852 = vpop.f32.mrf.mxu0
    %v9853 = vadd.f32 %v9804, %v9852
    %v9854 = vpop.f32.mrf.mxu0
    %v9855 = vadd.f32 %v9806, %v9854
    %9856 = vmatmul.bf16.gmra.mxu0 %v6873
    %v9857 = vpop.f32.mrf.mxu0
    %v9858 = vadd.f32 %v9809, %v9857
    %v9859 = vpop.f32.mrf.mxu0
    %v9860 = vadd.f32 %v9811, %v9859
    %9861 = vmatmul.bf16.gmra.mxu0 %v6881
    %v9862 = vpop.f32.mrf.mxu0
    %v9863 = vadd.f32 %v9814, %v9862
    %v9864 = vpop.f32.mrf.mxu0
    %v9865 = vadd.f32 %v9816, %v9864
    %9866 = vmatmul.bf16.gmra.mxu0 %v6889
    %v9867 = vpop.f32.mrf.mxu0
    %v9868 = vadd.f32 %v9819, %v9867
    %v9869 = vpop.f32.mrf.mxu0
    %v9870 = vadd.f32 %v9821, %v9869
    %9871 = vmatmul.bf16.gmra.mxu0 %v6897
    %v9872 = vpop.f32.mrf.mxu0
    %v9873 = vadd.f32 %v9824, %v9872
    %v9874 = vpop.f32.mrf.mxu0
    %v9875 = vadd.f32 %v9826, %v9874
    %9876 = vmatmul.bf16.gmra.mxu0 %v6905
    %v9877 = vpop.f32.mrf.mxu0
    %v9878 = vadd.f32 %v9829, %v9877
    %v9879 = vpop.f32.mrf.mxu0
    %v9880 = vadd.f32 %v9831, %v9879
    %9881 = vmatmul.bf16.gmra.mxu0 %v6913
    %v9882 = vpop.f32.mrf.mxu0
    %v9883 = vadd.f32 %v9834, %v9882
    %v9884 = vpop.f32.mrf.mxu0
    %v9885 = vadd.f32 %v9836, %v9884
    %9886 = vmatmul.bf16.gmra.mxu0 %v6921
    %v9887 = vpop.f32.mrf.mxu0
    %v9888 = vadd.f32 %v9839, %v9887
    %v9889 = vpop.f32.mrf.mxu0
    %v9890 = vadd.f32 %v9841, %v9889
    %9891 = vdwg.mxu0
    %9892 = vmatpush.bf16.msra.mxu0 %v8150
    %9893 = vmatpush.bf16.msra.mxu0 %v8146
    %9894 = vmatpush.bf16.msra.mxu0 %v8142
    %9895 = vmatpush.bf16.msra.mxu0 %v8138
    %9896 = vmatpush.bf16.msra.mxu0 %v8134
    %9897 = vmatpush.bf16.msra.mxu0 %v8130
    %9898 = vmatpush.bf16.msra.mxu0 %v8126
    %9899 = vmatpush.bf16.msra.mxu0 %v8122
    %9900 = vmatmul.bf16.gmra.mxu0 %v6866
    %v9901 = vpop.f32.mrf.mxu0
    %v9902 = vadd.f32 %v9853, %v9901
    %v9903 = vpop.f32.mrf.mxu0
    %v9904 = vadd.f32 %v9855, %v9903
    %9905 = vmatmul.bf16.gmra.mxu0 %v6874
    %v9906 = vpop.f32.mrf.mxu0
    %v9907 = vadd.f32 %v9858, %v9906
    %v9908 = vpop.f32.mrf.mxu0
    %v9909 = vadd.f32 %v9860, %v9908
    %9910 = vmatmul.bf16.gmra.mxu0 %v6882
    %v9911 = vpop.f32.mrf.mxu0
    %v9912 = vadd.f32 %v9863, %v9911
    %v9913 = vpop.f32.mrf.mxu0
    %v9914 = vadd.f32 %v9865, %v9913
    %9915 = vmatmul.bf16.gmra.mxu0 %v6890
    %v9916 = vpop.f32.mrf.mxu0
    %v9917 = vadd.f32 %v9868, %v9916
    %v9918 = vpop.f32.mrf.mxu0
    %v9919 = vadd.f32 %v9870, %v9918
    %9920 = vmatmul.bf16.gmra.mxu0 %v6898
    %v9921 = vpop.f32.mrf.mxu0
    %v9922 = vadd.f32 %v9873, %v9921
    %v9923 = vpop.f32.mrf.mxu0
    %v9924 = vadd.f32 %v9875, %v9923
    %9925 = vmatmul.bf16.gmra.mxu0 %v6906
    %v9926 = vpop.f32.mrf.mxu0
    %v9927 = vadd.f32 %v9878, %v9926
    %v9928 = vpop.f32.mrf.mxu0
    %v9929 = vadd.f32 %v9880, %v9928
    %9930 = vmatmul.bf16.gmra.mxu0 %v6914
    %v9931 = vpop.f32.mrf.mxu0
    %v9932 = vadd.f32 %v9883, %v9931
    %v9933 = vpop.f32.mrf.mxu0
    %v9934 = vadd.f32 %v9885, %v9933
    %9935 = vmatmul.bf16.gmra.mxu0 %v6922
    %v9936 = vpop.f32.mrf.mxu0
    %v9937 = vadd.f32 %v9888, %v9936
    %v9938 = vpop.f32.mrf.mxu0
    %v9939 = vadd.f32 %v9890, %v9938
    %9940 = vdwg.mxu0
    %9941 = vmatpush.bf16.msra.mxu0 %v8182
    %9942 = vmatpush.bf16.msra.mxu0 %v8178
    %9943 = vmatpush.bf16.msra.mxu0 %v8174
    %9944 = vmatpush.bf16.msra.mxu0 %v8170
    %9945 = vmatpush.bf16.msra.mxu0 %v8166
    %9946 = vmatpush.bf16.msra.mxu0 %v8162
    %9947 = vmatpush.bf16.msra.mxu0 %v8158
    %9948 = vmatpush.bf16.msra.mxu0 %v8154
    %9949 = vmatmul.bf16.gmra.mxu0 %v6867
    %v9950 = vpop.f32.mrf.mxu0
    %v9951 = vadd.f32 %v9902, %v9950
    %v9952 = vpop.f32.mrf.mxu0
    %v9953 = vadd.f32 %v9904, %v9952
    %9954 = vmatmul.bf16.gmra.mxu0 %v6875
    %v9955 = vpop.f32.mrf.mxu0
    %v9956 = vadd.f32 %v9907, %v9955
    %v9957 = vpop.f32.mrf.mxu0
    %v9958 = vadd.f32 %v9909, %v9957
    %9959 = vmatmul.bf16.gmra.mxu0 %v6883
    %v9960 = vpop.f32.mrf.mxu0
    %v9961 = vadd.f32 %v9912, %v9960
    %v9962 = vpop.f32.mrf.mxu0
    %v9963 = vadd.f32 %v9914, %v9962
    %9964 = vmatmul.bf16.gmra.mxu0 %v6891
    %v9965 = vpop.f32.mrf.mxu0
    %v9966 = vadd.f32 %v9917, %v9965
    %v9967 = vpop.f32.mrf.mxu0
    %v9968 = vadd.f32 %v9919, %v9967
    %9969 = vmatmul.bf16.gmra.mxu0 %v6899
    %v9970 = vpop.f32.mrf.mxu0
    %v9971 = vadd.f32 %v9922, %v9970
    %v9972 = vpop.f32.mrf.mxu0
    %v9973 = vadd.f32 %v9924, %v9972
    %9974 = vmatmul.bf16.gmra.mxu0 %v6907
    %v9975 = vpop.f32.mrf.mxu0
    %v9976 = vadd.f32 %v9927, %v9975
    %v9977 = vpop.f32.mrf.mxu0
    %v9978 = vadd.f32 %v9929, %v9977
    %9979 = vmatmul.bf16.gmra.mxu0 %v6915
    %v9980 = vpop.f32.mrf.mxu0
    %v9981 = vadd.f32 %v9932, %v9980
    %v9982 = vpop.f32.mrf.mxu0
    %v9983 = vadd.f32 %v9934, %v9982
    %9984 = vmatmul.bf16.gmra.mxu0 %v6923
    %v9985 = vpop.f32.mrf.mxu0
    %v9986 = vadd.f32 %v9937, %v9985
    %v9987 = vpop.f32.mrf.mxu0
    %v9988 = vadd.f32 %v9939, %v9987
    %9989 = vdwg.mxu0
    %9990 = vmatpush.bf16.msra.mxu0 %v8214
    %9991 = vmatpush.bf16.msra.mxu0 %v8210
    %9992 = vmatpush.bf16.msra.mxu0 %v8206
    %9993 = vmatpush.bf16.msra.mxu0 %v8202
    %9994 = vmatpush.bf16.msra.mxu0 %v8198
    %9995 = vmatpush.bf16.msra.mxu0 %v8194
    %9996 = vmatpush.bf16.msra.mxu0 %v8190
    %9997 = vmatpush.bf16.msra.mxu0 %v8186
    %9998 = vmatmul.bf16.gmra.mxu0 %v6868
    %v9999 = vpop.f32.mrf.mxu0
    %v10000 = vadd.f32 %v9951, %v9999
    %v10001 = vpop.f32.mrf.mxu0
    %v10002 = vadd.f32 %v9953, %v10001
    %10003 = vmatmul.bf16.gmra.mxu0 %v6876
    %v10004 = vpop.f32.mrf.mxu0
    %v10005 = vadd.f32 %v9956, %v10004
    %v10006 = vpop.f32.mrf.mxu0
    %v10007 = vadd.f32 %v9958, %v10006
    %10008 = vmatmul.bf16.gmra.mxu0 %v6884
    %v10009 = vpop.f32.mrf.mxu0
    %v10010 = vadd.f32 %v9961, %v10009
    %v10011 = vpop.f32.mrf.mxu0
    %v10012 = vadd.f32 %v9963, %v10011
    %10013 = vmatmul.bf16.gmra.mxu0 %v6892
    %v10014 = vpop.f32.mrf.mxu0
    %v10015 = vadd.f32 %v9966, %v10014
    %v10016 = vpop.f32.mrf.mxu0
    %v10017 = vadd.f32 %v9968, %v10016
    %10018 = vmatmul.bf16.gmra.mxu0 %v6900
    %v10019 = vpop.f32.mrf.mxu0
    %v10020 = vadd.f32 %v9971, %v10019
    %v10021 = vpop.f32.mrf.mxu0
    %v10022 = vadd.f32 %v9973, %v10021
    %10023 = vmatmul.bf16.gmra.mxu0 %v6908
    %v10024 = vpop.f32.mrf.mxu0
    %v10025 = vadd.f32 %v9976, %v10024
    %v10026 = vpop.f32.mrf.mxu0
    %v10027 = vadd.f32 %v9978, %v10026
    %10028 = vmatmul.bf16.gmra.mxu0 %v6916
    %v10029 = vpop.f32.mrf.mxu0
    %v10030 = vadd.f32 %v9981, %v10029
    %v10031 = vpop.f32.mrf.mxu0
    %v10032 = vadd.f32 %v9983, %v10031
    %10033 = vmatmul.bf16.gmra.mxu0 %v6924
    %v10034 = vpop.f32.mrf.mxu0
    %v10035 = vadd.f32 %v9986, %v10034
    %v10036 = vpop.f32.mrf.mxu0
    %v10037 = vadd.f32 %v9988, %v10036
    %10038 = vdwg.mxu0
    %v10039 = vmul.f32 %v8824, 0.2
    %v10040 = vmul.f32 %v9216, 0.2
    %v10041 = vmul.f32 %v9608, 0.2
    %v10042 = vmul.f32 %v10000, 0.2
    %v10043 = vmul.f32 %v8826, 0.2
    %v10044 = vmul.f32 %v9218, 0.2
    %v10045 = vmul.f32 %v9610, 0.2
    %v10046 = vmul.f32 %v10002, 0.2
    %v10047 = vmul.f32 %v8829, 0.2
    %v10048 = vmul.f32 %v9221, 0.2
    %v10049 = vmul.f32 %v9613, 0.2
    %v10050 = vmul.f32 %v10005, 0.2
    %v10051 = vmul.f32 %v8831, 0.2
    %v10052 = vmul.f32 %v9223, 0.2
    %v10053 = vmul.f32 %v9615, 0.2
    %v10054 = vmul.f32 %v10007, 0.2
    %v10055 = vmul.f32 %v8834, 0.2
    %v10056 = vmul.f32 %v9226, 0.2
    %v10057 = vmul.f32 %v9618, 0.2
    %v10058 = vmul.f32 %v10010, 0.2
    %v10059 = vmul.f32 %v8836, 0.2
    %v10060 = vmul.f32 %v9228, 0.2
    %v10061 = vmul.f32 %v9620, 0.2
    %v10062 = vmul.f32 %v10012, 0.2
    %v10063 = vmul.f32 %v8839, 0.2
    %v10064 = vmul.f32 %v9231, 0.2
    %v10065 = vmul.f32 %v9623, 0.2
    %v10066 = vmul.f32 %v10015, 0.2
    %v10067 = vmul.f32 %v8841, 0.2
    %v10068 = vmul.f32 %v9233, 0.2
    %v10069 = vmul.f32 %v9625, 0.2
    %v10070 = vmul.f32 %v10017, 0.2
    %v10071 = vmul.f32 %v8844, 0.2
    %v10072 = vmul.f32 %v9236, 0.2
    %v10073 = vmul.f32 %v9628, 0.2
    %v10074 = vmul.f32 %v10020, 0.2
    %v10075 = vmul.f32 %v8846, 0.2
    %v10076 = vmul.f32 %v9238, 0.2
    %v10077 = vmul.f32 %v9630, 0.2
    %v10078 = vmul.f32 %v10022, 0.2
    %v10079 = vmul.f32 %v8849, 0.2
    %v10080 = vmul.f32 %v9241, 0.2
    %v10081 = vmul.f32 %v9633, 0.2
    %v10082 = vmul.f32 %v10025, 0.2
    %v10083 = vmul.f32 %v8851, 0.2
    %v10084 = vmul.f32 %v9243, 0.2
    %v10085 = vmul.f32 %v9635, 0.2
    %v10086 = vmul.f32 %v10027, 0.2
    %v10087 = vmul.f32 %v8854, 0.2
    %v10088 = vmul.f32 %v9246, 0.2
    %v10089 = vmul.f32 %v9638, 0.2
    %v10090 = vmul.f32 %v10030, 0.2
    %v10091 = vmul.f32 %v8856, 0.2
    %v10092 = vmul.f32 %v9248, 0.2
    %v10093 = vmul.f32 %v9640, 0.2
    %v10094 = vmul.f32 %v10032, 0.2
    %v10095 = vmul.f32 %v8859, 0.2
    %v10096 = vmul.f32 %v9251, 0.2
    %v10097 = vmul.f32 %v9643, 0.2
    %v10098 = vmul.f32 %v10035, 0.2
    %v10099 = vmul.f32 %v8861, 0.2
    %v10100 = vmul.f32 %v9253, 0.2
    %v10101 = vmul.f32 %v9645, 0.2
    %v10102 = vmul.f32 %v10037, 0.2
    %v10103 = vmax.f32 %v8824, %v10039
    %v10104 = vmax.f32 %v9216, %v10040
    %v10105 = vmax.f32 %v9608, %v10041
    %v10106 = vmax.f32 %v10000, %v10042
    %v10107 = vmax.f32 %v8826, %v10043
    %v10108 = vmax.f32 %v9218, %v10044
    %v10109 = vmax.f32 %v9610, %v10045
    %v10110 = vmax.f32 %v10002, %v10046
    %v10111 = vmax.f32 %v8829, %v10047
    %v10112 = vmax.f32 %v9221, %v10048
    %v10113 = vmax.f32 %v9613, %v10049
    %v10114 = vmax.f32 %v10005, %v10050
    %v10115 = vmax.f32 %v8831, %v10051
    %v10116 = vmax.f32 %v9223, %v10052
    %v10117 = vmax.f32 %v9615, %v10053
    %v10118 = vmax.f32 %v10007, %v10054
    %v10119 = vmax.f32 %v8834, %v10055
    %v10120 = vmax.f32 %v9226, %v10056
    %v10121 = vmax.f32 %v9618, %v10057
    %v10122 = vmax.f32 %v10010, %v10058
    %v10123 = vmax.f32 %v8836, %v10059
    %v10124 = vmax.f32 %v9228, %v10060
    %v10125 = vmax.f32 %v9620, %v10061
    %v10126 = vmax.f32 %v10012, %v10062
    %v10127 = vmax.f32 %v8839, %v10063
    %v10128 = vmax.f32 %v9231, %v10064
    %v10129 = vmax.f32 %v9623, %v10065
    %v10130 = vmax.f32 %v10015, %v10066
    %v10131 = vmax.f32 %v8841, %v10067
    %v10132 = vmax.f32 %v9233, %v10068
    %v10133 = vmax.f32 %v9625, %v10069
    %v10134 = vmax.f32 %v10017, %v10070
    %v10135 = vmax.f32 %v8844, %v10071
    %v10136 = vmax.f32 %v9236, %v10072
    %v10137 = vmax.f32 %v9628, %v10073
    %v10138 = vmax.f32 %v10020, %v10074
    %v10139 = vmax.f32 %v8846, %v10075
    %v10140 = vmax.f32 %v9238, %v10076
    %v10141 = vmax.f32 %v9630, %v10077
    %v10142 = vmax.f32 %v10022, %v10078
    %v10143 = vmax.f32 %v8849, %v10079
    %v10144 = vmax.f32 %v9241, %v10080
    %v10145 = vmax.f32 %v9633, %v10081
    %v10146 = vmax.f32 %v10025, %v10082
    %v10147 = vmax.f32 %v8851, %v10083
    %v10148 = vmax.f32 %v9243, %v10084
    %v10149 = vmax.f32 %v9635, %v10085
    %v10150 = vmax.f32 %v10027, %v10086
    %v10151 = vmax.f32 %v8854, %v10087
    %v10152 = vmax.f32 %v9246, %v10088
    %v10153 = vmax.f32 %v9638, %v10089
    %v10154 = vmax.f32 %v10030, %v10090
    %v10155 = vmax.f32 %v8856, %v10091
    %v10156 = vmax.f32 %v9248, %v10092
    %v10157 = vmax.f32 %v9640, %v10093
    %v10158 = vmax.f32 %v10032, %v10094
    %v10159 = vmax.f32 %v8859, %v10095
    %v10160 = vmax.f32 %v9251, %v10096
    %v10161 = vmax.f32 %v9643, %v10097
    %v10162 = vmax.f32 %v10035, %v10098
    %v10163 = vmax.f32 %v8861, %v10099
    %v10164 = vmax.f32 %v9253, %v10100
    %v10165 = vmax.f32 %v9645, %v10101
    %v10166 = vmax.f32 %v10037, %v10102
    %v10167 = vpack.c.bf16 %v10107, %v10103
    %v10168 = vpack.c.bf16 %v10108, %v10104
    %v10169 = vpack.c.bf16 %v10109, %v10105
    %v10170 = vpack.c.bf16 %v10110, %v10106
    %v10171 = vpack.c.bf16 %v10115, %v10111
    %v10172 = vpack.c.bf16 %v10116, %v10112
    %v10173 = vpack.c.bf16 %v10117, %v10113
    %v10174 = vpack.c.bf16 %v10118, %v10114
    %v10175 = vpack.c.bf16 %v10123, %v10119
    %v10176 = vpack.c.bf16 %v10124, %v10120
    %v10177 = vpack.c.bf16 %v10125, %v10121
    %v10178 = vpack.c.bf16 %v10126, %v10122
    %v10179 = vpack.c.bf16 %v10131, %v10127
    %v10180 = vpack.c.bf16 %v10132, %v10128
    %v10181 = vpack.c.bf16 %v10133, %v10129
    %v10182 = vpack.c.bf16 %v10134, %v10130
    %v10183 = vpack.c.bf16 %v10139, %v10135
    %v10184 = vpack.c.bf16 %v10140, %v10136
    %v10185 = vpack.c.bf16 %v10141, %v10137
    %v10186 = vpack.c.bf16 %v10142, %v10138
    %v10187 = vpack.c.bf16 %v10147, %v10143
    %v10188 = vpack.c.bf16 %v10148, %v10144
    %v10189 = vpack.c.bf16 %v10149, %v10145
    %v10190 = vpack.c.bf16 %v10150, %v10146
    %v10191 = vpack.c.bf16 %v10155, %v10151
    %v10192 = vpack.c.bf16 %v10156, %v10152
    %v10193 = vpack.c.bf16 %v10157, %v10153
    %v10194 = vpack.c.bf16 %v10158, %v10154
    %v10195 = vpack.c.bf16 %v10163, %v10159
    %v10196 = vpack.c.bf16 %v10164, %v10160
    %v10197 = vpack.c.bf16 %v10165, %v10161
    %v10198 = vpack.c.bf16 %v10166, %v10162
    %v10199 = vld [vmem:[#allocation12] sm:$0xff]
    %v10200 = vld [vmem:[#allocation12 + $0x8] sm:$0xff]
    %v10201 = vld [vmem:[#allocation12 + $0x10] sm:$0xff]
    %v10202 = vld [vmem:[#allocation12 + $0x18] sm:$0xff]
    %v10203 = vld [vmem:[#allocation12 + $0x20] sm:$0xff]
    %v10204 = vld [vmem:[#allocation12 + $0x28] sm:$0xff]
    %v10205 = vld [vmem:[#allocation12 + $0x30] sm:$0xff]
    %v10206 = vld [vmem:[#allocation12 + $0x38] sm:$0xff]
    %v10207 = vld [vmem:[#allocation12 + $0x40] sm:$0xff]
    %v10208 = vld [vmem:[#allocation12 + $0x48] sm:$0xff]
    %v10209 = vld [vmem:[#allocation12 + $0x50] sm:$0xff]
    %v10210 = vld [vmem:[#allocation12 + $0x58] sm:$0xff]
    %v10211 = vld [vmem:[#allocation12 + $0x60] sm:$0xff]
    %v10212 = vld [vmem:[#allocation12 + $0x68] sm:$0xff]
    %v10213 = vld [vmem:[#allocation12 + $0x70] sm:$0xff]
    %v10214 = vld [vmem:[#allocation12 + $0x78] sm:$0xff]
    %v10215 = vld [vmem:[#allocation12 + $0x80] sm:$0xff]
    %v10216 = vld [vmem:[#allocation12 + $0x88] sm:$0xff]
    %v10217 = vld [vmem:[#allocation12 + $0x90] sm:$0xff]
    %v10218 = vld [vmem:[#allocation12 + $0x98] sm:$0xff]
    %v10219 = vld [vmem:[#allocation12 + $0xa0] sm:$0xff]
    %v10220 = vld [vmem:[#allocation12 + $0xa8] sm:$0xff]
    %v10221 = vld [vmem:[#allocation12 + $0xb0] sm:$0xff]
    %v10222 = vld [vmem:[#allocation12 + $0xb8] sm:$0xff]
    %v10223 = vld [vmem:[#allocation12 + $0xc0] sm:$0xff]
    %v10224 = vld [vmem:[#allocation12 + $0xc8] sm:$0xff]
    %v10225 = vld [vmem:[#allocation12 + $0xd0] sm:$0xff]
    %v10226 = vld [vmem:[#allocation12 + $0xd8] sm:$0xff]
    %v10227 = vld [vmem:[#allocation12 + $0xe0] sm:$0xff]
    %v10228 = vld [vmem:[#allocation12 + $0xe8] sm:$0xff]
    %v10229 = vld [vmem:[#allocation12 + $0xf0] sm:$0xff]
    %v10230 = vld [vmem:[#allocation12 + $0xf8] sm:$0xff]
    %v10231 = vld [vmem:[#allocation12 + $0x100] sm:$0xff]
    %v10232 = vld [vmem:[#allocation12 + $0x108] sm:$0xff]
    %v10233 = vld [vmem:[#allocation12 + $0x110] sm:$0xff]
    %v10234 = vld [vmem:[#allocation12 + $0x118] sm:$0xff]
    %v10235 = vld [vmem:[#allocation12 + $0x120] sm:$0xff]
    %v10236 = vld [vmem:[#allocation12 + $0x128] sm:$0xff]
    %v10237 = vld [vmem:[#allocation12 + $0x130] sm:$0xff]
    %v10238 = vld [vmem:[#allocation12 + $0x138] sm:$0xff]
    %v10239 = vld [vmem:[#allocation12 + $0x140] sm:$0xff]
    %v10240 = vld [vmem:[#allocation12 + $0x148] sm:$0xff]
    %v10241 = vld [vmem:[#allocation12 + $0x150] sm:$0xff]
    %v10242 = vld [vmem:[#allocation12 + $0x158] sm:$0xff]
    %v10243 = vld [vmem:[#allocation12 + $0x160] sm:$0xff]
    %v10244 = vld [vmem:[#allocation12 + $0x168] sm:$0xff]
    %v10245 = vld [vmem:[#allocation12 + $0x170] sm:$0xff]
    %v10246 = vld [vmem:[#allocation12 + $0x178] sm:$0xff]
    %v10247 = vld [vmem:[#allocation12 + $0x180] sm:$0xff]
    %v10248 = vld [vmem:[#allocation12 + $0x188] sm:$0xff]
    %v10249 = vld [vmem:[#allocation12 + $0x190] sm:$0xff]
    %v10250 = vld [vmem:[#allocation12 + $0x198] sm:$0xff]
    %v10251 = vld [vmem:[#allocation12 + $0x1a0] sm:$0xff]
    %v10252 = vld [vmem:[#allocation12 + $0x1a8] sm:$0xff]
    %v10253 = vld [vmem:[#allocation12 + $0x1b0] sm:$0xff]
    %v10254 = vld [vmem:[#allocation12 + $0x1b8] sm:$0xff]
    %v10255 = vld [vmem:[#allocation12 + $0x1c0] sm:$0xff]
    %v10256 = vld [vmem:[#allocation12 + $0x1c8] sm:$0xff]
    %v10257 = vld [vmem:[#allocation12 + $0x1d0] sm:$0xff]
    %v10258 = vld [vmem:[#allocation12 + $0x1d8] sm:$0xff]
    %v10259 = vld [vmem:[#allocation12 + $0x1e0] sm:$0xff]
    %v10260 = vld [vmem:[#allocation12 + $0x1e8] sm:$0xff]
    %v10261 = vld [vmem:[#allocation12 + $0x1f0] sm:$0xff]
    %v10262 = vld [vmem:[#allocation12 + $0x1f8] sm:$0xff]
    %v10263 = vld [vmem:[#allocation14] sm:$0x3]
    %v10265 = vperm.slane %v10263, 0
    %v10266 = vperm.slane %v10263, 1
    %v10333 = vunpack.c.l.b16 %v10199
    %v10334 = vunpack.c.h.b16 %v10199
    %v10335 = vunpack.c.l.b16 %v10200
    %v10336 = vunpack.c.h.b16 %v10200
    %v10337 = vunpack.c.l.b16 %v10201
    %v10338 = vunpack.c.h.b16 %v10201
    %v10339 = vunpack.c.l.b16 %v10202
    %v10340 = vunpack.c.h.b16 %v10202
    %v10341 = vunpack.c.l.b16 %v10203
    %v10342 = vunpack.c.h.b16 %v10203
    %v10343 = vunpack.c.l.b16 %v10204
    %v10344 = vunpack.c.h.b16 %v10204
    %v10345 = vunpack.c.l.b16 %v10205
    %v10346 = vunpack.c.h.b16 %v10205
    %v10347 = vunpack.c.l.b16 %v10206
    %v10348 = vunpack.c.h.b16 %v10206
    %v10349 = vunpack.c.l.b16 %v10207
    %v10350 = vunpack.c.h.b16 %v10207
    %v10351 = vunpack.c.l.b16 %v10208
    %v10352 = vunpack.c.h.b16 %v10208
    %v10353 = vunpack.c.l.b16 %v10209
    %v10354 = vunpack.c.h.b16 %v10209
    %v10355 = vunpack.c.l.b16 %v10210
    %v10356 = vunpack.c.h.b16 %v10210
    %v10357 = vunpack.c.l.b16 %v10211
    %v10358 = vunpack.c.h.b16 %v10211
    %v10359 = vunpack.c.l.b16 %v10212
    %v10360 = vunpack.c.h.b16 %v10212
    %v10361 = vunpack.c.l.b16 %v10213
    %v10362 = vunpack.c.h.b16 %v10213
    %v10363 = vunpack.c.l.b16 %v10214
    %v10364 = vunpack.c.h.b16 %v10214
    %v10365 = vunpack.c.l.b16 %v10215
    %v10366 = vunpack.c.h.b16 %v10215
    %v10367 = vunpack.c.l.b16 %v10216
    %v10368 = vunpack.c.h.b16 %v10216
    %v10369 = vunpack.c.l.b16 %v10217
    %v10370 = vunpack.c.h.b16 %v10217
    %v10371 = vunpack.c.l.b16 %v10218
    %v10372 = vunpack.c.h.b16 %v10218
    %v10373 = vunpack.c.l.b16 %v10219
    %v10374 = vunpack.c.h.b16 %v10219
    %v10375 = vunpack.c.l.b16 %v10220
    %v10376 = vunpack.c.h.b16 %v10220
    %v10377 = vunpack.c.l.b16 %v10221
    %v10378 = vunpack.c.h.b16 %v10221
    %v10379 = vunpack.c.l.b16 %v10222
    %v10380 = vunpack.c.h.b16 %v10222
    %v10381 = vunpack.c.l.b16 %v10223
    %v10382 = vunpack.c.h.b16 %v10223
    %v10383 = vunpack.c.l.b16 %v10224
    %v10384 = vunpack.c.h.b16 %v10224
    %v10385 = vunpack.c.l.b16 %v10225
    %v10386 = vunpack.c.h.b16 %v10225
    %v10387 = vunpack.c.l.b16 %v10226
    %v10388 = vunpack.c.h.b16 %v10226
    %v10389 = vunpack.c.l.b16 %v10227
    %v10390 = vunpack.c.h.b16 %v10227
    %v10391 = vunpack.c.l.b16 %v10228
    %v10392 = vunpack.c.h.b16 %v10228
    %v10393 = vunpack.c.l.b16 %v10229
    %v10394 = vunpack.c.h.b16 %v10229
    %v10395 = vunpack.c.l.b16 %v10230
    %v10396 = vunpack.c.h.b16 %v10230
    %v10397 = vunpack.c.l.b16 %v10231
    %v10398 = vunpack.c.h.b16 %v10231
    %v10399 = vunpack.c.l.b16 %v10232
    %v10400 = vunpack.c.h.b16 %v10232
    %v10401 = vunpack.c.l.b16 %v10233
    %v10402 = vunpack.c.h.b16 %v10233
    %v10403 = vunpack.c.l.b16 %v10234
    %v10404 = vunpack.c.h.b16 %v10234
    %v10405 = vunpack.c.l.b16 %v10235
    %v10406 = vunpack.c.h.b16 %v10235
    %v10407 = vunpack.c.l.b16 %v10236
    %v10408 = vunpack.c.h.b16 %v10236
    %v10409 = vunpack.c.l.b16 %v10237
    %v10410 = vunpack.c.h.b16 %v10237
    %v10411 = vunpack.c.l.b16 %v10238
    %v10412 = vunpack.c.h.b16 %v10238
    %v10413 = vunpack.c.l.b16 %v10239
    %v10414 = vunpack.c.h.b16 %v10239
    %v10415 = vunpack.c.l.b16 %v10240
    %v10416 = vunpack.c.h.b16 %v10240
    %v10417 = vunpack.c.l.b16 %v10241
    %v10418 = vunpack.c.h.b16 %v10241
    %v10419 = vunpack.c.l.b16 %v10242
    %v10420 = vunpack.c.h.b16 %v10242
    %v10421 = vunpack.c.l.b16 %v10243
    %v10422 = vunpack.c.h.b16 %v10243
    %v10423 = vunpack.c.l.b16 %v10244
    %v10424 = vunpack.c.h.b16 %v10244
    %v10425 = vunpack.c.l.b16 %v10245
    %v10426 = vunpack.c.h.b16 %v10245
    %v10427 = vunpack.c.l.b16 %v10246
    %v10428 = vunpack.c.h.b16 %v10246
    %v10429 = vunpack.c.l.b16 %v10247
    %v10430 = vunpack.c.h.b16 %v10247
    %v10431 = vunpack.c.l.b16 %v10248
    %v10432 = vunpack.c.h.b16 %v10248
    %v10433 = vunpack.c.l.b16 %v10249
    %v10434 = vunpack.c.h.b16 %v10249
    %v10435 = vunpack.c.l.b16 %v10250
    %v10436 = vunpack.c.h.b16 %v10250
    %v10437 = vunpack.c.l.b16 %v10251
    %v10438 = vunpack.c.h.b16 %v10251
    %v10439 = vunpack.c.l.b16 %v10252
    %v10440 = vunpack.c.h.b16 %v10252
    %v10441 = vunpack.c.l.b16 %v10253
    %v10442 = vunpack.c.h.b16 %v10253
    %v10443 = vunpack.c.l.b16 %v10254
    %v10444 = vunpack.c.h.b16 %v10254
    %v10445 = vunpack.c.l.b16 %v10255
    %v10446 = vunpack.c.h.b16 %v10255
    %v10447 = vunpack.c.l.b16 %v10256
    %v10448 = vunpack.c.h.b16 %v10256
    %v10449 = vunpack.c.l.b16 %v10257
    %v10450 = vunpack.c.h.b16 %v10257
    %v10451 = vunpack.c.l.b16 %v10258
    %v10452 = vunpack.c.h.b16 %v10258
    %v10453 = vunpack.c.l.b16 %v10259
    %v10454 = vunpack.c.h.b16 %v10259
    %v10455 = vunpack.c.l.b16 %v10260
    %v10456 = vunpack.c.h.b16 %v10260
    %v10457 = vunpack.c.l.b16 %v10261
    %v10458 = vunpack.c.h.b16 %v10261
    %v10459 = vunpack.c.l.b16 %v10262
    %v10460 = vunpack.c.h.b16 %v10262
    %v10461 = vpack.c.b16 %v10335, %v10333
    %v10462 = vpack.c.b16 %v10336, %v10334
    %v10463 = vpack.c.b16 %v10339, %v10337
    %v10464 = vpack.c.b16 %v10340, %v10338
    %v10465 = vpack.c.b16 %v10343, %v10341
    %v10466 = vpack.c.b16 %v10344, %v10342
    %v10467 = vpack.c.b16 %v10347, %v10345
    %v10468 = vpack.c.b16 %v10348, %v10346
    %v10469 = vpack.c.b16 %v10351, %v10349
    %v10470 = vpack.c.b16 %v10352, %v10350
    %v10471 = vpack.c.b16 %v10355, %v10353
    %v10472 = vpack.c.b16 %v10356, %v10354
    %v10473 = vpack.c.b16 %v10359, %v10357
    %v10474 = vpack.c.b16 %v10360, %v10358
    %v10475 = vpack.c.b16 %v10363, %v10361
    %v10476 = vpack.c.b16 %v10364, %v10362
    %v10477 = vpack.c.b16 %v10367, %v10365
    %v10478 = vpack.c.b16 %v10368, %v10366
    %v10479 = vpack.c.b16 %v10371, %v10369
    %v10480 = vpack.c.b16 %v10372, %v10370
    %v10481 = vpack.c.b16 %v10375, %v10373
    %v10482 = vpack.c.b16 %v10376, %v10374
    %v10483 = vpack.c.b16 %v10379, %v10377
    %v10484 = vpack.c.b16 %v10380, %v10378
    %v10485 = vpack.c.b16 %v10383, %v10381
    %v10486 = vpack.c.b16 %v10384, %v10382
    %v10487 = vpack.c.b16 %v10387, %v10385
    %v10488 = vpack.c.b16 %v10388, %v10386
    %v10489 = vpack.c.b16 %v10391, %v10389
    %v10490 = vpack.c.b16 %v10392, %v10390
    %v10491 = vpack.c.b16 %v10395, %v10393
    %v10492 = vpack.c.b16 %v10396, %v10394
    %v10493 = vpack.c.b16 %v10399, %v10397
    %v10494 = vpack.c.b16 %v10400, %v10398
    %v10495 = vpack.c.b16 %v10403, %v10401
    %v10496 = vpack.c.b16 %v10404, %v10402
    %v10497 = vpack.c.b16 %v10407, %v10405
    %v10498 = vpack.c.b16 %v10408, %v10406
    %v10499 = vpack.c.b16 %v10411, %v10409
    %v10500 = vpack.c.b16 %v10412, %v10410
    %v10501 = vpack.c.b16 %v10415, %v10413
    %v10502 = vpack.c.b16 %v10416, %v10414
    %v10503 = vpack.c.b16 %v10419, %v10417
    %v10504 = vpack.c.b16 %v10420, %v10418
    %v10505 = vpack.c.b16 %v10423, %v10421
    %v10506 = vpack.c.b16 %v10424, %v10422
    %v10507 = vpack.c.b16 %v10427, %v10425
    %v10508 = vpack.c.b16 %v10428, %v10426
    %v10509 = vpack.c.b16 %v10431, %v10429
    %v10510 = vpack.c.b16 %v10432, %v10430
    %v10511 = vpack.c.b16 %v10435, %v10433
    %v10512 = vpack.c.b16 %v10436, %v10434
    %v10513 = vpack.c.b16 %v10439, %v10437
    %v10514 = vpack.c.b16 %v10440, %v10438
    %v10515 = vpack.c.b16 %v10443, %v10441
    %v10516 = vpack.c.b16 %v10444, %v10442
    %v10517 = vpack.c.b16 %v10447, %v10445
    %v10518 = vpack.c.b16 %v10448, %v10446
    %v10519 = vpack.c.b16 %v10451, %v10449
    %v10520 = vpack.c.b16 %v10452, %v10450
    %v10521 = vpack.c.b16 %v10455, %v10453
    %v10522 = vpack.c.b16 %v10456, %v10454
    %v10523 = vpack.c.b16 %v10459, %v10457
    %v10524 = vpack.c.b16 %v10460, %v10458
    %10589 = vmatpush.bf16.msra.mxu0 %v10475
    %10590 = vmatpush.bf16.msra.mxu0 %v10473
    %10591 = vmatpush.bf16.msra.mxu0 %v10471
    %10592 = vmatpush.bf16.msra.mxu0 %v10469
    %10593 = vmatpush.bf16.msra.mxu0 %v10467
    %10594 = vmatpush.bf16.msra.mxu0 %v10465
    %10595 = vmatpush.bf16.msra.mxu0 %v10463
    %10596 = vmatpush.bf16.msra.mxu0 %v10461
    %10597 = vmatmul.bf16.gmra.mxu0 %v10167
    %v10598 = vpop.f32.mrf.mxu0
    %v10599 = vadd.f32 %v10265, %v10598
    %v10600 = vpop.f32.mrf.mxu0
    %v10601 = vadd.f32 %v10265, %v10600
    %10602 = vmatmul.bf16.gmra.mxu0 %v10171
    %v10603 = vpop.f32.mrf.mxu0
    %v10604 = vadd.f32 %v10265, %v10603
    %v10605 = vpop.f32.mrf.mxu0
    %v10606 = vadd.f32 %v10265, %v10605
    %10607 = vmatmul.bf16.gmra.mxu0 %v10175
    %v10608 = vpop.f32.mrf.mxu0
    %v10609 = vadd.f32 %v10265, %v10608
    %v10610 = vpop.f32.mrf.mxu0
    %v10611 = vadd.f32 %v10265, %v10610
    %10612 = vmatmul.bf16.gmra.mxu0 %v10179
    %v10613 = vpop.f32.mrf.mxu0
    %v10614 = vadd.f32 %v10265, %v10613
    %v10615 = vpop.f32.mrf.mxu0
    %v10616 = vadd.f32 %v10265, %v10615
    %10617 = vmatmul.bf16.gmra.mxu0 %v10183
    %v10618 = vpop.f32.mrf.mxu0
    %v10619 = vadd.f32 %v10265, %v10618
    %v10620 = vpop.f32.mrf.mxu0
    %v10621 = vadd.f32 %v10265, %v10620
    %10622 = vmatmul.bf16.gmra.mxu0 %v10187
    %v10623 = vpop.f32.mrf.mxu0
    %v10624 = vadd.f32 %v10265, %v10623
    %v10625 = vpop.f32.mrf.mxu0
    %v10626 = vadd.f32 %v10265, %v10625
    %10627 = vmatmul.bf16.gmra.mxu0 %v10191
    %v10628 = vpop.f32.mrf.mxu0
    %v10629 = vadd.f32 %v10265, %v10628
    %v10630 = vpop.f32.mrf.mxu0
    %v10631 = vadd.f32 %v10265, %v10630
    %10632 = vmatmul.bf16.gmra.mxu0 %v10195
    %v10633 = vpop.f32.mrf.mxu0
    %v10634 = vadd.f32 %v10265, %v10633
    %v10635 = vpop.f32.mrf.mxu0
    %v10636 = vadd.f32 %v10265, %v10635
    %10637 = vdwg.mxu0
    %10638 = vmatpush.bf16.msra.mxu0 %v10491
    %10639 = vmatpush.bf16.msra.mxu0 %v10489
    %10640 = vmatpush.bf16.msra.mxu0 %v10487
    %10641 = vmatpush.bf16.msra.mxu0 %v10485
    %10642 = vmatpush.bf16.msra.mxu0 %v10483
    %10643 = vmatpush.bf16.msra.mxu0 %v10481
    %10644 = vmatpush.bf16.msra.mxu0 %v10479
    %10645 = vmatpush.bf16.msra.mxu0 %v10477
    %10646 = vmatmul.bf16.gmra.mxu0 %v10168
    %v10647 = vpop.f32.mrf.mxu0
    %v10648 = vadd.f32 %v10599, %v10647
    %v10649 = vpop.f32.mrf.mxu0
    %v10650 = vadd.f32 %v10601, %v10649
    %10651 = vmatmul.bf16.gmra.mxu0 %v10172
    %v10652 = vpop.f32.mrf.mxu0
    %v10653 = vadd.f32 %v10604, %v10652
    %v10654 = vpop.f32.mrf.mxu0
    %v10655 = vadd.f32 %v10606, %v10654
    %10656 = vmatmul.bf16.gmra.mxu0 %v10176
    %v10657 = vpop.f32.mrf.mxu0
    %v10658 = vadd.f32 %v10609, %v10657
    %v10659 = vpop.f32.mrf.mxu0
    %v10660 = vadd.f32 %v10611, %v10659
    %10661 = vmatmul.bf16.gmra.mxu0 %v10180
    %v10662 = vpop.f32.mrf.mxu0
    %v10663 = vadd.f32 %v10614, %v10662
    %v10664 = vpop.f32.mrf.mxu0
    %v10665 = vadd.f32 %v10616, %v10664
    %10666 = vmatmul.bf16.gmra.mxu0 %v10184
    %v10667 = vpop.f32.mrf.mxu0
    %v10668 = vadd.f32 %v10619, %v10667
    %v10669 = vpop.f32.mrf.mxu0
    %v10670 = vadd.f32 %v10621, %v10669
    %10671 = vmatmul.bf16.gmra.mxu0 %v10188
    %v10672 = vpop.f32.mrf.mxu0
    %v10673 = vadd.f32 %v10624, %v10672
    %v10674 = vpop.f32.mrf.mxu0
    %v10675 = vadd.f32 %v10626, %v10674
    %10676 = vmatmul.bf16.gmra.mxu0 %v10192
    %v10677 = vpop.f32.mrf.mxu0
    %v10678 = vadd.f32 %v10629, %v10677
    %v10679 = vpop.f32.mrf.mxu0
    %v10680 = vadd.f32 %v10631, %v10679
    %10681 = vmatmul.bf16.gmra.mxu0 %v10196
    %v10682 = vpop.f32.mrf.mxu0
    %v10683 = vadd.f32 %v10634, %v10682
    %v10684 = vpop.f32.mrf.mxu0
    %v10685 = vadd.f32 %v10636, %v10684
    %10686 = vdwg.mxu0
    %10687 = vmatpush.bf16.msra.mxu0 %v10507
    %10688 = vmatpush.bf16.msra.mxu0 %v10505
    %10689 = vmatpush.bf16.msra.mxu0 %v10503
    %10690 = vmatpush.bf16.msra.mxu0 %v10501
    %10691 = vmatpush.bf16.msra.mxu0 %v10499
    %10692 = vmatpush.bf16.msra.mxu0 %v10497
    %10693 = vmatpush.bf16.msra.mxu0 %v10495
    %10694 = vmatpush.bf16.msra.mxu0 %v10493
    %10695 = vmatmul.bf16.gmra.mxu0 %v10169
    %v10696 = vpop.f32.mrf.mxu0
    %v10697 = vadd.f32 %v10648, %v10696
    %v10698 = vpop.f32.mrf.mxu0
    %v10699 = vadd.f32 %v10650, %v10698
    %10700 = vmatmul.bf16.gmra.mxu0 %v10173
    %v10701 = vpop.f32.mrf.mxu0
    %v10702 = vadd.f32 %v10653, %v10701
    %v10703 = vpop.f32.mrf.mxu0
    %v10704 = vadd.f32 %v10655, %v10703
    %10705 = vmatmul.bf16.gmra.mxu0 %v10177
    %v10706 = vpop.f32.mrf.mxu0
    %v10707 = vadd.f32 %v10658, %v10706
    %v10708 = vpop.f32.mrf.mxu0
    %v10709 = vadd.f32 %v10660, %v10708
    %10710 = vmatmul.bf16.gmra.mxu0 %v10181
    %v10711 = vpop.f32.mrf.mxu0
    %v10712 = vadd.f32 %v10663, %v10711
    %v10713 = vpop.f32.mrf.mxu0
    %v10714 = vadd.f32 %v10665, %v10713
    %10715 = vmatmul.bf16.gmra.mxu0 %v10185
    %v10716 = vpop.f32.mrf.mxu0
    %v10717 = vadd.f32 %v10668, %v10716
    %v10718 = vpop.f32.mrf.mxu0
    %v10719 = vadd.f32 %v10670, %v10718
    %10720 = vmatmul.bf16.gmra.mxu0 %v10189
    %v10721 = vpop.f32.mrf.mxu0
    %v10722 = vadd.f32 %v10673, %v10721
    %v10723 = vpop.f32.mrf.mxu0
    %v10724 = vadd.f32 %v10675, %v10723
    %10725 = vmatmul.bf16.gmra.mxu0 %v10193
    %v10726 = vpop.f32.mrf.mxu0
    %v10727 = vadd.f32 %v10678, %v10726
    %v10728 = vpop.f32.mrf.mxu0
    %v10729 = vadd.f32 %v10680, %v10728
    %10730 = vmatmul.bf16.gmra.mxu0 %v10197
    %v10731 = vpop.f32.mrf.mxu0
    %v10732 = vadd.f32 %v10683, %v10731
    %v10733 = vpop.f32.mrf.mxu0
    %v10734 = vadd.f32 %v10685, %v10733
    %10735 = vdwg.mxu0
    %10736 = vmatpush.bf16.msra.mxu0 %v10523
    %10737 = vmatpush.bf16.msra.mxu0 %v10521
    %10738 = vmatpush.bf16.msra.mxu0 %v10519
    %10739 = vmatpush.bf16.msra.mxu0 %v10517
    %10740 = vmatpush.bf16.msra.mxu0 %v10515
    %10741 = vmatpush.bf16.msra.mxu0 %v10513
    %10742 = vmatpush.bf16.msra.mxu0 %v10511
    %10743 = vmatpush.bf16.msra.mxu0 %v10509
    %10744 = vmatmul.bf16.gmra.mxu0 %v10170
    %v10745 = vpop.f32.mrf.mxu0
    %v10746 = vadd.f32 %v10697, %v10745
    %v10747 = vpop.f32.mrf.mxu0
    %v10748 = vadd.f32 %v10699, %v10747
    %10749 = vmatmul.bf16.gmra.mxu0 %v10174
    %v10750 = vpop.f32.mrf.mxu0
    %v10751 = vadd.f32 %v10702, %v10750
    %v10752 = vpop.f32.mrf.mxu0
    %v10753 = vadd.f32 %v10704, %v10752
    %10754 = vmatmul.bf16.gmra.mxu0 %v10178
    %v10755 = vpop.f32.mrf.mxu0
    %v10756 = vadd.f32 %v10707, %v10755
    %v10757 = vpop.f32.mrf.mxu0
    %v10758 = vadd.f32 %v10709, %v10757
    %10759 = vmatmul.bf16.gmra.mxu0 %v10182
    %v10760 = vpop.f32.mrf.mxu0
    %v10761 = vadd.f32 %v10712, %v10760
    %v10762 = vpop.f32.mrf.mxu0
    %v10763 = vadd.f32 %v10714, %v10762
    %10764 = vmatmul.bf16.gmra.mxu0 %v10186
    %v10765 = vpop.f32.mrf.mxu0
    %v10766 = vadd.f32 %v10717, %v10765
    %v10767 = vpop.f32.mrf.mxu0
    %v10768 = vadd.f32 %v10719, %v10767
    %10769 = vmatmul.bf16.gmra.mxu0 %v10190
    %v10770 = vpop.f32.mrf.mxu0
    %v10771 = vadd.f32 %v10722, %v10770
    %v10772 = vpop.f32.mrf.mxu0
    %v10773 = vadd.f32 %v10724, %v10772
    %10774 = vmatmul.bf16.gmra.mxu0 %v10194
    %v10775 = vpop.f32.mrf.mxu0
    %v10776 = vadd.f32 %v10727, %v10775
    %v10777 = vpop.f32.mrf.mxu0
    %v10778 = vadd.f32 %v10729, %v10777
    %10779 = vmatmul.bf16.gmra.mxu0 %v10198
    %v10780 = vpop.f32.mrf.mxu0
    %v10781 = vadd.f32 %v10732, %v10780
    %v10782 = vpop.f32.mrf.mxu0
    %v10783 = vadd.f32 %v10734, %v10782
    %10784 = vdwg.mxu0
    %10785 = vmatpush.bf16.msra.mxu0 %v10476
    %10786 = vmatpush.bf16.msra.mxu0 %v10474
    %10787 = vmatpush.bf16.msra.mxu0 %v10472
    %10788 = vmatpush.bf16.msra.mxu0 %v10470
    %10789 = vmatpush.bf16.msra.mxu0 %v10468
    %10790 = vmatpush.bf16.msra.mxu0 %v10466
    %10791 = vmatpush.bf16.msra.mxu0 %v10464
    %10792 = vmatpush.bf16.msra.mxu0 %v10462
    %10793 = vmatmul.bf16.gmra.mxu0 %v10167
    %v10794 = vpop.f32.mrf.mxu0
    %v10795 = vadd.f32 %v10266, %v10794
    %v10796 = vpop.f32.mrf.mxu0
    %v10797 = vadd.f32 %v10266, %v10796
    %10798 = vmatmul.bf16.gmra.mxu0 %v10171
    %v10799 = vpop.f32.mrf.mxu0
    %v10800 = vadd.f32 %v10266, %v10799
    %v10801 = vpop.f32.mrf.mxu0
    %v10802 = vadd.f32 %v10266, %v10801
    %10803 = vmatmul.bf16.gmra.mxu0 %v10175
    %v10804 = vpop.f32.mrf.mxu0
    %v10805 = vadd.f32 %v10266, %v10804
    %v10806 = vpop.f32.mrf.mxu0
    %v10807 = vadd.f32 %v10266, %v10806
    %10808 = vmatmul.bf16.gmra.mxu0 %v10179
    %v10809 = vpop.f32.mrf.mxu0
    %v10810 = vadd.f32 %v10266, %v10809
    %v10811 = vpop.f32.mrf.mxu0
    %v10812 = vadd.f32 %v10266, %v10811
    %10813 = vmatmul.bf16.gmra.mxu0 %v10183
    %v10814 = vpop.f32.mrf.mxu0
    %v10815 = vadd.f32 %v10266, %v10814
    %v10816 = vpop.f32.mrf.mxu0
    %v10817 = vadd.f32 %v10266, %v10816
    %10818 = vmatmul.bf16.gmra.mxu0 %v10187
    %v10819 = vpop.f32.mrf.mxu0
    %v10820 = vadd.f32 %v10266, %v10819
    %v10821 = vpop.f32.mrf.mxu0
    %v10822 = vadd.f32 %v10266, %v10821
    %10823 = vmatmul.bf16.gmra.mxu0 %v10191
    %v10824 = vpop.f32.mrf.mxu0
    %v10825 = vadd.f32 %v10266, %v10824
    %v10826 = vpop.f32.mrf.mxu0
    %v10827 = vadd.f32 %v10266, %v10826
    %10828 = vmatmul.bf16.gmra.mxu0 %v10195
    %v10829 = vpop.f32.mrf.mxu0
    %v10830 = vadd.f32 %v10266, %v10829
    %v10831 = vpop.f32.mrf.mxu0
    %v10832 = vadd.f32 %v10266, %v10831
    %10833 = vdwg.mxu0
    %10834 = vmatpush.bf16.msra.mxu0 %v10492
    %10835 = vmatpush.bf16.msra.mxu0 %v10490
    %10836 = vmatpush.bf16.msra.mxu0 %v10488
    %10837 = vmatpush.bf16.msra.mxu0 %v10486
    %10838 = vmatpush.bf16.msra.mxu0 %v10484
    %10839 = vmatpush.bf16.msra.mxu0 %v10482
    %10840 = vmatpush.bf16.msra.mxu0 %v10480
    %10841 = vmatpush.bf16.msra.mxu0 %v10478
    %10842 = vmatmul.bf16.gmra.mxu0 %v10168
    %v10843 = vpop.f32.mrf.mxu0
    %v10844 = vadd.f32 %v10795, %v10843
    %v10845 = vpop.f32.mrf.mxu0
    %v10846 = vadd.f32 %v10797, %v10845
    %10847 = vmatmul.bf16.gmra.mxu0 %v10172
    %v10848 = vpop.f32.mrf.mxu0
    %v10849 = vadd.f32 %v10800, %v10848
    %v10850 = vpop.f32.mrf.mxu0
    %v10851 = vadd.f32 %v10802, %v10850
    %10852 = vmatmul.bf16.gmra.mxu0 %v10176
    %v10853 = vpop.f32.mrf.mxu0
    %v10854 = vadd.f32 %v10805, %v10853
    %v10855 = vpop.f32.mrf.mxu0
    %v10856 = vadd.f32 %v10807, %v10855
    %10857 = vmatmul.bf16.gmra.mxu0 %v10180
    %v10858 = vpop.f32.mrf.mxu0
    %v10859 = vadd.f32 %v10810, %v10858
    %v10860 = vpop.f32.mrf.mxu0
    %v10861 = vadd.f32 %v10812, %v10860
    %10862 = vmatmul.bf16.gmra.mxu0 %v10184
    %v10863 = vpop.f32.mrf.mxu0
    %v10864 = vadd.f32 %v10815, %v10863
    %v10865 = vpop.f32.mrf.mxu0
    %v10866 = vadd.f32 %v10817, %v10865
    %10867 = vmatmul.bf16.gmra.mxu0 %v10188
    %v10868 = vpop.f32.mrf.mxu0
    %v10869 = vadd.f32 %v10820, %v10868
    %v10870 = vpop.f32.mrf.mxu0
    %v10871 = vadd.f32 %v10822, %v10870
    %10872 = vmatmul.bf16.gmra.mxu0 %v10192
    %v10873 = vpop.f32.mrf.mxu0
    %v10874 = vadd.f32 %v10825, %v10873
    %v10875 = vpop.f32.mrf.mxu0
    %v10876 = vadd.f32 %v10827, %v10875
    %10877 = vmatmul.bf16.gmra.mxu0 %v10196
    %v10878 = vpop.f32.mrf.mxu0
    %v10879 = vadd.f32 %v10830, %v10878
    %v10880 = vpop.f32.mrf.mxu0
    %v10881 = vadd.f32 %v10832, %v10880
    %10882 = vdwg.mxu0
    %10883 = vmatpush.bf16.msra.mxu0 %v10508
    %10884 = vmatpush.bf16.msra.mxu0 %v10506
    %10885 = vmatpush.bf16.msra.mxu0 %v10504
    %10886 = vmatpush.bf16.msra.mxu0 %v10502
    %10887 = vmatpush.bf16.msra.mxu0 %v10500
    %10888 = vmatpush.bf16.msra.mxu0 %v10498
    %10889 = vmatpush.bf16.msra.mxu0 %v10496
    %10890 = vmatpush.bf16.msra.mxu0 %v10494
    %10891 = vmatmul.bf16.gmra.mxu0 %v10169
    %v10892 = vpop.f32.mrf.mxu0
    %v10893 = vadd.f32 %v10844, %v10892
    %v10894 = vpop.f32.mrf.mxu0
    %v10895 = vadd.f32 %v10846, %v10894
    %10896 = vmatmul.bf16.gmra.mxu0 %v10173
    %v10897 = vpop.f32.mrf.mxu0
    %v10898 = vadd.f32 %v10849, %v10897
    %v10899 = vpop.f32.mrf.mxu0
    %v10900 = vadd.f32 %v10851, %v10899
    %10901 = vmatmul.bf16.gmra.mxu0 %v10177
    %v10902 = vpop.f32.mrf.mxu0
    %v10903 = vadd.f32 %v10854, %v10902
    %v10904 = vpop.f32.mrf.mxu0
    %v10905 = vadd.f32 %v10856, %v10904
    %10906 = vmatmul.bf16.gmra.mxu0 %v10181
    %v10907 = vpop.f32.mrf.mxu0
    %v10908 = vadd.f32 %v10859, %v10907
    %v10909 = vpop.f32.mrf.mxu0
    %v10910 = vadd.f32 %v10861, %v10909
    %10911 = vmatmul.bf16.gmra.mxu0 %v10185
    %v10912 = vpop.f32.mrf.mxu0
    %v10913 = vadd.f32 %v10864, %v10912
    %v10914 = vpop.f32.mrf.mxu0
    %v10915 = vadd.f32 %v10866, %v10914
    %10916 = vmatmul.bf16.gmra.mxu0 %v10189
    %v10917 = vpop.f32.mrf.mxu0
    %v10918 = vadd.f32 %v10869, %v10917
    %v10919 = vpop.f32.mrf.mxu0
    %v10920 = vadd.f32 %v10871, %v10919
    %10921 = vmatmul.bf16.gmra.mxu0 %v10193
    %v10922 = vpop.f32.mrf.mxu0
    %v10923 = vadd.f32 %v10874, %v10922
    %v10924 = vpop.f32.mrf.mxu0
    %v10925 = vadd.f32 %v10876, %v10924
    %10926 = vmatmul.bf16.gmra.mxu0 %v10197
    %v10927 = vpop.f32.mrf.mxu0
    %v10928 = vadd.f32 %v10879, %v10927
    %v10929 = vpop.f32.mrf.mxu0
    %v10930 = vadd.f32 %v10881, %v10929
    %10931 = vdwg.mxu0
    %10932 = vmatpush.bf16.msra.mxu0 %v10524
    %10933 = vmatpush.bf16.msra.mxu0 %v10522
    %10934 = vmatpush.bf16.msra.mxu0 %v10520
    %10935 = vmatpush.bf16.msra.mxu0 %v10518
    %10936 = vmatpush.bf16.msra.mxu0 %v10516
    %10937 = vmatpush.bf16.msra.mxu0 %v10514
    %10938 = vmatpush.bf16.msra.mxu0 %v10512
    %10939 = vmatpush.bf16.msra.mxu0 %v10510
    %10940 = vmatmul.bf16.gmra.mxu0 %v10170
    %v10941 = vpop.f32.mrf.mxu0
    %v10942 = vadd.f32 %v10893, %v10941
    %v10943 = vpop.f32.mrf.mxu0
    %v10944 = vadd.f32 %v10895, %v10943
    %10945 = vmatmul.bf16.gmra.mxu0 %v10174
    %v10946 = vpop.f32.mrf.mxu0
    %v10947 = vadd.f32 %v10898, %v10946
    %v10948 = vpop.f32.mrf.mxu0
    %v10949 = vadd.f32 %v10900, %v10948
    %10950 = vmatmul.bf16.gmra.mxu0 %v10178
    %v10951 = vpop.f32.mrf.mxu0
    %v10952 = vadd.f32 %v10903, %v10951
    %v10953 = vpop.f32.mrf.mxu0
    %v10954 = vadd.f32 %v10905, %v10953
    %10955 = vmatmul.bf16.gmra.mxu0 %v10182
    %v10956 = vpop.f32.mrf.mxu0
    %v10957 = vadd.f32 %v10908, %v10956
    %v10958 = vpop.f32.mrf.mxu0
    %v10959 = vadd.f32 %v10910, %v10958
    %10960 = vmatmul.bf16.gmra.mxu0 %v10186
    %v10961 = vpop.f32.mrf.mxu0
    %v10962 = vadd.f32 %v10913, %v10961
    %v10963 = vpop.f32.mrf.mxu0
    %v10964 = vadd.f32 %v10915, %v10963
    %10965 = vmatmul.bf16.gmra.mxu0 %v10190
    %v10966 = vpop.f32.mrf.mxu0
    %v10967 = vadd.f32 %v10918, %v10966
    %v10968 = vpop.f32.mrf.mxu0
    %v10969 = vadd.f32 %v10920, %v10968
    %10970 = vmatmul.bf16.gmra.mxu0 %v10194
    %v10971 = vpop.f32.mrf.mxu0
    %v10972 = vadd.f32 %v10923, %v10971
    %v10973 = vpop.f32.mrf.mxu0
    %v10974 = vadd.f32 %v10925, %v10973
    %10975 = vmatmul.bf16.gmra.mxu0 %v10198
    %v10976 = vpop.f32.mrf.mxu0
    %v10977 = vadd.f32 %v10928, %v10976
    %v10978 = vpop.f32.mrf.mxu0
    %v10979 = vadd.f32 %v10930, %v10978
    %10980 = vdwg.mxu0
    %v10981 = vmul.f32 %v10746, 0.2
    %v10982 = vmul.f32 %v10942, 0.2
    %v10983 = vmul.f32 %v10748, 0.2
    %v10984 = vmul.f32 %v10944, 0.2
    %v10985 = vmul.f32 %v10751, 0.2
    %v10986 = vmul.f32 %v10947, 0.2
    %v10987 = vmul.f32 %v10753, 0.2
    %v10988 = vmul.f32 %v10949, 0.2
    %v10989 = vmul.f32 %v10756, 0.2
    %v10990 = vmul.f32 %v10952, 0.2
    %v10991 = vmul.f32 %v10758, 0.2
    %v10992 = vmul.f32 %v10954, 0.2
    %v10993 = vmul.f32 %v10761, 0.2
    %v10994 = vmul.f32 %v10957, 0.2
    %v10995 = vmul.f32 %v10763, 0.2
    %v10996 = vmul.f32 %v10959, 0.2
    %v10997 = vmul.f32 %v10766, 0.2
    %v10998 = vmul.f32 %v10962, 0.2
    %v10999 = vmul.f32 %v10768, 0.2
    %v11000 = vmul.f32 %v10964, 0.2
    %v11001 = vmul.f32 %v10771, 0.2
    %v11002 = vmul.f32 %v10967, 0.2
    %v11003 = vmul.f32 %v10773, 0.2
    %v11004 = vmul.f32 %v10969, 0.2
    %v11005 = vmul.f32 %v10776, 0.2
    %v11006 = vmul.f32 %v10972, 0.2
    %v11007 = vmul.f32 %v10778, 0.2
    %v11008 = vmul.f32 %v10974, 0.2
    %v11009 = vmul.f32 %v10781, 0.2
    %v11010 = vmul.f32 %v10977, 0.2
    %v11011 = vmul.f32 %v10783, 0.2
    %v11012 = vmul.f32 %v10979, 0.2
    %v11013 = vmax.f32 %v10746, %v10981
    %v11014 = vmax.f32 %v10942, %v10982
    %v11015 = vmax.f32 %v10748, %v10983
    %v11016 = vmax.f32 %v10944, %v10984
    %v11017 = vmax.f32 %v10751, %v10985
    %v11018 = vmax.f32 %v10947, %v10986
    %v11019 = vmax.f32 %v10753, %v10987
    %v11020 = vmax.f32 %v10949, %v10988
    %v11021 = vmax.f32 %v10756, %v10989
    %v11022 = vmax.f32 %v10952, %v10990
    %v11023 = vmax.f32 %v10758, %v10991
    %v11024 = vmax.f32 %v10954, %v10992
    %v11025 = vmax.f32 %v10761, %v10993
    %v11026 = vmax.f32 %v10957, %v10994
    %v11027 = vmax.f32 %v10763, %v10995
    %v11028 = vmax.f32 %v10959, %v10996
    %v11029 = vmax.f32 %v10766, %v10997
    %v11030 = vmax.f32 %v10962, %v10998
    %v11031 = vmax.f32 %v10768, %v10999
    %v11032 = vmax.f32 %v10964, %v11000
    %v11033 = vmax.f32 %v10771, %v11001
    %v11034 = vmax.f32 %v10967, %v11002
    %v11035 = vmax.f32 %v10773, %v11003
    %v11036 = vmax.f32 %v10969, %v11004
    %v11037 = vmax.f32 %v10776, %v11005
    %v11038 = vmax.f32 %v10972, %v11006
    %v11039 = vmax.f32 %v10778, %v11007
    %v11040 = vmax.f32 %v10974, %v11008
    %v11041 = vmax.f32 %v10781, %v11009
    %v11042 = vmax.f32 %v10977, %v11010
    %v11043 = vmax.f32 %v10783, %v11011
    %v11044 = vmax.f32 %v10979, %v11012
    %v11045 = vpack.c.bf16 %v11015, %v11013
    %v11046 = vpack.c.bf16 %v11016, %v11014
    %v11047 = vpack.c.bf16 %v11019, %v11017
    %v11048 = vpack.c.bf16 %v11020, %v11018
    %v11049 = vpack.c.bf16 %v11023, %v11021
    %v11050 = vpack.c.bf16 %v11024, %v11022
    %v11051 = vpack.c.bf16 %v11027, %v11025
    %v11052 = vpack.c.bf16 %v11028, %v11026
    %v11053 = vpack.c.bf16 %v11031, %v11029
    %v11054 = vpack.c.bf16 %v11032, %v11030
    %v11055 = vpack.c.bf16 %v11035, %v11033
    %v11056 = vpack.c.bf16 %v11036, %v11034
    %v11057 = vpack.c.bf16 %v11039, %v11037
    %v11058 = vpack.c.bf16 %v11040, %v11038
    %v11059 = vpack.c.bf16 %v11043, %v11041
    %v11060 = vpack.c.bf16 %v11044, %v11042
    %v11061 = vld [vmem:[#allocation15] sm:$0xf]
    %v11062 = vld [vmem:[#allocation15 + $0x4] sm:$0xf]
    %v11063 = vld [vmem:[#allocation15 + $0x8] sm:$0xf]
    %v11064 = vld [vmem:[#allocation15 + $0xc] sm:$0xf]
    %v11065 = vld [vmem:[#allocation15 + $0x10] sm:$0xf]
    %v11066 = vld [vmem:[#allocation15 + $0x14] sm:$0xf]
    %v11067 = vld [vmem:[#allocation15 + $0x18] sm:$0xf]
    %v11068 = vld [vmem:[#allocation15 + $0x1c] sm:$0xf]
    %v11069 = vld [vmem:[#allocation15 + $0x20] sm:$0xf]
    %v11070 = vld [vmem:[#allocation15 + $0x24] sm:$0xf]
    %v11071 = vld [vmem:[#allocation15 + $0x28] sm:$0xf]
    %v11072 = vld [vmem:[#allocation15 + $0x2c] sm:$0xf]
    %v11073 = vld [vmem:[#allocation15 + $0x30] sm:$0xf]
    %v11074 = vld [vmem:[#allocation15 + $0x34] sm:$0xf]
    %v11075 = vld [vmem:[#allocation15 + $0x38] sm:$0xf]
    %v11076 = vld [vmem:[#allocation15 + $0x3c] sm:$0xf]
    %v11077 = vld [vmem:[#allocation15 + $0x40] sm:$0xf]
    %v11078 = vld [vmem:[#allocation15 + $0x44] sm:$0xf]
    %v11079 = vld [vmem:[#allocation15 + $0x48] sm:$0xf]
    %v11080 = vld [vmem:[#allocation15 + $0x4c] sm:$0xf]
    %v11081 = vld [vmem:[#allocation15 + $0x50] sm:$0xf]
    %v11082 = vld [vmem:[#allocation15 + $0x54] sm:$0xf]
    %v11083 = vld [vmem:[#allocation15 + $0x58] sm:$0xf]
    %v11084 = vld [vmem:[#allocation15 + $0x5c] sm:$0xf]
    %v11085 = vld [vmem:[#allocation15 + $0x60] sm:$0xf]
    %v11086 = vld [vmem:[#allocation15 + $0x64] sm:$0xf]
    %v11087 = vld [vmem:[#allocation15 + $0x68] sm:$0xf]
    %v11088 = vld [vmem:[#allocation15 + $0x6c] sm:$0xf]
    %v11089 = vld [vmem:[#allocation15 + $0x70] sm:$0xf]
    %v11090 = vld [vmem:[#allocation15 + $0x74] sm:$0xf]
    %v11091 = vld [vmem:[#allocation15 + $0x78] sm:$0xf]
    %v11092 = vld [vmem:[#allocation15 + $0x7c] sm:$0xf]
    %v11093 = vld [vmem:[#allocation17] sm:$0x1]
    %v11095 = vperm.slane %v11093, 0
    %v11129 = vunpack.c.l.b16 %v11061
    %v11130 = vunpack.c.l.b16 %v11062
    %v11131 = vunpack.c.l.b16 %v11063
    %v11132 = vunpack.c.l.b16 %v11064
    %v11133 = vunpack.c.l.b16 %v11065
    %v11134 = vunpack.c.l.b16 %v11066
    %v11135 = vunpack.c.l.b16 %v11067
    %v11136 = vunpack.c.l.b16 %v11068
    %v11137 = vunpack.c.l.b16 %v11069
    %v11138 = vunpack.c.l.b16 %v11070
    %v11139 = vunpack.c.l.b16 %v11071
    %v11140 = vunpack.c.l.b16 %v11072
    %v11141 = vunpack.c.l.b16 %v11073
    %v11142 = vunpack.c.l.b16 %v11074
    %v11143 = vunpack.c.l.b16 %v11075
    %v11144 = vunpack.c.l.b16 %v11076
    %v11145 = vunpack.c.l.b16 %v11077
    %v11146 = vunpack.c.l.b16 %v11078
    %v11147 = vunpack.c.l.b16 %v11079
    %v11148 = vunpack.c.l.b16 %v11080
    %v11149 = vunpack.c.l.b16 %v11081
    %v11150 = vunpack.c.l.b16 %v11082
    %v11151 = vunpack.c.l.b16 %v11083
    %v11152 = vunpack.c.l.b16 %v11084
    %v11153 = vunpack.c.l.b16 %v11085
    %v11154 = vunpack.c.l.b16 %v11086
    %v11155 = vunpack.c.l.b16 %v11087
    %v11156 = vunpack.c.l.b16 %v11088
    %v11157 = vunpack.c.l.b16 %v11089
    %v11158 = vunpack.c.l.b16 %v11090
    %v11159 = vunpack.c.l.b16 %v11091
    %v11160 = vunpack.c.l.b16 %v11092
    %v11161 = vpack.c.b16 %v11130, %v11129
    %v11162 = vpack.c.b16 %v11132, %v11131
    %v11163 = vpack.c.b16 %v11134, %v11133
    %v11164 = vpack.c.b16 %v11136, %v11135
    %v11165 = vpack.c.b16 %v11138, %v11137
    %v11166 = vpack.c.b16 %v11140, %v11139
    %v11167 = vpack.c.b16 %v11142, %v11141
    %v11168 = vpack.c.b16 %v11144, %v11143
    %v11169 = vpack.c.b16 %v11146, %v11145
    %v11170 = vpack.c.b16 %v11148, %v11147
    %v11171 = vpack.c.b16 %v11150, %v11149
    %v11172 = vpack.c.b16 %v11152, %v11151
    %v11173 = vpack.c.b16 %v11154, %v11153
    %v11174 = vpack.c.b16 %v11156, %v11155
    %v11175 = vpack.c.b16 %v11158, %v11157
    %v11176 = vpack.c.b16 %v11160, %v11159
    %11193 = vmatpush.bf16.msra.mxu0 %v11168
    %11194 = vmatpush.bf16.msra.mxu0 %v11167
    %11195 = vmatpush.bf16.msra.mxu0 %v11166
    %11196 = vmatpush.bf16.msra.mxu0 %v11165
    %11197 = vmatpush.bf16.msra.mxu0 %v11164
    %11198 = vmatpush.bf16.msra.mxu0 %v11163
    %11199 = vmatpush.bf16.msra.mxu0 %v11162
    %11200 = vmatpush.bf16.msra.mxu0 %v11161
    %11201 = vmatmul.bf16.gmra.mxu0 %v11045
    %v11202 = vpop.f32.mrf.mxu0
    %v11203 = vadd.f32 %v11095, %v11202
    %v11204 = vpop.f32.mrf.mxu0
    %v11205 = vadd.f32 %v11095, %v11204
    %11206 = vmatmul.bf16.gmra.mxu0 %v11047
    %v11207 = vpop.f32.mrf.mxu0
    %v11208 = vadd.f32 %v11095, %v11207
    %v11209 = vpop.f32.mrf.mxu0
    %v11210 = vadd.f32 %v11095, %v11209
    %11211 = vmatmul.bf16.gmra.mxu0 %v11049
    %v11212 = vpop.f32.mrf.mxu0
    %v11213 = vadd.f32 %v11095, %v11212
    %v11214 = vpop.f32.mrf.mxu0
    %v11215 = vadd.f32 %v11095, %v11214
    %11216 = vmatmul.bf16.gmra.mxu0 %v11051
    %v11217 = vpop.f32.mrf.mxu0
    %v11218 = vadd.f32 %v11095, %v11217
    %v11219 = vpop.f32.mrf.mxu0
    %v11220 = vadd.f32 %v11095, %v11219
    %11221 = vmatmul.bf16.gmra.mxu0 %v11053
    %v11222 = vpop.f32.mrf.mxu0
    %v11223 = vadd.f32 %v11095, %v11222
    %v11224 = vpop.f32.mrf.mxu0
    %v11225 = vadd.f32 %v11095, %v11224
    %11226 = vmatmul.bf16.gmra.mxu0 %v11055
    %v11227 = vpop.f32.mrf.mxu0
    %v11228 = vadd.f32 %v11095, %v11227
    %v11229 = vpop.f32.mrf.mxu0
    %v11230 = vadd.f32 %v11095, %v11229
    %11231 = vmatmul.bf16.gmra.mxu0 %v11057
    %v11232 = vpop.f32.mrf.mxu0
    %v11233 = vadd.f32 %v11095, %v11232
    %v11234 = vpop.f32.mrf.mxu0
    %v11235 = vadd.f32 %v11095, %v11234
    %11236 = vmatmul.bf16.gmra.mxu0 %v11059
    %v11237 = vpop.f32.mrf.mxu0
    %v11238 = vadd.f32 %v11095, %v11237
    %v11239 = vpop.f32.mrf.mxu0
    %v11240 = vadd.f32 %v11095, %v11239
    %11241 = vdwg.mxu0
    %11242 = vmatpush.bf16.msra.mxu0 %v11176
    %11243 = vmatpush.bf16.msra.mxu0 %v11175
    %11244 = vmatpush.bf16.msra.mxu0 %v11174
    %11245 = vmatpush.bf16.msra.mxu0 %v11173
    %11246 = vmatpush.bf16.msra.mxu0 %v11172
    %11247 = vmatpush.bf16.msra.mxu0 %v11171
    %11248 = vmatpush.bf16.msra.mxu0 %v11170
    %11249 = vmatpush.bf16.msra.mxu0 %v11169
    %11250 = vmatmul.bf16.gmra.mxu0 %v11046
    %v11251 = vpop.f32.mrf.mxu0
    %v11252 = vadd.f32 %v11203, %v11251
    %v11253 = vpop.f32.mrf.mxu0
    %v11254 = vadd.f32 %v11205, %v11253
    %11255 = vmatmul.bf16.gmra.mxu0 %v11048
    %v11256 = vpop.f32.mrf.mxu0
    %v11257 = vadd.f32 %v11208, %v11256
    %v11258 = vpop.f32.mrf.mxu0
    %v11259 = vadd.f32 %v11210, %v11258
    %11260 = vmatmul.bf16.gmra.mxu0 %v11050
    %v11261 = vpop.f32.mrf.mxu0
    %v11262 = vadd.f32 %v11213, %v11261
    %v11263 = vpop.f32.mrf.mxu0
    %v11264 = vadd.f32 %v11215, %v11263
    %11265 = vmatmul.bf16.gmra.mxu0 %v11052
    %v11266 = vpop.f32.mrf.mxu0
    %v11267 = vadd.f32 %v11218, %v11266
    %v11268 = vpop.f32.mrf.mxu0
    %v11269 = vadd.f32 %v11220, %v11268
    %11270 = vmatmul.bf16.gmra.mxu0 %v11054
    %v11271 = vpop.f32.mrf.mxu0
    %v11272 = vadd.f32 %v11223, %v11271
    %v11273 = vpop.f32.mrf.mxu0
    %v11274 = vadd.f32 %v11225, %v11273
    %11275 = vmatmul.bf16.gmra.mxu0 %v11056
    %v11276 = vpop.f32.mrf.mxu0
    %v11277 = vadd.f32 %v11228, %v11276
    %v11278 = vpop.f32.mrf.mxu0
    %v11279 = vadd.f32 %v11230, %v11278
    %11280 = vmatmul.bf16.gmra.mxu0 %v11058
    %v11281 = vpop.f32.mrf.mxu0
    %v11282 = vadd.f32 %v11233, %v11281
    %v11283 = vpop.f32.mrf.mxu0
    %v11284 = vadd.f32 %v11235, %v11283
    %11285 = vmatmul.bf16.gmra.mxu0 %v11060
    %v11286 = vpop.f32.mrf.mxu0
    %v11287 = vadd.f32 %v11238, %v11286
    %v11288 = vpop.f32.mrf.mxu0
    %v11289 = vadd.f32 %v11240, %v11288
    %11290 = vdwg.mxu0
    %v11291 = vmul.f32 %v11252, 0.2
    %v11292 = vmul.f32 %v11254, 0.2
    %v11293 = vmul.f32 %v11257, 0.2
    %v11294 = vmul.f32 %v11259, 0.2
    %v11295 = vmul.f32 %v11262, 0.2
    %v11296 = vmul.f32 %v11264, 0.2
    %v11297 = vmul.f32 %v11267, 0.2
    %v11298 = vmul.f32 %v11269, 0.2
    %v11299 = vmul.f32 %v11272, 0.2
    %v11300 = vmul.f32 %v11274, 0.2
    %v11301 = vmul.f32 %v11277, 0.2
    %v11302 = vmul.f32 %v11279, 0.2
    %v11303 = vmul.f32 %v11282, 0.2
    %v11304 = vmul.f32 %v11284, 0.2
    %v11305 = vmul.f32 %v11287, 0.2
    %v11306 = vmul.f32 %v11289, 0.2
    %v11307 = vmax.f32 %v11252, %v11291
    %v11308 = vmax.f32 %v11254, %v11292
    %v11309 = vmax.f32 %v11257, %v11293
    %v11310 = vmax.f32 %v11259, %v11294
    %v11311 = vmax.f32 %v11262, %v11295
    %v11312 = vmax.f32 %v11264, %v11296
    %v11313 = vmax.f32 %v11267, %v11297
    %v11314 = vmax.f32 %v11269, %v11298
    %v11315 = vmax.f32 %v11272, %v11299
    %v11316 = vmax.f32 %v11274, %v11300
    %v11317 = vmax.f32 %v11277, %v11301
    %v11318 = vmax.f32 %v11279, %v11302
    %v11319 = vmax.f32 %v11282, %v11303
    %v11320 = vmax.f32 %v11284, %v11304
    %v11321 = vmax.f32 %v11287, %v11305
    %v11322 = vmax.f32 %v11289, %v11306
    %v11323 = vpack.c.bf16 %v11308, %v11307
    %v11324 = vpack.c.bf16 %v11310, %v11309
    %v11325 = vpack.c.bf16 %v11312, %v11311
    %v11326 = vpack.c.bf16 %v11314, %v11313
    %v11327 = vpack.c.bf16 %v11316, %v11315
    %v11328 = vpack.c.bf16 %v11318, %v11317
    %v11329 = vpack.c.bf16 %v11320, %v11319
    %v11330 = vpack.c.bf16 %v11322, %v11321
    %v11331 = vld [vmem:[#allocation18] sm:$0xf]
    %11332 = vmatpush.bf16.xpose.msra.mxu0 %v11330
    %11333 = vmatpush.bf16.xpose.msra.mxu0 %v11329
    %11334 = vmatpush.bf16.xpose.msra.mxu0 %v11328
    %11335 = vmatpush.bf16.xpose.msra.mxu0 %v11327
    %11336 = vmatpush.bf16.xpose.msra.mxu0 %v11326
    %11337 = vmatpush.bf16.xpose.msra.mxu0 %v11325
    %11338 = vmatpush.bf16.xpose.msra.mxu0 %v11324
    %11339 = vmatpush.bf16.xpose.msra.mxu0 %v11323
    %11340 = vmatmul.bf16.gmra.mxu0 %v11331
    %v11341 = vpop.f32.mrf.mxu0
    %v11342 = vadd.f32 0.0, %v11341
    %v11343 = vpop.f32.mrf.mxu0
    %11344 = vdwg.mxu0
    %v11345 = vld [vmem:[#allocation2] sm:$0x1]
    %11347 = vset.pattern.permute.xlu0 0
    %11348 = vperm.xlu0 %11347, %v11345
    %v11349 = vpop.permute.xlu0 %11348
    %v11351 = vperm.slane %v11349, 0
    %v11352 = vadd.f32 %v11342, %v11351
    %11353 = vst [vmem:[#allocation20] sm:$0x1] %v11352
    // Predicated region
    $region86: #{tpu_custom_call.1} parent=1 // pred_check
      _
    $region87: #{tpu_custom_call.1} parent=1 // pred_check_branch
      %11355 = sbr.rel (0) target = $region89
    $region88: #{tpu_custom_call.1} parent=1 // pred_region
      %11357 = vsyncadd [#allocation5], 0
      %s11359 = sshll.u32 [#allocation20], 4
      %s11360 = int_to_ptr.vmem [resolvable:$true] %s11359
      %s11361 = sshll.u32 %s11, 4
      %s11362 = int_to_ptr.hbm [resolvable:$true] %s11361
      %11364 = dma.vmem_to_hbm [thread:$0]  %s11360, 16, %s11362, [#allocation5]
    $region89: #{tpu_custom_call.1} parent=1 // pred_fallthru
      _
    // Predicated region
    $region90: #{tpu_custom_call.1} parent=1 // pred_check
      _
    $region91: #{tpu_custom_call.1} parent=1 // pred_check_branch
      %11366 = sbr.rel (0) target = $region93
    $region92: #{tpu_custom_call.1} parent=1 // pred_region
      %11368 = dma.done [#allocation5], 16
    $region93: #{tpu_custom_call.1} parent=1 // pred_fallthru
      _
    %11369 = vsyncpa [#allocation4], 1
    %11370 = vsyncpa [#allocation7], 1
    %11371 = vsyncpa [#allocation10], 1
    %11372 = vsyncpa [#allocation13], 1
    %11373 = vsyncpa [#allocation16], 1
    %11374 = vsyncpa [#allocation19], 1
    %11375 = vsyncpa [#allocation5], 1

</llo_original>
